<compile_context>
chip_gen: v7x
topology: tpu7x:2x2x1
jax: 0.10.0
libtpu: 0.0.40
codegen_flags: <defaults>
</compile_context>

<pallas_src>
import jax
import jax.numpy as jnp
from jax.experimental import pallas as pl
from jax.experimental.pallas import tpu as pltpu


# ---------------------------------------------------------------------------
# Fused Pallas kernel: 3x (3x3 conv + folded-BN + ReLU), concat-free,
# one batch element per grid step.
# ---------------------------------------------------------------------------
def upconv_fused_kernel(xup_ref, skip_ref,
                        w1_ref, s1_ref, b1_ref,
                        w2s_ref, w2x_ref, s2_ref, b2_ref,
                        w3_ref, s3_ref, b3_ref,
                        o_ref,
                        xpad, skpad, x1pad, ypad):
    # xup_ref : (1, H2, W2, Cin)   upsampled high-level features (bf16)
    # skip_ref: (1, H2, W2, Cs)    encoder skip features (bf16)
    # w1/w2s/w2x/w3 : (9*Cin_i, Cout_i) im2col conv weights (bf16); conv2a's
    #                weight is pre-split into its skip / x halves (concat-free)
    # s*/b*   : (1, Cout_i)        folded BN scale / bias (f32)
    # o_ref   : (1, Cout, H2*W2)   lane-dense NCHW-flat output (f32)
    # *pad    : (H2+2, W2+2, C)    bf16 VMEM scratch with 1-px zero halo
    h2, w2 = xup_ref.shape[1], xup_ref.shape[2]
    n = h2 * w2
    bf = jnp.bfloat16

    def zero_halo(ref):
        hp, wp, c = ref.shape
        ref[0:1, :, :] = jnp.zeros((1, wp, c), bf)
        ref[hp - 1:hp, :, :] = jnp.zeros((1, wp, c), bf)
        ref[:, 0:1, :] = jnp.zeros((hp, 1, c), bf)
        ref[:, wp - 1:wp, :] = jnp.zeros((hp, 1, c), bf)

    # Only the 1-px halo needs zeros (== conv pad=1); interiors are fully
    # overwritten below before any read.  O(H+W) stores per buffer per step.
    zero_halo(xpad)
    zero_halo(skpad)
    zero_halo(x1pad)
    zero_halo(ypad)

    # Fill interiors directly in bf16 (no f32 round trip).
    xpad[1:1 + h2, 1:1 + w2, :] = xup_ref[0]
    skpad[1:1 + h2, 1:1 + w2, :] = skip_ref[0]

    def im2col(padded):
        # padded: (H2+2, W2+2, C) bf16 value -> (H2*W2, 9*C) patch matrix.
        taps = [padded[kh:kh + h2, kw:kw + w2, :]
                for kh in range(3) for kw in range(3)]
        patches = jnp.concatenate(taps, axis=-1)              # (H2, W2, 9*C)
        return patches.reshape(n, patches.shape[-1])

    def bn_relu(acc, s_ref, b_ref):                            # f32 epilogue
        return jnp.maximum(acc * s_ref[...] + b_ref[...], 0.0)

    # conv_block1: Conv3x3(Cin -> C1) + BN + ReLU on the upsampled map.
    acc1 = jnp.dot(im2col(xpad[...]), w1_ref[...],
                   preferred_element_type=jnp.float32)
    y1 = bn_relu(acc1, s1_ref, b1_ref)                         # (N, C1) f32
    x1pad[1:1 + h2, 1:1 + w2, :] = y1.reshape(h2, w2, y1.shape[-1]).astype(bf)

    # conv_block2 #1: Conv3x3 over concat([skip, conv1]) without materializing
    # the concat: two accumulating MXU dots against the split weight halves.
    acc2 = jnp.dot(im2col(skpad[...]), w2s_ref[...],
                   preferred_element_type=jnp.float32)
    acc2 = acc2 + jnp.dot(im2col(x1pad[...]), w2x_ref[...],
                          preferred_element_type=jnp.float32)
    y2 = bn_relu(acc2, s2_ref, b2_ref)                         # (N, C2) f32
    ypad[1:1 + h2, 1:1 + w2, :] = y2.reshape(h2, w2, y2.shape[-1]).astype(bf)

    # conv_block2 #2: Conv3x3(C2 -> C3) + BN + ReLU.
    acc3 = jnp.dot(im2col(ypad[...]), w3_ref[...],
                   preferred_element_type=jnp.float32)
    y3 = bn_relu(acc3, s3_ref, b3_ref)                         # (N, C3) f32

    # Lane-dense, NCHW-flat store: last dim is H2*W2 (multiple of 128), so the
    # output store is unmasked and the wrapper needs no HBM transpose.
    o_ref[0] = jnp.transpose(y3).astype(o_ref.dtype)           # (C3, N)


def upconv_fused(x_up, skip, w1, s1, b1, w2s, w2x, s2, b2, w3, s3, b3):
    """x_up/skip: (B, 2H, 2W, C) bf16; w*: (9*Cin_i, Cout_i) bf16; s*/b*: (1, Cout_i) f32.

    Returns (B, Cout, (2H)*(2W)) f32 (NCHW-flat).
    """
    b, h2, w2d, cin = x_up.shape
    cs = skip.shape[-1]
    c1, c2, c3 = w1.shape[-1], w2s.shape[-1], w3.shape[-1]
    n = h2 * w2d

    def full(a):
        return pl.BlockSpec(a.shape, lambda i: (0,) * a.ndim)

    # Explicit scoped-VMEM budget: double-buffered I/O blocks + bf16 scratch +
    # resident weights, 2x headroom, capped at 64 MiB so it is valid on v7x.
    scratch_b = (h2 + 2) * (w2d + 2) * (cin + cs + c1 + c2) * 2
    io_b = 2 * (h2 * w2d * (cin + cs) * 2 + c3 * n * 4)
    wts_b = 9 * (cin * c1 + cs * c2 + c1 * c2 + c2 * c3) * 2 + 2 * (c1 + c2 + c3) * 4
    vmem_limit = int(min(64 << 20, max(32 << 20, 2 * (scratch_b + io_b + wts_b))))

    return pl.pallas_call(
        upconv_fused_kernel,
        out_shape=jax.ShapeDtypeStruct((b, c3, n), jnp.float32),
        grid=(b,),
        in_specs=[
            pl.BlockSpec((1, h2, w2d, cin), lambda i: (i, 0, 0, 0)),
            pl.BlockSpec((1, h2, w2d, cs), lambda i: (i, 0, 0, 0)),
            full(w1), full(s1), full(b1),
            full(w2s), full(w2x), full(s2), full(b2),
            full(w3), full(s3), full(b3),
        ],
        out_specs=pl.BlockSpec((1, c3, n), lambda i: (i, 0, 0)),
        scratch_shapes=[
            pltpu.VMEM((h2 + 2, w2d + 2, cin), jnp.bfloat16),
            pltpu.VMEM((h2 + 2, w2d + 2, cs), jnp.bfloat16),
            pltpu.VMEM((h2 + 2, w2d + 2, c1), jnp.bfloat16),
            pltpu.VMEM((h2 + 2, w2d + 2, c2), jnp.bfloat16),
        ],
        compiler_params=pltpu.CompilerParams(
            dimension_semantics=("parallel",),
            vmem_limit_bytes=vmem_limit),
    )(x_up, skip, w1, s1, b1, w2s, w2x, s2, b2, w3, s3, b3)


# ---------------------------------------------------------------------------
# 2x bilinear upsample (align_corners=False) — shift + weighted-add, no gathers
# TODO(synk): fuse into the kernel with 4-phase strided VMEM stores.
# ---------------------------------------------------------------------------
def bilinear_upsample_x2(x):
    """x: (B, H, W, C) -> (B, 2H, 2W, C), matches nn.Upsample(2, 'bilinear')."""
    b, h, w, c = x.shape
    xf = x.astype(jnp.float32)
    up = jnp.concatenate([xf[:, :1], xf[:, :-1]], axis=1)     # x[i-1], edge-clamped
    dn = jnp.concatenate([xf[:, 1:], xf[:, -1:]], axis=1)     # x[i+1], edge-clamped
    r_even = 0.25 * up + 0.75 * xf                            # out row 2i
    r_odd = 0.75 * xf + 0.25 * dn                             # out row 2i+1
    rows = jnp.stack([r_even, r_odd], axis=2).reshape(b, 2 * h, w, c)
    lf = jnp.concatenate([rows[:, :, :1], rows[:, :, :-1]], axis=2)
    rt = jnp.concatenate([rows[:, :, 1:], rows[:, :, -1:]], axis=2)
    c_even = 0.25 * lf + 0.75 * rows                          # out col 2j
    c_odd = 0.75 * rows + 0.25 * rt                           # out col 2j+1
    return jnp.stack([c_even, c_odd], axis=3).reshape(b, 2 * h, 2 * w, c)


# ---------------------------------------------------------------------------
# Parameter construction (deterministic, synthetic) + eval-mode BN folding
# ---------------------------------------------------------------------------
def make_conv_bn_params(key, cin, cout, eps=1e-5):
    k_w, k_g, k_b, k_m, k_v = jax.random.split(key, 5)
    w = jax.random.normal(k_w, (3, 3, cin, cout), jnp.float32) * 0.1  # HWIO
    gamma = 1.0 + 0.1 * jax.random.normal(k_g, (cout,), jnp.float32)
    beta = 0.1 * jax.random.normal(k_b, (cout,), jnp.float32)
    mean = 0.1 * jax.random.normal(k_m, (cout,), jnp.float32)
    var = jnp.abs(jax.random.normal(k_v, (cout,), jnp.float32)) + 0.5
    scale = gamma / jnp.sqrt(var + eps)
    bias = beta - mean * scale
    return dict(w=w, scale=scale, bias=bias)


def init_upconvblock_params(key, in_channels, skip_channels, out_channels):
    k1, k2, k3 = jax.random.split(key, 3)
    return dict(
        conv1=make_conv_bn_params(k1, in_channels, out_channels),
        conv2a=make_conv_bn_params(k2, 2 * skip_channels, out_channels),
        conv2b=make_conv_bn_params(k3, out_channels, out_channels),
    )


# ---------------------------------------------------------------------------
# UpConvBlock forward
# ---------------------------------------------------------------------------
@jax.jit
def upconv_block_forward(skip_nchw, x_nchw, params):
    # external NCHW (PyTorch); internal NHWC (channels on the TPU lane axis)
    skip = jnp.transpose(skip_nchw, (0, 2, 3, 1))
    x = jnp.transpose(x_nchw, (0, 2, 3, 1))

    x_up = bilinear_upsample_x2(x)                 # nn.Upsample(2, 'bilinear')
    b, h2, w2d, cin = x_up.shape
    cs = skip.shape[-1]

    p1, p2, p3 = params["conv1"], params["conv2a"], params["conv2b"]
    c1 = p1["w"].shape[-1]
    c2 = p2["w"].shape[-1]
    c3 = p3["w"].shape[-1]

    # conv_block2's first conv expects 2*skip_channels input channels; the
    # concat produces skip_channels + out_channels, so this only matches when
    # out_channels == skip_channels (fail loudly otherwise).
    assert p2["w"].shape[2] == cs + c1, (
        "UpConvBlock requires out_channels == skip_channels "
        "(conv_block2 input channels = 2 * skip_channels)")

    bf = jnp.bfloat16
    w1 = p1["w"].reshape(9 * cin, c1).astype(bf)
    w2s = p2["w"][:, :, :cs, :].reshape(9 * cs, c2).astype(bf)   # skip half
    w2x = p2["w"][:, :, cs:, :].reshape(9 * c1, c2).astype(bf)   # conv1 half
    w3 = p3["w"].reshape(9 * p3["w"].shape[2], c3).astype(bf)

    def sb(p):
        return (p["scale"].reshape(1, -1).astype(jnp.float32),
                p["bias"].reshape(1, -1).astype(jnp.float32))
    s1, b1 = sb(p1)
    s2, b2 = sb(p2)
    s3, b3 = sb(p3)

    out_flat = upconv_fused(x_up.astype(bf), skip.astype(bf),
                            w1, s1, b1, w2s, w2x, s2, b2, w3, s3, b3)
    # kernel output is NCHW-flat (B, C3, H2*W2): just reshape, no transpose.
    return out_flat.reshape(b, c3, h2, w2d)


if __name__ == "__main__":
    B = 2
    in_channels = 8       # high-level (low-res) feature channels
    skip_channels = 8     # encoder skip channels
    out_channels = 8      # must equal skip_channels (conv_block2 takes 2*skip)
    H = W = 8             # low-res spatial size; skip / output are 2H x 2W

    key = jax.random.PRNGKey(0)
    k_skip, k_x, k_params = jax.random.split(key, 3)

    skip = jax.random.normal(k_skip, (B, skip_channels, 2 * H, 2 * W), jnp.float32)
    x = jax.random.normal(k_x, (B, in_channels, H, W), jnp.float32)
    params = init_upconvblock_params(k_params, in_channels, skip_channels, out_channels)

    out = upconv_block_forward(skip, x, params)
    jax.block_until_ready(out)

    assert out.shape == (B, out_channels, 2 * H, 2 * W), out.shape
    assert bool(jnp.all(jnp.isfinite(out)))
    print("KERNEL_OK")
</pallas_src>

<mosaic_0001>
module attributes {stable_mosaic.version = 11 : i64} {
  func.func @upconv_fused_kernel(%arg0: i32, %arg1: memref<1x16x16x8xbf16, #tpu.memory_space<vmem>>, %arg2: memref<1x16x16x8xbf16, #tpu.memory_space<vmem>>, %arg3: memref<72x8xbf16, #tpu.memory_space<vmem>>, %arg4: memref<1x8xf32, #tpu.memory_space<vmem>>, %arg5: memref<1x8xf32, #tpu.memory_space<vmem>>, %arg6: memref<72x8xbf16, #tpu.memory_space<vmem>>, %arg7: memref<72x8xbf16, #tpu.memory_space<vmem>>, %arg8: memref<1x8xf32, #tpu.memory_space<vmem>>, %arg9: memref<1x8xf32, #tpu.memory_space<vmem>>, %arg10: memref<72x8xbf16, #tpu.memory_space<vmem>>, %arg11: memref<1x8xf32, #tpu.memory_space<vmem>>, %arg12: memref<1x8xf32, #tpu.memory_space<vmem>>, %arg13: memref<1x8x256xf32, #tpu.memory_space<vmem>>, %arg14: memref<18x18x8xbf16, #tpu.memory_space<vmem>>, %arg15: memref<18x18x8xbf16, #tpu.memory_space<vmem>>, %arg16: memref<18x18x8xbf16, #tpu.memory_space<vmem>>, %arg17: memref<18x18x8xbf16, #tpu.memory_space<vmem>>) attributes {dimension_semantics = [#tpu.dimension_semantics<parallel>], iteration_bounds = array<i64: 2>, scalar_prefetch = 0 : i64, scratch_operands = 4 : i64, tpu.core_type = #tpu.core_type<tc>, window_params = [{transform_indices = @transform_0, window_bounds = array<i64: 1, 16, 16, 8>}, {transform_indices = @transform_1, window_bounds = array<i64: 1, 16, 16, 8>}, {pipeline_mode = #tpu.pipeline_mode<synchronous>, transform_indices = @transform_2, window_bounds = array<i64: 72, 8>}, {pipeline_mode = #tpu.pipeline_mode<synchronous>, transform_indices = @transform_3, window_bounds = array<i64: 1, 8>}, {pipeline_mode = #tpu.pipeline_mode<synchronous>, transform_indices = @transform_4, window_bounds = array<i64: 1, 8>}, {pipeline_mode = #tpu.pipeline_mode<synchronous>, transform_indices = @transform_5, window_bounds = array<i64: 72, 8>}, {pipeline_mode = #tpu.pipeline_mode<synchronous>, transform_indices = @transform_6, window_bounds = array<i64: 72, 8>}, {pipeline_mode = #tpu.pipeline_mode<synchronous>, transform_indices = @transform_7, window_bounds = array<i64: 1, 8>}, {pipeline_mode = #tpu.pipeline_mode<synchronous>, transform_indices = @transform_8, window_bounds = array<i64: 1, 8>}, {pipeline_mode = #tpu.pipeline_mode<synchronous>, transform_indices = @transform_9, window_bounds = array<i64: 72, 8>}, {pipeline_mode = #tpu.pipeline_mode<synchronous>, transform_indices = @transform_10, window_bounds = array<i64: 1, 8>}, {pipeline_mode = #tpu.pipeline_mode<synchronous>, transform_indices = @transform_11, window_bounds = array<i64: 1, 8>}, {transform_indices = @transform_12, window_bounds = array<i64: 1, 8, 256>}]} {
    %cst = arith.constant 0.000000e+00 : bf16
    %0 = vector.broadcast %cst : bf16 to vector<1x18x8xbf16>
    %c0 = arith.constant 0 : index
    %c0_0 = arith.constant 0 : index
    %c0_1 = arith.constant 0 : index
    %1 = vector.load %arg14[%c0, %c0_0, %c0_1] : memref<18x18x8xbf16, #tpu.memory_space<vmem>>, vector<1x18x8xbf16>
    tpu.vector_store %arg14[%c0, %c0_0, %c0_1], %0 {strides = array<i32>} : memref<18x18x8xbf16, #tpu.memory_space<vmem>>, vector<1x18x8xbf16>,
    %cst_2 = arith.constant 0.000000e+00 : bf16
    %2 = vector.broadcast %cst_2 : bf16 to vector<1x18x8xbf16>
    %c17 = arith.constant 17 : index
    %c0_3 = arith.constant 0 : index
    %c0_4 = arith.constant 0 : index
    %3 = vector.load %arg14[%c17, %c0_3, %c0_4] : memref<18x18x8xbf16, #tpu.memory_space<vmem>>, vector<1x18x8xbf16>
    tpu.vector_store %arg14[%c17, %c0_3, %c0_4], %2 {strides = array<i32>} : memref<18x18x8xbf16, #tpu.memory_space<vmem>>, vector<1x18x8xbf16>,
    %cst_5 = arith.constant 0.000000e+00 : bf16
    %4 = vector.broadcast %cst_5 : bf16 to vector<18x1x8xbf16>
    %c0_6 = arith.constant 0 : index
    %c0_7 = arith.constant 0 : index
    %c0_8 = arith.constant 0 : index
    %5 = vector.load %arg14[%c0_6, %c0_7, %c0_8] : memref<18x18x8xbf16, #tpu.memory_space<vmem>>, vector<18x1x8xbf16>
    tpu.vector_store %arg14[%c0_6, %c0_7, %c0_8], %4 {strides = array<i32>} : memref<18x18x8xbf16, #tpu.memory_space<vmem>>, vector<18x1x8xbf16>,
    %cst_9 = arith.constant 0.000000e+00 : bf16
    %6 = vector.broadcast %cst_9 : bf16 to vector<18x1x8xbf16>
    %c0_10 = arith.constant 0 : index
    %c17_11 = arith.constant 17 : index
    %c0_12 = arith.constant 0 : index
    %7 = vector.load %arg14[%c0_10, %c17_11, %c0_12] : memref<18x18x8xbf16, #tpu.memory_space<vmem>>, vector<18x1x8xbf16>
    tpu.vector_store %arg14[%c0_10, %c17_11, %c0_12], %6 {strides = array<i32>} : memref<18x18x8xbf16, #tpu.memory_space<vmem>>, vector<18x1x8xbf16>,
    %cst_13 = arith.constant 0.000000e+00 : bf16
    %8 = vector.broadcast %cst_13 : bf16 to vector<1x18x8xbf16>
    %c0_14 = arith.constant 0 : index
    %c0_15 = arith.constant 0 : index
    %c0_16 = arith.constant 0 : index
    %9 = vector.load %arg15[%c0_14, %c0_15, %c0_16] : memref<18x18x8xbf16, #tpu.memory_space<vmem>>, vector<1x18x8xbf16>
    tpu.vector_store %arg15[%c0_14, %c0_15, %c0_16], %8 {strides = array<i32>} : memref<18x18x8xbf16, #tpu.memory_space<vmem>>, vector<1x18x8xbf16>,
    %cst_17 = arith.constant 0.000000e+00 : bf16
    %10 = vector.broadcast %cst_17 : bf16 to vector<1x18x8xbf16>
    %c17_18 = arith.constant 17 : index
    %c0_19 = arith.constant 0 : index
    %c0_20 = arith.constant 0 : index
    %11 = vector.load %arg15[%c17_18, %c0_19, %c0_20] : memref<18x18x8xbf16, #tpu.memory_space<vmem>>, vector<1x18x8xbf16>
    tpu.vector_store %arg15[%c17_18, %c0_19, %c0_20], %10 {strides = array<i32>} : memref<18x18x8xbf16, #tpu.memory_space<vmem>>, vector<1x18x8xbf16>,
    %cst_21 = arith.constant 0.000000e+00 : bf16
    %12 = vector.broadcast %cst_21 : bf16 to vector<18x1x8xbf16>
    %c0_22 = arith.constant 0 : index
    %c0_23 = arith.constant 0 : index
    %c0_24 = arith.constant 0 : index
    %13 = vector.load %arg15[%c0_22, %c0_23, %c0_24] : memref<18x18x8xbf16, #tpu.memory_space<vmem>>, vector<18x1x8xbf16>
    tpu.vector_store %arg15[%c0_22, %c0_23, %c0_24], %12 {strides = array<i32>} : memref<18x18x8xbf16, #tpu.memory_space<vmem>>, vector<18x1x8xbf16>,
    %cst_25 = arith.constant 0.000000e+00 : bf16
    %14 = vector.broadcast %cst_25 : bf16 to vector<18x1x8xbf16>
    %c0_26 = arith.constant 0 : index
    %c17_27 = arith.constant 17 : index
    %c0_28 = arith.constant 0 : index
    %15 = vector.load %arg15[%c0_26, %c17_27, %c0_28] : memref<18x18x8xbf16, #tpu.memory_space<vmem>>, vector<18x1x8xbf16>
    tpu.vector_store %arg15[%c0_26, %c17_27, %c0_28], %14 {strides = array<i32>} : memref<18x18x8xbf16, #tpu.memory_space<vmem>>, vector<18x1x8xbf16>,
    %cst_29 = arith.constant 0.000000e+00 : bf16
    %16 = vector.broadcast %cst_29 : bf16 to vector<1x18x8xbf16>
    %c0_30 = arith.constant 0 : index
    %c0_31 = arith.constant 0 : index
    %c0_32 = arith.constant 0 : index
    %17 = vector.load %arg16[%c0_30, %c0_31, %c0_32] : memref<18x18x8xbf16, #tpu.memory_space<vmem>>, vector<1x18x8xbf16>
    tpu.vector_store %arg16[%c0_30, %c0_31, %c0_32], %16 {strides = array<i32>} : memref<18x18x8xbf16, #tpu.memory_space<vmem>>, vector<1x18x8xbf16>,
    %cst_33 = arith.constant 0.000000e+00 : bf16
    %18 = vector.broadcast %cst_33 : bf16 to vector<1x18x8xbf16>
    %c17_34 = arith.constant 17 : index
    %c0_35 = arith.constant 0 : index
    %c0_36 = arith.constant 0 : index
    %19 = vector.load %arg16[%c17_34, %c0_35, %c0_36] : memref<18x18x8xbf16, #tpu.memory_space<vmem>>, vector<1x18x8xbf16>
    tpu.vector_store %arg16[%c17_34, %c0_35, %c0_36], %18 {strides = array<i32>} : memref<18x18x8xbf16, #tpu.memory_space<vmem>>, vector<1x18x8xbf16>,
    %cst_37 = arith.constant 0.000000e+00 : bf16
    %20 = vector.broadcast %cst_37 : bf16 to vector<18x1x8xbf16>
    %c0_38 = arith.constant 0 : index
    %c0_39 = arith.constant 0 : index
    %c0_40 = arith.constant 0 : index
    %21 = vector.load %arg16[%c0_38, %c0_39, %c0_40] : memref<18x18x8xbf16, #tpu.memory_space<vmem>>, vector<18x1x8xbf16>
    tpu.vector_store %arg16[%c0_38, %c0_39, %c0_40], %20 {strides = array<i32>} : memref<18x18x8xbf16, #tpu.memory_space<vmem>>, vector<18x1x8xbf16>,
    %cst_41 = arith.constant 0.000000e+00 : bf16
    %22 = vector.broadcast %cst_41 : bf16 to vector<18x1x8xbf16>
    %c0_42 = arith.constant 0 : index
    %c17_43 = arith.constant 17 : index
    %c0_44 = arith.constant 0 : index
    %23 = vector.load %arg16[%c0_42, %c17_43, %c0_44] : memref<18x18x8xbf16, #tpu.memory_space<vmem>>, vector<18x1x8xbf16>
    tpu.vector_store %arg16[%c0_42, %c17_43, %c0_44], %22 {strides = array<i32>} : memref<18x18x8xbf16, #tpu.memory_space<vmem>>, vector<18x1x8xbf16>,
    %cst_45 = arith.constant 0.000000e+00 : bf16
    %24 = vector.broadcast %cst_45 : bf16 to vector<1x18x8xbf16>
    %c0_46 = arith.constant 0 : index
    %c0_47 = arith.constant 0 : index
    %c0_48 = arith.constant 0 : index
    %25 = vector.load %arg17[%c0_46, %c0_47, %c0_48] : memref<18x18x8xbf16, #tpu.memory_space<vmem>>, vector<1x18x8xbf16>
    tpu.vector_store %arg17[%c0_46, %c0_47, %c0_48], %24 {strides = array<i32>} : memref<18x18x8xbf16, #tpu.memory_space<vmem>>, vector<1x18x8xbf16>,
    %cst_49 = arith.constant 0.000000e+00 : bf16
    %26 = vector.broadcast %cst_49 : bf16 to vector<1x18x8xbf16>
    %c17_50 = arith.constant 17 : index
    %c0_51 = arith.constant 0 : index
    %c0_52 = arith.constant 0 : index
    %27 = vector.load %arg17[%c17_50, %c0_51, %c0_52] : memref<18x18x8xbf16, #tpu.memory_space<vmem>>, vector<1x18x8xbf16>
    tpu.vector_store %arg17[%c17_50, %c0_51, %c0_52], %26 {strides = array<i32>} : memref<18x18x8xbf16, #tpu.memory_space<vmem>>, vector<1x18x8xbf16>,
    %cst_53 = arith.constant 0.000000e+00 : bf16
    %28 = vector.broadcast %cst_53 : bf16 to vector<18x1x8xbf16>
    %c0_54 = arith.constant 0 : index
    %c0_55 = arith.constant 0 : index
    %c0_56 = arith.constant 0 : index
    %29 = vector.load %arg17[%c0_54, %c0_55, %c0_56] : memref<18x18x8xbf16, #tpu.memory_space<vmem>>, vector<18x1x8xbf16>
    tpu.vector_store %arg17[%c0_54, %c0_55, %c0_56], %28 {strides = array<i32>} : memref<18x18x8xbf16, #tpu.memory_space<vmem>>, vector<18x1x8xbf16>,
    %cst_57 = arith.constant 0.000000e+00 : bf16
    %30 = vector.broadcast %cst_57 : bf16 to vector<18x1x8xbf16>
    %c0_58 = arith.constant 0 : index
    %c17_59 = arith.constant 17 : index
    %c0_60 = arith.constant 0 : index
    %31 = vector.load %arg17[%c0_58, %c17_59, %c0_60] : memref<18x18x8xbf16, #tpu.memory_space<vmem>>, vector<18x1x8xbf16>
    tpu.vector_store %arg17[%c0_58, %c17_59, %c0_60], %30 {strides = array<i32>} : memref<18x18x8xbf16, #tpu.memory_space<vmem>>, vector<18x1x8xbf16>,
    %c0_61 = arith.constant 0 : index
    %c0_62 = arith.constant 0 : index
    %c0_63 = arith.constant 0 : index
    %c0_64 = arith.constant 0 : index
    %32 = vector.load %arg1[%c0_61, %c0_62, %c0_63, %c0_64] : memref<1x16x16x8xbf16, #tpu.memory_space<vmem>>, vector<1x16x16x8xbf16>
    %33 = vector.shape_cast %32 : vector<1x16x16x8xbf16> to vector<16x16x8xbf16>
    %c1 = arith.constant 1 : index
    %c1_65 = arith.constant 1 : index
    %c0_66 = arith.constant 0 : index
    %34 = vector.load %arg14[%c1, %c1_65, %c0_66] : memref<18x18x8xbf16, #tpu.memory_space<vmem>>, vector<16x16x8xbf16>
    tpu.vector_store %arg14[%c1, %c1_65, %c0_66], %33 {strides = array<i32>} : memref<18x18x8xbf16, #tpu.memory_space<vmem>>, vector<16x16x8xbf16>,
    %c0_67 = arith.constant 0 : index
    %c0_68 = arith.constant 0 : index
    %c0_69 = arith.constant 0 : index
    %c0_70 = arith.constant 0 : index
    %35 = vector.load %arg2[%c0_67, %c0_68, %c0_69, %c0_70] : memref<1x16x16x8xbf16, #tpu.memory_space<vmem>>, vector<1x16x16x8xbf16>
    %36 = vector.shape_cast %35 : vector<1x16x16x8xbf16> to vector<16x16x8xbf16>
    %c1_71 = arith.constant 1 : index
    %c1_72 = arith.constant 1 : index
    %c0_73 = arith.constant 0 : index
    %37 = vector.load %arg15[%c1_71, %c1_72, %c0_73] : memref<18x18x8xbf16, #tpu.memory_space<vmem>>, vector<16x16x8xbf16>
    tpu.vector_store %arg15[%c1_71, %c1_72, %c0_73], %36 {strides = array<i32>} : memref<18x18x8xbf16, #tpu.memory_space<vmem>>, vector<16x16x8xbf16>,
    %c0_74 = arith.constant 0 : index
    %c0_75 = arith.constant 0 : index
    %c0_76 = arith.constant 0 : index
    %38 = vector.load %arg14[%c0_74, %c0_75, %c0_76] : memref<18x18x8xbf16, #tpu.memory_space<vmem>>, vector<18x18x8xbf16>
    %39 = vector.extract_strided_slice %38 {offsets = [0, 0, 0], sizes = [16, 16, 8], strides = [1, 1, 1]} : vector<18x18x8xbf16> to vector<16x16x8xbf16>
    %40 = vector.extract_strided_slice %38 {offsets = [0, 1, 0], sizes = [16, 16, 8], strides = [1, 1, 1]} : vector<18x18x8xbf16> to vector<16x16x8xbf16>
    %41 = vector.extract_strided_slice %38 {offsets = [0, 2, 0], sizes = [16, 16, 8], strides = [1, 1, 1]} : vector<18x18x8xbf16> to vector<16x16x8xbf16>
    %42 = vector.extract_strided_slice %38 {offsets = [1, 0, 0], sizes = [16, 16, 8], strides = [1, 1, 1]} : vector<18x18x8xbf16> to vector<16x16x8xbf16>
    %43 = vector.extract_strided_slice %38 {offsets = [1, 1, 0], sizes = [16, 16, 8], strides = [1, 1, 1]} : vector<18x18x8xbf16> to vector<16x16x8xbf16>
    %44 = vector.extract_strided_slice %38 {offsets = [1, 2, 0], sizes = [16, 16, 8], strides = [1, 1, 1]} : vector<18x18x8xbf16> to vector<16x16x8xbf16>
    %45 = vector.extract_strided_slice %38 {offsets = [2, 0, 0], sizes = [16, 16, 8], strides = [1, 1, 1]} : vector<18x18x8xbf16> to vector<16x16x8xbf16>
    %46 = vector.extract_strided_slice %38 {offsets = [2, 1, 0], sizes = [16, 16, 8], strides = [1, 1, 1]} : vector<18x18x8xbf16> to vector<16x16x8xbf16>
    %47 = vector.extract_strided_slice %38 {offsets = [2, 2, 0], sizes = [16, 16, 8], strides = [1, 1, 1]} : vector<18x18x8xbf16> to vector<16x16x8xbf16>
    %48 = tpu.concatenate %39, %40, %41, %42, %43, %44, %45, %46, %47 in 2 : vector<16x16x8xbf16>, vector<16x16x8xbf16>, vector<16x16x8xbf16>, vector<16x16x8xbf16>, vector<16x16x8xbf16>, vector<16x16x8xbf16>, vector<16x16x8xbf16>, vector<16x16x8xbf16>, vector<16x16x8xbf16> -> vector<16x16x72xbf16>
    %49 = vector.shape_cast %48 : vector<16x16x72xbf16> to vector<256x72xbf16>
    %c0_77 = arith.constant 0 : index
    %c0_78 = arith.constant 0 : index
    %50 = vector.load %arg3[%c0_77, %c0_78] : memref<72x8xbf16, #tpu.memory_space<vmem>>, vector<72x8xbf16>
    %cst_79 = arith.constant dense<0.000000e+00> : vector<256x8xf32>
    %51 = tpu.matmul %49, %50, %cst_79 {dimension_numbers = #tpu.dot_dimension_numbers<[1], [0], [0], [1], [0, 0, 1, 1], [], []>} : vector<256x72xbf16>, vector<72x8xbf16>, vector<256x8xf32> -> vector<256x8xf32>
    %c0_80 = arith.constant 0 : index
    %c0_81 = arith.constant 0 : index
    %52 = vector.load %arg4[%c0_80, %c0_81] : memref<1x8xf32, #tpu.memory_space<vmem>>, vector<1x8xf32>
    %53 = vector.broadcast %52 : vector<1x8xf32> to vector<256x8xf32>
    %54 = arith.mulf %51, %53 : vector<256x8xf32>
    %c0_82 = arith.constant 0 : index
    %c0_83 = arith.constant 0 : index
    %55 = vector.load %arg5[%c0_82, %c0_83] : memref<1x8xf32, #tpu.memory_space<vmem>>, vector<1x8xf32>
    %56 = vector.broadcast %55 : vector<1x8xf32> to vector<256x8xf32>
    %57 = arith.addf %54, %56 : vector<256x8xf32>
    %cst_84 = arith.constant 0.000000e+00 : f32
    %58 = vector.broadcast %cst_84 : f32 to vector<256x8xf32>
    %59 = arith.maximumf %57, %58 : vector<256x8xf32>
    %60 = vector.shape_cast %59 : vector<256x8xf32> to vector<16x16x8xf32>
    %61 = arith.truncf %60 : vector<16x16x8xf32> to vector<16x16x8xbf16>
    %c1_85 = arith.constant 1 : index
    %c1_86 = arith.constant 1 : index
    %c0_87 = arith.constant 0 : index
    %62 = vector.load %arg16[%c1_85, %c1_86, %c0_87] : memref<18x18x8xbf16, #tpu.memory_space<vmem>>, vector<16x16x8xbf16>
    tpu.vector_store %arg16[%c1_85, %c1_86, %c0_87], %61 {strides = array<i32>} : memref<18x18x8xbf16, #tpu.memory_space<vmem>>, vector<16x16x8xbf16>,
    %c0_88 = arith.constant 0 : index
    %c0_89 = arith.constant 0 : index
    %c0_90 = arith.constant 0 : index
    %63 = vector.load %arg15[%c0_88, %c0_89, %c0_90] : memref<18x18x8xbf16, #tpu.memory_space<vmem>>, vector<18x18x8xbf16>
    %64 = vector.extract_strided_slice %63 {offsets = [0, 0, 0], sizes = [16, 16, 8], strides = [1, 1, 1]} : vector<18x18x8xbf16> to vector<16x16x8xbf16>
    %65 = vector.extract_strided_slice %63 {offsets = [0, 1, 0], sizes = [16, 16, 8], strides = [1, 1, 1]} : vector<18x18x8xbf16> to vector<16x16x8xbf16>
    %66 = vector.extract_strided_slice %63 {offsets = [0, 2, 0], sizes = [16, 16, 8], strides = [1, 1, 1]} : vector<18x18x8xbf16> to vector<16x16x8xbf16>
    %67 = vector.extract_strided_slice %63 {offsets = [1, 0, 0], sizes = [16, 16, 8], strides = [1, 1, 1]} : vector<18x18x8xbf16> to vector<16x16x8xbf16>
    %68 = vector.extract_strided_slice %63 {offsets = [1, 1, 0], sizes = [16, 16, 8], strides = [1, 1, 1]} : vector<18x18x8xbf16> to vector<16x16x8xbf16>
    %69 = vector.extract_strided_slice %63 {offsets = [1, 2, 0], sizes = [16, 16, 8], strides = [1, 1, 1]} : vector<18x18x8xbf16> to vector<16x16x8xbf16>
    %70 = vector.extract_strided_slice %63 {offsets = [2, 0, 0], sizes = [16, 16, 8], strides = [1, 1, 1]} : vector<18x18x8xbf16> to vector<16x16x8xbf16>
    %71 = vector.extract_strided_slice %63 {offsets = [2, 1, 0], sizes = [16, 16, 8], strides = [1, 1, 1]} : vector<18x18x8xbf16> to vector<16x16x8xbf16>
    %72 = vector.extract_strided_slice %63 {offsets = [2, 2, 0], sizes = [16, 16, 8], strides = [1, 1, 1]} : vector<18x18x8xbf16> to vector<16x16x8xbf16>
    %73 = tpu.concatenate %64, %65, %66, %67, %68, %69, %70, %71, %72 in 2 : vector<16x16x8xbf16>, vector<16x16x8xbf16>, vector<16x16x8xbf16>, vector<16x16x8xbf16>, vector<16x16x8xbf16>, vector<16x16x8xbf16>, vector<16x16x8xbf16>, vector<16x16x8xbf16>, vector<16x16x8xbf16> -> vector<16x16x72xbf16>
    %74 = vector.shape_cast %73 : vector<16x16x72xbf16> to vector<256x72xbf16>
    %c0_91 = arith.constant 0 : index
    %c0_92 = arith.constant 0 : index
    %75 = vector.load %arg6[%c0_91, %c0_92] : memref<72x8xbf16, #tpu.memory_space<vmem>>, vector<72x8xbf16>
    %cst_93 = arith.constant dense<0.000000e+00> : vector<256x8xf32>
    %76 = tpu.matmul %74, %75, %cst_93 {dimension_numbers = #tpu.dot_dimension_numbers<[1], [0], [0], [1], [0, 0, 1, 1], [], []>} : vector<256x72xbf16>, vector<72x8xbf16>, vector<256x8xf32> -> vector<256x8xf32>
    %c0_94 = arith.constant 0 : index
    %c0_95 = arith.constant 0 : index
    %c0_96 = arith.constant 0 : index
    %77 = vector.load %arg16[%c0_94, %c0_95, %c0_96] : memref<18x18x8xbf16, #tpu.memory_space<vmem>>, vector<18x18x8xbf16>
    %78 = vector.extract_strided_slice %77 {offsets = [0, 0, 0], sizes = [16, 16, 8], strides = [1, 1, 1]} : vector<18x18x8xbf16> to vector<16x16x8xbf16>
    %79 = vector.extract_strided_slice %77 {offsets = [0, 1, 0], sizes = [16, 16, 8], strides = [1, 1, 1]} : vector<18x18x8xbf16> to vector<16x16x8xbf16>
    %80 = vector.extract_strided_slice %77 {offsets = [0, 2, 0], sizes = [16, 16, 8], strides = [1, 1, 1]} : vector<18x18x8xbf16> to vector<16x16x8xbf16>
    %81 = vector.extract_strided_slice %77 {offsets = [1, 0, 0], sizes = [16, 16, 8], strides = [1, 1, 1]} : vector<18x18x8xbf16> to vector<16x16x8xbf16>
    %82 = vector.extract_strided_slice %77 {offsets = [1, 1, 0], sizes = [16, 16, 8], strides = [1, 1, 1]} : vector<18x18x8xbf16> to vector<16x16x8xbf16>
    %83 = vector.extract_strided_slice %77 {offsets = [1, 2, 0], sizes = [16, 16, 8], strides = [1, 1, 1]} : vector<18x18x8xbf16> to vector<16x16x8xbf16>
    %84 = vector.extract_strided_slice %77 {offsets = [2, 0, 0], sizes = [16, 16, 8], strides = [1, 1, 1]} : vector<18x18x8xbf16> to vector<16x16x8xbf16>
    %85 = vector.extract_strided_slice %77 {offsets = [2, 1, 0], sizes = [16, 16, 8], strides = [1, 1, 1]} : vector<18x18x8xbf16> to vector<16x16x8xbf16>
    %86 = vector.extract_strided_slice %77 {offsets = [2, 2, 0], sizes = [16, 16, 8], strides = [1, 1, 1]} : vector<18x18x8xbf16> to vector<16x16x8xbf16>
    %87 = tpu.concatenate %78, %79, %80, %81, %82, %83, %84, %85, %86 in 2 : vector<16x16x8xbf16>, vector<16x16x8xbf16>, vector<16x16x8xbf16>, vector<16x16x8xbf16>, vector<16x16x8xbf16>, vector<16x16x8xbf16>, vector<16x16x8xbf16>, vector<16x16x8xbf16>, vector<16x16x8xbf16> -> vector<16x16x72xbf16>
    %88 = vector.shape_cast %87 : vector<16x16x72xbf16> to vector<256x72xbf16>
    %c0_97 = arith.constant 0 : index
    %c0_98 = arith.constant 0 : index
    %89 = vector.load %arg7[%c0_97, %c0_98] : memref<72x8xbf16, #tpu.memory_space<vmem>>, vector<72x8xbf16>
    %cst_99 = arith.constant dense<0.000000e+00> : vector<256x8xf32>
    %90 = tpu.matmul %88, %89, %cst_99 {dimension_numbers = #tpu.dot_dimension_numbers<[1], [0], [0], [1], [0, 0, 1, 1], [], []>} : vector<256x72xbf16>, vector<72x8xbf16>, vector<256x8xf32> -> vector<256x8xf32>
    %91 = arith.addf %76, %90 : vector<256x8xf32>
    %c0_100 = arith.constant 0 : index
    %c0_101 = arith.constant 0 : index
    %92 = vector.load %arg8[%c0_100, %c0_101] : memref<1x8xf32, #tpu.memory_space<vmem>>, vector<1x8xf32>
    %93 = vector.broadcast %92 : vector<1x8xf32> to vector<256x8xf32>
    %94 = arith.mulf %91, %93 : vector<256x8xf32>
    %c0_102 = arith.constant 0 : index
    %c0_103 = arith.constant 0 : index
    %95 = vector.load %arg9[%c0_102, %c0_103] : memref<1x8xf32, #tpu.memory_space<vmem>>, vector<1x8xf32>
    %96 = vector.broadcast %95 : vector<1x8xf32> to vector<256x8xf32>
    %97 = arith.addf %94, %96 : vector<256x8xf32>
    %cst_104 = arith.constant 0.000000e+00 : f32
    %98 = vector.broadcast %cst_104 : f32 to vector<256x8xf32>
    %99 = arith.maximumf %97, %98 : vector<256x8xf32>
    %100 = vector.shape_cast %99 : vector<256x8xf32> to vector<16x16x8xf32>
    %101 = arith.truncf %100 : vector<16x16x8xf32> to vector<16x16x8xbf16>
    %c1_105 = arith.constant 1 : index
    %c1_106 = arith.constant 1 : index
    %c0_107 = arith.constant 0 : index
    %102 = vector.load %arg17[%c1_105, %c1_106, %c0_107] : memref<18x18x8xbf16, #tpu.memory_space<vmem>>, vector<16x16x8xbf16>
    tpu.vector_store %arg17[%c1_105, %c1_106, %c0_107], %101 {strides = array<i32>} : memref<18x18x8xbf16, #tpu.memory_space<vmem>>, vector<16x16x8xbf16>,
    %c0_108 = arith.constant 0 : index
    %c0_109 = arith.constant 0 : index
    %c0_110 = arith.constant 0 : index
    %103 = vector.load %arg17[%c0_108, %c0_109, %c0_110] : memref<18x18x8xbf16, #tpu.memory_space<vmem>>, vector<18x18x8xbf16>
    %104 = vector.extract_strided_slice %103 {offsets = [0, 0, 0], sizes = [16, 16, 8], strides = [1, 1, 1]} : vector<18x18x8xbf16> to vector<16x16x8xbf16>
    %105 = vector.extract_strided_slice %103 {offsets = [0, 1, 0], sizes = [16, 16, 8], strides = [1, 1, 1]} : vector<18x18x8xbf16> to vector<16x16x8xbf16>
    %106 = vector.extract_strided_slice %103 {offsets = [0, 2, 0], sizes = [16, 16, 8], strides = [1, 1, 1]} : vector<18x18x8xbf16> to vector<16x16x8xbf16>
    %107 = vector.extract_strided_slice %103 {offsets = [1, 0, 0], sizes = [16, 16, 8], strides = [1, 1, 1]} : vector<18x18x8xbf16> to vector<16x16x8xbf16>
    %108 = vector.extract_strided_slice %103 {offsets = [1, 1, 0], sizes = [16, 16, 8], strides = [1, 1, 1]} : vector<18x18x8xbf16> to vector<16x16x8xbf16>
    %109 = vector.extract_strided_slice %103 {offsets = [1, 2, 0], sizes = [16, 16, 8], strides = [1, 1, 1]} : vector<18x18x8xbf16> to vector<16x16x8xbf16>
    %110 = vector.extract_strided_slice %103 {offsets = [2, 0, 0], sizes = [16, 16, 8], strides = [1, 1, 1]} : vector<18x18x8xbf16> to vector<16x16x8xbf16>
    %111 = vector.extract_strided_slice %103 {offsets = [2, 1, 0], sizes = [16, 16, 8], strides = [1, 1, 1]} : vector<18x18x8xbf16> to vector<16x16x8xbf16>
    %112 = vector.extract_strided_slice %103 {offsets = [2, 2, 0], sizes = [16, 16, 8], strides = [1, 1, 1]} : vector<18x18x8xbf16> to vector<16x16x8xbf16>
    %113 = tpu.concatenate %104, %105, %106, %107, %108, %109, %110, %111, %112 in 2 : vector<16x16x8xbf16>, vector<16x16x8xbf16>, vector<16x16x8xbf16>, vector<16x16x8xbf16>, vector<16x16x8xbf16>, vector<16x16x8xbf16>, vector<16x16x8xbf16>, vector<16x16x8xbf16>, vector<16x16x8xbf16> -> vector<16x16x72xbf16>
    %114 = vector.shape_cast %113 : vector<16x16x72xbf16> to vector<256x72xbf16>
    %c0_111 = arith.constant 0 : index
    %c0_112 = arith.constant 0 : index
    %115 = vector.load %arg10[%c0_111, %c0_112] : memref<72x8xbf16, #tpu.memory_space<vmem>>, vector<72x8xbf16>
    %cst_113 = arith.constant dense<0.000000e+00> : vector<256x8xf32>
    %116 = tpu.matmul %114, %115, %cst_113 {dimension_numbers = #tpu.dot_dimension_numbers<[1], [0], [0], [1], [0, 0, 1, 1], [], []>} : vector<256x72xbf16>, vector<72x8xbf16>, vector<256x8xf32> -> vector<256x8xf32>
    %c0_114 = arith.constant 0 : index
    %c0_115 = arith.constant 0 : index
    %117 = vector.load %arg11[%c0_114, %c0_115] : memref<1x8xf32, #tpu.memory_space<vmem>>, vector<1x8xf32>
    %118 = vector.broadcast %117 : vector<1x8xf32> to vector<256x8xf32>
    %119 = arith.mulf %116, %118 : vector<256x8xf32>
    %c0_116 = arith.constant 0 : index
    %c0_117 = arith.constant 0 : index
    %120 = vector.load %arg12[%c0_116, %c0_117] : memref<1x8xf32, #tpu.memory_space<vmem>>, vector<1x8xf32>
    %121 = vector.broadcast %120 : vector<1x8xf32> to vector<256x8xf32>
    %122 = arith.addf %119, %121 : vector<256x8xf32>
    %cst_118 = arith.constant 0.000000e+00 : f32
    %123 = vector.broadcast %cst_118 : f32 to vector<256x8xf32>
    %124 = arith.maximumf %122, %123 : vector<256x8xf32>
    %125 = tpu.transpose %124, [1, 0] : vector<256x8xf32> -> vector<8x256xf32>
    %c0_119 = arith.constant 0 : index
    %c0_120 = arith.constant 0 : index
    %c0_121 = arith.constant 0 : index
    %126 = vector.load %arg13[%c0_119, %c0_120, %c0_121] : memref<1x8x256xf32, #tpu.memory_space<vmem>>, vector<1x8x256xf32>
    %127 = vector.shape_cast %126 : vector<1x8x256xf32> to vector<8x256xf32>
    %128 = vector.shape_cast %125 : vector<8x256xf32> to vector<1x8x256xf32>
    tpu.vector_store %arg13[%c0_119, %c0_120, %c0_121], %128 {strides = array<i32>} : memref<1x8x256xf32, #tpu.memory_space<vmem>>, vector<1x8x256xf32>,
    return
  }
  func.func @transform_0(%arg0: i32) -> (i32, i32, i32, i32) {
    %c0_i32 = arith.constant 0 : i32
    %c0_i32_0 = arith.constant 0 : i32
    %c0_i32_1 = arith.constant 0 : i32
    %c0_i32_2 = arith.constant 0 : i32
    return %arg0, %c0_i32, %c0_i32_0, %c0_i32_1 : i32, i32, i32, i32
  }
  func.func @transform_1(%arg0: i32) -> (i32, i32, i32, i32) {
    %c0_i32 = arith.constant 0 : i32
    %c0_i32_0 = arith.constant 0 : i32
    %c0_i32_1 = arith.constant 0 : i32
    %c0_i32_2 = arith.constant 0 : i32
    return %arg0, %c0_i32, %c0_i32_0, %c0_i32_1 : i32, i32, i32, i32
  }
  func.func @transform_2(%arg0: i32) -> (i32, i32) {
    %c0_i32 = arith.constant 0 : i32
    %c0_i32_0 = arith.constant 0 : i32
    %c0_i32_1 = arith.constant 0 : i32
    return %c0_i32, %c0_i32_0 : i32, i32
  }
  func.func @transform_3(%arg0: i32) -> (i32, i32) {
    %c0_i32 = arith.constant 0 : i32
    %c0_i32_0 = arith.constant 0 : i32
    %c0_i32_1 = arith.constant 0 : i32
    return %c0_i32, %c0_i32_0 : i32, i32
  }
  func.func @transform_4(%arg0: i32) -> (i32, i32) {
    %c0_i32 = arith.constant 0 : i32
    %c0_i32_0 = arith.constant 0 : i32
    %c0_i32_1 = arith.constant 0 : i32
    return %c0_i32, %c0_i32_0 : i32, i32
  }
  func.func @transform_5(%arg0: i32) -> (i32, i32) {
    %c0_i32 = arith.constant 0 : i32
    %c0_i32_0 = arith.constant 0 : i32
    %c0_i32_1 = arith.constant 0 : i32
    return %c0_i32, %c0_i32_0 : i32, i32
  }
  func.func @transform_6(%arg0: i32) -> (i32, i32) {
    %c0_i32 = arith.constant 0 : i32
    %c0_i32_0 = arith.constant 0 : i32
    %c0_i32_1 = arith.constant 0 : i32
    return %c0_i32, %c0_i32_0 : i32, i32
  }
  func.func @transform_7(%arg0: i32) -> (i32, i32) {
    %c0_i32 = arith.constant 0 : i32
    %c0_i32_0 = arith.constant 0 : i32
    %c0_i32_1 = arith.constant 0 : i32
    return %c0_i32, %c0_i32_0 : i32, i32
  }
  func.func @transform_8(%arg0: i32) -> (i32, i32) {
    %c0_i32 = arith.constant 0 : i32
    %c0_i32_0 = arith.constant 0 : i32
    %c0_i32_1 = arith.constant 0 : i32
    return %c0_i32, %c0_i32_0 : i32, i32
  }
  func.func @transform_9(%arg0: i32) -> (i32, i32) {
    %c0_i32 = arith.constant 0 : i32
    %c0_i32_0 = arith.constant 0 : i32
    %c0_i32_1 = arith.constant 0 : i32
    return %c0_i32, %c0_i32_0 : i32, i32
  }
  func.func @transform_10(%arg0: i32) -> (i32, i32) {
    %c0_i32 = arith.constant 0 : i32
    %c0_i32_0 = arith.constant 0 : i32
    %c0_i32_1 = arith.constant 0 : i32
    return %c0_i32, %c0_i32_0 : i32, i32
  }
  func.func @transform_11(%arg0: i32) -> (i32, i32) {
    %c0_i32 = arith.constant 0 : i32
    %c0_i32_0 = arith.constant 0 : i32
    %c0_i32_1 = arith.constant 0 : i32
    return %c0_i32, %c0_i32_0 : i32, i32
  }
  func.func @transform_12(%arg0: i32) -> (i32, i32, i32) {
    %c0_i32 = arith.constant 0 : i32
    %c0_i32_0 = arith.constant 0 : i32
    %c0_i32_1 = arith.constant 0 : i32
    return %arg0, %c0_i32, %c0_i32_0 : i32, i32, i32
  }
}

</mosaic_0001>

<llo_original>
// kernel: upconv_block_forward.1
$region0: #{upconv_block_forward.1}
  #allocation0 [shape = 'u32[]', space=smem, size = 0x4, offset = 0x4, fixed_abs, tag = 'smem constant byte address 0x4 - core index']
  #allocation1 [shape = 'u32[144,128]{1,0:T(1,128)}', space=vmem, size = 0x12000, scoped, tag = 'internal scratch']
  #allocation2 [shape = 'bf16[18,18,8]{2,1,0:T(8,128)(2,1)}', space=vmem, size = 0x1b000, scoped, tag = 'scratch operand']
  #allocation3 [shape = 'bf16[18,18,8]{2,1,0:T(8,128)(2,1)}', space=vmem, size = 0x1b000, scoped, tag = 'scratch operand']
  #allocation4 [shape = 'bf16[18,18,8]{2,1,0:T(8,128)(2,1)}', space=vmem, size = 0x1b000, scoped, tag = 'scratch operand']
  #allocation5 [shape = 'bf16[18,18,8]{2,1,0:T(8,128)(2,1)}', space=vmem, size = 0x1b000, scoped, tag = 'scratch operand']
  %s0 = inlined_call_operand.vmem [shape: bf16[2,16,16,8], index: 0, kind: input, shape index: {}]
  %s1 = inlined_call_operand.vmem [shape: bf16[2,16,16,8], index: 1, kind: input, shape index: {}]
  %s2 = inlined_call_operand.vmem [shape: bf16[72,8], index: 2, kind: input, shape index: {}]
  %s3 = inlined_call_operand.vmem [shape: f32[1,8], index: 3, kind: input, shape index: {}]
  %s4 = inlined_call_operand.vmem [shape: f32[1,8], index: 4, kind: input, shape index: {}]
  %s5 = inlined_call_operand.vmem [shape: bf16[72,8], index: 5, kind: input, shape index: {}]
  %s6 = inlined_call_operand.vmem [shape: bf16[72,8], index: 6, kind: input, shape index: {}]
  %s7 = inlined_call_operand.vmem [shape: f32[1,8], index: 7, kind: input, shape index: {}]
  %s8 = inlined_call_operand.vmem [shape: f32[1,8], index: 8, kind: input, shape index: {}]
  %s9 = inlined_call_operand.vmem [shape: bf16[72,8], index: 9, kind: input, shape index: {}]
  %s10 = inlined_call_operand.vmem [shape: f32[1,8], index: 10, kind: input, shape index: {}]
  %s11 = inlined_call_operand.vmem [shape: f32[1,8], index: 11, kind: input, shape index: {}]
  %s12 = inlined_call_operand.vmem [shape: f32[2,8,256], index: 12, kind: output, shape index: {}]
  %s13 = sld [smem:[#allocation0]]
  $region81: #{upconv_block_forward.1} parent=0
    _
  %s15 = ssub.s32 1, %s13
  %s16 = scalar_select 0, %s15, %s13
  loop: start=0, step=1, limit=4
  $region2: #{upconv_block_forward.1} parent=0 // loop_pre_header
    _
  $region3: #{upconv_block_forward.1} parent=0 // loop_header
    %s18 = sphi 0, %s22
    %p19 = scmp.ge.s32.totalorder %s18, 4
    %s28 = sphi 0, %s30
    %s31 = sphi 0, %s28
    %s32 = sphi 0, %s31
    %s48 = sphi 0, %s32
    %s54 = sphi 0, %s56
    %s57 = sphi 0, %s54
    %s58 = sphi 0, %s57
    %s74 = sphi 0, %s58
    %s78 = sphi 0, %s78
    %s80 = sphi 0, %s78
    %s81 = sphi 0, %s80
    %s95 = sphi 0, %s81
    %s99 = sphi 0, %s99
    %s101 = sphi 0, %s99
    %s102 = sphi 0, %s101
    %s116 = sphi 0, %s102
    %s120 = sphi 0, %s120
    %s122 = sphi 0, %s120
    %s123 = sphi 0, %s122
    %s137 = sphi 0, %s123
    %s141 = sphi 0, %s141
    %s143 = sphi 0, %s141
    %s144 = sphi 0, %s143
    %s158 = sphi 0, %s144
    %s162 = sphi 0, %s162
    %s164 = sphi 0, %s162
    %s165 = sphi 0, %s164
    %s179 = sphi 0, %s165
    %s183 = sphi 0, %s183
    %s185 = sphi 0, %s183
    %s186 = sphi 0, %s185
    %s200 = sphi 0, %s186
    %s204 = sphi 0, %s204
    %s206 = sphi 0, %s204
    %s207 = sphi 0, %s206
    %s221 = sphi 0, %s207
    %s225 = sphi 0, %s225
    %s227 = sphi 0, %s225
    %s228 = sphi 0, %s227
    %s242 = sphi 0, %s228
    %s246 = sphi 0, %s246
    %s248 = sphi 0, %s246
    %s249 = sphi 0, %s248
    %s263 = sphi 0, %s249
    %s267 = sphi 0, %s267
    %s269 = sphi 0, %s267
    %s270 = sphi 0, %s269
    %s284 = sphi 0, %s270
    %s290 = sphi 0, %s292
    %s293 = sphi 0, %s290
    %s294 = sphi 0, %s293
    %s310 = sphi 0, %s294
  $region4: #{upconv_block_forward.1} parent=0 // loop_header_branch
    %21 = sbr.rel (%p19) target = $region8
  $region5: #{upconv_block_forward.1} parent=0 // loop_body
    %s23 = ssub.s32 %s18, 1
    %s24 = ssub.s32 %s18, 2
    %s25 = sadd.s32 %s18, 1
    %s26 = ssub.s32 %s18, %s25
    %p27 = scmp.eq.s32.totalorder %s26, 0
    %s29 = sadd.s32 %s28, 1
    %s30 = scalar_select %p27, %s28, %s29
    %p33 = pneg %p27
    %p34 = scmp.eq.s32.totalorder %s18, 1
    %p35 = por %p33, %p34
    %p36 = scmp.ne.s32.totalorder %s28, %s31
    %p37 = scmp.eq.s32.totalorder %s18, 0
    %p38 = por %p36, %p37
    %p39 = scmp.ne.s32.totalorder %s28, %s31
    %p40 = scmp.eq.s32.totalorder %s23, 1
    %p41 = por %p39, %p40
    %p42 = scmp.ne.s32.totalorder %s31, %s32
    %p43 = scmp.eq.s32.totalorder %s23, 0
    %p44 = por %p42, %p43
    %p45 = scmp.ne.s32.totalorder %s31, %s32
    %p46 = scmp.eq.s32.totalorder %s24, 1
    %p47 = por %p45, %p46
    %p49 = scmp.ne.s32.totalorder %s32, %s48
    %p50 = scmp.eq.s32.totalorder %s24, 0
    %p51 = por %p49, %p50
    %s52 = ssub.s32 %s18, %s25
    %p53 = scmp.eq.s32.totalorder %s52, 0
    %s55 = sadd.s32 %s54, 1
    %s56 = scalar_select %p53, %s54, %s55
    %p59 = pneg %p53
    %p60 = scmp.eq.s32.totalorder %s18, 1
    %p61 = por %p59, %p60
    %p62 = scmp.ne.s32.totalorder %s54, %s57
    %p63 = scmp.eq.s32.totalorder %s18, 0
    %p64 = por %p62, %p63
    %p65 = scmp.ne.s32.totalorder %s54, %s57
    %p66 = scmp.eq.s32.totalorder %s23, 1
    %p67 = por %p65, %p66
    %p68 = scmp.ne.s32.totalorder %s57, %s58
    %p69 = scmp.eq.s32.totalorder %s23, 0
    %p70 = por %p68, %p69
    %p71 = scmp.ne.s32.totalorder %s57, %s58
    %p72 = scmp.eq.s32.totalorder %s24, 1
    %p73 = por %p71, %p72
    %p75 = scmp.ne.s32.totalorder %s58, %s74
    %p76 = scmp.eq.s32.totalorder %s24, 0
    %p77 = por %p75, %p76
    %s79 = sadd.s32 %s78, 1
    %p82 = scmp.eq.s32.totalorder %s18, 1
    %p83 = scmp.ne.s32.totalorder %s78, %s80
    %p84 = scmp.eq.s32.totalorder %s18, 0
    %p85 = por %p83, %p84
    %p86 = scmp.ne.s32.totalorder %s78, %s80
    %p87 = scmp.eq.s32.totalorder %s23, 1
    %p88 = por %p86, %p87
    %p89 = scmp.ne.s32.totalorder %s80, %s81
    %p90 = scmp.eq.s32.totalorder %s23, 0
    %p91 = por %p89, %p90
    %p92 = scmp.ne.s32.totalorder %s80, %s81
    %p93 = scmp.eq.s32.totalorder %s24, 1
    %p94 = por %p92, %p93
    %p96 = scmp.ne.s32.totalorder %s81, %s95
    %p97 = scmp.eq.s32.totalorder %s24, 0
    %p98 = por %p96, %p97
    %s100 = sadd.s32 %s99, 1
    %p103 = scmp.eq.s32.totalorder %s18, 1
    %p104 = scmp.ne.s32.totalorder %s99, %s101
    %p105 = scmp.eq.s32.totalorder %s18, 0
    %p106 = por %p104, %p105
    %p107 = scmp.ne.s32.totalorder %s99, %s101
    %p108 = scmp.eq.s32.totalorder %s23, 1
    %p109 = por %p107, %p108
    %p110 = scmp.ne.s32.totalorder %s101, %s102
    %p111 = scmp.eq.s32.totalorder %s23, 0
    %p112 = por %p110, %p111
    %p113 = scmp.ne.s32.totalorder %s101, %s102
    %p114 = scmp.eq.s32.totalorder %s24, 1
    %p115 = por %p113, %p114
    %p117 = scmp.ne.s32.totalorder %s102, %s116
    %p118 = scmp.eq.s32.totalorder %s24, 0
    %p119 = por %p117, %p118
    %s121 = sadd.s32 %s120, 1
    %p124 = scmp.eq.s32.totalorder %s18, 1
    %p125 = scmp.ne.s32.totalorder %s120, %s122
    %p126 = scmp.eq.s32.totalorder %s18, 0
    %p127 = por %p125, %p126
    %p128 = scmp.ne.s32.totalorder %s120, %s122
    %p129 = scmp.eq.s32.totalorder %s23, 1
    %p130 = por %p128, %p129
    %p131 = scmp.ne.s32.totalorder %s122, %s123
    %p132 = scmp.eq.s32.totalorder %s23, 0
    %p133 = por %p131, %p132
    %p134 = scmp.ne.s32.totalorder %s122, %s123
    %p135 = scmp.eq.s32.totalorder %s24, 1
    %p136 = por %p134, %p135
    %p138 = scmp.ne.s32.totalorder %s123, %s137
    %p139 = scmp.eq.s32.totalorder %s24, 0
    %p140 = por %p138, %p139
    %s142 = sadd.s32 %s141, 1
    %p145 = scmp.eq.s32.totalorder %s18, 1
    %p146 = scmp.ne.s32.totalorder %s141, %s143
    %p147 = scmp.eq.s32.totalorder %s18, 0
    %p148 = por %p146, %p147
    %p149 = scmp.ne.s32.totalorder %s141, %s143
    %p150 = scmp.eq.s32.totalorder %s23, 1
    %p151 = por %p149, %p150
    %p152 = scmp.ne.s32.totalorder %s143, %s144
    %p153 = scmp.eq.s32.totalorder %s23, 0
    %p154 = por %p152, %p153
    %p155 = scmp.ne.s32.totalorder %s143, %s144
    %p156 = scmp.eq.s32.totalorder %s24, 1
    %p157 = por %p155, %p156
    %p159 = scmp.ne.s32.totalorder %s144, %s158
    %p160 = scmp.eq.s32.totalorder %s24, 0
    %p161 = por %p159, %p160
    %s163 = sadd.s32 %s162, 1
    %p166 = scmp.eq.s32.totalorder %s18, 1
    %p167 = scmp.ne.s32.totalorder %s162, %s164
    %p168 = scmp.eq.s32.totalorder %s18, 0
    %p169 = por %p167, %p168
    %p170 = scmp.ne.s32.totalorder %s162, %s164
    %p171 = scmp.eq.s32.totalorder %s23, 1
    %p172 = por %p170, %p171
    %p173 = scmp.ne.s32.totalorder %s164, %s165
    %p174 = scmp.eq.s32.totalorder %s23, 0
    %p175 = por %p173, %p174
    %p176 = scmp.ne.s32.totalorder %s164, %s165
    %p177 = scmp.eq.s32.totalorder %s24, 1
    %p178 = por %p176, %p177
    %p180 = scmp.ne.s32.totalorder %s165, %s179
    %p181 = scmp.eq.s32.totalorder %s24, 0
    %p182 = por %p180, %p181
    %s184 = sadd.s32 %s183, 1
    %p187 = scmp.eq.s32.totalorder %s18, 1
    %p188 = scmp.ne.s32.totalorder %s183, %s185
    %p189 = scmp.eq.s32.totalorder %s18, 0
    %p190 = por %p188, %p189
    %p191 = scmp.ne.s32.totalorder %s183, %s185
    %p192 = scmp.eq.s32.totalorder %s23, 1
    %p193 = por %p191, %p192
    %p194 = scmp.ne.s32.totalorder %s185, %s186
    %p195 = scmp.eq.s32.totalorder %s23, 0
    %p196 = por %p194, %p195
    %p197 = scmp.ne.s32.totalorder %s185, %s186
    %p198 = scmp.eq.s32.totalorder %s24, 1
    %p199 = por %p197, %p198
    %p201 = scmp.ne.s32.totalorder %s186, %s200
    %p202 = scmp.eq.s32.totalorder %s24, 0
    %p203 = por %p201, %p202
    %s205 = sadd.s32 %s204, 1
    %p208 = scmp.eq.s32.totalorder %s18, 1
    %p209 = scmp.ne.s32.totalorder %s204, %s206
    %p210 = scmp.eq.s32.totalorder %s18, 0
    %p211 = por %p209, %p210
    %p212 = scmp.ne.s32.totalorder %s204, %s206
    %p213 = scmp.eq.s32.totalorder %s23, 1
    %p214 = por %p212, %p213
    %p215 = scmp.ne.s32.totalorder %s206, %s207
    %p216 = scmp.eq.s32.totalorder %s23, 0
    %p217 = por %p215, %p216
    %p218 = scmp.ne.s32.totalorder %s206, %s207
    %p219 = scmp.eq.s32.totalorder %s24, 1
    %p220 = por %p218, %p219
    %p222 = scmp.ne.s32.totalorder %s207, %s221
    %p223 = scmp.eq.s32.totalorder %s24, 0
    %p224 = por %p222, %p223
    %s226 = sadd.s32 %s225, 1
    %p229 = scmp.eq.s32.totalorder %s18, 1
    %p230 = scmp.ne.s32.totalorder %s225, %s227
    %p231 = scmp.eq.s32.totalorder %s18, 0
    %p232 = por %p230, %p231
    %p233 = scmp.ne.s32.totalorder %s225, %s227
    %p234 = scmp.eq.s32.totalorder %s23, 1
    %p235 = por %p233, %p234
    %p236 = scmp.ne.s32.totalorder %s227, %s228
    %p237 = scmp.eq.s32.totalorder %s23, 0
    %p238 = por %p236, %p237
    %p239 = scmp.ne.s32.totalorder %s227, %s228
    %p240 = scmp.eq.s32.totalorder %s24, 1
    %p241 = por %p239, %p240
    %p243 = scmp.ne.s32.totalorder %s228, %s242
    %p244 = scmp.eq.s32.totalorder %s24, 0
    %p245 = por %p243, %p244
    %s247 = sadd.s32 %s246, 1
    %p250 = scmp.eq.s32.totalorder %s18, 1
    %p251 = scmp.ne.s32.totalorder %s246, %s248
    %p252 = scmp.eq.s32.totalorder %s18, 0
    %p253 = por %p251, %p252
    %p254 = scmp.ne.s32.totalorder %s246, %s248
    %p255 = scmp.eq.s32.totalorder %s23, 1
    %p256 = por %p254, %p255
    %p257 = scmp.ne.s32.totalorder %s248, %s249
    %p258 = scmp.eq.s32.totalorder %s23, 0
    %p259 = por %p257, %p258
    %p260 = scmp.ne.s32.totalorder %s248, %s249
    %p261 = scmp.eq.s32.totalorder %s24, 1
    %p262 = por %p260, %p261
    %p264 = scmp.ne.s32.totalorder %s249, %s263
    %p265 = scmp.eq.s32.totalorder %s24, 0
    %p266 = por %p264, %p265
    %s268 = sadd.s32 %s267, 1
    %p271 = scmp.eq.s32.totalorder %s18, 1
    %p272 = scmp.ne.s32.totalorder %s267, %s269
    %p273 = scmp.eq.s32.totalorder %s18, 0
    %p274 = por %p272, %p273
    %p275 = scmp.ne.s32.totalorder %s267, %s269
    %p276 = scmp.eq.s32.totalorder %s23, 1
    %p277 = por %p275, %p276
    %p278 = scmp.ne.s32.totalorder %s269, %s270
    %p279 = scmp.eq.s32.totalorder %s23, 0
    %p280 = por %p278, %p279
    %p281 = scmp.ne.s32.totalorder %s269, %s270
    %p282 = scmp.eq.s32.totalorder %s24, 1
    %p283 = por %p281, %p282
    %p285 = scmp.ne.s32.totalorder %s270, %s284
    %p286 = scmp.eq.s32.totalorder %s24, 0
    %p287 = por %p285, %p286
    %s288 = ssub.s32 %s18, %s25
    %p289 = scmp.eq.s32.totalorder %s288, 0
    %s291 = sadd.s32 %s290, 1
    %s292 = scalar_select %p289, %s290, %s291
    %p295 = pneg %p289
    %p296 = scmp.eq.s32.totalorder %s18, 1
    %p297 = por %p295, %p296
    %p298 = scmp.ne.s32.totalorder %s290, %s293
    %p299 = scmp.eq.s32.totalorder %s18, 0
    %p300 = por %p298, %p299
    %p301 = scmp.ne.s32.totalorder %s290, %s293
    %p302 = scmp.eq.s32.totalorder %s23, 1
    %p303 = por %p301, %p302
    %p304 = scmp.ne.s32.totalorder %s293, %s294
    %p305 = scmp.eq.s32.totalorder %s23, 0
    %p306 = por %p304, %p305
    %p307 = scmp.ne.s32.totalorder %s293, %s294
    %p308 = scmp.eq.s32.totalorder %s24, 1
    %p309 = por %p307, %p308
    %p311 = scmp.ne.s32.totalorder %s294, %s310
    %p312 = scmp.eq.s32.totalorder %s24, 0
    %p313 = por %p311, %p312
    %p314 = scmp.le.s32.totalorder 1, %s18
    %p315 = scmp.lt.s32.totalorder %s18, 3
    %p316 = pnand %p314, %p315
    %p317 = pneg %p316
    // Predicated region
    $region9: #{upconv_block_forward.1} parent=5 // pred_check
      _
    $region10: #{upconv_block_forward.1} parent=5 // pred_check_branch
      %319 = sbr.rel (%p316) target = $region12
    $region11: #{upconv_block_forward.1} parent=5 // pred_region
      %s320 = ssub.s32 %s18, 1
      // Predicated region
      $region13: #{upconv_block_forward.1} parent=11 // pred_check
        %p321 = pneg %p91
      $region14: #{upconv_block_forward.1} parent=11 // pred_check_branch
        %323 = sbr.rel (%p321) target = $region16
      $region15: #{upconv_block_forward.1} parent=11 // pred_region
        _
      $region16: #{upconv_block_forward.1} parent=11 // pred_fallthru
        _
      // Predicated region
      $region17: #{upconv_block_forward.1} parent=11 // pred_check
        %p324 = pneg %p112
      $region18: #{upconv_block_forward.1} parent=11 // pred_check_branch
        %326 = sbr.rel (%p324) target = $region20
      $region19: #{upconv_block_forward.1} parent=11 // pred_region
        _
      $region20: #{upconv_block_forward.1} parent=11 // pred_fallthru
        _
      // Predicated region
      $region21: #{upconv_block_forward.1} parent=11 // pred_check
        %p327 = pneg %p133
      $region22: #{upconv_block_forward.1} parent=11 // pred_check_branch
        %329 = sbr.rel (%p327) target = $region24
      $region23: #{upconv_block_forward.1} parent=11 // pred_region
        _
      $region24: #{upconv_block_forward.1} parent=11 // pred_fallthru
        _
      // Predicated region
      $region25: #{upconv_block_forward.1} parent=11 // pred_check
        %p330 = pneg %p154
      $region26: #{upconv_block_forward.1} parent=11 // pred_check_branch
        %332 = sbr.rel (%p330) target = $region28
      $region27: #{upconv_block_forward.1} parent=11 // pred_region
        _
      $region28: #{upconv_block_forward.1} parent=11 // pred_fallthru
        _
      // Predicated region
      $region29: #{upconv_block_forward.1} parent=11 // pred_check
        %p333 = pneg %p175
      $region30: #{upconv_block_forward.1} parent=11 // pred_check_branch
        %335 = sbr.rel (%p333) target = $region32
      $region31: #{upconv_block_forward.1} parent=11 // pred_region
        _
      $region32: #{upconv_block_forward.1} parent=11 // pred_fallthru
        _
      // Predicated region
      $region33: #{upconv_block_forward.1} parent=11 // pred_check
        %p336 = pneg %p196
      $region34: #{upconv_block_forward.1} parent=11 // pred_check_branch
        %338 = sbr.rel (%p336) target = $region36
      $region35: #{upconv_block_forward.1} parent=11 // pred_region
        _
      $region36: #{upconv_block_forward.1} parent=11 // pred_fallthru
        _
      // Predicated region
      $region37: #{upconv_block_forward.1} parent=11 // pred_check
        %p339 = pneg %p217
      $region38: #{upconv_block_forward.1} parent=11 // pred_check_branch
        %341 = sbr.rel (%p339) target = $region40
      $region39: #{upconv_block_forward.1} parent=11 // pred_region
        _
      $region40: #{upconv_block_forward.1} parent=11 // pred_fallthru
        _
      // Predicated region
      $region41: #{upconv_block_forward.1} parent=11 // pred_check
        %p342 = pneg %p238
      $region42: #{upconv_block_forward.1} parent=11 // pred_check_branch
        %344 = sbr.rel (%p342) target = $region44
      $region43: #{upconv_block_forward.1} parent=11 // pred_region
        _
      $region44: #{upconv_block_forward.1} parent=11 // pred_fallthru
        _
      // Predicated region
      $region45: #{upconv_block_forward.1} parent=11 // pred_check
        %p345 = pneg %p259
      $region46: #{upconv_block_forward.1} parent=11 // pred_check_branch
        %347 = sbr.rel (%p345) target = $region48
      $region47: #{upconv_block_forward.1} parent=11 // pred_region
        _
      $region48: #{upconv_block_forward.1} parent=11 // pred_fallthru
        _
      // Predicated region
      $region49: #{upconv_block_forward.1} parent=11 // pred_check
        %p348 = pneg %p280
      $region50: #{upconv_block_forward.1} parent=11 // pred_check_branch
        %350 = sbr.rel (%p348) target = $region52
      $region51: #{upconv_block_forward.1} parent=11 // pred_region
        _
      $region52: #{upconv_block_forward.1} parent=11 // pred_fallthru
        _
    $region12: #{upconv_block_forward.1} parent=5 // pred_fallthru
      _
    %p351 = scmp.lt.s32.totalorder %s18, 2
    // Predicated region
    $region53: #{upconv_block_forward.1} parent=5 // pred_check
      %p352 = pneg %p351
    $region54: #{upconv_block_forward.1} parent=5 // pred_check_branch
      %354 = sbr.rel (%p352) target = $region56
    $region55: #{upconv_block_forward.1} parent=5 // pred_region
      // Predicated region
      $region57: #{upconv_block_forward.1} parent=55 // pred_check
        %p355 = pneg %p38
      $region58: #{upconv_block_forward.1} parent=55 // pred_check_branch
        %357 = sbr.rel (%p355) target = $region60
      $region59: #{upconv_block_forward.1} parent=55 // pred_region
        %p358 = scmp.lt.s32.totalorder %s18, 1
        %s359 = scalar_select %p358, %s18, 1
        %s360 = smul.addr %s359, 32
        %s361 = smul.addr %s360, 4
        %s362 = scalar_lea.vmem %s0, %s361
      $region60: #{upconv_block_forward.1} parent=55 // pred_fallthru
        _
      // Predicated region
      $region61: #{upconv_block_forward.1} parent=55 // pred_check
        %p363 = pneg %p64
      $region62: #{upconv_block_forward.1} parent=55 // pred_check_branch
        %365 = sbr.rel (%p363) target = $region64
      $region63: #{upconv_block_forward.1} parent=55 // pred_region
        %p366 = scmp.lt.s32.totalorder %s18, 1
        %s367 = scalar_select %p366, %s18, 1
        %s368 = smul.addr %s367, 32
        %s369 = smul.addr %s368, 4
        %s370 = scalar_lea.vmem %s1, %s369
      $region64: #{upconv_block_forward.1} parent=55 // pred_fallthru
        _
    $region56: #{upconv_block_forward.1} parent=5 // pred_fallthru
      _
    %p371 = scmp.le.s32.totalorder 1, %s18
    %p372 = scmp.lt.s32.totalorder %s18, 3
    %p373 = pnand %p371, %p372
    %p374 = pneg %p373
    // Predicated region
    $region65: #{upconv_block_forward.1} parent=5 // pred_check
      _
    $region66: #{upconv_block_forward.1} parent=5 // pred_check_branch
      %376 = sbr.rel (%p373) target = $region68
    $region67: #{upconv_block_forward.1} parent=5 // pred_region
      %s377 = ssub.s32 %s18, 1
      %p378 = scmp.lt.s32.totalorder %s23, 1
      %s379 = scalar_select %p378, %s23, 1
      %s380 = smul.addr %s379, 32
      %s381 = smul.addr %s380, 4
      %s382 = scalar_lea.vmem %s0, %s381
      %p383 = pneg %p44
      %p384 = pneg %p41
      %p385 = scmp.lt.s32.totalorder %s23, 1
      %s386 = scalar_select %p385, %s23, 1
      %s387 = smul.addr %s386, 32
      %s388 = smul.addr %s387, 4
      %s389 = scalar_lea.vmem %s1, %s388
      %p390 = pneg %p70
      %p391 = pneg %p67
      %p392 = pneg %p91
      %p393 = pneg %p88
      %p394 = pneg %p112
      %p395 = pneg %p109
      %p396 = pneg %p133
      %p397 = pneg %p130
      %p398 = pneg %p154
      %p399 = pneg %p151
      %p400 = pneg %p175
      %p401 = pneg %p172
      %p402 = pneg %p196
      %p403 = pneg %p193
      %p404 = pneg %p217
      %p405 = pneg %p214
      %p406 = pneg %p238
      %p407 = pneg %p235
      %p408 = pneg %p259
      %p409 = pneg %p256
      %p410 = pneg %p280
      %p411 = pneg %p277
      %p412 = pneg %p306
      %p413 = pneg %p303
      %p414 = scmp.lt.s32.totalorder %s23, 1
      %s415 = scalar_select %p414, %s23, 1
      %s416 = smul.addr %s415, 2
      %s417 = smul.addr %s416, 8
      %s418 = scalar_lea.vmem %s12, %s417
      %p419 = scmp.lt.s32.totalorder %s23, 1
      %s420 = scalar_select %p419, %s23, 1
      %s421 = smul.addr %s420, 32
      %s422 = smul.addr %s421, 4
      %s423 = scalar_lea.vmem %s0, %s422
      %p424 = scmp.lt.s32.totalorder %s23, 1
      %s425 = scalar_select %p424, %s23, 1
      %s426 = smul.addr %s425, 32
      %s427 = smul.addr %s426, 4
      %s428 = scalar_lea.vmem %s1, %s427
      %p429 = scmp.lt.s32.totalorder %s23, 1
      %s430 = scalar_select %p429, %s23, 1
      %s431 = smul.addr %s430, 2
      %s432 = smul.addr %s431, 8
      %s433 = scalar_lea.vmem %s12, %s432
      %vm435 = vcmask 60416
      %436 = vst.msk [vmem:[#allocation2] sm:$0xf] %vm435, 0
      %437 = vst.msk [vmem:[#allocation2 + $0x4] sm:$0xf] %vm435, 0
      %vm438 = vcmask 57344
      %439 = vst.msk [vmem:[#allocation2 + $0x8] sm:$0x1] %vm438, 0
      %s440 = scalar_lea.vmem [#allocation2], 204
      %441 = vst.msk [vmem:[%s440] sm:$0xf] %vm435, 0
      %442 = vst.msk [vmem:[%s440 + $0x4] sm:$0xf] %vm435, 0
      %443 = vst.msk [vmem:[%s440 + $0x8] sm:$0x1] %vm438, 0
      %vm444 = vcmask 57344
      %vm445 = vsmask.f32 256
      %vm446 = vmand %vm444, %vm445
      %v447 = vld [vmem:[#allocation2] sm:$0x1]
      %v448 = vsel %vm446, 0, %v447
      %449 = vst [vmem:[#allocation2] sm:$0x1] %v448
      %v450 = vld [vmem:[#allocation2 + $0xc] sm:$0x1]
      %v451 = vsel %vm446, 0, %v450
      %452 = vst [vmem:[#allocation2 + $0xc] sm:$0x1] %v451
      %v453 = vld [vmem:[#allocation2 + $0x18] sm:$0x1]
      %v454 = vsel %vm446, 0, %v453
      %455 = vst [vmem:[#allocation2 + $0x18] sm:$0x1] %v454
      %v456 = vld [vmem:[#allocation2 + $0x24] sm:$0x1]
      %v457 = vsel %vm446, 0, %v456
      %458 = vst [vmem:[#allocation2 + $0x24] sm:$0x1] %v457
      %v459 = vld [vmem:[#allocation2 + $0x30] sm:$0x1]
      %v460 = vsel %vm446, 0, %v459
      %461 = vst [vmem:[#allocation2 + $0x30] sm:$0x1] %v460
      %v462 = vld [vmem:[#allocation2 + $0x3c] sm:$0x1]
      %v463 = vsel %vm446, 0, %v462
      %464 = vst [vmem:[#allocation2 + $0x3c] sm:$0x1] %v463
      %v465 = vld [vmem:[#allocation2 + $0x48] sm:$0x1]
      %v466 = vsel %vm446, 0, %v465
      %467 = vst [vmem:[#allocation2 + $0x48] sm:$0x1] %v466
      %v468 = vld [vmem:[#allocation2 + $0x54] sm:$0x1]
      %v469 = vsel %vm446, 0, %v468
      %470 = vst [vmem:[#allocation2 + $0x54] sm:$0x1] %v469
      %v471 = vld [vmem:[#allocation2 + $0x60] sm:$0x1]
      %v472 = vsel %vm446, 0, %v471
      %473 = vst [vmem:[#allocation2 + $0x60] sm:$0x1] %v472
      %v474 = vld [vmem:[#allocation2 + $0x6c] sm:$0x1]
      %v475 = vsel %vm446, 0, %v474
      %476 = vst [vmem:[#allocation2 + $0x6c] sm:$0x1] %v475
      %v477 = vld [vmem:[#allocation2 + $0x78] sm:$0x1]
      %v478 = vsel %vm446, 0, %v477
      %479 = vst [vmem:[#allocation2 + $0x78] sm:$0x1] %v478
      %v480 = vld [vmem:[#allocation2 + $0x84] sm:$0x1]
      %v481 = vsel %vm446, 0, %v480
      %482 = vst [vmem:[#allocation2 + $0x84] sm:$0x1] %v481
      %v483 = vld [vmem:[#allocation2 + $0x90] sm:$0x1]
      %v484 = vsel %vm446, 0, %v483
      %485 = vst [vmem:[#allocation2 + $0x90] sm:$0x1] %v484
      %v486 = vld [vmem:[#allocation2 + $0x9c] sm:$0x1]
      %v487 = vsel %vm446, 0, %v486
      %488 = vst [vmem:[#allocation2 + $0x9c] sm:$0x1] %v487
      %v489 = vld [vmem:[#allocation2 + $0xa8] sm:$0x1]
      %v490 = vsel %vm446, 0, %v489
      %491 = vst [vmem:[#allocation2 + $0xa8] sm:$0x1] %v490
      %v492 = vld [vmem:[#allocation2 + $0xb4] sm:$0x1]
      %v493 = vsel %vm446, 0, %v492
      %494 = vst [vmem:[#allocation2 + $0xb4] sm:$0x1] %v493
      %v495 = vld [vmem:[#allocation2 + $0xc0] sm:$0x1]
      %v496 = vsel %vm446, 0, %v495
      %497 = vst [vmem:[#allocation2 + $0xc0] sm:$0x1] %v496
      %v498 = vld [vmem:[#allocation2 + $0xcc] sm:$0x1]
      %v499 = vsel %vm446, 0, %v498
      %500 = vst [vmem:[#allocation2 + $0xcc] sm:$0x1] %v499
      %vm501 = vsmask.f32 7938
      %vm502 = vmand %vm444, %vm501
      %v503 = vld [vmem:[#allocation2 + $0x8] sm:$0x1]
      %v504 = vsel %vm502, 0, %v503
      %505 = vst [vmem:[#allocation2 + $0x8] sm:$0x1] %v504
      %v506 = vld [vmem:[#allocation2 + $0x14] sm:$0x1]
      %v507 = vsel %vm502, 0, %v506
      %508 = vst [vmem:[#allocation2 + $0x14] sm:$0x1] %v507
      %v509 = vld [vmem:[#allocation2 + $0x20] sm:$0x1]
      %v510 = vsel %vm502, 0, %v509
      %511 = vst [vmem:[#allocation2 + $0x20] sm:$0x1] %v510
      %v512 = vld [vmem:[#allocation2 + $0x2c] sm:$0x1]
      %v513 = vsel %vm502, 0, %v512
      %514 = vst [vmem:[#allocation2 + $0x2c] sm:$0x1] %v513
      %v515 = vld [vmem:[#allocation2 + $0x38] sm:$0x1]
      %v516 = vsel %vm502, 0, %v515
      %517 = vst [vmem:[#allocation2 + $0x38] sm:$0x1] %v516
      %v518 = vld [vmem:[#allocation2 + $0x44] sm:$0x1]
      %v519 = vsel %vm502, 0, %v518
      %520 = vst [vmem:[#allocation2 + $0x44] sm:$0x1] %v519
      %v521 = vld [vmem:[#allocation2 + $0x50] sm:$0x1]
      %v522 = vsel %vm502, 0, %v521
      %523 = vst [vmem:[#allocation2 + $0x50] sm:$0x1] %v522
      %v524 = vld [vmem:[#allocation2 + $0x5c] sm:$0x1]
      %v525 = vsel %vm502, 0, %v524
      %526 = vst [vmem:[#allocation2 + $0x5c] sm:$0x1] %v525
      %v527 = vld [vmem:[#allocation2 + $0x68] sm:$0x1]
      %v528 = vsel %vm502, 0, %v527
      %529 = vst [vmem:[#allocation2 + $0x68] sm:$0x1] %v528
      %v530 = vld [vmem:[#allocation2 + $0x74] sm:$0x1]
      %v531 = vsel %vm502, 0, %v530
      %532 = vst [vmem:[#allocation2 + $0x74] sm:$0x1] %v531
      %v533 = vld [vmem:[#allocation2 + $0x80] sm:$0x1]
      %v534 = vsel %vm502, 0, %v533
      %535 = vst [vmem:[#allocation2 + $0x80] sm:$0x1] %v534
      %v536 = vld [vmem:[#allocation2 + $0x8c] sm:$0x1]
      %v537 = vsel %vm502, 0, %v536
      %538 = vst [vmem:[#allocation2 + $0x8c] sm:$0x1] %v537
      %v539 = vld [vmem:[#allocation2 + $0x98] sm:$0x1]
      %v540 = vsel %vm502, 0, %v539
      %541 = vst [vmem:[#allocation2 + $0x98] sm:$0x1] %v540
      %v542 = vld [vmem:[#allocation2 + $0xa4] sm:$0x1]
      %v543 = vsel %vm502, 0, %v542
      %544 = vst [vmem:[#allocation2 + $0xa4] sm:$0x1] %v543
      %v545 = vld [vmem:[#allocation2 + $0xb0] sm:$0x1]
      %v546 = vsel %vm502, 0, %v545
      %547 = vst [vmem:[#allocation2 + $0xb0] sm:$0x1] %v546
      %v548 = vld [vmem:[#allocation2 + $0xbc] sm:$0x1]
      %v549 = vsel %vm502, 0, %v548
      %550 = vst [vmem:[#allocation2 + $0xbc] sm:$0x1] %v549
      %v551 = vld [vmem:[#allocation2 + $0xc8] sm:$0x1]
      %v552 = vsel %vm502, 0, %v551
      %553 = vst [vmem:[#allocation2 + $0xc8] sm:$0x1] %v552
      %v554 = vld [vmem:[#allocation2 + $0xd4] sm:$0x1]
      %v555 = vsel %vm502, 0, %v554
      %556 = vst [vmem:[#allocation2 + $0xd4] sm:$0x1] %v555
      %557 = vst.msk [vmem:[#allocation3] sm:$0xf] %vm435, 0
      %558 = vst.msk [vmem:[#allocation3 + $0x4] sm:$0xf] %vm435, 0
      %559 = vst.msk [vmem:[#allocation3 + $0x8] sm:$0x1] %vm438, 0
      %s560 = scalar_lea.vmem [#allocation3], 204
      %561 = vst.msk [vmem:[%s560] sm:$0xf] %vm435, 0
      %562 = vst.msk [vmem:[%s560 + $0x4] sm:$0xf] %vm435, 0
      %563 = vst.msk [vmem:[%s560 + $0x8] sm:$0x1] %vm438, 0
      %v564 = vld [vmem:[#allocation3] sm:$0x1]
      %v565 = vsel %vm446, 0, %v564
      %566 = vst [vmem:[#allocation3] sm:$0x1] %v565
      %v567 = vld [vmem:[#allocation3 + $0xc] sm:$0x1]
      %v568 = vsel %vm446, 0, %v567
      %569 = vst [vmem:[#allocation3 + $0xc] sm:$0x1] %v568
      %v570 = vld [vmem:[#allocation3 + $0x18] sm:$0x1]
      %v571 = vsel %vm446, 0, %v570
      %572 = vst [vmem:[#allocation3 + $0x18] sm:$0x1] %v571
      %v573 = vld [vmem:[#allocation3 + $0x24] sm:$0x1]
      %v574 = vsel %vm446, 0, %v573
      %575 = vst [vmem:[#allocation3 + $0x24] sm:$0x1] %v574
      %v576 = vld [vmem:[#allocation3 + $0x30] sm:$0x1]
      %v577 = vsel %vm446, 0, %v576
      %578 = vst [vmem:[#allocation3 + $0x30] sm:$0x1] %v577
      %v579 = vld [vmem:[#allocation3 + $0x3c] sm:$0x1]
      %v580 = vsel %vm446, 0, %v579
      %581 = vst [vmem:[#allocation3 + $0x3c] sm:$0x1] %v580
      %v582 = vld [vmem:[#allocation3 + $0x48] sm:$0x1]
      %v583 = vsel %vm446, 0, %v582
      %584 = vst [vmem:[#allocation3 + $0x48] sm:$0x1] %v583
      %v585 = vld [vmem:[#allocation3 + $0x54] sm:$0x1]
      %v586 = vsel %vm446, 0, %v585
      %587 = vst [vmem:[#allocation3 + $0x54] sm:$0x1] %v586
      %v588 = vld [vmem:[#allocation3 + $0x60] sm:$0x1]
      %v589 = vsel %vm446, 0, %v588
      %590 = vst [vmem:[#allocation3 + $0x60] sm:$0x1] %v589
      %v591 = vld [vmem:[#allocation3 + $0x6c] sm:$0x1]
      %v592 = vsel %vm446, 0, %v591
      %593 = vst [vmem:[#allocation3 + $0x6c] sm:$0x1] %v592
      %v594 = vld [vmem:[#allocation3 + $0x78] sm:$0x1]
      %v595 = vsel %vm446, 0, %v594
      %596 = vst [vmem:[#allocation3 + $0x78] sm:$0x1] %v595
      %v597 = vld [vmem:[#allocation3 + $0x84] sm:$0x1]
      %v598 = vsel %vm446, 0, %v597
      %599 = vst [vmem:[#allocation3 + $0x84] sm:$0x1] %v598
      %v600 = vld [vmem:[#allocation3 + $0x90] sm:$0x1]
      %v601 = vsel %vm446, 0, %v600
      %602 = vst [vmem:[#allocation3 + $0x90] sm:$0x1] %v601
      %v603 = vld [vmem:[#allocation3 + $0x9c] sm:$0x1]
      %v604 = vsel %vm446, 0, %v603
      %605 = vst [vmem:[#allocation3 + $0x9c] sm:$0x1] %v604
      %v606 = vld [vmem:[#allocation3 + $0xa8] sm:$0x1]
      %v607 = vsel %vm446, 0, %v606
      %608 = vst [vmem:[#allocation3 + $0xa8] sm:$0x1] %v607
      %v609 = vld [vmem:[#allocation3 + $0xb4] sm:$0x1]
      %v610 = vsel %vm446, 0, %v609
      %611 = vst [vmem:[#allocation3 + $0xb4] sm:$0x1] %v610
      %v612 = vld [vmem:[#allocation3 + $0xc0] sm:$0x1]
      %v613 = vsel %vm446, 0, %v612
      %614 = vst [vmem:[#allocation3 + $0xc0] sm:$0x1] %v613
      %v615 = vld [vmem:[#allocation3 + $0xcc] sm:$0x1]
      %v616 = vsel %vm446, 0, %v615
      %617 = vst [vmem:[#allocation3 + $0xcc] sm:$0x1] %v616
      %v618 = vld [vmem:[#allocation3 + $0x8] sm:$0x1]
      %v619 = vsel %vm502, 0, %v618
      %620 = vst [vmem:[#allocation3 + $0x8] sm:$0x1] %v619
      %v621 = vld [vmem:[#allocation3 + $0x14] sm:$0x1]
      %v622 = vsel %vm502, 0, %v621
      %623 = vst [vmem:[#allocation3 + $0x14] sm:$0x1] %v622
      %v624 = vld [vmem:[#allocation3 + $0x20] sm:$0x1]
      %v625 = vsel %vm502, 0, %v624
      %626 = vst [vmem:[#allocation3 + $0x20] sm:$0x1] %v625
      %v627 = vld [vmem:[#allocation3 + $0x2c] sm:$0x1]
      %v628 = vsel %vm502, 0, %v627
      %629 = vst [vmem:[#allocation3 + $0x2c] sm:$0x1] %v628
      %v630 = vld [vmem:[#allocation3 + $0x38] sm:$0x1]
      %v631 = vsel %vm502, 0, %v630
      %632 = vst [vmem:[#allocation3 + $0x38] sm:$0x1] %v631
      %v633 = vld [vmem:[#allocation3 + $0x44] sm:$0x1]
      %v634 = vsel %vm502, 0, %v633
      %635 = vst [vmem:[#allocation3 + $0x44] sm:$0x1] %v634
      %v636 = vld [vmem:[#allocation3 + $0x50] sm:$0x1]
      %v637 = vsel %vm502, 0, %v636
      %638 = vst [vmem:[#allocation3 + $0x50] sm:$0x1] %v637
      %v639 = vld [vmem:[#allocation3 + $0x5c] sm:$0x1]
      %v640 = vsel %vm502, 0, %v639
      %641 = vst [vmem:[#allocation3 + $0x5c] sm:$0x1] %v640
      %v642 = vld [vmem:[#allocation3 + $0x68] sm:$0x1]
      %v643 = vsel %vm502, 0, %v642
      %644 = vst [vmem:[#allocation3 + $0x68] sm:$0x1] %v643
      %v645 = vld [vmem:[#allocation3 + $0x74] sm:$0x1]
      %v646 = vsel %vm502, 0, %v645
      %647 = vst [vmem:[#allocation3 + $0x74] sm:$0x1] %v646
      %v648 = vld [vmem:[#allocation3 + $0x80] sm:$0x1]
      %v649 = vsel %vm502, 0, %v648
      %650 = vst [vmem:[#allocation3 + $0x80] sm:$0x1] %v649
      %v651 = vld [vmem:[#allocation3 + $0x8c] sm:$0x1]
      %v652 = vsel %vm502, 0, %v651
      %653 = vst [vmem:[#allocation3 + $0x8c] sm:$0x1] %v652
      %v654 = vld [vmem:[#allocation3 + $0x98] sm:$0x1]
      %v655 = vsel %vm502, 0, %v654
      %656 = vst [vmem:[#allocation3 + $0x98] sm:$0x1] %v655
      %v657 = vld [vmem:[#allocation3 + $0xa4] sm:$0x1]
      %v658 = vsel %vm502, 0, %v657
      %659 = vst [vmem:[#allocation3 + $0xa4] sm:$0x1] %v658
      %v660 = vld [vmem:[#allocation3 + $0xb0] sm:$0x1]
      %v661 = vsel %vm502, 0, %v660
      %662 = vst [vmem:[#allocation3 + $0xb0] sm:$0x1] %v661
      %v663 = vld [vmem:[#allocation3 + $0xbc] sm:$0x1]
      %v664 = vsel %vm502, 0, %v663
      %665 = vst [vmem:[#allocation3 + $0xbc] sm:$0x1] %v664
      %v666 = vld [vmem:[#allocation3 + $0xc8] sm:$0x1]
      %v667 = vsel %vm502, 0, %v666
      %668 = vst [vmem:[#allocation3 + $0xc8] sm:$0x1] %v667
      %v669 = vld [vmem:[#allocation3 + $0xd4] sm:$0x1]
      %v670 = vsel %vm502, 0, %v669
      %671 = vst [vmem:[#allocation3 + $0xd4] sm:$0x1] %v670
      %672 = vst.msk [vmem:[#allocation4] sm:$0xf] %vm435, 0
      %673 = vst.msk [vmem:[#allocation4 + $0x4] sm:$0xf] %vm435, 0
      %674 = vst.msk [vmem:[#allocation4 + $0x8] sm:$0x1] %vm438, 0
      %s675 = scalar_lea.vmem [#allocation4], 204
      %676 = vst.msk [vmem:[%s675] sm:$0xf] %vm435, 0
      %677 = vst.msk [vmem:[%s675 + $0x4] sm:$0xf] %vm435, 0
      %678 = vst.msk [vmem:[%s675 + $0x8] sm:$0x1] %vm438, 0
      %v679 = vld [vmem:[#allocation4] sm:$0x1]
      %v680 = vsel %vm446, 0, %v679
      %681 = vst [vmem:[#allocation4] sm:$0x1] %v680
      %v682 = vld [vmem:[#allocation4 + $0xc] sm:$0x1]
      %v683 = vsel %vm446, 0, %v682
      %684 = vst [vmem:[#allocation4 + $0xc] sm:$0x1] %v683
      %v685 = vld [vmem:[#allocation4 + $0x18] sm:$0x1]
      %v686 = vsel %vm446, 0, %v685
      %687 = vst [vmem:[#allocation4 + $0x18] sm:$0x1] %v686
      %v688 = vld [vmem:[#allocation4 + $0x24] sm:$0x1]
      %v689 = vsel %vm446, 0, %v688
      %690 = vst [vmem:[#allocation4 + $0x24] sm:$0x1] %v689
      %v691 = vld [vmem:[#allocation4 + $0x30] sm:$0x1]
      %v692 = vsel %vm446, 0, %v691
      %693 = vst [vmem:[#allocation4 + $0x30] sm:$0x1] %v692
      %v694 = vld [vmem:[#allocation4 + $0x3c] sm:$0x1]
      %v695 = vsel %vm446, 0, %v694
      %696 = vst [vmem:[#allocation4 + $0x3c] sm:$0x1] %v695
      %v697 = vld [vmem:[#allocation4 + $0x48] sm:$0x1]
      %v698 = vsel %vm446, 0, %v697
      %699 = vst [vmem:[#allocation4 + $0x48] sm:$0x1] %v698
      %v700 = vld [vmem:[#allocation4 + $0x54] sm:$0x1]
      %v701 = vsel %vm446, 0, %v700
      %702 = vst [vmem:[#allocation4 + $0x54] sm:$0x1] %v701
      %v703 = vld [vmem:[#allocation4 + $0x60] sm:$0x1]
      %v704 = vsel %vm446, 0, %v703
      %705 = vst [vmem:[#allocation4 + $0x60] sm:$0x1] %v704
      %v706 = vld [vmem:[#allocation4 + $0x6c] sm:$0x1]
      %v707 = vsel %vm446, 0, %v706
      %708 = vst [vmem:[#allocation4 + $0x6c] sm:$0x1] %v707
      %v709 = vld [vmem:[#allocation4 + $0x78] sm:$0x1]
      %v710 = vsel %vm446, 0, %v709
      %711 = vst [vmem:[#allocation4 + $0x78] sm:$0x1] %v710
      %v712 = vld [vmem:[#allocation4 + $0x84] sm:$0x1]
      %v713 = vsel %vm446, 0, %v712
      %714 = vst [vmem:[#allocation4 + $0x84] sm:$0x1] %v713
      %v715 = vld [vmem:[#allocation4 + $0x90] sm:$0x1]
      %v716 = vsel %vm446, 0, %v715
      %717 = vst [vmem:[#allocation4 + $0x90] sm:$0x1] %v716
      %v718 = vld [vmem:[#allocation4 + $0x9c] sm:$0x1]
      %v719 = vsel %vm446, 0, %v718
      %720 = vst [vmem:[#allocation4 + $0x9c] sm:$0x1] %v719
      %v721 = vld [vmem:[#allocation4 + $0xa8] sm:$0x1]
      %v722 = vsel %vm446, 0, %v721
      %723 = vst [vmem:[#allocation4 + $0xa8] sm:$0x1] %v722
      %v724 = vld [vmem:[#allocation4 + $0xb4] sm:$0x1]
      %v725 = vsel %vm446, 0, %v724
      %726 = vst [vmem:[#allocation4 + $0xb4] sm:$0x1] %v725
      %v727 = vld [vmem:[#allocation4 + $0xc0] sm:$0x1]
      %v728 = vsel %vm446, 0, %v727
      %729 = vst [vmem:[#allocation4 + $0xc0] sm:$0x1] %v728
      %v730 = vld [vmem:[#allocation4 + $0xcc] sm:$0x1]
      %v731 = vsel %vm446, 0, %v730
      %732 = vst [vmem:[#allocation4 + $0xcc] sm:$0x1] %v731
      %v733 = vld [vmem:[#allocation4 + $0x8] sm:$0x1]
      %v734 = vsel %vm502, 0, %v733
      %735 = vst [vmem:[#allocation4 + $0x8] sm:$0x1] %v734
      %v736 = vld [vmem:[#allocation4 + $0x14] sm:$0x1]
      %v737 = vsel %vm502, 0, %v736
      %738 = vst [vmem:[#allocation4 + $0x14] sm:$0x1] %v737
      %v739 = vld [vmem:[#allocation4 + $0x20] sm:$0x1]
      %v740 = vsel %vm502, 0, %v739
      %741 = vst [vmem:[#allocation4 + $0x20] sm:$0x1] %v740
      %v742 = vld [vmem:[#allocation4 + $0x2c] sm:$0x1]
      %v743 = vsel %vm502, 0, %v742
      %744 = vst [vmem:[#allocation4 + $0x2c] sm:$0x1] %v743
      %v745 = vld [vmem:[#allocation4 + $0x38] sm:$0x1]
      %v746 = vsel %vm502, 0, %v745
      %747 = vst [vmem:[#allocation4 + $0x38] sm:$0x1] %v746
      %v748 = vld [vmem:[#allocation4 + $0x44] sm:$0x1]
      %v749 = vsel %vm502, 0, %v748
      %750 = vst [vmem:[#allocation4 + $0x44] sm:$0x1] %v749
      %v751 = vld [vmem:[#allocation4 + $0x50] sm:$0x1]
      %v752 = vsel %vm502, 0, %v751
      %753 = vst [vmem:[#allocation4 + $0x50] sm:$0x1] %v752
      %v754 = vld [vmem:[#allocation4 + $0x5c] sm:$0x1]
      %v755 = vsel %vm502, 0, %v754
      %756 = vst [vmem:[#allocation4 + $0x5c] sm:$0x1] %v755
      %v757 = vld [vmem:[#allocation4 + $0x68] sm:$0x1]
      %v758 = vsel %vm502, 0, %v757
      %759 = vst [vmem:[#allocation4 + $0x68] sm:$0x1] %v758
      %v760 = vld [vmem:[#allocation4 + $0x74] sm:$0x1]
      %v761 = vsel %vm502, 0, %v760
      %762 = vst [vmem:[#allocation4 + $0x74] sm:$0x1] %v761
      %v763 = vld [vmem:[#allocation4 + $0x80] sm:$0x1]
      %v764 = vsel %vm502, 0, %v763
      %765 = vst [vmem:[#allocation4 + $0x80] sm:$0x1] %v764
      %v766 = vld [vmem:[#allocation4 + $0x8c] sm:$0x1]
      %v767 = vsel %vm502, 0, %v766
      %768 = vst [vmem:[#allocation4 + $0x8c] sm:$0x1] %v767
      %v769 = vld [vmem:[#allocation4 + $0x98] sm:$0x1]
      %v770 = vsel %vm502, 0, %v769
      %771 = vst [vmem:[#allocation4 + $0x98] sm:$0x1] %v770
      %v772 = vld [vmem:[#allocation4 + $0xa4] sm:$0x1]
      %v773 = vsel %vm502, 0, %v772
      %774 = vst [vmem:[#allocation4 + $0xa4] sm:$0x1] %v773
      %v775 = vld [vmem:[#allocation4 + $0xb0] sm:$0x1]
      %v776 = vsel %vm502, 0, %v775
      %777 = vst [vmem:[#allocation4 + $0xb0] sm:$0x1] %v776
      %v778 = vld [vmem:[#allocation4 + $0xbc] sm:$0x1]
      %v779 = vsel %vm502, 0, %v778
      %780 = vst [vmem:[#allocation4 + $0xbc] sm:$0x1] %v779
      %v781 = vld [vmem:[#allocation4 + $0xc8] sm:$0x1]
      %v782 = vsel %vm502, 0, %v781
      %783 = vst [vmem:[#allocation4 + $0xc8] sm:$0x1] %v782
      %v784 = vld [vmem:[#allocation4 + $0xd4] sm:$0x1]
      %v785 = vsel %vm502, 0, %v784
      %786 = vst [vmem:[#allocation4 + $0xd4] sm:$0x1] %v785
      %787 = vst.msk [vmem:[#allocation5] sm:$0xf] %vm435, 0
      %788 = vst.msk [vmem:[#allocation5 + $0x4] sm:$0xf] %vm435, 0
      %789 = vst.msk [vmem:[#allocation5 + $0x8] sm:$0x1] %vm438, 0
      %s790 = scalar_lea.vmem [#allocation5], 204
      %791 = vst.msk [vmem:[%s790] sm:$0xf] %vm435, 0
      %792 = vst.msk [vmem:[%s790 + $0x4] sm:$0xf] %vm435, 0
      %793 = vst.msk [vmem:[%s790 + $0x8] sm:$0x1] %vm438, 0
      %v794 = vld [vmem:[#allocation5] sm:$0x1]
      %v795 = vsel %vm446, 0, %v794
      %796 = vst [vmem:[#allocation5] sm:$0x1] %v795
      %v797 = vld [vmem:[#allocation5 + $0xc] sm:$0x1]
      %v798 = vsel %vm446, 0, %v797
      %799 = vst [vmem:[#allocation5 + $0xc] sm:$0x1] %v798
      %v800 = vld [vmem:[#allocation5 + $0x18] sm:$0x1]
      %v801 = vsel %vm446, 0, %v800
      %802 = vst [vmem:[#allocation5 + $0x18] sm:$0x1] %v801
      %v803 = vld [vmem:[#allocation5 + $0x24] sm:$0x1]
      %v804 = vsel %vm446, 0, %v803
      %805 = vst [vmem:[#allocation5 + $0x24] sm:$0x1] %v804
      %v806 = vld [vmem:[#allocation5 + $0x30] sm:$0x1]
      %v807 = vsel %vm446, 0, %v806
      %808 = vst [vmem:[#allocation5 + $0x30] sm:$0x1] %v807
      %v809 = vld [vmem:[#allocation5 + $0x3c] sm:$0x1]
      %v810 = vsel %vm446, 0, %v809
      %811 = vst [vmem:[#allocation5 + $0x3c] sm:$0x1] %v810
      %v812 = vld [vmem:[#allocation5 + $0x48] sm:$0x1]
      %v813 = vsel %vm446, 0, %v812
      %814 = vst [vmem:[#allocation5 + $0x48] sm:$0x1] %v813
      %v815 = vld [vmem:[#allocation5 + $0x54] sm:$0x1]
      %v816 = vsel %vm446, 0, %v815
      %817 = vst [vmem:[#allocation5 + $0x54] sm:$0x1] %v816
      %v818 = vld [vmem:[#allocation5 + $0x60] sm:$0x1]
      %v819 = vsel %vm446, 0, %v818
      %820 = vst [vmem:[#allocation5 + $0x60] sm:$0x1] %v819
      %v821 = vld [vmem:[#allocation5 + $0x6c] sm:$0x1]
      %v822 = vsel %vm446, 0, %v821
      %823 = vst [vmem:[#allocation5 + $0x6c] sm:$0x1] %v822
      %v824 = vld [vmem:[#allocation5 + $0x78] sm:$0x1]
      %v825 = vsel %vm446, 0, %v824
      %826 = vst [vmem:[#allocation5 + $0x78] sm:$0x1] %v825
      %v827 = vld [vmem:[#allocation5 + $0x84] sm:$0x1]
      %v828 = vsel %vm446, 0, %v827
      %829 = vst [vmem:[#allocation5 + $0x84] sm:$0x1] %v828
      %v830 = vld [vmem:[#allocation5 + $0x90] sm:$0x1]
      %v831 = vsel %vm446, 0, %v830
      %832 = vst [vmem:[#allocation5 + $0x90] sm:$0x1] %v831
      %v833 = vld [vmem:[#allocation5 + $0x9c] sm:$0x1]
      %v834 = vsel %vm446, 0, %v833
      %835 = vst [vmem:[#allocation5 + $0x9c] sm:$0x1] %v834
      %v836 = vld [vmem:[#allocation5 + $0xa8] sm:$0x1]
      %v837 = vsel %vm446, 0, %v836
      %838 = vst [vmem:[#allocation5 + $0xa8] sm:$0x1] %v837
      %v839 = vld [vmem:[#allocation5 + $0xb4] sm:$0x1]
      %v840 = vsel %vm446, 0, %v839
      %841 = vst [vmem:[#allocation5 + $0xb4] sm:$0x1] %v840
      %v842 = vld [vmem:[#allocation5 + $0xc0] sm:$0x1]
      %v843 = vsel %vm446, 0, %v842
      %844 = vst [vmem:[#allocation5 + $0xc0] sm:$0x1] %v843
      %v845 = vld [vmem:[#allocation5 + $0xcc] sm:$0x1]
      %v846 = vsel %vm446, 0, %v845
      %847 = vst [vmem:[#allocation5 + $0xcc] sm:$0x1] %v846
      %v848 = vld [vmem:[#allocation5 + $0x8] sm:$0x1]
      %v849 = vsel %vm502, 0, %v848
      %850 = vst [vmem:[#allocation5 + $0x8] sm:$0x1] %v849
      %v851 = vld [vmem:[#allocation5 + $0x14] sm:$0x1]
      %v852 = vsel %vm502, 0, %v851
      %853 = vst [vmem:[#allocation5 + $0x14] sm:$0x1] %v852
      %v854 = vld [vmem:[#allocation5 + $0x20] sm:$0x1]
      %v855 = vsel %vm502, 0, %v854
      %856 = vst [vmem:[#allocation5 + $0x20] sm:$0x1] %v855
      %v857 = vld [vmem:[#allocation5 + $0x2c] sm:$0x1]
      %v858 = vsel %vm502, 0, %v857
      %859 = vst [vmem:[#allocation5 + $0x2c] sm:$0x1] %v858
      %v860 = vld [vmem:[#allocation5 + $0x38] sm:$0x1]
      %v861 = vsel %vm502, 0, %v860
      %862 = vst [vmem:[#allocation5 + $0x38] sm:$0x1] %v861
      %v863 = vld [vmem:[#allocation5 + $0x44] sm:$0x1]
      %v864 = vsel %vm502, 0, %v863
      %865 = vst [vmem:[#allocation5 + $0x44] sm:$0x1] %v864
      %v866 = vld [vmem:[#allocation5 + $0x50] sm:$0x1]
      %v867 = vsel %vm502, 0, %v866
      %868 = vst [vmem:[#allocation5 + $0x50] sm:$0x1] %v867
      %v869 = vld [vmem:[#allocation5 + $0x5c] sm:$0x1]
      %v870 = vsel %vm502, 0, %v869
      %871 = vst [vmem:[#allocation5 + $0x5c] sm:$0x1] %v870
      %v872 = vld [vmem:[#allocation5 + $0x68] sm:$0x1]
      %v873 = vsel %vm502, 0, %v872
      %874 = vst [vmem:[#allocation5 + $0x68] sm:$0x1] %v873
      %v875 = vld [vmem:[#allocation5 + $0x74] sm:$0x1]
      %v876 = vsel %vm502, 0, %v875
      %877 = vst [vmem:[#allocation5 + $0x74] sm:$0x1] %v876
      %v878 = vld [vmem:[#allocation5 + $0x80] sm:$0x1]
      %v879 = vsel %vm502, 0, %v878
      %880 = vst [vmem:[#allocation5 + $0x80] sm:$0x1] %v879
      %v881 = vld [vmem:[#allocation5 + $0x8c] sm:$0x1]
      %v882 = vsel %vm502, 0, %v881
      %883 = vst [vmem:[#allocation5 + $0x8c] sm:$0x1] %v882
      %v884 = vld [vmem:[#allocation5 + $0x98] sm:$0x1]
      %v885 = vsel %vm502, 0, %v884
      %886 = vst [vmem:[#allocation5 + $0x98] sm:$0x1] %v885
      %v887 = vld [vmem:[#allocation5 + $0xa4] sm:$0x1]
      %v888 = vsel %vm502, 0, %v887
      %889 = vst [vmem:[#allocation5 + $0xa4] sm:$0x1] %v888
      %v890 = vld [vmem:[#allocation5 + $0xb0] sm:$0x1]
      %v891 = vsel %vm502, 0, %v890
      %892 = vst [vmem:[#allocation5 + $0xb0] sm:$0x1] %v891
      %v893 = vld [vmem:[#allocation5 + $0xbc] sm:$0x1]
      %v894 = vsel %vm502, 0, %v893
      %895 = vst [vmem:[#allocation5 + $0xbc] sm:$0x1] %v894
      %v896 = vld [vmem:[#allocation5 + $0xc8] sm:$0x1]
      %v897 = vsel %vm502, 0, %v896
      %898 = vst [vmem:[#allocation5 + $0xc8] sm:$0x1] %v897
      %v899 = vld [vmem:[#allocation5 + $0xd4] sm:$0x1]
      %v900 = vsel %vm502, 0, %v899
      %901 = vst [vmem:[#allocation5 + $0xd4] sm:$0x1] %v900
      %v902 = vld [vmem:[%s423] sm:$0xf]
      %v903 = vld [vmem:[%s423 + $0x4] sm:$0xf]
      %v904 = vld [vmem:[%s423 + $0x8] sm:$0xf]
      %v905 = vld [vmem:[%s423 + $0xc] sm:$0xf]
      %v906 = vld [vmem:[%s423 + $0x10] sm:$0xf]
      %v907 = vld [vmem:[%s423 + $0x14] sm:$0xf]
      %v908 = vld [vmem:[%s423 + $0x18] sm:$0xf]
      %v909 = vld [vmem:[%s423 + $0x1c] sm:$0xf]
      %v910 = vld [vmem:[%s423 + $0x20] sm:$0xf]
      %v911 = vld [vmem:[%s423 + $0x24] sm:$0xf]
      %v912 = vld [vmem:[%s423 + $0x28] sm:$0xf]
      %v913 = vld [vmem:[%s423 + $0x2c] sm:$0xf]
      %v914 = vld [vmem:[%s423 + $0x30] sm:$0xf]
      %v915 = vld [vmem:[%s423 + $0x34] sm:$0xf]
      %v916 = vld [vmem:[%s423 + $0x38] sm:$0xf]
      %v917 = vld [vmem:[%s423 + $0x3c] sm:$0xf]
      %v918 = vld [vmem:[%s423 + $0x40] sm:$0xf]
      %v919 = vld [vmem:[%s423 + $0x44] sm:$0xf]
      %v920 = vld [vmem:[%s423 + $0x48] sm:$0xf]
      %v921 = vld [vmem:[%s423 + $0x4c] sm:$0xf]
      %v922 = vld [vmem:[%s423 + $0x50] sm:$0xf]
      %v923 = vld [vmem:[%s423 + $0x54] sm:$0xf]
      %v924 = vld [vmem:[%s423 + $0x58] sm:$0xf]
      %v925 = vld [vmem:[%s423 + $0x5c] sm:$0xf]
      %v926 = vld [vmem:[%s423 + $0x60] sm:$0xf]
      %v927 = vld [vmem:[%s423 + $0x64] sm:$0xf]
      %v928 = vld [vmem:[%s423 + $0x68] sm:$0xf]
      %v929 = vld [vmem:[%s423 + $0x6c] sm:$0xf]
      %v930 = vld [vmem:[%s423 + $0x70] sm:$0xf]
      %v931 = vld [vmem:[%s423 + $0x74] sm:$0xf]
      %v932 = vld [vmem:[%s423 + $0x78] sm:$0xf]
      %v933 = vld [vmem:[%s423 + $0x7c] sm:$0xf]
      %vm934 = vsmask.f32 4368
      %vm935 = vmor %vm445, %vm934
      %v937 = vshrl.u32 %v902, 16
      %v939 = vrot.slane %v937, 7
      %v940 = vshll.u32 %v902, 16
      %v942 = vor.u32 %v939, %v940
      %v943 = vrot.slane %v939, 4
      %v945 = vshrl.u32 %v903, 16
      %v947 = vrot.slane %v945, 7
      %v948 = vshll.u32 %v903, 16
      %v950 = vor.u32 %v947, %v948
      %v951 = vsel %vm935, %v943, %v950
      %v952 = vrot.slane %v947, 4
      %v954 = vshrl.u32 %v904, 16
      %v956 = vrot.slane %v954, 7
      %v957 = vshll.u32 %v904, 16
      %v959 = vor.u32 %v956, %v957
      %v960 = vrot.slane %v956, 4
      %v962 = vshrl.u32 %v905, 16
      %v964 = vrot.slane %v962, 7
      %v965 = vshll.u32 %v905, 16
      %v967 = vor.u32 %v964, %v965
      %v968 = vsel %vm935, %v960, %v967
      %v969 = vrot.slane %v964, 4
      %v971 = vshrl.u32 %v906, 16
      %v973 = vrot.slane %v971, 7
      %v974 = vshll.u32 %v906, 16
      %v976 = vor.u32 %v973, %v974
      %v977 = vrot.slane %v973, 4
      %v979 = vshrl.u32 %v907, 16
      %v981 = vrot.slane %v979, 7
      %v982 = vshll.u32 %v907, 16
      %v984 = vor.u32 %v981, %v982
      %v985 = vsel %vm935, %v977, %v984
      %v986 = vrot.slane %v981, 4
      %v988 = vshrl.u32 %v908, 16
      %v990 = vrot.slane %v988, 7
      %v991 = vshll.u32 %v908, 16
      %v993 = vor.u32 %v990, %v991
      %v994 = vrot.slane %v990, 4
      %v996 = vshrl.u32 %v909, 16
      %v998 = vrot.slane %v996, 7
      %v999 = vshll.u32 %v909, 16
      %v1001 = vor.u32 %v998, %v999
      %v1002 = vsel %vm935, %v994, %v1001
      %v1003 = vrot.slane %v998, 4
      %v1005 = vshrl.u32 %v910, 16
      %v1007 = vrot.slane %v1005, 7
      %v1008 = vshll.u32 %v910, 16
      %v1010 = vor.u32 %v1007, %v1008
      %v1011 = vrot.slane %v1007, 4
      %v1013 = vshrl.u32 %v911, 16
      %v1015 = vrot.slane %v1013, 7
      %v1016 = vshll.u32 %v911, 16
      %v1018 = vor.u32 %v1015, %v1016
      %v1019 = vsel %vm935, %v1011, %v1018
      %v1020 = vrot.slane %v1015, 4
      %v1022 = vshrl.u32 %v912, 16
      %v1024 = vrot.slane %v1022, 7
      %v1025 = vshll.u32 %v912, 16
      %v1027 = vor.u32 %v1024, %v1025
      %v1028 = vrot.slane %v1024, 4
      %v1030 = vshrl.u32 %v913, 16
      %v1032 = vrot.slane %v1030, 7
      %v1033 = vshll.u32 %v913, 16
      %v1035 = vor.u32 %v1032, %v1033
      %v1036 = vsel %vm935, %v1028, %v1035
      %v1037 = vrot.slane %v1032, 4
      %v1039 = vshrl.u32 %v914, 16
      %v1041 = vrot.slane %v1039, 7
      %v1042 = vshll.u32 %v914, 16
      %v1044 = vor.u32 %v1041, %v1042
      %v1045 = vrot.slane %v1041, 4
      %v1047 = vshrl.u32 %v915, 16
      %v1049 = vrot.slane %v1047, 7
      %v1050 = vshll.u32 %v915, 16
      %v1052 = vor.u32 %v1049, %v1050
      %v1053 = vsel %vm935, %v1045, %v1052
      %v1054 = vrot.slane %v1049, 4
      %v1056 = vshrl.u32 %v916, 16
      %v1058 = vrot.slane %v1056, 7
      %v1059 = vshll.u32 %v916, 16
      %v1061 = vor.u32 %v1058, %v1059
      %v1062 = vrot.slane %v1058, 4
      %v1064 = vshrl.u32 %v917, 16
      %v1066 = vrot.slane %v1064, 7
      %v1067 = vshll.u32 %v917, 16
      %v1069 = vor.u32 %v1066, %v1067
      %v1070 = vsel %vm935, %v1062, %v1069
      %v1071 = vrot.slane %v1066, 4
      %v1073 = vshrl.u32 %v918, 16
      %v1075 = vrot.slane %v1073, 7
      %v1076 = vshll.u32 %v918, 16
      %v1078 = vor.u32 %v1075, %v1076
      %v1079 = vrot.slane %v1075, 4
      %v1081 = vshrl.u32 %v919, 16
      %v1083 = vrot.slane %v1081, 7
      %v1084 = vshll.u32 %v919, 16
      %v1086 = vor.u32 %v1083, %v1084
      %v1087 = vsel %vm935, %v1079, %v1086
      %v1088 = vrot.slane %v1083, 4
      %v1090 = vshrl.u32 %v920, 16
      %v1092 = vrot.slane %v1090, 7
      %v1093 = vshll.u32 %v920, 16
      %v1095 = vor.u32 %v1092, %v1093
      %v1096 = vrot.slane %v1092, 4
      %v1098 = vshrl.u32 %v921, 16
      %v1100 = vrot.slane %v1098, 7
      %v1101 = vshll.u32 %v921, 16
      %v1103 = vor.u32 %v1100, %v1101
      %v1104 = vsel %vm935, %v1096, %v1103
      %v1105 = vrot.slane %v1100, 4
      %v1107 = vshrl.u32 %v922, 16
      %v1109 = vrot.slane %v1107, 7
      %v1110 = vshll.u32 %v922, 16
      %v1112 = vor.u32 %v1109, %v1110
      %v1113 = vrot.slane %v1109, 4
      %v1115 = vshrl.u32 %v923, 16
      %v1117 = vrot.slane %v1115, 7
      %v1118 = vshll.u32 %v923, 16
      %v1120 = vor.u32 %v1117, %v1118
      %v1121 = vsel %vm935, %v1113, %v1120
      %v1122 = vrot.slane %v1117, 4
      %v1124 = vshrl.u32 %v924, 16
      %v1126 = vrot.slane %v1124, 7
      %v1127 = vshll.u32 %v924, 16
      %v1129 = vor.u32 %v1126, %v1127
      %v1130 = vrot.slane %v1126, 4
      %v1132 = vshrl.u32 %v925, 16
      %v1134 = vrot.slane %v1132, 7
      %v1135 = vshll.u32 %v925, 16
      %v1137 = vor.u32 %v1134, %v1135
      %v1138 = vsel %vm935, %v1130, %v1137
      %v1139 = vrot.slane %v1134, 4
      %v1141 = vshrl.u32 %v926, 16
      %v1143 = vrot.slane %v1141, 7
      %v1144 = vshll.u32 %v926, 16
      %v1146 = vor.u32 %v1143, %v1144
      %v1147 = vrot.slane %v1143, 4
      %v1149 = vshrl.u32 %v927, 16
      %v1151 = vrot.slane %v1149, 7
      %v1152 = vshll.u32 %v927, 16
      %v1154 = vor.u32 %v1151, %v1152
      %v1155 = vsel %vm935, %v1147, %v1154
      %v1156 = vrot.slane %v1151, 4
      %v1158 = vshrl.u32 %v928, 16
      %v1160 = vrot.slane %v1158, 7
      %v1161 = vshll.u32 %v928, 16
      %v1163 = vor.u32 %v1160, %v1161
      %v1164 = vrot.slane %v1160, 4
      %v1166 = vshrl.u32 %v929, 16
      %v1168 = vrot.slane %v1166, 7
      %v1169 = vshll.u32 %v929, 16
      %v1171 = vor.u32 %v1168, %v1169
      %v1172 = vsel %vm935, %v1164, %v1171
      %v1173 = vrot.slane %v1168, 4
      %v1175 = vshrl.u32 %v930, 16
      %v1177 = vrot.slane %v1175, 7
      %v1178 = vshll.u32 %v930, 16
      %v1180 = vor.u32 %v1177, %v1178
      %v1181 = vrot.slane %v1177, 4
      %v1183 = vshrl.u32 %v931, 16
      %v1185 = vrot.slane %v1183, 7
      %v1186 = vshll.u32 %v931, 16
      %v1188 = vor.u32 %v1185, %v1186
      %v1189 = vsel %vm935, %v1181, %v1188
      %v1190 = vrot.slane %v1185, 4
      %v1192 = vshrl.u32 %v932, 16
      %v1194 = vrot.slane %v1192, 7
      %v1195 = vshll.u32 %v932, 16
      %v1197 = vor.u32 %v1194, %v1195
      %v1198 = vrot.slane %v1194, 4
      %v1200 = vshrl.u32 %v933, 16
      %v1202 = vrot.slane %v1200, 7
      %v1203 = vshll.u32 %v933, 16
      %v1205 = vor.u32 %v1202, %v1203
      %v1206 = vsel %vm935, %v1198, %v1205
      %v1207 = vrot.slane %v1202, 4
      %s1256 = scalar_lea.vmem [#allocation2], 12
      %vm1257 = vcmask 60416
      %vm1258 = vmand %vm1257, %vm501
      %v1259 = vld [vmem:[%s1256] sm:$0xf]
      %v1260 = vsel %vm1258, %v942, %v1259
      %1261 = vst [vmem:[%s1256] sm:$0xf] %v1260
      %1262 = vst.msk [vmem:[%s1256 + $0x4] sm:$0xf] %vm435, %v951
      %v1263 = vld [vmem:[%s1256 + $0x8] sm:$0x1]
      %v1264 = vsel %vm446, %v952, %v1263
      %1265 = vst [vmem:[%s1256 + $0x8] sm:$0x1] %v1264
      %v1266 = vld [vmem:[%s1256 + $0xc] sm:$0xf]
      %v1267 = vsel %vm1258, %v959, %v1266
      %1268 = vst [vmem:[%s1256 + $0xc] sm:$0xf] %v1267
      %1269 = vst.msk [vmem:[%s1256 + $0x10] sm:$0xf] %vm435, %v968
      %v1270 = vld [vmem:[%s1256 + $0x14] sm:$0x1]
      %v1271 = vsel %vm446, %v969, %v1270
      %1272 = vst [vmem:[%s1256 + $0x14] sm:$0x1] %v1271
      %v1273 = vld [vmem:[%s1256 + $0x18] sm:$0xf]
      %v1274 = vsel %vm1258, %v976, %v1273
      %1275 = vst [vmem:[%s1256 + $0x18] sm:$0xf] %v1274
      %1276 = vst.msk [vmem:[%s1256 + $0x1c] sm:$0xf] %vm435, %v985
      %v1277 = vld [vmem:[%s1256 + $0x20] sm:$0x1]
      %v1278 = vsel %vm446, %v986, %v1277
      %1279 = vst [vmem:[%s1256 + $0x20] sm:$0x1] %v1278
      %v1280 = vld [vmem:[%s1256 + $0x24] sm:$0xf]
      %v1281 = vsel %vm1258, %v993, %v1280
      %1282 = vst [vmem:[%s1256 + $0x24] sm:$0xf] %v1281
      %1283 = vst.msk [vmem:[%s1256 + $0x28] sm:$0xf] %vm435, %v1002
      %v1284 = vld [vmem:[%s1256 + $0x2c] sm:$0x1]
      %v1285 = vsel %vm446, %v1003, %v1284
      %1286 = vst [vmem:[%s1256 + $0x2c] sm:$0x1] %v1285
      %v1287 = vld [vmem:[%s1256 + $0x30] sm:$0xf]
      %v1288 = vsel %vm1258, %v1010, %v1287
      %1289 = vst [vmem:[%s1256 + $0x30] sm:$0xf] %v1288
      %1290 = vst.msk [vmem:[%s1256 + $0x34] sm:$0xf] %vm435, %v1019
      %v1291 = vld [vmem:[%s1256 + $0x38] sm:$0x1]
      %v1292 = vsel %vm446, %v1020, %v1291
      %1293 = vst [vmem:[%s1256 + $0x38] sm:$0x1] %v1292
      %v1294 = vld [vmem:[%s1256 + $0x3c] sm:$0xf]
      %v1295 = vsel %vm1258, %v1027, %v1294
      %1296 = vst [vmem:[%s1256 + $0x3c] sm:$0xf] %v1295
      %1297 = vst.msk [vmem:[%s1256 + $0x40] sm:$0xf] %vm435, %v1036
      %v1298 = vld [vmem:[%s1256 + $0x44] sm:$0x1]
      %v1299 = vsel %vm446, %v1037, %v1298
      %1300 = vst [vmem:[%s1256 + $0x44] sm:$0x1] %v1299
      %v1301 = vld [vmem:[%s1256 + $0x48] sm:$0xf]
      %v1302 = vsel %vm1258, %v1044, %v1301
      %1303 = vst [vmem:[%s1256 + $0x48] sm:$0xf] %v1302
      %1304 = vst.msk [vmem:[%s1256 + $0x4c] sm:$0xf] %vm435, %v1053
      %v1305 = vld [vmem:[%s1256 + $0x50] sm:$0x1]
      %v1306 = vsel %vm446, %v1054, %v1305
      %1307 = vst [vmem:[%s1256 + $0x50] sm:$0x1] %v1306
      %v1308 = vld [vmem:[%s1256 + $0x54] sm:$0xf]
      %v1309 = vsel %vm1258, %v1061, %v1308
      %1310 = vst [vmem:[%s1256 + $0x54] sm:$0xf] %v1309
      %1311 = vst.msk [vmem:[%s1256 + $0x58] sm:$0xf] %vm435, %v1070
      %v1312 = vld [vmem:[%s1256 + $0x5c] sm:$0x1]
      %v1313 = vsel %vm446, %v1071, %v1312
      %1314 = vst [vmem:[%s1256 + $0x5c] sm:$0x1] %v1313
      %v1315 = vld [vmem:[%s1256 + $0x60] sm:$0xf]
      %v1316 = vsel %vm1258, %v1078, %v1315
      %1317 = vst [vmem:[%s1256 + $0x60] sm:$0xf] %v1316
      %1318 = vst.msk [vmem:[%s1256 + $0x64] sm:$0xf] %vm435, %v1087
      %v1319 = vld [vmem:[%s1256 + $0x68] sm:$0x1]
      %v1320 = vsel %vm446, %v1088, %v1319
      %1321 = vst [vmem:[%s1256 + $0x68] sm:$0x1] %v1320
      %v1322 = vld [vmem:[%s1256 + $0x6c] sm:$0xf]
      %v1323 = vsel %vm1258, %v1095, %v1322
      %1324 = vst [vmem:[%s1256 + $0x6c] sm:$0xf] %v1323
      %1325 = vst.msk [vmem:[%s1256 + $0x70] sm:$0xf] %vm435, %v1104
      %v1326 = vld [vmem:[%s1256 + $0x74] sm:$0x1]
      %v1327 = vsel %vm446, %v1105, %v1326
      %1328 = vst [vmem:[%s1256 + $0x74] sm:$0x1] %v1327
      %v1329 = vld [vmem:[%s1256 + $0x78] sm:$0xf]
      %v1330 = vsel %vm1258, %v1112, %v1329
      %1331 = vst [vmem:[%s1256 + $0x78] sm:$0xf] %v1330
      %1332 = vst.msk [vmem:[%s1256 + $0x7c] sm:$0xf] %vm435, %v1121
      %v1333 = vld [vmem:[%s1256 + $0x80] sm:$0x1]
      %v1334 = vsel %vm446, %v1122, %v1333
      %1335 = vst [vmem:[%s1256 + $0x80] sm:$0x1] %v1334
      %v1336 = vld [vmem:[%s1256 + $0x84] sm:$0xf]
      %v1337 = vsel %vm1258, %v1129, %v1336
      %1338 = vst [vmem:[%s1256 + $0x84] sm:$0xf] %v1337
      %1339 = vst.msk [vmem:[%s1256 + $0x88] sm:$0xf] %vm435, %v1138
      %v1340 = vld [vmem:[%s1256 + $0x8c] sm:$0x1]
      %v1341 = vsel %vm446, %v1139, %v1340
      %1342 = vst [vmem:[%s1256 + $0x8c] sm:$0x1] %v1341
      %v1343 = vld [vmem:[%s1256 + $0x90] sm:$0xf]
      %v1344 = vsel %vm1258, %v1146, %v1343
      %1345 = vst [vmem:[%s1256 + $0x90] sm:$0xf] %v1344
      %1346 = vst.msk [vmem:[%s1256 + $0x94] sm:$0xf] %vm435, %v1155
      %v1347 = vld [vmem:[%s1256 + $0x98] sm:$0x1]
      %v1348 = vsel %vm446, %v1156, %v1347
      %1349 = vst [vmem:[%s1256 + $0x98] sm:$0x1] %v1348
      %v1350 = vld [vmem:[%s1256 + $0x9c] sm:$0xf]
      %v1351 = vsel %vm1258, %v1163, %v1350
      %1352 = vst [vmem:[%s1256 + $0x9c] sm:$0xf] %v1351
      %1353 = vst.msk [vmem:[%s1256 + $0xa0] sm:$0xf] %vm435, %v1172
      %v1354 = vld [vmem:[%s1256 + $0xa4] sm:$0x1]
      %v1355 = vsel %vm446, %v1173, %v1354
      %1356 = vst [vmem:[%s1256 + $0xa4] sm:$0x1] %v1355
      %v1357 = vld [vmem:[%s1256 + $0xa8] sm:$0xf]
      %v1358 = vsel %vm1258, %v1180, %v1357
      %1359 = vst [vmem:[%s1256 + $0xa8] sm:$0xf] %v1358
      %1360 = vst.msk [vmem:[%s1256 + $0xac] sm:$0xf] %vm435, %v1189
      %v1361 = vld [vmem:[%s1256 + $0xb0] sm:$0x1]
      %v1362 = vsel %vm446, %v1190, %v1361
      %1363 = vst [vmem:[%s1256 + $0xb0] sm:$0x1] %v1362
      %v1364 = vld [vmem:[%s1256 + $0xb4] sm:$0xf]
      %v1365 = vsel %vm1258, %v1197, %v1364
      %1366 = vst [vmem:[%s1256 + $0xb4] sm:$0xf] %v1365
      %1367 = vst.msk [vmem:[%s1256 + $0xb8] sm:$0xf] %vm435, %v1206
      %v1368 = vld [vmem:[%s1256 + $0xbc] sm:$0x1]
      %v1369 = vsel %vm446, %v1207, %v1368
      %1370 = vst [vmem:[%s1256 + $0xbc] sm:$0x1] %v1369
      %v1371 = vld [vmem:[%s428] sm:$0xf]
      %v1372 = vld [vmem:[%s428 + $0x4] sm:$0xf]
      %v1373 = vld [vmem:[%s428 + $0x8] sm:$0xf]
      %v1374 = vld [vmem:[%s428 + $0xc] sm:$0xf]
      %v1375 = vld [vmem:[%s428 + $0x10] sm:$0xf]
      %v1376 = vld [vmem:[%s428 + $0x14] sm:$0xf]
      %v1377 = vld [vmem:[%s428 + $0x18] sm:$0xf]
      %v1378 = vld [vmem:[%s428 + $0x1c] sm:$0xf]
      %v1379 = vld [vmem:[%s428 + $0x20] sm:$0xf]
      %v1380 = vld [vmem:[%s428 + $0x24] sm:$0xf]
      %v1381 = vld [vmem:[%s428 + $0x28] sm:$0xf]
      %v1382 = vld [vmem:[%s428 + $0x2c] sm:$0xf]
      %v1383 = vld [vmem:[%s428 + $0x30] sm:$0xf]
      %v1384 = vld [vmem:[%s428 + $0x34] sm:$0xf]
      %v1385 = vld [vmem:[%s428 + $0x38] sm:$0xf]
      %v1386 = vld [vmem:[%s428 + $0x3c] sm:$0xf]
      %v1387 = vld [vmem:[%s428 + $0x40] sm:$0xf]
      %v1388 = vld [vmem:[%s428 + $0x44] sm:$0xf]
      %v1389 = vld [vmem:[%s428 + $0x48] sm:$0xf]
      %v1390 = vld [vmem:[%s428 + $0x4c] sm:$0xf]
      %v1391 = vld [vmem:[%s428 + $0x50] sm:$0xf]
      %v1392 = vld [vmem:[%s428 + $0x54] sm:$0xf]
      %v1393 = vld [vmem:[%s428 + $0x58] sm:$0xf]
      %v1394 = vld [vmem:[%s428 + $0x5c] sm:$0xf]
      %v1395 = vld [vmem:[%s428 + $0x60] sm:$0xf]
      %v1396 = vld [vmem:[%s428 + $0x64] sm:$0xf]
      %v1397 = vld [vmem:[%s428 + $0x68] sm:$0xf]
      %v1398 = vld [vmem:[%s428 + $0x6c] sm:$0xf]
      %v1399 = vld [vmem:[%s428 + $0x70] sm:$0xf]
      %v1400 = vld [vmem:[%s428 + $0x74] sm:$0xf]
      %v1401 = vld [vmem:[%s428 + $0x78] sm:$0xf]
      %v1402 = vld [vmem:[%s428 + $0x7c] sm:$0xf]
      %v1404 = vshrl.u32 %v1371, 16
      %v1406 = vrot.slane %v1404, 7
      %v1407 = vshll.u32 %v1371, 16
      %v1409 = vor.u32 %v1406, %v1407
      %v1410 = vrot.slane %v1406, 4
      %v1412 = vshrl.u32 %v1372, 16
      %v1414 = vrot.slane %v1412, 7
      %v1415 = vshll.u32 %v1372, 16
      %v1417 = vor.u32 %v1414, %v1415
      %v1418 = vsel %vm935, %v1410, %v1417
      %v1419 = vrot.slane %v1414, 4
      %v1421 = vshrl.u32 %v1373, 16
      %v1423 = vrot.slane %v1421, 7
      %v1424 = vshll.u32 %v1373, 16
      %v1426 = vor.u32 %v1423, %v1424
      %v1427 = vrot.slane %v1423, 4
      %v1429 = vshrl.u32 %v1374, 16
      %v1431 = vrot.slane %v1429, 7
      %v1432 = vshll.u32 %v1374, 16
      %v1434 = vor.u32 %v1431, %v1432
      %v1435 = vsel %vm935, %v1427, %v1434
      %v1436 = vrot.slane %v1431, 4
      %v1438 = vshrl.u32 %v1375, 16
      %v1440 = vrot.slane %v1438, 7
      %v1441 = vshll.u32 %v1375, 16
      %v1443 = vor.u32 %v1440, %v1441
      %v1444 = vrot.slane %v1440, 4
      %v1446 = vshrl.u32 %v1376, 16
      %v1448 = vrot.slane %v1446, 7
      %v1449 = vshll.u32 %v1376, 16
      %v1451 = vor.u32 %v1448, %v1449
      %v1452 = vsel %vm935, %v1444, %v1451
      %v1453 = vrot.slane %v1448, 4
      %v1455 = vshrl.u32 %v1377, 16
      %v1457 = vrot.slane %v1455, 7
      %v1458 = vshll.u32 %v1377, 16
      %v1460 = vor.u32 %v1457, %v1458
      %v1461 = vrot.slane %v1457, 4
      %v1463 = vshrl.u32 %v1378, 16
      %v1465 = vrot.slane %v1463, 7
      %v1466 = vshll.u32 %v1378, 16
      %v1468 = vor.u32 %v1465, %v1466
      %v1469 = vsel %vm935, %v1461, %v1468
      %v1470 = vrot.slane %v1465, 4
      %v1472 = vshrl.u32 %v1379, 16
      %v1474 = vrot.slane %v1472, 7
      %v1475 = vshll.u32 %v1379, 16
      %v1477 = vor.u32 %v1474, %v1475
      %v1478 = vrot.slane %v1474, 4
      %v1480 = vshrl.u32 %v1380, 16
      %v1482 = vrot.slane %v1480, 7
      %v1483 = vshll.u32 %v1380, 16
      %v1485 = vor.u32 %v1482, %v1483
      %v1486 = vsel %vm935, %v1478, %v1485
      %v1487 = vrot.slane %v1482, 4
      %v1489 = vshrl.u32 %v1381, 16
      %v1491 = vrot.slane %v1489, 7
      %v1492 = vshll.u32 %v1381, 16
      %v1494 = vor.u32 %v1491, %v1492
      %v1495 = vrot.slane %v1491, 4
      %v1497 = vshrl.u32 %v1382, 16
      %v1499 = vrot.slane %v1497, 7
      %v1500 = vshll.u32 %v1382, 16
      %v1502 = vor.u32 %v1499, %v1500
      %v1503 = vsel %vm935, %v1495, %v1502
      %v1504 = vrot.slane %v1499, 4
      %v1506 = vshrl.u32 %v1383, 16
      %v1508 = vrot.slane %v1506, 7
      %v1509 = vshll.u32 %v1383, 16
      %v1511 = vor.u32 %v1508, %v1509
      %v1512 = vrot.slane %v1508, 4
      %v1514 = vshrl.u32 %v1384, 16
      %v1516 = vrot.slane %v1514, 7
      %v1517 = vshll.u32 %v1384, 16
      %v1519 = vor.u32 %v1516, %v1517
      %v1520 = vsel %vm935, %v1512, %v1519
      %v1521 = vrot.slane %v1516, 4
      %v1523 = vshrl.u32 %v1385, 16
      %v1525 = vrot.slane %v1523, 7
      %v1526 = vshll.u32 %v1385, 16
      %v1528 = vor.u32 %v1525, %v1526
      %v1529 = vrot.slane %v1525, 4
      %v1531 = vshrl.u32 %v1386, 16
      %v1533 = vrot.slane %v1531, 7
      %v1534 = vshll.u32 %v1386, 16
      %v1536 = vor.u32 %v1533, %v1534
      %v1537 = vsel %vm935, %v1529, %v1536
      %v1538 = vrot.slane %v1533, 4
      %v1540 = vshrl.u32 %v1387, 16
      %v1542 = vrot.slane %v1540, 7
      %v1543 = vshll.u32 %v1387, 16
      %v1545 = vor.u32 %v1542, %v1543
      %v1546 = vrot.slane %v1542, 4
      %v1548 = vshrl.u32 %v1388, 16
      %v1550 = vrot.slane %v1548, 7
      %v1551 = vshll.u32 %v1388, 16
      %v1553 = vor.u32 %v1550, %v1551
      %v1554 = vsel %vm935, %v1546, %v1553
      %v1555 = vrot.slane %v1550, 4
      %v1557 = vshrl.u32 %v1389, 16
      %v1559 = vrot.slane %v1557, 7
      %v1560 = vshll.u32 %v1389, 16
      %v1562 = vor.u32 %v1559, %v1560
      %v1563 = vrot.slane %v1559, 4
      %v1565 = vshrl.u32 %v1390, 16
      %v1567 = vrot.slane %v1565, 7
      %v1568 = vshll.u32 %v1390, 16
      %v1570 = vor.u32 %v1567, %v1568
      %v1571 = vsel %vm935, %v1563, %v1570
      %v1572 = vrot.slane %v1567, 4
      %v1574 = vshrl.u32 %v1391, 16
      %v1576 = vrot.slane %v1574, 7
      %v1577 = vshll.u32 %v1391, 16
      %v1579 = vor.u32 %v1576, %v1577
      %v1580 = vrot.slane %v1576, 4
      %v1582 = vshrl.u32 %v1392, 16
      %v1584 = vrot.slane %v1582, 7
      %v1585 = vshll.u32 %v1392, 16
      %v1587 = vor.u32 %v1584, %v1585
      %v1588 = vsel %vm935, %v1580, %v1587
      %v1589 = vrot.slane %v1584, 4
      %v1591 = vshrl.u32 %v1393, 16
      %v1593 = vrot.slane %v1591, 7
      %v1594 = vshll.u32 %v1393, 16
      %v1596 = vor.u32 %v1593, %v1594
      %v1597 = vrot.slane %v1593, 4
      %v1599 = vshrl.u32 %v1394, 16
      %v1601 = vrot.slane %v1599, 7
      %v1602 = vshll.u32 %v1394, 16
      %v1604 = vor.u32 %v1601, %v1602
      %v1605 = vsel %vm935, %v1597, %v1604
      %v1606 = vrot.slane %v1601, 4
      %v1608 = vshrl.u32 %v1395, 16
      %v1610 = vrot.slane %v1608, 7
      %v1611 = vshll.u32 %v1395, 16
      %v1613 = vor.u32 %v1610, %v1611
      %v1614 = vrot.slane %v1610, 4
      %v1616 = vshrl.u32 %v1396, 16
      %v1618 = vrot.slane %v1616, 7
      %v1619 = vshll.u32 %v1396, 16
      %v1621 = vor.u32 %v1618, %v1619
      %v1622 = vsel %vm935, %v1614, %v1621
      %v1623 = vrot.slane %v1618, 4
      %v1625 = vshrl.u32 %v1397, 16
      %v1627 = vrot.slane %v1625, 7
      %v1628 = vshll.u32 %v1397, 16
      %v1630 = vor.u32 %v1627, %v1628
      %v1631 = vrot.slane %v1627, 4
      %v1633 = vshrl.u32 %v1398, 16
      %v1635 = vrot.slane %v1633, 7
      %v1636 = vshll.u32 %v1398, 16
      %v1638 = vor.u32 %v1635, %v1636
      %v1639 = vsel %vm935, %v1631, %v1638
      %v1640 = vrot.slane %v1635, 4
      %v1642 = vshrl.u32 %v1399, 16
      %v1644 = vrot.slane %v1642, 7
      %v1645 = vshll.u32 %v1399, 16
      %v1647 = vor.u32 %v1644, %v1645
      %v1648 = vrot.slane %v1644, 4
      %v1650 = vshrl.u32 %v1400, 16
      %v1652 = vrot.slane %v1650, 7
      %v1653 = vshll.u32 %v1400, 16
      %v1655 = vor.u32 %v1652, %v1653
      %v1656 = vsel %vm935, %v1648, %v1655
      %v1657 = vrot.slane %v1652, 4
      %v1659 = vshrl.u32 %v1401, 16
      %v1661 = vrot.slane %v1659, 7
      %v1662 = vshll.u32 %v1401, 16
      %v1664 = vor.u32 %v1661, %v1662
      %v1665 = vrot.slane %v1661, 4
      %v1667 = vshrl.u32 %v1402, 16
      %v1669 = vrot.slane %v1667, 7
      %v1670 = vshll.u32 %v1402, 16
      %v1672 = vor.u32 %v1669, %v1670
      %v1673 = vsel %vm935, %v1665, %v1672
      %v1674 = vrot.slane %v1669, 4
      %s1723 = scalar_lea.vmem [#allocation3], 12
      %v1724 = vld [vmem:[%s1723] sm:$0xf]
      %v1725 = vsel %vm1258, %v1409, %v1724
      %1726 = vst [vmem:[%s1723] sm:$0xf] %v1725
      %1727 = vst.msk [vmem:[%s1723 + $0x4] sm:$0xf] %vm435, %v1418
      %v1728 = vld [vmem:[%s1723 + $0x8] sm:$0x1]
      %v1729 = vsel %vm446, %v1419, %v1728
      %1730 = vst [vmem:[%s1723 + $0x8] sm:$0x1] %v1729
      %v1731 = vld [vmem:[%s1723 + $0xc] sm:$0xf]
      %v1732 = vsel %vm1258, %v1426, %v1731
      %1733 = vst [vmem:[%s1723 + $0xc] sm:$0xf] %v1732
      %1734 = vst.msk [vmem:[%s1723 + $0x10] sm:$0xf] %vm435, %v1435
      %v1735 = vld [vmem:[%s1723 + $0x14] sm:$0x1]
      %v1736 = vsel %vm446, %v1436, %v1735
      %1737 = vst [vmem:[%s1723 + $0x14] sm:$0x1] %v1736
      %v1738 = vld [vmem:[%s1723 + $0x18] sm:$0xf]
      %v1739 = vsel %vm1258, %v1443, %v1738
      %1740 = vst [vmem:[%s1723 + $0x18] sm:$0xf] %v1739
      %1741 = vst.msk [vmem:[%s1723 + $0x1c] sm:$0xf] %vm435, %v1452
      %v1742 = vld [vmem:[%s1723 + $0x20] sm:$0x1]
      %v1743 = vsel %vm446, %v1453, %v1742
      %1744 = vst [vmem:[%s1723 + $0x20] sm:$0x1] %v1743
      %v1745 = vld [vmem:[%s1723 + $0x24] sm:$0xf]
      %v1746 = vsel %vm1258, %v1460, %v1745
      %1747 = vst [vmem:[%s1723 + $0x24] sm:$0xf] %v1746
      %1748 = vst.msk [vmem:[%s1723 + $0x28] sm:$0xf] %vm435, %v1469
      %v1749 = vld [vmem:[%s1723 + $0x2c] sm:$0x1]
      %v1750 = vsel %vm446, %v1470, %v1749
      %1751 = vst [vmem:[%s1723 + $0x2c] sm:$0x1] %v1750
      %v1752 = vld [vmem:[%s1723 + $0x30] sm:$0xf]
      %v1753 = vsel %vm1258, %v1477, %v1752
      %1754 = vst [vmem:[%s1723 + $0x30] sm:$0xf] %v1753
      %1755 = vst.msk [vmem:[%s1723 + $0x34] sm:$0xf] %vm435, %v1486
      %v1756 = vld [vmem:[%s1723 + $0x38] sm:$0x1]
      %v1757 = vsel %vm446, %v1487, %v1756
      %1758 = vst [vmem:[%s1723 + $0x38] sm:$0x1] %v1757
      %v1759 = vld [vmem:[%s1723 + $0x3c] sm:$0xf]
      %v1760 = vsel %vm1258, %v1494, %v1759
      %1761 = vst [vmem:[%s1723 + $0x3c] sm:$0xf] %v1760
      %1762 = vst.msk [vmem:[%s1723 + $0x40] sm:$0xf] %vm435, %v1503
      %v1763 = vld [vmem:[%s1723 + $0x44] sm:$0x1]
      %v1764 = vsel %vm446, %v1504, %v1763
      %1765 = vst [vmem:[%s1723 + $0x44] sm:$0x1] %v1764
      %v1766 = vld [vmem:[%s1723 + $0x48] sm:$0xf]
      %v1767 = vsel %vm1258, %v1511, %v1766
      %1768 = vst [vmem:[%s1723 + $0x48] sm:$0xf] %v1767
      %1769 = vst.msk [vmem:[%s1723 + $0x4c] sm:$0xf] %vm435, %v1520
      %v1770 = vld [vmem:[%s1723 + $0x50] sm:$0x1]
      %v1771 = vsel %vm446, %v1521, %v1770
      %1772 = vst [vmem:[%s1723 + $0x50] sm:$0x1] %v1771
      %v1773 = vld [vmem:[%s1723 + $0x54] sm:$0xf]
      %v1774 = vsel %vm1258, %v1528, %v1773
      %1775 = vst [vmem:[%s1723 + $0x54] sm:$0xf] %v1774
      %1776 = vst.msk [vmem:[%s1723 + $0x58] sm:$0xf] %vm435, %v1537
      %v1777 = vld [vmem:[%s1723 + $0x5c] sm:$0x1]
      %v1778 = vsel %vm446, %v1538, %v1777
      %1779 = vst [vmem:[%s1723 + $0x5c] sm:$0x1] %v1778
      %v1780 = vld [vmem:[%s1723 + $0x60] sm:$0xf]
      %v1781 = vsel %vm1258, %v1545, %v1780
      %1782 = vst [vmem:[%s1723 + $0x60] sm:$0xf] %v1781
      %1783 = vst.msk [vmem:[%s1723 + $0x64] sm:$0xf] %vm435, %v1554
      %v1784 = vld [vmem:[%s1723 + $0x68] sm:$0x1]
      %v1785 = vsel %vm446, %v1555, %v1784
      %1786 = vst [vmem:[%s1723 + $0x68] sm:$0x1] %v1785
      %v1787 = vld [vmem:[%s1723 + $0x6c] sm:$0xf]
      %v1788 = vsel %vm1258, %v1562, %v1787
      %1789 = vst [vmem:[%s1723 + $0x6c] sm:$0xf] %v1788
      %1790 = vst.msk [vmem:[%s1723 + $0x70] sm:$0xf] %vm435, %v1571
      %v1791 = vld [vmem:[%s1723 + $0x74] sm:$0x1]
      %v1792 = vsel %vm446, %v1572, %v1791
      %1793 = vst [vmem:[%s1723 + $0x74] sm:$0x1] %v1792
      %v1794 = vld [vmem:[%s1723 + $0x78] sm:$0xf]
      %v1795 = vsel %vm1258, %v1579, %v1794
      %1796 = vst [vmem:[%s1723 + $0x78] sm:$0xf] %v1795
      %1797 = vst.msk [vmem:[%s1723 + $0x7c] sm:$0xf] %vm435, %v1588
      %v1798 = vld [vmem:[%s1723 + $0x80] sm:$0x1]
      %v1799 = vsel %vm446, %v1589, %v1798
      %1800 = vst [vmem:[%s1723 + $0x80] sm:$0x1] %v1799
      %v1801 = vld [vmem:[%s1723 + $0x84] sm:$0xf]
      %v1802 = vsel %vm1258, %v1596, %v1801
      %1803 = vst [vmem:[%s1723 + $0x84] sm:$0xf] %v1802
      %1804 = vst.msk [vmem:[%s1723 + $0x88] sm:$0xf] %vm435, %v1605
      %v1805 = vld [vmem:[%s1723 + $0x8c] sm:$0x1]
      %v1806 = vsel %vm446, %v1606, %v1805
      %1807 = vst [vmem:[%s1723 + $0x8c] sm:$0x1] %v1806
      %v1808 = vld [vmem:[%s1723 + $0x90] sm:$0xf]
      %v1809 = vsel %vm1258, %v1613, %v1808
      %1810 = vst [vmem:[%s1723 + $0x90] sm:$0xf] %v1809
      %1811 = vst.msk [vmem:[%s1723 + $0x94] sm:$0xf] %vm435, %v1622
      %v1812 = vld [vmem:[%s1723 + $0x98] sm:$0x1]
      %v1813 = vsel %vm446, %v1623, %v1812
      %1814 = vst [vmem:[%s1723 + $0x98] sm:$0x1] %v1813
      %v1815 = vld [vmem:[%s1723 + $0x9c] sm:$0xf]
      %v1816 = vsel %vm1258, %v1630, %v1815
      %1817 = vst [vmem:[%s1723 + $0x9c] sm:$0xf] %v1816
      %1818 = vst.msk [vmem:[%s1723 + $0xa0] sm:$0xf] %vm435, %v1639
      %v1819 = vld [vmem:[%s1723 + $0xa4] sm:$0x1]
      %v1820 = vsel %vm446, %v1640, %v1819
      %1821 = vst [vmem:[%s1723 + $0xa4] sm:$0x1] %v1820
      %v1822 = vld [vmem:[%s1723 + $0xa8] sm:$0xf]
      %v1823 = vsel %vm1258, %v1647, %v1822
      %1824 = vst [vmem:[%s1723 + $0xa8] sm:$0xf] %v1823
      %1825 = vst.msk [vmem:[%s1723 + $0xac] sm:$0xf] %vm435, %v1656
      %v1826 = vld [vmem:[%s1723 + $0xb0] sm:$0x1]
      %v1827 = vsel %vm446, %v1657, %v1826
      %1828 = vst [vmem:[%s1723 + $0xb0] sm:$0x1] %v1827
      %v1829 = vld [vmem:[%s1723 + $0xb4] sm:$0xf]
      %v1830 = vsel %vm1258, %v1664, %v1829
      %1831 = vst [vmem:[%s1723 + $0xb4] sm:$0xf] %v1830
      %1832 = vst.msk [vmem:[%s1723 + $0xb8] sm:$0xf] %vm435, %v1673
      %v1833 = vld [vmem:[%s1723 + $0xbc] sm:$0x1]
      %v1834 = vsel %vm446, %v1674, %v1833
      %1835 = vst [vmem:[%s1723 + $0xbc] sm:$0x1] %v1834
      %v1836 = vld [vmem:[#allocation2] sm:$0xf]
      %v1837 = vld [vmem:[#allocation2 + $0x4] sm:$0xf]
      %v1838 = vld [vmem:[#allocation2 + $0x8] sm:$0x1]
      %v1839 = vld [vmem:[#allocation2 + $0xc] sm:$0xf]
      %v1840 = vld [vmem:[#allocation2 + $0x10] sm:$0xf]
      %v1841 = vld [vmem:[#allocation2 + $0x14] sm:$0x1]
      %v1842 = vld [vmem:[#allocation2 + $0x18] sm:$0xf]
      %v1843 = vld [vmem:[#allocation2 + $0x1c] sm:$0xf]
      %v1844 = vld [vmem:[#allocation2 + $0x20] sm:$0x1]
      %v1845 = vld [vmem:[#allocation2 + $0x24] sm:$0xf]
      %v1846 = vld [vmem:[#allocation2 + $0x28] sm:$0xf]
      %v1847 = vld [vmem:[#allocation2 + $0x2c] sm:$0x1]
      %v1848 = vld [vmem:[#allocation2 + $0x30] sm:$0xf]
      %v1849 = vld [vmem:[#allocation2 + $0x34] sm:$0xf]
      %v1850 = vld [vmem:[#allocation2 + $0x38] sm:$0x1]
      %v1851 = vld [vmem:[#allocation2 + $0x3c] sm:$0xf]
      %v1852 = vld [vmem:[#allocation2 + $0x40] sm:$0xf]
      %v1853 = vld [vmem:[#allocation2 + $0x44] sm:$0x1]
      %v1854 = vld [vmem:[#allocation2 + $0x48] sm:$0xf]
      %v1855 = vld [vmem:[#allocation2 + $0x4c] sm:$0xf]
      %v1856 = vld [vmem:[#allocation2 + $0x50] sm:$0x1]
      %v1857 = vld [vmem:[#allocation2 + $0x54] sm:$0xf]
      %v1858 = vld [vmem:[#allocation2 + $0x58] sm:$0xf]
      %v1859 = vld [vmem:[#allocation2 + $0x5c] sm:$0x1]
      %v1860 = vld [vmem:[#allocation2 + $0x60] sm:$0xf]
      %v1861 = vld [vmem:[#allocation2 + $0x64] sm:$0xf]
      %v1862 = vld [vmem:[#allocation2 + $0x68] sm:$0x1]
      %v1863 = vld [vmem:[#allocation2 + $0x6c] sm:$0xf]
      %v1864 = vld [vmem:[#allocation2 + $0x70] sm:$0xf]
      %v1865 = vld [vmem:[#allocation2 + $0x74] sm:$0x1]
      %v1866 = vld [vmem:[#allocation2 + $0x78] sm:$0xf]
      %v1867 = vld [vmem:[#allocation2 + $0x7c] sm:$0xf]
      %v1868 = vld [vmem:[#allocation2 + $0x80] sm:$0x1]
      %v1869 = vld [vmem:[#allocation2 + $0x84] sm:$0xf]
      %v1870 = vld [vmem:[#allocation2 + $0x88] sm:$0xf]
      %v1871 = vld [vmem:[#allocation2 + $0x8c] sm:$0x1]
      %v1872 = vld [vmem:[#allocation2 + $0x90] sm:$0xf]
      %v1873 = vld [vmem:[#allocation2 + $0x94] sm:$0xf]
      %v1874 = vld [vmem:[#allocation2 + $0x98] sm:$0x1]
      %v1875 = vld [vmem:[#allocation2 + $0x9c] sm:$0xf]
      %v1876 = vld [vmem:[#allocation2 + $0xa0] sm:$0xf]
      %v1877 = vld [vmem:[#allocation2 + $0xa4] sm:$0x1]
      %v1878 = vld [vmem:[#allocation2 + $0xa8] sm:$0xf]
      %v1879 = vld [vmem:[#allocation2 + $0xac] sm:$0xf]
      %v1880 = vld [vmem:[#allocation2 + $0xb0] sm:$0x1]
      %v1881 = vld [vmem:[#allocation2 + $0xb4] sm:$0xf]
      %v1882 = vld [vmem:[#allocation2 + $0xb8] sm:$0xf]
      %v1883 = vld [vmem:[#allocation2 + $0xbc] sm:$0x1]
      %v1884 = vld [vmem:[#allocation2 + $0xc0] sm:$0xf]
      %v1885 = vld [vmem:[#allocation2 + $0xc4] sm:$0xf]
      %v1886 = vld [vmem:[#allocation2 + $0xc8] sm:$0x1]
      %v1887 = vld [vmem:[#allocation2 + $0xcc] sm:$0xf]
      %v1888 = vld [vmem:[#allocation2 + $0xd0] sm:$0xf]
      %v1889 = vld [vmem:[#allocation2 + $0xd4] sm:$0x1]
      %v1922 = vunpack.c.l.b16 %v1836
      %v1923 = vunpack.c.l.b16 %v1837
      %v1924 = vunpack.c.l.b16 %v1839
      %v1925 = vunpack.c.l.b16 %v1840
      %v1926 = vunpack.c.l.b16 %v1842
      %v1927 = vunpack.c.l.b16 %v1843
      %v1928 = vunpack.c.l.b16 %v1845
      %v1929 = vunpack.c.l.b16 %v1846
      %v1930 = vunpack.c.l.b16 %v1848
      %v1931 = vunpack.c.l.b16 %v1849
      %v1932 = vunpack.c.l.b16 %v1851
      %v1933 = vunpack.c.l.b16 %v1852
      %v1934 = vunpack.c.l.b16 %v1854
      %v1935 = vunpack.c.l.b16 %v1855
      %v1936 = vunpack.c.l.b16 %v1857
      %v1937 = vunpack.c.l.b16 %v1858
      %v1938 = vunpack.c.l.b16 %v1860
      %v1939 = vunpack.c.l.b16 %v1861
      %v1940 = vunpack.c.l.b16 %v1863
      %v1941 = vunpack.c.l.b16 %v1864
      %v1942 = vunpack.c.l.b16 %v1866
      %v1943 = vunpack.c.l.b16 %v1867
      %v1944 = vunpack.c.l.b16 %v1869
      %v1945 = vunpack.c.l.b16 %v1870
      %v1946 = vunpack.c.l.b16 %v1872
      %v1947 = vunpack.c.l.b16 %v1873
      %v1948 = vunpack.c.l.b16 %v1875
      %v1949 = vunpack.c.l.b16 %v1876
      %v1950 = vunpack.c.l.b16 %v1878
      %v1951 = vunpack.c.l.b16 %v1879
      %v1952 = vunpack.c.l.b16 %v1881
      %v1953 = vunpack.c.l.b16 %v1882
      %v1954 = vpack.c.b16 %v1923, %v1922
      %v1955 = vpack.c.b16 %v1925, %v1924
      %v1956 = vpack.c.b16 %v1927, %v1926
      %v1957 = vpack.c.b16 %v1929, %v1928
      %v1958 = vpack.c.b16 %v1931, %v1930
      %v1959 = vpack.c.b16 %v1933, %v1932
      %v1960 = vpack.c.b16 %v1935, %v1934
      %v1961 = vpack.c.b16 %v1937, %v1936
      %v1962 = vpack.c.b16 %v1939, %v1938
      %v1963 = vpack.c.b16 %v1941, %v1940
      %v1964 = vpack.c.b16 %v1943, %v1942
      %v1965 = vpack.c.b16 %v1945, %v1944
      %v1966 = vpack.c.b16 %v1947, %v1946
      %v1967 = vpack.c.b16 %v1949, %v1948
      %v1968 = vpack.c.b16 %v1951, %v1950
      %v1969 = vpack.c.b16 %v1953, %v1952
      %v1986 = vunpack.c.l.b16 %v1838
      %v1987 = vunpack.c.l.b16 %v1841
      %v1988 = vunpack.c.l.b16 %v1844
      %v1989 = vunpack.c.l.b16 %v1847
      %v1990 = vunpack.c.l.b16 %v1850
      %v1991 = vunpack.c.l.b16 %v1853
      %v1992 = vunpack.c.l.b16 %v1856
      %v1993 = vunpack.c.l.b16 %v1859
      %v1994 = vunpack.c.l.b16 %v1862
      %v1995 = vunpack.c.l.b16 %v1865
      %v1996 = vunpack.c.l.b16 %v1868
      %v1997 = vunpack.c.l.b16 %v1871
      %v1998 = vunpack.c.l.b16 %v1874
      %v1999 = vunpack.c.l.b16 %v1877
      %v2000 = vunpack.c.l.b16 %v1880
      %v2001 = vunpack.c.l.b16 %v1883
      %v2002 = vpack.c.b16 %v1986, %v1986
      %v2003 = vpack.c.b16 %v1987, %v1987
      %v2004 = vpack.c.b16 %v1988, %v1988
      %v2005 = vpack.c.b16 %v1989, %v1989
      %v2006 = vpack.c.b16 %v1990, %v1990
      %v2007 = vpack.c.b16 %v1991, %v1991
      %v2008 = vpack.c.b16 %v1992, %v1992
      %v2009 = vpack.c.b16 %v1993, %v1993
      %v2010 = vpack.c.b16 %v1994, %v1994
      %v2011 = vpack.c.b16 %v1995, %v1995
      %v2012 = vpack.c.b16 %v1996, %v1996
      %v2013 = vpack.c.b16 %v1997, %v1997
      %v2014 = vpack.c.b16 %v1998, %v1998
      %v2015 = vpack.c.b16 %v1999, %v1999
      %v2016 = vpack.c.b16 %v2000, %v2000
      %v2017 = vpack.c.b16 %v2001, %v2001
      %vm2018 = vsmask.f32 7424
      %v2020 = vshrl.u32 %v1954, 16
      %v2022 = vshll.u32 %v1954, 16
      %v2024 = vrot.slane %v2022, 1
      %v2025 = vor.u32 %v2020, %v2024
      %v2027 = vshll.u32 %v2002, 16
      %v2029 = vrot.slane %v2027, 1
      %v2030 = vsel %vm2018, %v2025, %v2029
      %v2032 = vshrl.u32 %v1955, 16
      %v2034 = vshll.u32 %v1955, 16
      %v2036 = vrot.slane %v2034, 1
      %v2037 = vor.u32 %v2032, %v2036
      %v2039 = vshll.u32 %v2003, 16
      %v2041 = vrot.slane %v2039, 1
      %v2042 = vsel %vm2018, %v2037, %v2041
      %v2044 = vshrl.u32 %v1956, 16
      %v2046 = vshll.u32 %v1956, 16
      %v2048 = vrot.slane %v2046, 1
      %v2049 = vor.u32 %v2044, %v2048
      %v2051 = vshll.u32 %v2004, 16
      %v2053 = vrot.slane %v2051, 1
      %v2054 = vsel %vm2018, %v2049, %v2053
      %v2056 = vshrl.u32 %v1957, 16
      %v2058 = vshll.u32 %v1957, 16
      %v2060 = vrot.slane %v2058, 1
      %v2061 = vor.u32 %v2056, %v2060
      %v2063 = vshll.u32 %v2005, 16
      %v2065 = vrot.slane %v2063, 1
      %v2066 = vsel %vm2018, %v2061, %v2065
      %v2068 = vshrl.u32 %v1958, 16
      %v2070 = vshll.u32 %v1958, 16
      %v2072 = vrot.slane %v2070, 1
      %v2073 = vor.u32 %v2068, %v2072
      %v2075 = vshll.u32 %v2006, 16
      %v2077 = vrot.slane %v2075, 1
      %v2078 = vsel %vm2018, %v2073, %v2077
      %v2080 = vshrl.u32 %v1959, 16
      %v2082 = vshll.u32 %v1959, 16
      %v2084 = vrot.slane %v2082, 1
      %v2085 = vor.u32 %v2080, %v2084
      %v2087 = vshll.u32 %v2007, 16
      %v2089 = vrot.slane %v2087, 1
      %v2090 = vsel %vm2018, %v2085, %v2089
      %v2092 = vshrl.u32 %v1960, 16
      %v2094 = vshll.u32 %v1960, 16
      %v2096 = vrot.slane %v2094, 1
      %v2097 = vor.u32 %v2092, %v2096
      %v2099 = vshll.u32 %v2008, 16
      %v2101 = vrot.slane %v2099, 1
      %v2102 = vsel %vm2018, %v2097, %v2101
      %v2104 = vshrl.u32 %v1961, 16
      %v2106 = vshll.u32 %v1961, 16
      %v2108 = vrot.slane %v2106, 1
      %v2109 = vor.u32 %v2104, %v2108
      %v2111 = vshll.u32 %v2009, 16
      %v2113 = vrot.slane %v2111, 1
      %v2114 = vsel %vm2018, %v2109, %v2113
      %v2116 = vshrl.u32 %v1962, 16
      %v2118 = vshll.u32 %v1962, 16
      %v2120 = vrot.slane %v2118, 1
      %v2121 = vor.u32 %v2116, %v2120
      %v2123 = vshll.u32 %v2010, 16
      %v2125 = vrot.slane %v2123, 1
      %v2126 = vsel %vm2018, %v2121, %v2125
      %v2128 = vshrl.u32 %v1963, 16
      %v2130 = vshll.u32 %v1963, 16
      %v2132 = vrot.slane %v2130, 1
      %v2133 = vor.u32 %v2128, %v2132
      %v2135 = vshll.u32 %v2011, 16
      %v2137 = vrot.slane %v2135, 1
      %v2138 = vsel %vm2018, %v2133, %v2137
      %v2140 = vshrl.u32 %v1964, 16
      %v2142 = vshll.u32 %v1964, 16
      %v2144 = vrot.slane %v2142, 1
      %v2145 = vor.u32 %v2140, %v2144
      %v2147 = vshll.u32 %v2012, 16
      %v2149 = vrot.slane %v2147, 1
      %v2150 = vsel %vm2018, %v2145, %v2149
      %v2152 = vshrl.u32 %v1965, 16
      %v2154 = vshll.u32 %v1965, 16
      %v2156 = vrot.slane %v2154, 1
      %v2157 = vor.u32 %v2152, %v2156
      %v2159 = vshll.u32 %v2013, 16
      %v2161 = vrot.slane %v2159, 1
      %v2162 = vsel %vm2018, %v2157, %v2161
      %v2164 = vshrl.u32 %v1966, 16
      %v2166 = vshll.u32 %v1966, 16
      %v2168 = vrot.slane %v2166, 1
      %v2169 = vor.u32 %v2164, %v2168
      %v2171 = vshll.u32 %v2014, 16
      %v2173 = vrot.slane %v2171, 1
      %v2174 = vsel %vm2018, %v2169, %v2173
      %v2176 = vshrl.u32 %v1967, 16
      %v2178 = vshll.u32 %v1967, 16
      %v2180 = vrot.slane %v2178, 1
      %v2181 = vor.u32 %v2176, %v2180
      %v2183 = vshll.u32 %v2015, 16
      %v2185 = vrot.slane %v2183, 1
      %v2186 = vsel %vm2018, %v2181, %v2185
      %v2188 = vshrl.u32 %v1968, 16
      %v2190 = vshll.u32 %v1968, 16
      %v2192 = vrot.slane %v2190, 1
      %v2193 = vor.u32 %v2188, %v2192
      %v2195 = vshll.u32 %v2016, 16
      %v2197 = vrot.slane %v2195, 1
      %v2198 = vsel %vm2018, %v2193, %v2197
      %v2200 = vshrl.u32 %v1969, 16
      %v2202 = vshll.u32 %v1969, 16
      %v2204 = vrot.slane %v2202, 1
      %v2205 = vor.u32 %v2200, %v2204
      %v2207 = vshll.u32 %v2017, 16
      %v2209 = vrot.slane %v2207, 1
      %v2210 = vsel %vm2018, %v2205, %v2209
      %2211 = vrot.lane.b32.xlu0 %v2030, 8
      %v2212 = vpop.permute.xlu0 %2211
      %2213 = vrot.lane.b32.xlu0 %v2042, 8
      %v2214 = vpop.permute.xlu0 %2213
      %2215 = vrot.lane.b32.xlu0 %v2054, 8
      %v2216 = vpop.permute.xlu0 %2215
      %2217 = vrot.lane.b32.xlu0 %v2066, 8
      %v2218 = vpop.permute.xlu0 %2217
      %2219 = vrot.lane.b32.xlu0 %v2078, 8
      %v2220 = vpop.permute.xlu0 %2219
      %2221 = vrot.lane.b32.xlu0 %v2090, 8
      %v2222 = vpop.permute.xlu0 %2221
      %2223 = vrot.lane.b32.xlu0 %v2102, 8
      %v2224 = vpop.permute.xlu0 %2223
      %2225 = vrot.lane.b32.xlu0 %v2114, 8
      %v2226 = vpop.permute.xlu0 %2225
      %2227 = vrot.lane.b32.xlu0 %v2126, 8
      %v2228 = vpop.permute.xlu0 %2227
      %2229 = vrot.lane.b32.xlu0 %v2138, 8
      %v2230 = vpop.permute.xlu0 %2229
      %2231 = vrot.lane.b32.xlu0 %v2150, 8
      %v2232 = vpop.permute.xlu0 %2231
      %2233 = vrot.lane.b32.xlu0 %v2162, 8
      %v2234 = vpop.permute.xlu0 %2233
      %2235 = vrot.lane.b32.xlu0 %v2174, 8
      %v2236 = vpop.permute.xlu0 %2235
      %2237 = vrot.lane.b32.xlu0 %v2186, 8
      %v2238 = vpop.permute.xlu0 %2237
      %2239 = vrot.lane.b32.xlu0 %v2198, 8
      %v2240 = vpop.permute.xlu0 %2239
      %2241 = vrot.lane.b32.xlu0 %v2210, 8
      %v2242 = vpop.permute.xlu0 %2241
      %vm2243 = vcmask 1046528
      %v2244 = vrot.slane %v1954, 1
      %v2245 = vrot.slane %v2002, 1
      %v2246 = vsel %vm2243, %v2244, %v2245
      %v2247 = vrot.slane %v1955, 1
      %v2248 = vrot.slane %v2003, 1
      %v2249 = vsel %vm2243, %v2247, %v2248
      %v2250 = vrot.slane %v1956, 1
      %v2251 = vrot.slane %v2004, 1
      %v2252 = vsel %vm2243, %v2250, %v2251
      %v2253 = vrot.slane %v1957, 1
      %v2254 = vrot.slane %v2005, 1
      %v2255 = vsel %vm2243, %v2253, %v2254
      %v2256 = vrot.slane %v1958, 1
      %v2257 = vrot.slane %v2006, 1
      %v2258 = vsel %vm2243, %v2256, %v2257
      %v2259 = vrot.slane %v1959, 1
      %v2260 = vrot.slane %v2007, 1
      %v2261 = vsel %vm2243, %v2259, %v2260
      %v2262 = vrot.slane %v1960, 1
      %v2263 = vrot.slane %v2008, 1
      %v2264 = vsel %vm2243, %v2262, %v2263
      %v2265 = vrot.slane %v1961, 1
      %v2266 = vrot.slane %v2009, 1
      %v2267 = vsel %vm2243, %v2265, %v2266
      %v2268 = vrot.slane %v1962, 1
      %v2269 = vrot.slane %v2010, 1
      %v2270 = vsel %vm2243, %v2268, %v2269
      %v2271 = vrot.slane %v1963, 1
      %v2272 = vrot.slane %v2011, 1
      %v2273 = vsel %vm2243, %v2271, %v2272
      %v2274 = vrot.slane %v1964, 1
      %v2275 = vrot.slane %v2012, 1
      %v2276 = vsel %vm2243, %v2274, %v2275
      %v2277 = vrot.slane %v1965, 1
      %v2278 = vrot.slane %v2013, 1
      %v2279 = vsel %vm2243, %v2277, %v2278
      %v2280 = vrot.slane %v1966, 1
      %v2281 = vrot.slane %v2014, 1
      %v2282 = vsel %vm2243, %v2280, %v2281
      %v2283 = vrot.slane %v1967, 1
      %v2284 = vrot.slane %v2015, 1
      %v2285 = vsel %vm2243, %v2283, %v2284
      %v2286 = vrot.slane %v1968, 1
      %v2287 = vrot.slane %v2016, 1
      %v2288 = vsel %vm2243, %v2286, %v2287
      %v2289 = vrot.slane %v1969, 1
      %v2290 = vrot.slane %v2017, 1
      %v2291 = vsel %vm2243, %v2289, %v2290
      %2292 = vrot.lane.b32.xlu0 %v2246, 16
      %v2293 = vpop.permute.xlu0 %2292
      %2294 = vrot.lane.b32.xlu0 %v2249, 16
      %v2295 = vpop.permute.xlu0 %2294
      %2296 = vrot.lane.b32.xlu0 %v2252, 16
      %v2297 = vpop.permute.xlu0 %2296
      %2298 = vrot.lane.b32.xlu0 %v2255, 16
      %v2299 = vpop.permute.xlu0 %2298
      %2300 = vrot.lane.b32.xlu0 %v2258, 16
      %v2301 = vpop.permute.xlu0 %2300
      %2302 = vrot.lane.b32.xlu0 %v2261, 16
      %v2303 = vpop.permute.xlu0 %2302
      %2304 = vrot.lane.b32.xlu0 %v2264, 16
      %v2305 = vpop.permute.xlu0 %2304
      %2306 = vrot.lane.b32.xlu0 %v2267, 16
      %v2307 = vpop.permute.xlu0 %2306
      %2308 = vrot.lane.b32.xlu0 %v2270, 16
      %v2309 = vpop.permute.xlu0 %2308
      %2310 = vrot.lane.b32.xlu0 %v2273, 16
      %v2311 = vpop.permute.xlu0 %2310
      %2312 = vrot.lane.b32.xlu0 %v2276, 16
      %v2313 = vpop.permute.xlu0 %2312
      %2314 = vrot.lane.b32.xlu0 %v2279, 16
      %v2315 = vpop.permute.xlu0 %2314
      %2316 = vrot.lane.b32.xlu0 %v2282, 16
      %v2317 = vpop.permute.xlu0 %2316
      %2318 = vrot.lane.b32.xlu0 %v2285, 16
      %v2319 = vpop.permute.xlu0 %2318
      %2320 = vrot.lane.b32.xlu0 %v2288, 16
      %v2321 = vpop.permute.xlu0 %2320
      %2322 = vrot.lane.b32.xlu0 %v2291, 16
      %v2323 = vpop.permute.xlu0 %2322
      %v2326 = vunpack.c.l.b16 %v1884
      %v2327 = vunpack.c.l.b16 %v1885
      %v2328 = vpack.c.b16 %v2327, %v2326
      %2329 = vrot.lane.b32.xlu0 %v1955, 24
      %v2330 = vpop.permute.xlu0 %2329
      %2331 = vrot.lane.b32.xlu0 %v1956, 24
      %v2332 = vpop.permute.xlu0 %2331
      %2333 = vrot.lane.b32.xlu0 %v1957, 24
      %v2334 = vpop.permute.xlu0 %2333
      %2335 = vrot.lane.b32.xlu0 %v1958, 24
      %v2336 = vpop.permute.xlu0 %2335
      %2337 = vrot.lane.b32.xlu0 %v1959, 24
      %v2338 = vpop.permute.xlu0 %2337
      %2339 = vrot.lane.b32.xlu0 %v1960, 24
      %v2340 = vpop.permute.xlu0 %2339
      %2341 = vrot.lane.b32.xlu0 %v1961, 24
      %v2342 = vpop.permute.xlu0 %2341
      %2343 = vrot.lane.b32.xlu0 %v1962, 24
      %v2344 = vpop.permute.xlu0 %2343
      %2345 = vrot.lane.b32.xlu0 %v1963, 24
      %v2346 = vpop.permute.xlu0 %2345
      %2347 = vrot.lane.b32.xlu0 %v1964, 24
      %v2348 = vpop.permute.xlu0 %2347
      %2349 = vrot.lane.b32.xlu0 %v1965, 24
      %v2350 = vpop.permute.xlu0 %2349
      %2351 = vrot.lane.b32.xlu0 %v1966, 24
      %v2352 = vpop.permute.xlu0 %2351
      %2353 = vrot.lane.b32.xlu0 %v1967, 24
      %v2354 = vpop.permute.xlu0 %2353
      %2355 = vrot.lane.b32.xlu0 %v1968, 24
      %v2356 = vpop.permute.xlu0 %2355
      %2357 = vrot.lane.b32.xlu0 %v1969, 24
      %v2358 = vpop.permute.xlu0 %2357
      %2359 = vrot.lane.b32.xlu0 %v2328, 24
      %v2360 = vpop.permute.xlu0 %2359
      %v2362 = vunpack.c.l.b16 %v1886
      %v2363 = vpack.c.b16 %v2362, %v2362
      %v2365 = vshrl.u32 %v2328, 16
      %v2367 = vshll.u32 %v2328, 16
      %v2369 = vrot.slane %v2367, 1
      %v2370 = vor.u32 %v2365, %v2369
      %v2372 = vshll.u32 %v2363, 16
      %v2374 = vrot.slane %v2372, 1
      %v2375 = vsel %vm2018, %v2370, %v2374
      %2376 = vrot.lane.b32.xlu0 %v2042, 32
      %v2377 = vpop.permute.xlu0 %2376
      %2378 = vrot.lane.b32.xlu0 %v2054, 32
      %v2379 = vpop.permute.xlu0 %2378
      %2380 = vrot.lane.b32.xlu0 %v2066, 32
      %v2381 = vpop.permute.xlu0 %2380
      %2382 = vrot.lane.b32.xlu0 %v2078, 32
      %v2383 = vpop.permute.xlu0 %2382
      %2384 = vrot.lane.b32.xlu0 %v2090, 32
      %v2385 = vpop.permute.xlu0 %2384
      %2386 = vrot.lane.b32.xlu0 %v2102, 32
      %v2387 = vpop.permute.xlu0 %2386
      %2388 = vrot.lane.b32.xlu0 %v2114, 32
      %v2389 = vpop.permute.xlu0 %2388
      %2390 = vrot.lane.b32.xlu0 %v2126, 32
      %v2391 = vpop.permute.xlu0 %2390
      %2392 = vrot.lane.b32.xlu0 %v2138, 32
      %v2393 = vpop.permute.xlu0 %2392
      %2394 = vrot.lane.b32.xlu0 %v2150, 32
      %v2395 = vpop.permute.xlu0 %2394
      %2396 = vrot.lane.b32.xlu0 %v2162, 32
      %v2397 = vpop.permute.xlu0 %2396
      %2398 = vrot.lane.b32.xlu0 %v2174, 32
      %v2399 = vpop.permute.xlu0 %2398
      %2400 = vrot.lane.b32.xlu0 %v2186, 32
      %v2401 = vpop.permute.xlu0 %2400
      %2402 = vrot.lane.b32.xlu0 %v2198, 32
      %v2403 = vpop.permute.xlu0 %2402
      %2404 = vrot.lane.b32.xlu0 %v2210, 32
      %v2405 = vpop.permute.xlu0 %2404
      %2406 = vrot.lane.b32.xlu0 %v2375, 32
      %v2407 = vpop.permute.xlu0 %2406
      %v2408 = vrot.slane %v2328, 1
      %v2409 = vrot.slane %v2363, 1
      %v2410 = vsel %vm2243, %v2408, %v2409
      %2411 = vrot.lane.b32.xlu0 %v2249, 40
      %v2412 = vpop.permute.xlu0 %2411
      %2413 = vrot.lane.b32.xlu0 %v2252, 40
      %v2414 = vpop.permute.xlu0 %2413
      %2415 = vrot.lane.b32.xlu0 %v2255, 40
      %v2416 = vpop.permute.xlu0 %2415
      %2417 = vrot.lane.b32.xlu0 %v2258, 40
      %v2418 = vpop.permute.xlu0 %2417
      %2419 = vrot.lane.b32.xlu0 %v2261, 40
      %v2420 = vpop.permute.xlu0 %2419
      %2421 = vrot.lane.b32.xlu0 %v2264, 40
      %v2422 = vpop.permute.xlu0 %2421
      %2423 = vrot.lane.b32.xlu0 %v2267, 40
      %v2424 = vpop.permute.xlu0 %2423
      %2425 = vrot.lane.b32.xlu0 %v2270, 40
      %v2426 = vpop.permute.xlu0 %2425
      %2427 = vrot.lane.b32.xlu0 %v2273, 40
      %v2428 = vpop.permute.xlu0 %2427
      %2429 = vrot.lane.b32.xlu0 %v2276, 40
      %v2430 = vpop.permute.xlu0 %2429
      %2431 = vrot.lane.b32.xlu0 %v2279, 40
      %v2432 = vpop.permute.xlu0 %2431
      %2433 = vrot.lane.b32.xlu0 %v2282, 40
      %v2434 = vpop.permute.xlu0 %2433
      %2435 = vrot.lane.b32.xlu0 %v2285, 40
      %v2436 = vpop.permute.xlu0 %2435
      %2437 = vrot.lane.b32.xlu0 %v2288, 40
      %v2438 = vpop.permute.xlu0 %2437
      %2439 = vrot.lane.b32.xlu0 %v2291, 40
      %v2440 = vpop.permute.xlu0 %2439
      %2441 = vrot.lane.b32.xlu0 %v2410, 40
      %v2442 = vpop.permute.xlu0 %2441
      %v2445 = vunpack.c.l.b16 %v1887
      %v2446 = vunpack.c.l.b16 %v1888
      %v2447 = vpack.c.b16 %v2446, %v2445
      %2448 = vrot.lane.b32.xlu0 %v1956, 48
      %v2449 = vpop.permute.xlu0 %2448
      %2450 = vrot.lane.b32.xlu0 %v1957, 48
      %v2451 = vpop.permute.xlu0 %2450
      %2452 = vrot.lane.b32.xlu0 %v1958, 48
      %v2453 = vpop.permute.xlu0 %2452
      %2454 = vrot.lane.b32.xlu0 %v1959, 48
      %v2455 = vpop.permute.xlu0 %2454
      %2456 = vrot.lane.b32.xlu0 %v1960, 48
      %v2457 = vpop.permute.xlu0 %2456
      %2458 = vrot.lane.b32.xlu0 %v1961, 48
      %v2459 = vpop.permute.xlu0 %2458
      %2460 = vrot.lane.b32.xlu0 %v1962, 48
      %v2461 = vpop.permute.xlu0 %2460
      %2462 = vrot.lane.b32.xlu0 %v1963, 48
      %v2463 = vpop.permute.xlu0 %2462
      %2464 = vrot.lane.b32.xlu0 %v1964, 48
      %v2465 = vpop.permute.xlu0 %2464
      %2466 = vrot.lane.b32.xlu0 %v1965, 48
      %v2467 = vpop.permute.xlu0 %2466
      %2468 = vrot.lane.b32.xlu0 %v1966, 48
      %v2469 = vpop.permute.xlu0 %2468
      %2470 = vrot.lane.b32.xlu0 %v1967, 48
      %v2471 = vpop.permute.xlu0 %2470
      %2472 = vrot.lane.b32.xlu0 %v1968, 48
      %v2473 = vpop.permute.xlu0 %2472
      %2474 = vrot.lane.b32.xlu0 %v1969, 48
      %v2475 = vpop.permute.xlu0 %2474
      %2476 = vrot.lane.b32.xlu0 %v2328, 48
      %v2477 = vpop.permute.xlu0 %2476
      %2478 = vrot.lane.b32.xlu0 %v2447, 48
      %v2479 = vpop.permute.xlu0 %2478
      %v2481 = vunpack.c.l.b16 %v1889
      %v2482 = vpack.c.b16 %v2481, %v2481
      %v2484 = vshrl.u32 %v2447, 16
      %v2486 = vshll.u32 %v2447, 16
      %v2488 = vrot.slane %v2486, 1
      %v2489 = vor.u32 %v2484, %v2488
      %v2491 = vshll.u32 %v2482, 16
      %v2493 = vrot.slane %v2491, 1
      %v2494 = vsel %vm2018, %v2489, %v2493
      %2495 = vrot.lane.b32.xlu0 %v2054, 56
      %v2496 = vpop.permute.xlu0 %2495
      %2497 = vrot.lane.b32.xlu0 %v2066, 56
      %v2498 = vpop.permute.xlu0 %2497
      %2499 = vrot.lane.b32.xlu0 %v2078, 56
      %v2500 = vpop.permute.xlu0 %2499
      %2501 = vrot.lane.b32.xlu0 %v2090, 56
      %v2502 = vpop.permute.xlu0 %2501
      %2503 = vrot.lane.b32.xlu0 %v2102, 56
      %v2504 = vpop.permute.xlu0 %2503
      %2505 = vrot.lane.b32.xlu0 %v2114, 56
      %v2506 = vpop.permute.xlu0 %2505
      %2507 = vrot.lane.b32.xlu0 %v2126, 56
      %v2508 = vpop.permute.xlu0 %2507
      %2509 = vrot.lane.b32.xlu0 %v2138, 56
      %v2510 = vpop.permute.xlu0 %2509
      %2511 = vrot.lane.b32.xlu0 %v2150, 56
      %v2512 = vpop.permute.xlu0 %2511
      %2513 = vrot.lane.b32.xlu0 %v2162, 56
      %v2514 = vpop.permute.xlu0 %2513
      %2515 = vrot.lane.b32.xlu0 %v2174, 56
      %v2516 = vpop.permute.xlu0 %2515
      %2517 = vrot.lane.b32.xlu0 %v2186, 56
      %v2518 = vpop.permute.xlu0 %2517
      %2519 = vrot.lane.b32.xlu0 %v2198, 56
      %v2520 = vpop.permute.xlu0 %2519
      %2521 = vrot.lane.b32.xlu0 %v2210, 56
      %v2522 = vpop.permute.xlu0 %2521
      %2523 = vrot.lane.b32.xlu0 %v2375, 56
      %v2524 = vpop.permute.xlu0 %2523
      %2525 = vrot.lane.b32.xlu0 %v2494, 56
      %v2526 = vpop.permute.xlu0 %2525
      %v2527 = vrot.slane %v2447, 1
      %v2528 = vrot.slane %v2482, 1
      %v2529 = vsel %vm2243, %v2527, %v2528
      %2530 = vrot.lane.b32.xlu0 %v2252, 64
      %v2531 = vpop.permute.xlu0 %2530
      %2532 = vrot.lane.b32.xlu0 %v2255, 64
      %v2533 = vpop.permute.xlu0 %2532
      %2534 = vrot.lane.b32.xlu0 %v2258, 64
      %v2535 = vpop.permute.xlu0 %2534
      %2536 = vrot.lane.b32.xlu0 %v2261, 64
      %v2537 = vpop.permute.xlu0 %2536
      %2538 = vrot.lane.b32.xlu0 %v2264, 64
      %v2539 = vpop.permute.xlu0 %2538
      %2540 = vrot.lane.b32.xlu0 %v2267, 64
      %v2541 = vpop.permute.xlu0 %2540
      %2542 = vrot.lane.b32.xlu0 %v2270, 64
      %v2543 = vpop.permute.xlu0 %2542
      %2544 = vrot.lane.b32.xlu0 %v2273, 64
      %v2545 = vpop.permute.xlu0 %2544
      %2546 = vrot.lane.b32.xlu0 %v2276, 64
      %v2547 = vpop.permute.xlu0 %2546
      %2548 = vrot.lane.b32.xlu0 %v2279, 64
      %v2549 = vpop.permute.xlu0 %2548
      %2550 = vrot.lane.b32.xlu0 %v2282, 64
      %v2551 = vpop.permute.xlu0 %2550
      %2552 = vrot.lane.b32.xlu0 %v2285, 64
      %v2553 = vpop.permute.xlu0 %2552
      %2554 = vrot.lane.b32.xlu0 %v2288, 64
      %v2555 = vpop.permute.xlu0 %2554
      %2556 = vrot.lane.b32.xlu0 %v2291, 64
      %v2557 = vpop.permute.xlu0 %2556
      %2558 = vrot.lane.b32.xlu0 %v2410, 64
      %v2559 = vpop.permute.xlu0 %2558
      %2560 = vrot.lane.b32.xlu0 %v2529, 64
      %v2561 = vpop.permute.xlu0 %2560
      %vm2562 = vcmask 64512
      %v2564 = vsel %vm2562, %v1954, %v2212
      %v2566 = vsel %vm2562, %v1955, %v2214
      %v2568 = vsel %vm2562, %v1956, %v2216
      %v2570 = vsel %vm2562, %v1957, %v2218
      %v2572 = vsel %vm2562, %v1958, %v2220
      %v2574 = vsel %vm2562, %v1959, %v2222
      %v2576 = vsel %vm2562, %v1960, %v2224
      %v2578 = vsel %vm2562, %v1961, %v2226
      %v2580 = vsel %vm2562, %v1962, %v2228
      %v2582 = vsel %vm2562, %v1963, %v2230
      %v2584 = vsel %vm2562, %v1964, %v2232
      %v2586 = vsel %vm2562, %v1965, %v2234
      %v2588 = vsel %vm2562, %v1966, %v2236
      %v2590 = vsel %vm2562, %v1967, %v2238
      %v2592 = vsel %vm2562, %v1968, %v2240
      %v2594 = vsel %vm2562, %v1969, %v2242
      %vm2595 = vcmask 130048
      %v2597 = vsel %vm2595, %v2564, %v2293
      %v2599 = vsel %vm2595, %v2566, %v2295
      %v2601 = vsel %vm2595, %v2568, %v2297
      %v2603 = vsel %vm2595, %v2570, %v2299
      %v2605 = vsel %vm2595, %v2572, %v2301
      %v2607 = vsel %vm2595, %v2574, %v2303
      %v2609 = vsel %vm2595, %v2576, %v2305
      %v2611 = vsel %vm2595, %v2578, %v2307
      %v2613 = vsel %vm2595, %v2580, %v2309
      %v2615 = vsel %vm2595, %v2582, %v2311
      %v2617 = vsel %vm2595, %v2584, %v2313
      %v2619 = vsel %vm2595, %v2586, %v2315
      %v2621 = vsel %vm2595, %v2588, %v2317
      %v2623 = vsel %vm2595, %v2590, %v2319
      %v2625 = vsel %vm2595, %v2592, %v2321
      %v2627 = vsel %vm2595, %v2594, %v2323
      %vm2628 = vcmask 195584
      %v2630 = vsel %vm2628, %v2597, %v2330
      %v2632 = vsel %vm2628, %v2599, %v2332
      %v2634 = vsel %vm2628, %v2601, %v2334
      %v2636 = vsel %vm2628, %v2603, %v2336
      %v2638 = vsel %vm2628, %v2605, %v2338
      %v2640 = vsel %vm2628, %v2607, %v2340
      %v2642 = vsel %vm2628, %v2609, %v2342
      %v2644 = vsel %vm2628, %v2611, %v2344
      %v2646 = vsel %vm2628, %v2613, %v2346
      %v2648 = vsel %vm2628, %v2615, %v2348
      %v2650 = vsel %vm2628, %v2617, %v2350
      %v2652 = vsel %vm2628, %v2619, %v2352
      %v2654 = vsel %vm2628, %v2621, %v2354
      %v2656 = vsel %vm2628, %v2623, %v2356
      %v2658 = vsel %vm2628, %v2625, %v2358
      %v2660 = vsel %vm2628, %v2627, %v2360
      %vm2661 = vcmask 261120
      %v2663 = vsel %vm2661, %v2630, %v2377
      %v2665 = vsel %vm2661, %v2632, %v2379
      %v2667 = vsel %vm2661, %v2634, %v2381
      %v2669 = vsel %vm2661, %v2636, %v2383
      %v2671 = vsel %vm2661, %v2638, %v2385
      %v2673 = vsel %vm2661, %v2640, %v2387
      %v2675 = vsel %vm2661, %v2642, %v2389
      %v2677 = vsel %vm2661, %v2644, %v2391
      %v2679 = vsel %vm2661, %v2646, %v2393
      %v2681 = vsel %vm2661, %v2648, %v2395
      %v2683 = vsel %vm2661, %v2650, %v2397
      %v2685 = vsel %vm2661, %v2652, %v2399
      %v2687 = vsel %vm2661, %v2654, %v2401
      %v2689 = vsel %vm2661, %v2656, %v2403
      %v2691 = vsel %vm2661, %v2658, %v2405
      %v2693 = vsel %vm2661, %v2660, %v2407
      %vm2694 = vcmask 326656
      %v2696 = vsel %vm2694, %v2663, %v2412
      %v2698 = vsel %vm2694, %v2665, %v2414
      %v2700 = vsel %vm2694, %v2667, %v2416
      %v2702 = vsel %vm2694, %v2669, %v2418
      %v2704 = vsel %vm2694, %v2671, %v2420
      %v2706 = vsel %vm2694, %v2673, %v2422
      %v2708 = vsel %vm2694, %v2675, %v2424
      %v2710 = vsel %vm2694, %v2677, %v2426
      %v2712 = vsel %vm2694, %v2679, %v2428
      %v2714 = vsel %vm2694, %v2681, %v2430
      %v2716 = vsel %vm2694, %v2683, %v2432
      %v2718 = vsel %vm2694, %v2685, %v2434
      %v2720 = vsel %vm2694, %v2687, %v2436
      %v2722 = vsel %vm2694, %v2689, %v2438
      %v2724 = vsel %vm2694, %v2691, %v2440
      %v2726 = vsel %vm2694, %v2693, %v2442
      %vm2727 = vcmask 392192
      %v2729 = vsel %vm2727, %v2696, %v2449
      %v2731 = vsel %vm2727, %v2698, %v2451
      %v2733 = vsel %vm2727, %v2700, %v2453
      %v2735 = vsel %vm2727, %v2702, %v2455
      %v2737 = vsel %vm2727, %v2704, %v2457
      %v2739 = vsel %vm2727, %v2706, %v2459
      %v2741 = vsel %vm2727, %v2708, %v2461
      %v2743 = vsel %vm2727, %v2710, %v2463
      %v2745 = vsel %vm2727, %v2712, %v2465
      %v2747 = vsel %vm2727, %v2714, %v2467
      %v2749 = vsel %vm2727, %v2716, %v2469
      %v2751 = vsel %vm2727, %v2718, %v2471
      %v2753 = vsel %vm2727, %v2720, %v2473
      %v2755 = vsel %vm2727, %v2722, %v2475
      %v2757 = vsel %vm2727, %v2724, %v2477
      %v2759 = vsel %vm2727, %v2726, %v2479
      %vm2760 = vcmask 457728
      %v2762 = vsel %vm2760, %v2729, %v2496
      %v2764 = vsel %vm2760, %v2731, %v2498
      %v2766 = vsel %vm2760, %v2733, %v2500
      %v2768 = vsel %vm2760, %v2735, %v2502
      %v2770 = vsel %vm2760, %v2737, %v2504
      %v2772 = vsel %vm2760, %v2739, %v2506
      %v2774 = vsel %vm2760, %v2741, %v2508
      %v2776 = vsel %vm2760, %v2743, %v2510
      %v2778 = vsel %vm2760, %v2745, %v2512
      %v2780 = vsel %vm2760, %v2747, %v2514
      %v2782 = vsel %vm2760, %v2749, %v2516
      %v2784 = vsel %vm2760, %v2751, %v2518
      %v2786 = vsel %vm2760, %v2753, %v2520
      %v2788 = vsel %vm2760, %v2755, %v2522
      %v2790 = vsel %vm2760, %v2757, %v2524
      %v2792 = vsel %vm2760, %v2759, %v2526
      %vm2793 = vcmask 523264
      %v2795 = vsel %vm2793, %v2762, %v2531
      %v2797 = vsel %vm2793, %v2764, %v2533
      %v2799 = vsel %vm2793, %v2766, %v2535
      %v2801 = vsel %vm2793, %v2768, %v2537
      %v2803 = vsel %vm2793, %v2770, %v2539
      %v2805 = vsel %vm2793, %v2772, %v2541
      %v2807 = vsel %vm2793, %v2774, %v2543
      %v2809 = vsel %vm2793, %v2776, %v2545
      %v2811 = vsel %vm2793, %v2778, %v2547
      %v2813 = vsel %vm2793, %v2780, %v2549
      %v2815 = vsel %vm2793, %v2782, %v2551
      %v2817 = vsel %vm2793, %v2784, %v2553
      %v2819 = vsel %vm2793, %v2786, %v2555
      %v2821 = vsel %vm2793, %v2788, %v2557
      %v2823 = vsel %vm2793, %v2790, %v2559
      %v2825 = vsel %vm2793, %v2792, %v2561
      %v2826 = vld [vmem:[%s2] sm:$0xf]
      %v2827 = vld [vmem:[%s2 + $0x4] sm:$0xf]
      %v2828 = vld [vmem:[%s2 + $0x8] sm:$0xf]
      %v2829 = vld [vmem:[%s2 + $0xc] sm:$0xf]
      %v2830 = vld [vmem:[%s2 + $0x10] sm:$0xf]
      %v2831 = vld [vmem:[%s2 + $0x14] sm:$0xf]
      %v2832 = vld [vmem:[%s2 + $0x18] sm:$0xf]
      %v2833 = vld [vmem:[%s2 + $0x1c] sm:$0xf]
      %v2834 = vld [vmem:[%s2 + $0x20] sm:$0xf]
      %v2844 = vunpack.c.l.b16 %v2826
      %v2845 = vunpack.c.l.b16 %v2827
      %v2846 = vunpack.c.l.b16 %v2828
      %v2847 = vunpack.c.l.b16 %v2829
      %v2848 = vunpack.c.l.b16 %v2830
      %v2849 = vunpack.c.l.b16 %v2831
      %v2850 = vunpack.c.l.b16 %v2832
      %v2851 = vunpack.c.l.b16 %v2833
      %v2852 = vunpack.c.l.b16 %v2834
      %v2853 = vpack.c.b16 %v2845, %v2844
      %v2854 = vpack.c.b16 %v2847, %v2846
      %v2855 = vpack.c.b16 %v2849, %v2848
      %v2856 = vpack.c.b16 %v2851, %v2850
      %v2857 = vpack.c.b16 %v2852, %v2852
      %vm2862 = vcmask 588800
      %v2863 = vsel %vm2862, %v2795, 0
      %v2865 = vsel %vm2862, %v2797, 0
      %v2867 = vsel %vm2862, %v2799, 0
      %v2869 = vsel %vm2862, %v2801, 0
      %v2871 = vsel %vm2862, %v2803, 0
      %v2873 = vsel %vm2862, %v2805, 0
      %v2875 = vsel %vm2862, %v2807, 0
      %v2877 = vsel %vm2862, %v2809, 0
      %v2879 = vsel %vm2862, %v2811, 0
      %v2881 = vsel %vm2862, %v2813, 0
      %v2883 = vsel %vm2862, %v2815, 0
      %v2885 = vsel %vm2862, %v2817, 0
      %v2887 = vsel %vm2862, %v2819, 0
      %v2889 = vsel %vm2862, %v2821, 0
      %v2891 = vsel %vm2862, %v2823, 0
      %v2893 = vsel %vm2862, %v2825, 0
      %vm2895 = vcmask 1043456
      %v2897 = vsel %vm2895, %v2857, 0
      %2899 = vmatprep.subr.bf16.mxu0 0
      %2900 = vmatpush1.bf16.msra.mxu0 %v2853
      %2901 = vmatprep.subr.bf16.mxu0 0
      %2902 = vmatpush1.bf16.msra.mxu0 %v2854
      %2903 = vmatprep.subr.bf16.mxu0 0
      %2904 = vmatpush1.bf16.msra.mxu0 %v2855
      %2905 = vmatprep.subr.bf16.mxu0 0
      %2906 = vmatpush1.bf16.msra.mxu0 %v2856
      %2907 = vmatprep.subr.bf16.mxu0 0
      %2908 = vmatpush1.bf16.msra.mxu0 %v2897
      %2909 = vmatprep.subr.bf16.mxu0 0
      %2910 = vmatpush1.bf16.msra.mxu0 0
      %2911 = vmatprep.subr.bf16.mxu0 0
      %2912 = vmatpush1.bf16.msra.mxu0 0
      %2913 = vmatprep.subr.bf16.mxu0 0
      %2914 = vmatpush1.bf16.msra.mxu0 0
      %2915 = vmatprep.subr.bf16.mxu0 0
      %2916 = vmatpush1.bf16.msra.mxu0 0
      %2917 = vmatprep.subr.bf16.mxu0 0
      %2918 = vmatpush1.bf16.msra.mxu0 0
      %2919 = vmatprep.subr.bf16.mxu0 0
      %2920 = vmatpush1.bf16.msra.mxu0 0
      %2921 = vmatprep.subr.bf16.mxu0 0
      %2922 = vmatpush1.bf16.msra.mxu0 0
      %2923 = vmatprep.subr.bf16.mxu0 0
      %2924 = vmatpush1.bf16.msra.mxu0 0
      %2925 = vmatprep.subr.bf16.mxu0 0
      %2926 = vmatpush1.bf16.msra.mxu0 0
      %2927 = vmatprep.subr.bf16.mxu0 0
      %2928 = vmatpush1.bf16.msra.mxu0 0
      %2929 = vmatprep.subr.bf16.mxu0 0
      %2930 = vmatpush1.bf16.msra.mxu0 0
      %2931 = vmatprep.mubr.bf16.mxu0 0
      %2932 = vmatmul.mubr.bf16.gmra.mrb[0].mxu0 %v2863
      %v2933 = vpop.f32.mrb[0].mxu0
      %v2934 = vadd.f32 0.0, %v2933
      %v2935 = vpop.f32.mrb[0].mxu0
      %v2936 = vpop.f32.mrb[0].mxu0
      %v2937 = vadd.f32 0.0, %v2936
      %v2938 = vpop.f32.mrb[0].mxu0
      %2939 = vmatprep.mubr.bf16.mxu0 0
      %2940 = vmatmul.mubr.bf16.gmra.mrb[0].mxu0 %v2865
      %v2941 = vpop.f32.mrb[0].mxu0
      %v2942 = vadd.f32 0.0, %v2941
      %v2943 = vpop.f32.mrb[0].mxu0
      %v2944 = vpop.f32.mrb[0].mxu0
      %v2945 = vadd.f32 0.0, %v2944
      %v2946 = vpop.f32.mrb[0].mxu0
      %2947 = vmatprep.mubr.bf16.mxu0 0
      %2948 = vmatmul.mubr.bf16.gmra.mrb[0].mxu0 %v2867
      %v2949 = vpop.f32.mrb[0].mxu0
      %v2950 = vadd.f32 0.0, %v2949
      %v2951 = vpop.f32.mrb[0].mxu0
      %v2952 = vpop.f32.mrb[0].mxu0
      %v2953 = vadd.f32 0.0, %v2952
      %v2954 = vpop.f32.mrb[0].mxu0
      %2955 = vmatprep.mubr.bf16.mxu0 0
      %2956 = vmatmul.mubr.bf16.gmra.mrb[0].mxu0 %v2869
      %v2957 = vpop.f32.mrb[0].mxu0
      %v2958 = vadd.f32 0.0, %v2957
      %v2959 = vpop.f32.mrb[0].mxu0
      %v2960 = vpop.f32.mrb[0].mxu0
      %v2961 = vadd.f32 0.0, %v2960
      %v2962 = vpop.f32.mrb[0].mxu0
      %2963 = vmatprep.mubr.bf16.mxu0 0
      %2964 = vmatmul.mubr.bf16.gmra.mrb[0].mxu0 %v2871
      %v2965 = vpop.f32.mrb[0].mxu0
      %v2966 = vadd.f32 0.0, %v2965
      %v2967 = vpop.f32.mrb[0].mxu0
      %v2968 = vpop.f32.mrb[0].mxu0
      %v2969 = vadd.f32 0.0, %v2968
      %v2970 = vpop.f32.mrb[0].mxu0
      %2971 = vmatprep.mubr.bf16.mxu0 0
      %2972 = vmatmul.mubr.bf16.gmra.mrb[0].mxu0 %v2873
      %v2973 = vpop.f32.mrb[0].mxu0
      %v2974 = vadd.f32 0.0, %v2973
      %v2975 = vpop.f32.mrb[0].mxu0
      %v2976 = vpop.f32.mrb[0].mxu0
      %v2977 = vadd.f32 0.0, %v2976
      %v2978 = vpop.f32.mrb[0].mxu0
      %2979 = vmatprep.mubr.bf16.mxu0 0
      %2980 = vmatmul.mubr.bf16.gmra.mrb[0].mxu0 %v2875
      %v2981 = vpop.f32.mrb[0].mxu0
      %v2982 = vadd.f32 0.0, %v2981
      %v2983 = vpop.f32.mrb[0].mxu0
      %v2984 = vpop.f32.mrb[0].mxu0
      %v2985 = vadd.f32 0.0, %v2984
      %v2986 = vpop.f32.mrb[0].mxu0
      %2987 = vmatprep.mubr.bf16.mxu0 0
      %2988 = vmatmul.mubr.bf16.gmra.mrb[0].mxu0 %v2877
      %v2989 = vpop.f32.mrb[0].mxu0
      %v2990 = vadd.f32 0.0, %v2989
      %v2991 = vpop.f32.mrb[0].mxu0
      %v2992 = vpop.f32.mrb[0].mxu0
      %v2993 = vadd.f32 0.0, %v2992
      %v2994 = vpop.f32.mrb[0].mxu0
      %2995 = vmatprep.mubr.bf16.mxu0 0
      %2996 = vmatmul.mubr.bf16.gmra.mrb[0].mxu0 %v2879
      %v2997 = vpop.f32.mrb[0].mxu0
      %v2998 = vadd.f32 0.0, %v2997
      %v2999 = vpop.f32.mrb[0].mxu0
      %v3000 = vpop.f32.mrb[0].mxu0
      %v3001 = vadd.f32 0.0, %v3000
      %v3002 = vpop.f32.mrb[0].mxu0
      %3003 = vmatprep.mubr.bf16.mxu0 0
      %3004 = vmatmul.mubr.bf16.gmra.mrb[0].mxu0 %v2881
      %v3005 = vpop.f32.mrb[0].mxu0
      %v3006 = vadd.f32 0.0, %v3005
      %v3007 = vpop.f32.mrb[0].mxu0
      %v3008 = vpop.f32.mrb[0].mxu0
      %v3009 = vadd.f32 0.0, %v3008
      %v3010 = vpop.f32.mrb[0].mxu0
      %3011 = vmatprep.mubr.bf16.mxu0 0
      %3012 = vmatmul.mubr.bf16.gmra.mrb[0].mxu0 %v2883
      %v3013 = vpop.f32.mrb[0].mxu0
      %v3014 = vadd.f32 0.0, %v3013
      %v3015 = vpop.f32.mrb[0].mxu0
      %v3016 = vpop.f32.mrb[0].mxu0
      %v3017 = vadd.f32 0.0, %v3016
      %v3018 = vpop.f32.mrb[0].mxu0
      %3019 = vmatprep.mubr.bf16.mxu0 0
      %3020 = vmatmul.mubr.bf16.gmra.mrb[0].mxu0 %v2885
      %v3021 = vpop.f32.mrb[0].mxu0
      %v3022 = vadd.f32 0.0, %v3021
      %v3023 = vpop.f32.mrb[0].mxu0
      %v3024 = vpop.f32.mrb[0].mxu0
      %v3025 = vadd.f32 0.0, %v3024
      %v3026 = vpop.f32.mrb[0].mxu0
      %3027 = vmatprep.mubr.bf16.mxu0 0
      %3028 = vmatmul.mubr.bf16.gmra.mrb[0].mxu0 %v2887
      %v3029 = vpop.f32.mrb[0].mxu0
      %v3030 = vadd.f32 0.0, %v3029
      %v3031 = vpop.f32.mrb[0].mxu0
      %v3032 = vpop.f32.mrb[0].mxu0
      %v3033 = vadd.f32 0.0, %v3032
      %v3034 = vpop.f32.mrb[0].mxu0
      %3035 = vmatprep.mubr.bf16.mxu0 0
      %3036 = vmatmul.mubr.bf16.gmra.mrb[0].mxu0 %v2889
      %v3037 = vpop.f32.mrb[0].mxu0
      %v3038 = vadd.f32 0.0, %v3037
      %v3039 = vpop.f32.mrb[0].mxu0
      %v3040 = vpop.f32.mrb[0].mxu0
      %v3041 = vadd.f32 0.0, %v3040
      %v3042 = vpop.f32.mrb[0].mxu0
      %3043 = vmatprep.mubr.bf16.mxu0 0
      %3044 = vmatmul.mubr.bf16.gmra.mrb[0].mxu0 %v2891
      %v3045 = vpop.f32.mrb[0].mxu0
      %v3046 = vadd.f32 0.0, %v3045
      %v3047 = vpop.f32.mrb[0].mxu0
      %v3048 = vpop.f32.mrb[0].mxu0
      %v3049 = vadd.f32 0.0, %v3048
      %v3050 = vpop.f32.mrb[0].mxu0
      %3051 = vmatprep.mubr.bf16.mxu0 0
      %3052 = vmatmul.mubr.bf16.gmra.mrb[0].mxu0 %v2893
      %v3053 = vpop.f32.mrb[0].mxu0
      %v3054 = vadd.f32 0.0, %v3053
      %v3055 = vpop.f32.mrb[0].mxu0
      %v3056 = vpop.f32.mrb[0].mxu0
      %v3057 = vadd.f32 0.0, %v3056
      %v3058 = vpop.f32.mrb[0].mxu0
      %3059 = vdwg.mxu0
      %v3060 = vld [vmem:[%s3] sm:$0x1]
      %v3062 = vlaneseq
      %v3063 = vshrl.u32 %v3062, 7
      %v3064 = vsub.s32 0, %v3063
      %v3065 = vrot.slane %v3060, %v3064
      %v3067 = vmul.f32 %v2934, %v3065
      %v3068 = vmul.f32 %v2937, %v3065
      %v3069 = vmul.f32 %v2942, %v3065
      %v3070 = vmul.f32 %v2945, %v3065
      %v3071 = vmul.f32 %v2950, %v3065
      %v3072 = vmul.f32 %v2953, %v3065
      %v3073 = vmul.f32 %v2958, %v3065
      %v3074 = vmul.f32 %v2961, %v3065
      %v3075 = vmul.f32 %v2966, %v3065
      %v3076 = vmul.f32 %v2969, %v3065
      %v3077 = vmul.f32 %v2974, %v3065
      %v3078 = vmul.f32 %v2977, %v3065
      %v3079 = vmul.f32 %v2982, %v3065
      %v3080 = vmul.f32 %v2985, %v3065
      %v3081 = vmul.f32 %v2990, %v3065
      %v3082 = vmul.f32 %v2993, %v3065
      %v3083 = vmul.f32 %v2998, %v3065
      %v3084 = vmul.f32 %v3001, %v3065
      %v3085 = vmul.f32 %v3006, %v3065
      %v3086 = vmul.f32 %v3009, %v3065
      %v3087 = vmul.f32 %v3014, %v3065
      %v3088 = vmul.f32 %v3017, %v3065
      %v3089 = vmul.f32 %v3022, %v3065
      %v3090 = vmul.f32 %v3025, %v3065
      %v3091 = vmul.f32 %v3030, %v3065
      %v3092 = vmul.f32 %v3033, %v3065
      %v3093 = vmul.f32 %v3038, %v3065
      %v3094 = vmul.f32 %v3041, %v3065
      %v3095 = vmul.f32 %v3046, %v3065
      %v3096 = vmul.f32 %v3049, %v3065
      %v3097 = vmul.f32 %v3054, %v3065
      %v3098 = vmul.f32 %v3057, %v3065
      %v3099 = vld [vmem:[%s4] sm:$0x1]
      %v3101 = vlaneseq
      %v3102 = vshrl.u32 %v3101, 7
      %v3103 = vsub.s32 0, %v3102
      %v3104 = vrot.slane %v3099, %v3103
      %v3106 = vadd.f32 %v3067, %v3104
      %v3107 = vadd.f32 %v3068, %v3104
      %v3108 = vadd.f32 %v3069, %v3104
      %v3109 = vadd.f32 %v3070, %v3104
      %v3110 = vadd.f32 %v3071, %v3104
      %v3111 = vadd.f32 %v3072, %v3104
      %v3112 = vadd.f32 %v3073, %v3104
      %v3113 = vadd.f32 %v3074, %v3104
      %v3114 = vadd.f32 %v3075, %v3104
      %v3115 = vadd.f32 %v3076, %v3104
      %v3116 = vadd.f32 %v3077, %v3104
      %v3117 = vadd.f32 %v3078, %v3104
      %v3118 = vadd.f32 %v3079, %v3104
      %v3119 = vadd.f32 %v3080, %v3104
      %v3120 = vadd.f32 %v3081, %v3104
      %v3121 = vadd.f32 %v3082, %v3104
      %v3122 = vadd.f32 %v3083, %v3104
      %v3123 = vadd.f32 %v3084, %v3104
      %v3124 = vadd.f32 %v3085, %v3104
      %v3125 = vadd.f32 %v3086, %v3104
      %v3126 = vadd.f32 %v3087, %v3104
      %v3127 = vadd.f32 %v3088, %v3104
      %v3128 = vadd.f32 %v3089, %v3104
      %v3129 = vadd.f32 %v3090, %v3104
      %v3130 = vadd.f32 %v3091, %v3104
      %v3131 = vadd.f32 %v3092, %v3104
      %v3132 = vadd.f32 %v3093, %v3104
      %v3133 = vadd.f32 %v3094, %v3104
      %v3134 = vadd.f32 %v3095, %v3104
      %v3135 = vadd.f32 %v3096, %v3104
      %v3136 = vadd.f32 %v3097, %v3104
      %v3137 = vadd.f32 %v3098, %v3104
      %v3138 = vmax.f32 %v3106, 0.0
      %v3139 = vmax.f32 %v3107, 0.0
      %v3140 = vmax.f32 %v3108, 0.0
      %v3141 = vmax.f32 %v3109, 0.0
      %v3142 = vmax.f32 %v3110, 0.0
      %v3143 = vmax.f32 %v3111, 0.0
      %v3144 = vmax.f32 %v3112, 0.0
      %v3145 = vmax.f32 %v3113, 0.0
      %v3146 = vmax.f32 %v3114, 0.0
      %v3147 = vmax.f32 %v3115, 0.0
      %v3148 = vmax.f32 %v3116, 0.0
      %v3149 = vmax.f32 %v3117, 0.0
      %v3150 = vmax.f32 %v3118, 0.0
      %v3151 = vmax.f32 %v3119, 0.0
      %v3152 = vmax.f32 %v3120, 0.0
      %v3153 = vmax.f32 %v3121, 0.0
      %v3154 = vmax.f32 %v3122, 0.0
      %v3155 = vmax.f32 %v3123, 0.0
      %v3156 = vmax.f32 %v3124, 0.0
      %v3157 = vmax.f32 %v3125, 0.0
      %v3158 = vmax.f32 %v3126, 0.0
      %v3159 = vmax.f32 %v3127, 0.0
      %v3160 = vmax.f32 %v3128, 0.0
      %v3161 = vmax.f32 %v3129, 0.0
      %v3162 = vmax.f32 %v3130, 0.0
      %v3163 = vmax.f32 %v3131, 0.0
      %v3164 = vmax.f32 %v3132, 0.0
      %v3165 = vmax.f32 %v3133, 0.0
      %v3166 = vmax.f32 %v3134, 0.0
      %v3167 = vmax.f32 %v3135, 0.0
      %v3168 = vmax.f32 %v3136, 0.0
      %v3169 = vmax.f32 %v3137, 0.0
      %v3170 = vpack.c.bf16 %v3139, %v3138
      %v3171 = vpack.c.bf16 %v3141, %v3140
      %v3172 = vpack.c.bf16 %v3143, %v3142
      %v3173 = vpack.c.bf16 %v3145, %v3144
      %v3174 = vpack.c.bf16 %v3147, %v3146
      %v3175 = vpack.c.bf16 %v3149, %v3148
      %v3176 = vpack.c.bf16 %v3151, %v3150
      %v3177 = vpack.c.bf16 %v3153, %v3152
      %v3178 = vpack.c.bf16 %v3155, %v3154
      %v3179 = vpack.c.bf16 %v3157, %v3156
      %v3180 = vpack.c.bf16 %v3159, %v3158
      %v3181 = vpack.c.bf16 %v3161, %v3160
      %v3182 = vpack.c.bf16 %v3163, %v3162
      %v3183 = vpack.c.bf16 %v3165, %v3164
      %v3184 = vpack.c.bf16 %v3167, %v3166
      %v3185 = vpack.c.bf16 %v3169, %v3168
      %v3202 = vunpack.c.l.b16 %v3170
      %v3203 = vunpack.c.h.b16 %v3170
      %v3204 = vunpack.c.l.b16 %v3171
      %v3205 = vunpack.c.h.b16 %v3171
      %v3206 = vunpack.c.l.b16 %v3172
      %v3207 = vunpack.c.h.b16 %v3172
      %v3208 = vunpack.c.l.b16 %v3173
      %v3209 = vunpack.c.h.b16 %v3173
      %v3210 = vunpack.c.l.b16 %v3174
      %v3211 = vunpack.c.h.b16 %v3174
      %v3212 = vunpack.c.l.b16 %v3175
      %v3213 = vunpack.c.h.b16 %v3175
      %v3214 = vunpack.c.l.b16 %v3176
      %v3215 = vunpack.c.h.b16 %v3176
      %v3216 = vunpack.c.l.b16 %v3177
      %v3217 = vunpack.c.h.b16 %v3177
      %v3218 = vunpack.c.l.b16 %v3178
      %v3219 = vunpack.c.h.b16 %v3178
      %v3220 = vunpack.c.l.b16 %v3179
      %v3221 = vunpack.c.h.b16 %v3179
      %v3222 = vunpack.c.l.b16 %v3180
      %v3223 = vunpack.c.h.b16 %v3180
      %v3224 = vunpack.c.l.b16 %v3181
      %v3225 = vunpack.c.h.b16 %v3181
      %v3226 = vunpack.c.l.b16 %v3182
      %v3227 = vunpack.c.h.b16 %v3182
      %v3228 = vunpack.c.l.b16 %v3183
      %v3229 = vunpack.c.h.b16 %v3183
      %v3230 = vunpack.c.l.b16 %v3184
      %v3231 = vunpack.c.h.b16 %v3184
      %v3232 = vunpack.c.l.b16 %v3185
      %v3233 = vunpack.c.h.b16 %v3185
      %v3234 = vpack.c.b16 %v3202, %v3202
      %v3235 = vpack.c.b16 %v3203, %v3203
      %v3236 = vpack.c.b16 %v3204, %v3204
      %v3237 = vpack.c.b16 %v3205, %v3205
      %v3238 = vpack.c.b16 %v3206, %v3206
      %v3239 = vpack.c.b16 %v3207, %v3207
      %v3240 = vpack.c.b16 %v3208, %v3208
      %v3241 = vpack.c.b16 %v3209, %v3209
      %v3242 = vpack.c.b16 %v3210, %v3210
      %v3243 = vpack.c.b16 %v3211, %v3211
      %v3244 = vpack.c.b16 %v3212, %v3212
      %v3245 = vpack.c.b16 %v3213, %v3213
      %v3246 = vpack.c.b16 %v3214, %v3214
      %v3247 = vpack.c.b16 %v3215, %v3215
      %v3248 = vpack.c.b16 %v3216, %v3216
      %v3249 = vpack.c.b16 %v3217, %v3217
      %v3250 = vpack.c.b16 %v3218, %v3218
      %v3251 = vpack.c.b16 %v3219, %v3219
      %v3252 = vpack.c.b16 %v3220, %v3220
      %v3253 = vpack.c.b16 %v3221, %v3221
      %v3254 = vpack.c.b16 %v3222, %v3222
      %v3255 = vpack.c.b16 %v3223, %v3223
      %v3256 = vpack.c.b16 %v3224, %v3224
      %v3257 = vpack.c.b16 %v3225, %v3225
      %v3258 = vpack.c.b16 %v3226, %v3226
      %v3259 = vpack.c.b16 %v3227, %v3227
      %v3260 = vpack.c.b16 %v3228, %v3228
      %v3261 = vpack.c.b16 %v3229, %v3229
      %v3262 = vpack.c.b16 %v3230, %v3230
      %v3263 = vpack.c.b16 %v3231, %v3231
      %v3264 = vpack.c.b16 %v3232, %v3232
      %v3265 = vpack.c.b16 %v3233, %v3233
      %v3267 = vshrl.u32 %v3234, 16
      %v3269 = vrot.slane %v3267, 7
      %v3270 = vshll.u32 %v3234, 16
      %v3272 = vor.u32 %v3269, %v3270
      %v3273 = vrot.slane %v3269, 4
      %v3275 = vshrl.u32 %v3235, 16
      %v3277 = vrot.slane %v3275, 7
      %v3278 = vshll.u32 %v3235, 16
      %v3280 = vor.u32 %v3277, %v3278
      %v3281 = vsel %vm935, %v3273, %v3280
      %v3282 = vrot.slane %v3277, 4
      %v3284 = vshrl.u32 %v3236, 16
      %v3286 = vrot.slane %v3284, 7
      %v3287 = vshll.u32 %v3236, 16
      %v3289 = vor.u32 %v3286, %v3287
      %v3290 = vrot.slane %v3286, 4
      %v3292 = vshrl.u32 %v3237, 16
      %v3294 = vrot.slane %v3292, 7
      %v3295 = vshll.u32 %v3237, 16
      %v3297 = vor.u32 %v3294, %v3295
      %v3298 = vsel %vm935, %v3290, %v3297
      %v3299 = vrot.slane %v3294, 4
      %v3301 = vshrl.u32 %v3238, 16
      %v3303 = vrot.slane %v3301, 7
      %v3304 = vshll.u32 %v3238, 16
      %v3306 = vor.u32 %v3303, %v3304
      %v3307 = vrot.slane %v3303, 4
      %v3309 = vshrl.u32 %v3239, 16
      %v3311 = vrot.slane %v3309, 7
      %v3312 = vshll.u32 %v3239, 16
      %v3314 = vor.u32 %v3311, %v3312
      %v3315 = vsel %vm935, %v3307, %v3314
      %v3316 = vrot.slane %v3311, 4
      %v3318 = vshrl.u32 %v3240, 16
      %v3320 = vrot.slane %v3318, 7
      %v3321 = vshll.u32 %v3240, 16
      %v3323 = vor.u32 %v3320, %v3321
      %v3324 = vrot.slane %v3320, 4
      %v3326 = vshrl.u32 %v3241, 16
      %v3328 = vrot.slane %v3326, 7
      %v3329 = vshll.u32 %v3241, 16
      %v3331 = vor.u32 %v3328, %v3329
      %v3332 = vsel %vm935, %v3324, %v3331
      %v3333 = vrot.slane %v3328, 4
      %v3335 = vshrl.u32 %v3242, 16
      %v3337 = vrot.slane %v3335, 7
      %v3338 = vshll.u32 %v3242, 16
      %v3340 = vor.u32 %v3337, %v3338
      %v3341 = vrot.slane %v3337, 4
      %v3343 = vshrl.u32 %v3243, 16
      %v3345 = vrot.slane %v3343, 7
      %v3346 = vshll.u32 %v3243, 16
      %v3348 = vor.u32 %v3345, %v3346
      %v3349 = vsel %vm935, %v3341, %v3348
      %v3350 = vrot.slane %v3345, 4
      %v3352 = vshrl.u32 %v3244, 16
      %v3354 = vrot.slane %v3352, 7
      %v3355 = vshll.u32 %v3244, 16
      %v3357 = vor.u32 %v3354, %v3355
      %v3358 = vrot.slane %v3354, 4
      %v3360 = vshrl.u32 %v3245, 16
      %v3362 = vrot.slane %v3360, 7
      %v3363 = vshll.u32 %v3245, 16
      %v3365 = vor.u32 %v3362, %v3363
      %v3366 = vsel %vm935, %v3358, %v3365
      %v3367 = vrot.slane %v3362, 4
      %v3369 = vshrl.u32 %v3246, 16
      %v3371 = vrot.slane %v3369, 7
      %v3372 = vshll.u32 %v3246, 16
      %v3374 = vor.u32 %v3371, %v3372
      %v3375 = vrot.slane %v3371, 4
      %v3377 = vshrl.u32 %v3247, 16
      %v3379 = vrot.slane %v3377, 7
      %v3380 = vshll.u32 %v3247, 16
      %v3382 = vor.u32 %v3379, %v3380
      %v3383 = vsel %vm935, %v3375, %v3382
      %v3384 = vrot.slane %v3379, 4
      %v3386 = vshrl.u32 %v3248, 16
      %v3388 = vrot.slane %v3386, 7
      %v3389 = vshll.u32 %v3248, 16
      %v3391 = vor.u32 %v3388, %v3389
      %v3392 = vrot.slane %v3388, 4
      %v3394 = vshrl.u32 %v3249, 16
      %v3396 = vrot.slane %v3394, 7
      %v3397 = vshll.u32 %v3249, 16
      %v3399 = vor.u32 %v3396, %v3397
      %v3400 = vsel %vm935, %v3392, %v3399
      %v3401 = vrot.slane %v3396, 4
      %v3403 = vshrl.u32 %v3250, 16
      %v3405 = vrot.slane %v3403, 7
      %v3406 = vshll.u32 %v3250, 16
      %v3408 = vor.u32 %v3405, %v3406
      %v3409 = vrot.slane %v3405, 4
      %v3411 = vshrl.u32 %v3251, 16
      %v3413 = vrot.slane %v3411, 7
      %v3414 = vshll.u32 %v3251, 16
      %v3416 = vor.u32 %v3413, %v3414
      %v3417 = vsel %vm935, %v3409, %v3416
      %v3418 = vrot.slane %v3413, 4
      %v3420 = vshrl.u32 %v3252, 16
      %v3422 = vrot.slane %v3420, 7
      %v3423 = vshll.u32 %v3252, 16
      %v3425 = vor.u32 %v3422, %v3423
      %v3426 = vrot.slane %v3422, 4
      %v3428 = vshrl.u32 %v3253, 16
      %v3430 = vrot.slane %v3428, 7
      %v3431 = vshll.u32 %v3253, 16
      %v3433 = vor.u32 %v3430, %v3431
      %v3434 = vsel %vm935, %v3426, %v3433
      %v3435 = vrot.slane %v3430, 4
      %v3437 = vshrl.u32 %v3254, 16
      %v3439 = vrot.slane %v3437, 7
      %v3440 = vshll.u32 %v3254, 16
      %v3442 = vor.u32 %v3439, %v3440
      %v3443 = vrot.slane %v3439, 4
      %v3445 = vshrl.u32 %v3255, 16
      %v3447 = vrot.slane %v3445, 7
      %v3448 = vshll.u32 %v3255, 16
      %v3450 = vor.u32 %v3447, %v3448
      %v3451 = vsel %vm935, %v3443, %v3450
      %v3452 = vrot.slane %v3447, 4
      %v3454 = vshrl.u32 %v3256, 16
      %v3456 = vrot.slane %v3454, 7
      %v3457 = vshll.u32 %v3256, 16
      %v3459 = vor.u32 %v3456, %v3457
      %v3460 = vrot.slane %v3456, 4
      %v3462 = vshrl.u32 %v3257, 16
      %v3464 = vrot.slane %v3462, 7
      %v3465 = vshll.u32 %v3257, 16
      %v3467 = vor.u32 %v3464, %v3465
      %v3468 = vsel %vm935, %v3460, %v3467
      %v3469 = vrot.slane %v3464, 4
      %v3471 = vshrl.u32 %v3258, 16
      %v3473 = vrot.slane %v3471, 7
      %v3474 = vshll.u32 %v3258, 16
      %v3476 = vor.u32 %v3473, %v3474
      %v3477 = vrot.slane %v3473, 4
      %v3479 = vshrl.u32 %v3259, 16
      %v3481 = vrot.slane %v3479, 7
      %v3482 = vshll.u32 %v3259, 16
      %v3484 = vor.u32 %v3481, %v3482
      %v3485 = vsel %vm935, %v3477, %v3484
      %v3486 = vrot.slane %v3481, 4
      %v3488 = vshrl.u32 %v3260, 16
      %v3490 = vrot.slane %v3488, 7
      %v3491 = vshll.u32 %v3260, 16
      %v3493 = vor.u32 %v3490, %v3491
      %v3494 = vrot.slane %v3490, 4
      %v3496 = vshrl.u32 %v3261, 16
      %v3498 = vrot.slane %v3496, 7
      %v3499 = vshll.u32 %v3261, 16
      %v3501 = vor.u32 %v3498, %v3499
      %v3502 = vsel %vm935, %v3494, %v3501
      %v3503 = vrot.slane %v3498, 4
      %v3505 = vshrl.u32 %v3262, 16
      %v3507 = vrot.slane %v3505, 7
      %v3508 = vshll.u32 %v3262, 16
      %v3510 = vor.u32 %v3507, %v3508
      %v3511 = vrot.slane %v3507, 4
      %v3513 = vshrl.u32 %v3263, 16
      %v3515 = vrot.slane %v3513, 7
      %v3516 = vshll.u32 %v3263, 16
      %v3518 = vor.u32 %v3515, %v3516
      %v3519 = vsel %vm935, %v3511, %v3518
      %v3520 = vrot.slane %v3515, 4
      %v3522 = vshrl.u32 %v3264, 16
      %v3524 = vrot.slane %v3522, 7
      %v3525 = vshll.u32 %v3264, 16
      %v3527 = vor.u32 %v3524, %v3525
      %v3528 = vrot.slane %v3524, 4
      %v3530 = vshrl.u32 %v3265, 16
      %v3532 = vrot.slane %v3530, 7
      %v3533 = vshll.u32 %v3265, 16
      %v3535 = vor.u32 %v3532, %v3533
      %v3536 = vsel %vm935, %v3528, %v3535
      %v3537 = vrot.slane %v3532, 4
      %s3586 = scalar_lea.vmem [#allocation4], 12
      %v3587 = vld [vmem:[%s3586] sm:$0xf]
      %v3588 = vsel %vm1258, %v3272, %v3587
      %3589 = vst [vmem:[%s3586] sm:$0xf] %v3588
      %3590 = vst.msk [vmem:[%s3586 + $0x4] sm:$0xf] %vm435, %v3281
      %v3591 = vld [vmem:[%s3586 + $0x8] sm:$0x1]
      %v3592 = vsel %vm446, %v3282, %v3591
      %3593 = vst [vmem:[%s3586 + $0x8] sm:$0x1] %v3592
      %v3594 = vld [vmem:[%s3586 + $0xc] sm:$0xf]
      %v3595 = vsel %vm1258, %v3289, %v3594
      %3596 = vst [vmem:[%s3586 + $0xc] sm:$0xf] %v3595
      %3597 = vst.msk [vmem:[%s3586 + $0x10] sm:$0xf] %vm435, %v3298
      %v3598 = vld [vmem:[%s3586 + $0x14] sm:$0x1]
      %v3599 = vsel %vm446, %v3299, %v3598
      %3600 = vst [vmem:[%s3586 + $0x14] sm:$0x1] %v3599
      %v3601 = vld [vmem:[%s3586 + $0x18] sm:$0xf]
      %v3602 = vsel %vm1258, %v3306, %v3601
      %3603 = vst [vmem:[%s3586 + $0x18] sm:$0xf] %v3602
      %3604 = vst.msk [vmem:[%s3586 + $0x1c] sm:$0xf] %vm435, %v3315
      %v3605 = vld [vmem:[%s3586 + $0x20] sm:$0x1]
      %v3606 = vsel %vm446, %v3316, %v3605
      %3607 = vst [vmem:[%s3586 + $0x20] sm:$0x1] %v3606
      %v3608 = vld [vmem:[%s3586 + $0x24] sm:$0xf]
      %v3609 = vsel %vm1258, %v3323, %v3608
      %3610 = vst [vmem:[%s3586 + $0x24] sm:$0xf] %v3609
      %3611 = vst.msk [vmem:[%s3586 + $0x28] sm:$0xf] %vm435, %v3332
      %v3612 = vld [vmem:[%s3586 + $0x2c] sm:$0x1]
      %v3613 = vsel %vm446, %v3333, %v3612
      %3614 = vst [vmem:[%s3586 + $0x2c] sm:$0x1] %v3613
      %v3615 = vld [vmem:[%s3586 + $0x30] sm:$0xf]
      %v3616 = vsel %vm1258, %v3340, %v3615
      %3617 = vst [vmem:[%s3586 + $0x30] sm:$0xf] %v3616
      %3618 = vst.msk [vmem:[%s3586 + $0x34] sm:$0xf] %vm435, %v3349
      %v3619 = vld [vmem:[%s3586 + $0x38] sm:$0x1]
      %v3620 = vsel %vm446, %v3350, %v3619
      %3621 = vst [vmem:[%s3586 + $0x38] sm:$0x1] %v3620
      %v3622 = vld [vmem:[%s3586 + $0x3c] sm:$0xf]
      %v3623 = vsel %vm1258, %v3357, %v3622
      %3624 = vst [vmem:[%s3586 + $0x3c] sm:$0xf] %v3623
      %3625 = vst.msk [vmem:[%s3586 + $0x40] sm:$0xf] %vm435, %v3366
      %v3626 = vld [vmem:[%s3586 + $0x44] sm:$0x1]
      %v3627 = vsel %vm446, %v3367, %v3626
      %3628 = vst [vmem:[%s3586 + $0x44] sm:$0x1] %v3627
      %v3629 = vld [vmem:[%s3586 + $0x48] sm:$0xf]
      %v3630 = vsel %vm1258, %v3374, %v3629
      %3631 = vst [vmem:[%s3586 + $0x48] sm:$0xf] %v3630
      %3632 = vst.msk [vmem:[%s3586 + $0x4c] sm:$0xf] %vm435, %v3383
      %v3633 = vld [vmem:[%s3586 + $0x50] sm:$0x1]
      %v3634 = vsel %vm446, %v3384, %v3633
      %3635 = vst [vmem:[%s3586 + $0x50] sm:$0x1] %v3634
      %v3636 = vld [vmem:[%s3586 + $0x54] sm:$0xf]
      %v3637 = vsel %vm1258, %v3391, %v3636
      %3638 = vst [vmem:[%s3586 + $0x54] sm:$0xf] %v3637
      %3639 = vst.msk [vmem:[%s3586 + $0x58] sm:$0xf] %vm435, %v3400
      %v3640 = vld [vmem:[%s3586 + $0x5c] sm:$0x1]
      %v3641 = vsel %vm446, %v3401, %v3640
      %3642 = vst [vmem:[%s3586 + $0x5c] sm:$0x1] %v3641
      %v3643 = vld [vmem:[%s3586 + $0x60] sm:$0xf]
      %v3644 = vsel %vm1258, %v3408, %v3643
      %3645 = vst [vmem:[%s3586 + $0x60] sm:$0xf] %v3644
      %3646 = vst.msk [vmem:[%s3586 + $0x64] sm:$0xf] %vm435, %v3417
      %v3647 = vld [vmem:[%s3586 + $0x68] sm:$0x1]
      %v3648 = vsel %vm446, %v3418, %v3647
      %3649 = vst [vmem:[%s3586 + $0x68] sm:$0x1] %v3648
      %v3650 = vld [vmem:[%s3586 + $0x6c] sm:$0xf]
      %v3651 = vsel %vm1258, %v3425, %v3650
      %3652 = vst [vmem:[%s3586 + $0x6c] sm:$0xf] %v3651
      %3653 = vst.msk [vmem:[%s3586 + $0x70] sm:$0xf] %vm435, %v3434
      %v3654 = vld [vmem:[%s3586 + $0x74] sm:$0x1]
      %v3655 = vsel %vm446, %v3435, %v3654
      %3656 = vst [vmem:[%s3586 + $0x74] sm:$0x1] %v3655
      %v3657 = vld [vmem:[%s3586 + $0x78] sm:$0xf]
      %v3658 = vsel %vm1258, %v3442, %v3657
      %3659 = vst [vmem:[%s3586 + $0x78] sm:$0xf] %v3658
      %3660 = vst.msk [vmem:[%s3586 + $0x7c] sm:$0xf] %vm435, %v3451
      %v3661 = vld [vmem:[%s3586 + $0x80] sm:$0x1]
      %v3662 = vsel %vm446, %v3452, %v3661
      %3663 = vst [vmem:[%s3586 + $0x80] sm:$0x1] %v3662
      %v3664 = vld [vmem:[%s3586 + $0x84] sm:$0xf]
      %v3665 = vsel %vm1258, %v3459, %v3664
      %3666 = vst [vmem:[%s3586 + $0x84] sm:$0xf] %v3665
      %3667 = vst.msk [vmem:[%s3586 + $0x88] sm:$0xf] %vm435, %v3468
      %v3668 = vld [vmem:[%s3586 + $0x8c] sm:$0x1]
      %v3669 = vsel %vm446, %v3469, %v3668
      %3670 = vst [vmem:[%s3586 + $0x8c] sm:$0x1] %v3669
      %v3671 = vld [vmem:[%s3586 + $0x90] sm:$0xf]
      %v3672 = vsel %vm1258, %v3476, %v3671
      %3673 = vst [vmem:[%s3586 + $0x90] sm:$0xf] %v3672
      %3674 = vst.msk [vmem:[%s3586 + $0x94] sm:$0xf] %vm435, %v3485
      %v3675 = vld [vmem:[%s3586 + $0x98] sm:$0x1]
      %v3676 = vsel %vm446, %v3486, %v3675
      %3677 = vst [vmem:[%s3586 + $0x98] sm:$0x1] %v3676
      %v3678 = vld [vmem:[%s3586 + $0x9c] sm:$0xf]
      %v3679 = vsel %vm1258, %v3493, %v3678
      %3680 = vst [vmem:[%s3586 + $0x9c] sm:$0xf] %v3679
      %3681 = vst.msk [vmem:[%s3586 + $0xa0] sm:$0xf] %vm435, %v3502
      %v3682 = vld [vmem:[%s3586 + $0xa4] sm:$0x1]
      %v3683 = vsel %vm446, %v3503, %v3682
      %3684 = vst [vmem:[%s3586 + $0xa4] sm:$0x1] %v3683
      %v3685 = vld [vmem:[%s3586 + $0xa8] sm:$0xf]
      %v3686 = vsel %vm1258, %v3510, %v3685
      %3687 = vst [vmem:[%s3586 + $0xa8] sm:$0xf] %v3686
      %3688 = vst.msk [vmem:[%s3586 + $0xac] sm:$0xf] %vm435, %v3519
      %v3689 = vld [vmem:[%s3586 + $0xb0] sm:$0x1]
      %v3690 = vsel %vm446, %v3520, %v3689
      %3691 = vst [vmem:[%s3586 + $0xb0] sm:$0x1] %v3690
      %v3692 = vld [vmem:[%s3586 + $0xb4] sm:$0xf]
      %v3693 = vsel %vm1258, %v3527, %v3692
      %3694 = vst [vmem:[%s3586 + $0xb4] sm:$0xf] %v3693
      %3695 = vst.msk [vmem:[%s3586 + $0xb8] sm:$0xf] %vm435, %v3536
      %v3696 = vld [vmem:[%s3586 + $0xbc] sm:$0x1]
      %v3697 = vsel %vm446, %v3537, %v3696
      %3698 = vst [vmem:[%s3586 + $0xbc] sm:$0x1] %v3697
      %v3699 = vld [vmem:[#allocation3] sm:$0xf]
      %v3700 = vld [vmem:[#allocation3 + $0x4] sm:$0xf]
      %v3701 = vld [vmem:[#allocation3 + $0x8] sm:$0x1]
      %v3702 = vld [vmem:[#allocation3 + $0xc] sm:$0xf]
      %v3703 = vld [vmem:[#allocation3 + $0x10] sm:$0xf]
      %v3704 = vld [vmem:[#allocation3 + $0x14] sm:$0x1]
      %v3705 = vld [vmem:[#allocation3 + $0x18] sm:$0xf]
      %v3706 = vld [vmem:[#allocation3 + $0x1c] sm:$0xf]
      %v3707 = vld [vmem:[#allocation3 + $0x20] sm:$0x1]
      %v3708 = vld [vmem:[#allocation3 + $0x24] sm:$0xf]
      %v3709 = vld [vmem:[#allocation3 + $0x28] sm:$0xf]
      %v3710 = vld [vmem:[#allocation3 + $0x2c] sm:$0x1]
      %v3711 = vld [vmem:[#allocation3 + $0x30] sm:$0xf]
      %v3712 = vld [vmem:[#allocation3 + $0x34] sm:$0xf]
      %v3713 = vld [vmem:[#allocation3 + $0x38] sm:$0x1]
      %v3714 = vld [vmem:[#allocation3 + $0x3c] sm:$0xf]
      %v3715 = vld [vmem:[#allocation3 + $0x40] sm:$0xf]
      %v3716 = vld [vmem:[#allocation3 + $0x44] sm:$0x1]
      %v3717 = vld [vmem:[#allocation3 + $0x48] sm:$0xf]
      %v3718 = vld [vmem:[#allocation3 + $0x4c] sm:$0xf]
      %v3719 = vld [vmem:[#allocation3 + $0x50] sm:$0x1]
      %v3720 = vld [vmem:[#allocation3 + $0x54] sm:$0xf]
      %v3721 = vld [vmem:[#allocation3 + $0x58] sm:$0xf]
      %v3722 = vld [vmem:[#allocation3 + $0x5c] sm:$0x1]
      %v3723 = vld [vmem:[#allocation3 + $0x60] sm:$0xf]
      %v3724 = vld [vmem:[#allocation3 + $0x64] sm:$0xf]
      %v3725 = vld [vmem:[#allocation3 + $0x68] sm:$0x1]
      %v3726 = vld [vmem:[#allocation3 + $0x6c] sm:$0xf]
      %v3727 = vld [vmem:[#allocation3 + $0x70] sm:$0xf]
      %v3728 = vld [vmem:[#allocation3 + $0x74] sm:$0x1]
      %v3729 = vld [vmem:[#allocation3 + $0x78] sm:$0xf]
      %v3730 = vld [vmem:[#allocation3 + $0x7c] sm:$0xf]
      %v3731 = vld [vmem:[#allocation3 + $0x80] sm:$0x1]
      %v3732 = vld [vmem:[#allocation3 + $0x84] sm:$0xf]
      %v3733 = vld [vmem:[#allocation3 + $0x88] sm:$0xf]
      %v3734 = vld [vmem:[#allocation3 + $0x8c] sm:$0x1]
      %v3735 = vld [vmem:[#allocation3 + $0x90] sm:$0xf]
      %v3736 = vld [vmem:[#allocation3 + $0x94] sm:$0xf]
      %v3737 = vld [vmem:[#allocation3 + $0x98] sm:$0x1]
      %v3738 = vld [vmem:[#allocation3 + $0x9c] sm:$0xf]
      %v3739 = vld [vmem:[#allocation3 + $0xa0] sm:$0xf]
      %v3740 = vld [vmem:[#allocation3 + $0xa4] sm:$0x1]
      %v3741 = vld [vmem:[#allocation3 + $0xa8] sm:$0xf]
      %v3742 = vld [vmem:[#allocation3 + $0xac] sm:$0xf]
      %v3743 = vld [vmem:[#allocation3 + $0xb0] sm:$0x1]
      %v3744 = vld [vmem:[#allocation3 + $0xb4] sm:$0xf]
      %v3745 = vld [vmem:[#allocation3 + $0xb8] sm:$0xf]
      %v3746 = vld [vmem:[#allocation3 + $0xbc] sm:$0x1]
      %v3747 = vld [vmem:[#allocation3 + $0xc0] sm:$0xf]
      %v3748 = vld [vmem:[#allocation3 + $0xc4] sm:$0xf]
      %v3749 = vld [vmem:[#allocation3 + $0xc8] sm:$0x1]
      %v3750 = vld [vmem:[#allocation3 + $0xcc] sm:$0xf]
      %v3751 = vld [vmem:[#allocation3 + $0xd0] sm:$0xf]
      %v3752 = vld [vmem:[#allocation3 + $0xd4] sm:$0x1]
      %v3785 = vunpack.c.l.b16 %v3699
      %v3786 = vunpack.c.l.b16 %v3700
      %v3787 = vunpack.c.l.b16 %v3702
      %v3788 = vunpack.c.l.b16 %v3703
      %v3789 = vunpack.c.l.b16 %v3705
      %v3790 = vunpack.c.l.b16 %v3706
      %v3791 = vunpack.c.l.b16 %v3708
      %v3792 = vunpack.c.l.b16 %v3709
      %v3793 = vunpack.c.l.b16 %v3711
      %v3794 = vunpack.c.l.b16 %v3712
      %v3795 = vunpack.c.l.b16 %v3714
      %v3796 = vunpack.c.l.b16 %v3715
      %v3797 = vunpack.c.l.b16 %v3717
      %v3798 = vunpack.c.l.b16 %v3718
      %v3799 = vunpack.c.l.b16 %v3720
      %v3800 = vunpack.c.l.b16 %v3721
      %v3801 = vunpack.c.l.b16 %v3723
      %v3802 = vunpack.c.l.b16 %v3724
      %v3803 = vunpack.c.l.b16 %v3726
      %v3804 = vunpack.c.l.b16 %v3727
      %v3805 = vunpack.c.l.b16 %v3729
      %v3806 = vunpack.c.l.b16 %v3730
      %v3807 = vunpack.c.l.b16 %v3732
      %v3808 = vunpack.c.l.b16 %v3733
      %v3809 = vunpack.c.l.b16 %v3735
      %v3810 = vunpack.c.l.b16 %v3736
      %v3811 = vunpack.c.l.b16 %v3738
      %v3812 = vunpack.c.l.b16 %v3739
      %v3813 = vunpack.c.l.b16 %v3741
      %v3814 = vunpack.c.l.b16 %v3742
      %v3815 = vunpack.c.l.b16 %v3744
      %v3816 = vunpack.c.l.b16 %v3745
      %v3817 = vpack.c.b16 %v3786, %v3785
      %v3818 = vpack.c.b16 %v3788, %v3787
      %v3819 = vpack.c.b16 %v3790, %v3789
      %v3820 = vpack.c.b16 %v3792, %v3791
      %v3821 = vpack.c.b16 %v3794, %v3793
      %v3822 = vpack.c.b16 %v3796, %v3795
      %v3823 = vpack.c.b16 %v3798, %v3797
      %v3824 = vpack.c.b16 %v3800, %v3799
      %v3825 = vpack.c.b16 %v3802, %v3801
      %v3826 = vpack.c.b16 %v3804, %v3803
      %v3827 = vpack.c.b16 %v3806, %v3805
      %v3828 = vpack.c.b16 %v3808, %v3807
      %v3829 = vpack.c.b16 %v3810, %v3809
      %v3830 = vpack.c.b16 %v3812, %v3811
      %v3831 = vpack.c.b16 %v3814, %v3813
      %v3832 = vpack.c.b16 %v3816, %v3815
      %v3849 = vunpack.c.l.b16 %v3701
      %v3850 = vunpack.c.l.b16 %v3704
      %v3851 = vunpack.c.l.b16 %v3707
      %v3852 = vunpack.c.l.b16 %v3710
      %v3853 = vunpack.c.l.b16 %v3713
      %v3854 = vunpack.c.l.b16 %v3716
      %v3855 = vunpack.c.l.b16 %v3719
      %v3856 = vunpack.c.l.b16 %v3722
      %v3857 = vunpack.c.l.b16 %v3725
      %v3858 = vunpack.c.l.b16 %v3728
      %v3859 = vunpack.c.l.b16 %v3731
      %v3860 = vunpack.c.l.b16 %v3734
      %v3861 = vunpack.c.l.b16 %v3737
      %v3862 = vunpack.c.l.b16 %v3740
      %v3863 = vunpack.c.l.b16 %v3743
      %v3864 = vunpack.c.l.b16 %v3746
      %v3865 = vpack.c.b16 %v3849, %v3849
      %v3866 = vpack.c.b16 %v3850, %v3850
      %v3867 = vpack.c.b16 %v3851, %v3851
      %v3868 = vpack.c.b16 %v3852, %v3852
      %v3869 = vpack.c.b16 %v3853, %v3853
      %v3870 = vpack.c.b16 %v3854, %v3854
      %v3871 = vpack.c.b16 %v3855, %v3855
      %v3872 = vpack.c.b16 %v3856, %v3856
      %v3873 = vpack.c.b16 %v3857, %v3857
      %v3874 = vpack.c.b16 %v3858, %v3858
      %v3875 = vpack.c.b16 %v3859, %v3859
      %v3876 = vpack.c.b16 %v3860, %v3860
      %v3877 = vpack.c.b16 %v3861, %v3861
      %v3878 = vpack.c.b16 %v3862, %v3862
      %v3879 = vpack.c.b16 %v3863, %v3863
      %v3880 = vpack.c.b16 %v3864, %v3864
      %v3882 = vshrl.u32 %v3817, 16
      %v3884 = vshll.u32 %v3817, 16
      %v3886 = vrot.slane %v3884, 1
      %v3887 = vor.u32 %v3882, %v3886
      %v3889 = vshll.u32 %v3865, 16
      %v3891 = vrot.slane %v3889, 1
      %v3892 = vsel %vm2018, %v3887, %v3891
      %v3894 = vshrl.u32 %v3818, 16
      %v3896 = vshll.u32 %v3818, 16
      %v3898 = vrot.slane %v3896, 1
      %v3899 = vor.u32 %v3894, %v3898
      %v3901 = vshll.u32 %v3866, 16
      %v3903 = vrot.slane %v3901, 1
      %v3904 = vsel %vm2018, %v3899, %v3903
      %v3906 = vshrl.u32 %v3819, 16
      %v3908 = vshll.u32 %v3819, 16
      %v3910 = vrot.slane %v3908, 1
      %v3911 = vor.u32 %v3906, %v3910
      %v3913 = vshll.u32 %v3867, 16
      %v3915 = vrot.slane %v3913, 1
      %v3916 = vsel %vm2018, %v3911, %v3915
      %v3918 = vshrl.u32 %v3820, 16
      %v3920 = vshll.u32 %v3820, 16
      %v3922 = vrot.slane %v3920, 1
      %v3923 = vor.u32 %v3918, %v3922
      %v3925 = vshll.u32 %v3868, 16
      %v3927 = vrot.slane %v3925, 1
      %v3928 = vsel %vm2018, %v3923, %v3927
      %v3930 = vshrl.u32 %v3821, 16
      %v3932 = vshll.u32 %v3821, 16
      %v3934 = vrot.slane %v3932, 1
      %v3935 = vor.u32 %v3930, %v3934
      %v3937 = vshll.u32 %v3869, 16
      %v3939 = vrot.slane %v3937, 1
      %v3940 = vsel %vm2018, %v3935, %v3939
      %v3942 = vshrl.u32 %v3822, 16
      %v3944 = vshll.u32 %v3822, 16
      %v3946 = vrot.slane %v3944, 1
      %v3947 = vor.u32 %v3942, %v3946
      %v3949 = vshll.u32 %v3870, 16
      %v3951 = vrot.slane %v3949, 1
      %v3952 = vsel %vm2018, %v3947, %v3951
      %v3954 = vshrl.u32 %v3823, 16
      %v3956 = vshll.u32 %v3823, 16
      %v3958 = vrot.slane %v3956, 1
      %v3959 = vor.u32 %v3954, %v3958
      %v3961 = vshll.u32 %v3871, 16
      %v3963 = vrot.slane %v3961, 1
      %v3964 = vsel %vm2018, %v3959, %v3963
      %v3966 = vshrl.u32 %v3824, 16
      %v3968 = vshll.u32 %v3824, 16
      %v3970 = vrot.slane %v3968, 1
      %v3971 = vor.u32 %v3966, %v3970
      %v3973 = vshll.u32 %v3872, 16
      %v3975 = vrot.slane %v3973, 1
      %v3976 = vsel %vm2018, %v3971, %v3975
      %v3978 = vshrl.u32 %v3825, 16
      %v3980 = vshll.u32 %v3825, 16
      %v3982 = vrot.slane %v3980, 1
      %v3983 = vor.u32 %v3978, %v3982
      %v3985 = vshll.u32 %v3873, 16
      %v3987 = vrot.slane %v3985, 1
      %v3988 = vsel %vm2018, %v3983, %v3987
      %v3990 = vshrl.u32 %v3826, 16
      %v3992 = vshll.u32 %v3826, 16
      %v3994 = vrot.slane %v3992, 1
      %v3995 = vor.u32 %v3990, %v3994
      %v3997 = vshll.u32 %v3874, 16
      %v3999 = vrot.slane %v3997, 1
      %v4000 = vsel %vm2018, %v3995, %v3999
      %v4002 = vshrl.u32 %v3827, 16
      %v4004 = vshll.u32 %v3827, 16
      %v4006 = vrot.slane %v4004, 1
      %v4007 = vor.u32 %v4002, %v4006
      %v4009 = vshll.u32 %v3875, 16
      %v4011 = vrot.slane %v4009, 1
      %v4012 = vsel %vm2018, %v4007, %v4011
      %v4014 = vshrl.u32 %v3828, 16
      %v4016 = vshll.u32 %v3828, 16
      %v4018 = vrot.slane %v4016, 1
      %v4019 = vor.u32 %v4014, %v4018
      %v4021 = vshll.u32 %v3876, 16
      %v4023 = vrot.slane %v4021, 1
      %v4024 = vsel %vm2018, %v4019, %v4023
      %v4026 = vshrl.u32 %v3829, 16
      %v4028 = vshll.u32 %v3829, 16
      %v4030 = vrot.slane %v4028, 1
      %v4031 = vor.u32 %v4026, %v4030
      %v4033 = vshll.u32 %v3877, 16
      %v4035 = vrot.slane %v4033, 1
      %v4036 = vsel %vm2018, %v4031, %v4035
      %v4038 = vshrl.u32 %v3830, 16
      %v4040 = vshll.u32 %v3830, 16
      %v4042 = vrot.slane %v4040, 1
      %v4043 = vor.u32 %v4038, %v4042
      %v4045 = vshll.u32 %v3878, 16
      %v4047 = vrot.slane %v4045, 1
      %v4048 = vsel %vm2018, %v4043, %v4047
      %v4050 = vshrl.u32 %v3831, 16
      %v4052 = vshll.u32 %v3831, 16
      %v4054 = vrot.slane %v4052, 1
      %v4055 = vor.u32 %v4050, %v4054
      %v4057 = vshll.u32 %v3879, 16
      %v4059 = vrot.slane %v4057, 1
      %v4060 = vsel %vm2018, %v4055, %v4059
      %v4062 = vshrl.u32 %v3832, 16
      %v4064 = vshll.u32 %v3832, 16
      %v4066 = vrot.slane %v4064, 1
      %v4067 = vor.u32 %v4062, %v4066
      %v4069 = vshll.u32 %v3880, 16
      %v4071 = vrot.slane %v4069, 1
      %v4072 = vsel %vm2018, %v4067, %v4071
      %4073 = vrot.lane.b32.xlu0 %v3892, 8
      %v4074 = vpop.permute.xlu0 %4073
      %4075 = vrot.lane.b32.xlu0 %v3904, 8
      %v4076 = vpop.permute.xlu0 %4075
      %4077 = vrot.lane.b32.xlu0 %v3916, 8
      %v4078 = vpop.permute.xlu0 %4077
      %4079 = vrot.lane.b32.xlu0 %v3928, 8
      %v4080 = vpop.permute.xlu0 %4079
      %4081 = vrot.lane.b32.xlu0 %v3940, 8
      %v4082 = vpop.permute.xlu0 %4081
      %4083 = vrot.lane.b32.xlu0 %v3952, 8
      %v4084 = vpop.permute.xlu0 %4083
      %4085 = vrot.lane.b32.xlu0 %v3964, 8
      %v4086 = vpop.permute.xlu0 %4085
      %4087 = vrot.lane.b32.xlu0 %v3976, 8
      %v4088 = vpop.permute.xlu0 %4087
      %4089 = vrot.lane.b32.xlu0 %v3988, 8
      %v4090 = vpop.permute.xlu0 %4089
      %4091 = vrot.lane.b32.xlu0 %v4000, 8
      %v4092 = vpop.permute.xlu0 %4091
      %4093 = vrot.lane.b32.xlu0 %v4012, 8
      %v4094 = vpop.permute.xlu0 %4093
      %4095 = vrot.lane.b32.xlu0 %v4024, 8
      %v4096 = vpop.permute.xlu0 %4095
      %4097 = vrot.lane.b32.xlu0 %v4036, 8
      %v4098 = vpop.permute.xlu0 %4097
      %4099 = vrot.lane.b32.xlu0 %v4048, 8
      %v4100 = vpop.permute.xlu0 %4099
      %4101 = vrot.lane.b32.xlu0 %v4060, 8
      %v4102 = vpop.permute.xlu0 %4101
      %4103 = vrot.lane.b32.xlu0 %v4072, 8
      %v4104 = vpop.permute.xlu0 %4103
      %v4105 = vrot.slane %v3817, 1
      %v4106 = vrot.slane %v3865, 1
      %v4107 = vsel %vm2243, %v4105, %v4106
      %v4108 = vrot.slane %v3818, 1
      %v4109 = vrot.slane %v3866, 1
      %v4110 = vsel %vm2243, %v4108, %v4109
      %v4111 = vrot.slane %v3819, 1
      %v4112 = vrot.slane %v3867, 1
      %v4113 = vsel %vm2243, %v4111, %v4112
      %v4114 = vrot.slane %v3820, 1
      %v4115 = vrot.slane %v3868, 1
      %v4116 = vsel %vm2243, %v4114, %v4115
      %v4117 = vrot.slane %v3821, 1
      %v4118 = vrot.slane %v3869, 1
      %v4119 = vsel %vm2243, %v4117, %v4118
      %v4120 = vrot.slane %v3822, 1
      %v4121 = vrot.slane %v3870, 1
      %v4122 = vsel %vm2243, %v4120, %v4121
      %v4123 = vrot.slane %v3823, 1
      %v4124 = vrot.slane %v3871, 1
      %v4125 = vsel %vm2243, %v4123, %v4124
      %v4126 = vrot.slane %v3824, 1
      %v4127 = vrot.slane %v3872, 1
      %v4128 = vsel %vm2243, %v4126, %v4127
      %v4129 = vrot.slane %v3825, 1
      %v4130 = vrot.slane %v3873, 1
      %v4131 = vsel %vm2243, %v4129, %v4130
      %v4132 = vrot.slane %v3826, 1
      %v4133 = vrot.slane %v3874, 1
      %v4134 = vsel %vm2243, %v4132, %v4133
      %v4135 = vrot.slane %v3827, 1
      %v4136 = vrot.slane %v3875, 1
      %v4137 = vsel %vm2243, %v4135, %v4136
      %v4138 = vrot.slane %v3828, 1
      %v4139 = vrot.slane %v3876, 1
      %v4140 = vsel %vm2243, %v4138, %v4139
      %v4141 = vrot.slane %v3829, 1
      %v4142 = vrot.slane %v3877, 1
      %v4143 = vsel %vm2243, %v4141, %v4142
      %v4144 = vrot.slane %v3830, 1
      %v4145 = vrot.slane %v3878, 1
      %v4146 = vsel %vm2243, %v4144, %v4145
      %v4147 = vrot.slane %v3831, 1
      %v4148 = vrot.slane %v3879, 1
      %v4149 = vsel %vm2243, %v4147, %v4148
      %v4150 = vrot.slane %v3832, 1
      %v4151 = vrot.slane %v3880, 1
      %v4152 = vsel %vm2243, %v4150, %v4151
      %4153 = vrot.lane.b32.xlu0 %v4107, 16
      %v4154 = vpop.permute.xlu0 %4153
      %4155 = vrot.lane.b32.xlu0 %v4110, 16
      %v4156 = vpop.permute.xlu0 %4155
      %4157 = vrot.lane.b32.xlu0 %v4113, 16
      %v4158 = vpop.permute.xlu0 %4157
      %4159 = vrot.lane.b32.xlu0 %v4116, 16
      %v4160 = vpop.permute.xlu0 %4159
      %4161 = vrot.lane.b32.xlu0 %v4119, 16
      %v4162 = vpop.permute.xlu0 %4161
      %4163 = vrot.lane.b32.xlu0 %v4122, 16
      %v4164 = vpop.permute.xlu0 %4163
      %4165 = vrot.lane.b32.xlu0 %v4125, 16
      %v4166 = vpop.permute.xlu0 %4165
      %4167 = vrot.lane.b32.xlu0 %v4128, 16
      %v4168 = vpop.permute.xlu0 %4167
      %4169 = vrot.lane.b32.xlu0 %v4131, 16
      %v4170 = vpop.permute.xlu0 %4169
      %4171 = vrot.lane.b32.xlu0 %v4134, 16
      %v4172 = vpop.permute.xlu0 %4171
      %4173 = vrot.lane.b32.xlu0 %v4137, 16
      %v4174 = vpop.permute.xlu0 %4173
      %4175 = vrot.lane.b32.xlu0 %v4140, 16
      %v4176 = vpop.permute.xlu0 %4175
      %4177 = vrot.lane.b32.xlu0 %v4143, 16
      %v4178 = vpop.permute.xlu0 %4177
      %4179 = vrot.lane.b32.xlu0 %v4146, 16
      %v4180 = vpop.permute.xlu0 %4179
      %4181 = vrot.lane.b32.xlu0 %v4149, 16
      %v4182 = vpop.permute.xlu0 %4181
      %4183 = vrot.lane.b32.xlu0 %v4152, 16
      %v4184 = vpop.permute.xlu0 %4183
      %v4187 = vunpack.c.l.b16 %v3747
      %v4188 = vunpack.c.l.b16 %v3748
      %v4189 = vpack.c.b16 %v4188, %v4187
      %4190 = vrot.lane.b32.xlu0 %v3818, 24
      %v4191 = vpop.permute.xlu0 %4190
      %4192 = vrot.lane.b32.xlu0 %v3819, 24
      %v4193 = vpop.permute.xlu0 %4192
      %4194 = vrot.lane.b32.xlu0 %v3820, 24
      %v4195 = vpop.permute.xlu0 %4194
      %4196 = vrot.lane.b32.xlu0 %v3821, 24
      %v4197 = vpop.permute.xlu0 %4196
      %4198 = vrot.lane.b32.xlu0 %v3822, 24
      %v4199 = vpop.permute.xlu0 %4198
      %4200 = vrot.lane.b32.xlu0 %v3823, 24
      %v4201 = vpop.permute.xlu0 %4200
      %4202 = vrot.lane.b32.xlu0 %v3824, 24
      %v4203 = vpop.permute.xlu0 %4202
      %4204 = vrot.lane.b32.xlu0 %v3825, 24
      %v4205 = vpop.permute.xlu0 %4204
      %4206 = vrot.lane.b32.xlu0 %v3826, 24
      %v4207 = vpop.permute.xlu0 %4206
      %4208 = vrot.lane.b32.xlu0 %v3827, 24
      %v4209 = vpop.permute.xlu0 %4208
      %4210 = vrot.lane.b32.xlu0 %v3828, 24
      %v4211 = vpop.permute.xlu0 %4210
      %4212 = vrot.lane.b32.xlu0 %v3829, 24
      %v4213 = vpop.permute.xlu0 %4212
      %4214 = vrot.lane.b32.xlu0 %v3830, 24
      %v4215 = vpop.permute.xlu0 %4214
      %4216 = vrot.lane.b32.xlu0 %v3831, 24
      %v4217 = vpop.permute.xlu0 %4216
      %4218 = vrot.lane.b32.xlu0 %v3832, 24
      %v4219 = vpop.permute.xlu0 %4218
      %4220 = vrot.lane.b32.xlu0 %v4189, 24
      %v4221 = vpop.permute.xlu0 %4220
      %v4223 = vunpack.c.l.b16 %v3749
      %v4224 = vpack.c.b16 %v4223, %v4223
      %v4226 = vshrl.u32 %v4189, 16
      %v4228 = vshll.u32 %v4189, 16
      %v4230 = vrot.slane %v4228, 1
      %v4231 = vor.u32 %v4226, %v4230
      %v4233 = vshll.u32 %v4224, 16
      %v4235 = vrot.slane %v4233, 1
      %v4236 = vsel %vm2018, %v4231, %v4235
      %4237 = vrot.lane.b32.xlu0 %v3904, 32
      %v4238 = vpop.permute.xlu0 %4237
      %4239 = vrot.lane.b32.xlu0 %v3916, 32
      %v4240 = vpop.permute.xlu0 %4239
      %4241 = vrot.lane.b32.xlu0 %v3928, 32
      %v4242 = vpop.permute.xlu0 %4241
      %4243 = vrot.lane.b32.xlu0 %v3940, 32
      %v4244 = vpop.permute.xlu0 %4243
      %4245 = vrot.lane.b32.xlu0 %v3952, 32
      %v4246 = vpop.permute.xlu0 %4245
      %4247 = vrot.lane.b32.xlu0 %v3964, 32
      %v4248 = vpop.permute.xlu0 %4247
      %4249 = vrot.lane.b32.xlu0 %v3976, 32
      %v4250 = vpop.permute.xlu0 %4249
      %4251 = vrot.lane.b32.xlu0 %v3988, 32
      %v4252 = vpop.permute.xlu0 %4251
      %4253 = vrot.lane.b32.xlu0 %v4000, 32
      %v4254 = vpop.permute.xlu0 %4253
      %4255 = vrot.lane.b32.xlu0 %v4012, 32
      %v4256 = vpop.permute.xlu0 %4255
      %4257 = vrot.lane.b32.xlu0 %v4024, 32
      %v4258 = vpop.permute.xlu0 %4257
      %4259 = vrot.lane.b32.xlu0 %v4036, 32
      %v4260 = vpop.permute.xlu0 %4259
      %4261 = vrot.lane.b32.xlu0 %v4048, 32
      %v4262 = vpop.permute.xlu0 %4261
      %4263 = vrot.lane.b32.xlu0 %v4060, 32
      %v4264 = vpop.permute.xlu0 %4263
      %4265 = vrot.lane.b32.xlu0 %v4072, 32
      %v4266 = vpop.permute.xlu0 %4265
      %4267 = vrot.lane.b32.xlu0 %v4236, 32
      %v4268 = vpop.permute.xlu0 %4267
      %v4269 = vrot.slane %v4189, 1
      %v4270 = vrot.slane %v4224, 1
      %v4271 = vsel %vm2243, %v4269, %v4270
      %4272 = vrot.lane.b32.xlu0 %v4110, 40
      %v4273 = vpop.permute.xlu0 %4272
      %4274 = vrot.lane.b32.xlu0 %v4113, 40
      %v4275 = vpop.permute.xlu0 %4274
      %4276 = vrot.lane.b32.xlu0 %v4116, 40
      %v4277 = vpop.permute.xlu0 %4276
      %4278 = vrot.lane.b32.xlu0 %v4119, 40
      %v4279 = vpop.permute.xlu0 %4278
      %4280 = vrot.lane.b32.xlu0 %v4122, 40
      %v4281 = vpop.permute.xlu0 %4280
      %4282 = vrot.lane.b32.xlu0 %v4125, 40
      %v4283 = vpop.permute.xlu0 %4282
      %4284 = vrot.lane.b32.xlu0 %v4128, 40
      %v4285 = vpop.permute.xlu0 %4284
      %4286 = vrot.lane.b32.xlu0 %v4131, 40
      %v4287 = vpop.permute.xlu0 %4286
      %4288 = vrot.lane.b32.xlu0 %v4134, 40
      %v4289 = vpop.permute.xlu0 %4288
      %4290 = vrot.lane.b32.xlu0 %v4137, 40
      %v4291 = vpop.permute.xlu0 %4290
      %4292 = vrot.lane.b32.xlu0 %v4140, 40
      %v4293 = vpop.permute.xlu0 %4292
      %4294 = vrot.lane.b32.xlu0 %v4143, 40
      %v4295 = vpop.permute.xlu0 %4294
      %4296 = vrot.lane.b32.xlu0 %v4146, 40
      %v4297 = vpop.permute.xlu0 %4296
      %4298 = vrot.lane.b32.xlu0 %v4149, 40
      %v4299 = vpop.permute.xlu0 %4298
      %4300 = vrot.lane.b32.xlu0 %v4152, 40
      %v4301 = vpop.permute.xlu0 %4300
      %4302 = vrot.lane.b32.xlu0 %v4271, 40
      %v4303 = vpop.permute.xlu0 %4302
      %v4306 = vunpack.c.l.b16 %v3750
      %v4307 = vunpack.c.l.b16 %v3751
      %v4308 = vpack.c.b16 %v4307, %v4306
      %4309 = vrot.lane.b32.xlu0 %v3819, 48
      %v4310 = vpop.permute.xlu0 %4309
      %4311 = vrot.lane.b32.xlu0 %v3820, 48
      %v4312 = vpop.permute.xlu0 %4311
      %4313 = vrot.lane.b32.xlu0 %v3821, 48
      %v4314 = vpop.permute.xlu0 %4313
      %4315 = vrot.lane.b32.xlu0 %v3822, 48
      %v4316 = vpop.permute.xlu0 %4315
      %4317 = vrot.lane.b32.xlu0 %v3823, 48
      %v4318 = vpop.permute.xlu0 %4317
      %4319 = vrot.lane.b32.xlu0 %v3824, 48
      %v4320 = vpop.permute.xlu0 %4319
      %4321 = vrot.lane.b32.xlu0 %v3825, 48
      %v4322 = vpop.permute.xlu0 %4321
      %4323 = vrot.lane.b32.xlu0 %v3826, 48
      %v4324 = vpop.permute.xlu0 %4323
      %4325 = vrot.lane.b32.xlu0 %v3827, 48
      %v4326 = vpop.permute.xlu0 %4325
      %4327 = vrot.lane.b32.xlu0 %v3828, 48
      %v4328 = vpop.permute.xlu0 %4327
      %4329 = vrot.lane.b32.xlu0 %v3829, 48
      %v4330 = vpop.permute.xlu0 %4329
      %4331 = vrot.lane.b32.xlu0 %v3830, 48
      %v4332 = vpop.permute.xlu0 %4331
      %4333 = vrot.lane.b32.xlu0 %v3831, 48
      %v4334 = vpop.permute.xlu0 %4333
      %4335 = vrot.lane.b32.xlu0 %v3832, 48
      %v4336 = vpop.permute.xlu0 %4335
      %4337 = vrot.lane.b32.xlu0 %v4189, 48
      %v4338 = vpop.permute.xlu0 %4337
      %4339 = vrot.lane.b32.xlu0 %v4308, 48
      %v4340 = vpop.permute.xlu0 %4339
      %v4342 = vunpack.c.l.b16 %v3752
      %v4343 = vpack.c.b16 %v4342, %v4342
      %v4345 = vshrl.u32 %v4308, 16
      %v4347 = vshll.u32 %v4308, 16
      %v4349 = vrot.slane %v4347, 1
      %v4350 = vor.u32 %v4345, %v4349
      %v4352 = vshll.u32 %v4343, 16
      %v4354 = vrot.slane %v4352, 1
      %v4355 = vsel %vm2018, %v4350, %v4354
      %4356 = vrot.lane.b32.xlu0 %v3916, 56
      %v4357 = vpop.permute.xlu0 %4356
      %4358 = vrot.lane.b32.xlu0 %v3928, 56
      %v4359 = vpop.permute.xlu0 %4358
      %4360 = vrot.lane.b32.xlu0 %v3940, 56
      %v4361 = vpop.permute.xlu0 %4360
      %4362 = vrot.lane.b32.xlu0 %v3952, 56
      %v4363 = vpop.permute.xlu0 %4362
      %4364 = vrot.lane.b32.xlu0 %v3964, 56
      %v4365 = vpop.permute.xlu0 %4364
      %4366 = vrot.lane.b32.xlu0 %v3976, 56
      %v4367 = vpop.permute.xlu0 %4366
      %4368 = vrot.lane.b32.xlu0 %v3988, 56
      %v4369 = vpop.permute.xlu0 %4368
      %4370 = vrot.lane.b32.xlu0 %v4000, 56
      %v4371 = vpop.permute.xlu0 %4370
      %4372 = vrot.lane.b32.xlu0 %v4012, 56
      %v4373 = vpop.permute.xlu0 %4372
      %4374 = vrot.lane.b32.xlu0 %v4024, 56
      %v4375 = vpop.permute.xlu0 %4374
      %4376 = vrot.lane.b32.xlu0 %v4036, 56
      %v4377 = vpop.permute.xlu0 %4376
      %4378 = vrot.lane.b32.xlu0 %v4048, 56
      %v4379 = vpop.permute.xlu0 %4378
      %4380 = vrot.lane.b32.xlu0 %v4060, 56
      %v4381 = vpop.permute.xlu0 %4380
      %4382 = vrot.lane.b32.xlu0 %v4072, 56
      %v4383 = vpop.permute.xlu0 %4382
      %4384 = vrot.lane.b32.xlu0 %v4236, 56
      %v4385 = vpop.permute.xlu0 %4384
      %4386 = vrot.lane.b32.xlu0 %v4355, 56
      %v4387 = vpop.permute.xlu0 %4386
      %v4388 = vrot.slane %v4308, 1
      %v4389 = vrot.slane %v4343, 1
      %v4390 = vsel %vm2243, %v4388, %v4389
      %4391 = vrot.lane.b32.xlu0 %v4113, 64
      %v4392 = vpop.permute.xlu0 %4391
      %4393 = vrot.lane.b32.xlu0 %v4116, 64
      %v4394 = vpop.permute.xlu0 %4393
      %4395 = vrot.lane.b32.xlu0 %v4119, 64
      %v4396 = vpop.permute.xlu0 %4395
      %4397 = vrot.lane.b32.xlu0 %v4122, 64
      %v4398 = vpop.permute.xlu0 %4397
      %4399 = vrot.lane.b32.xlu0 %v4125, 64
      %v4400 = vpop.permute.xlu0 %4399
      %4401 = vrot.lane.b32.xlu0 %v4128, 64
      %v4402 = vpop.permute.xlu0 %4401
      %4403 = vrot.lane.b32.xlu0 %v4131, 64
      %v4404 = vpop.permute.xlu0 %4403
      %4405 = vrot.lane.b32.xlu0 %v4134, 64
      %v4406 = vpop.permute.xlu0 %4405
      %4407 = vrot.lane.b32.xlu0 %v4137, 64
      %v4408 = vpop.permute.xlu0 %4407
      %4409 = vrot.lane.b32.xlu0 %v4140, 64
      %v4410 = vpop.permute.xlu0 %4409
      %4411 = vrot.lane.b32.xlu0 %v4143, 64
      %v4412 = vpop.permute.xlu0 %4411
      %4413 = vrot.lane.b32.xlu0 %v4146, 64
      %v4414 = vpop.permute.xlu0 %4413
      %4415 = vrot.lane.b32.xlu0 %v4149, 64
      %v4416 = vpop.permute.xlu0 %4415
      %4417 = vrot.lane.b32.xlu0 %v4152, 64
      %v4418 = vpop.permute.xlu0 %4417
      %4419 = vrot.lane.b32.xlu0 %v4271, 64
      %v4420 = vpop.permute.xlu0 %4419
      %4421 = vrot.lane.b32.xlu0 %v4390, 64
      %v4422 = vpop.permute.xlu0 %4421
      %v4424 = vsel %vm2562, %v3817, %v4074
      %v4426 = vsel %vm2562, %v3818, %v4076
      %v4428 = vsel %vm2562, %v3819, %v4078
      %v4430 = vsel %vm2562, %v3820, %v4080
      %v4432 = vsel %vm2562, %v3821, %v4082
      %v4434 = vsel %vm2562, %v3822, %v4084
      %v4436 = vsel %vm2562, %v3823, %v4086
      %v4438 = vsel %vm2562, %v3824, %v4088
      %v4440 = vsel %vm2562, %v3825, %v4090
      %v4442 = vsel %vm2562, %v3826, %v4092
      %v4444 = vsel %vm2562, %v3827, %v4094
      %v4446 = vsel %vm2562, %v3828, %v4096
      %v4448 = vsel %vm2562, %v3829, %v4098
      %v4450 = vsel %vm2562, %v3830, %v4100
      %v4452 = vsel %vm2562, %v3831, %v4102
      %v4454 = vsel %vm2562, %v3832, %v4104
      %v4456 = vsel %vm2595, %v4424, %v4154
      %v4458 = vsel %vm2595, %v4426, %v4156
      %v4460 = vsel %vm2595, %v4428, %v4158
      %v4462 = vsel %vm2595, %v4430, %v4160
      %v4464 = vsel %vm2595, %v4432, %v4162
      %v4466 = vsel %vm2595, %v4434, %v4164
      %v4468 = vsel %vm2595, %v4436, %v4166
      %v4470 = vsel %vm2595, %v4438, %v4168
      %v4472 = vsel %vm2595, %v4440, %v4170
      %v4474 = vsel %vm2595, %v4442, %v4172
      %v4476 = vsel %vm2595, %v4444, %v4174
      %v4478 = vsel %vm2595, %v4446, %v4176
      %v4480 = vsel %vm2595, %v4448, %v4178
      %v4482 = vsel %vm2595, %v4450, %v4180
      %v4484 = vsel %vm2595, %v4452, %v4182
      %v4486 = vsel %vm2595, %v4454, %v4184
      %v4488 = vsel %vm2628, %v4456, %v4191
      %v4490 = vsel %vm2628, %v4458, %v4193
      %v4492 = vsel %vm2628, %v4460, %v4195
      %v4494 = vsel %vm2628, %v4462, %v4197
      %v4496 = vsel %vm2628, %v4464, %v4199
      %v4498 = vsel %vm2628, %v4466, %v4201
      %v4500 = vsel %vm2628, %v4468, %v4203
      %v4502 = vsel %vm2628, %v4470, %v4205
      %v4504 = vsel %vm2628, %v4472, %v4207
      %v4506 = vsel %vm2628, %v4474, %v4209
      %v4508 = vsel %vm2628, %v4476, %v4211
      %v4510 = vsel %vm2628, %v4478, %v4213
      %v4512 = vsel %vm2628, %v4480, %v4215
      %v4514 = vsel %vm2628, %v4482, %v4217
      %v4516 = vsel %vm2628, %v4484, %v4219
      %v4518 = vsel %vm2628, %v4486, %v4221
      %v4520 = vsel %vm2661, %v4488, %v4238
      %v4522 = vsel %vm2661, %v4490, %v4240
      %v4524 = vsel %vm2661, %v4492, %v4242
      %v4526 = vsel %vm2661, %v4494, %v4244
      %v4528 = vsel %vm2661, %v4496, %v4246
      %v4530 = vsel %vm2661, %v4498, %v4248
      %v4532 = vsel %vm2661, %v4500, %v4250
      %v4534 = vsel %vm2661, %v4502, %v4252
      %v4536 = vsel %vm2661, %v4504, %v4254
      %v4538 = vsel %vm2661, %v4506, %v4256
      %v4540 = vsel %vm2661, %v4508, %v4258
      %v4542 = vsel %vm2661, %v4510, %v4260
      %v4544 = vsel %vm2661, %v4512, %v4262
      %v4546 = vsel %vm2661, %v4514, %v4264
      %v4548 = vsel %vm2661, %v4516, %v4266
      %v4550 = vsel %vm2661, %v4518, %v4268
      %v4552 = vsel %vm2694, %v4520, %v4273
      %v4554 = vsel %vm2694, %v4522, %v4275
      %v4556 = vsel %vm2694, %v4524, %v4277
      %v4558 = vsel %vm2694, %v4526, %v4279
      %v4560 = vsel %vm2694, %v4528, %v4281
      %v4562 = vsel %vm2694, %v4530, %v4283
      %v4564 = vsel %vm2694, %v4532, %v4285
      %v4566 = vsel %vm2694, %v4534, %v4287
      %v4568 = vsel %vm2694, %v4536, %v4289
      %v4570 = vsel %vm2694, %v4538, %v4291
      %v4572 = vsel %vm2694, %v4540, %v4293
      %v4574 = vsel %vm2694, %v4542, %v4295
      %v4576 = vsel %vm2694, %v4544, %v4297
      %v4578 = vsel %vm2694, %v4546, %v4299
      %v4580 = vsel %vm2694, %v4548, %v4301
      %v4582 = vsel %vm2694, %v4550, %v4303
      %v4584 = vsel %vm2727, %v4552, %v4310
      %v4586 = vsel %vm2727, %v4554, %v4312
      %v4588 = vsel %vm2727, %v4556, %v4314
      %v4590 = vsel %vm2727, %v4558, %v4316
      %v4592 = vsel %vm2727, %v4560, %v4318
      %v4594 = vsel %vm2727, %v4562, %v4320
      %v4596 = vsel %vm2727, %v4564, %v4322
      %v4598 = vsel %vm2727, %v4566, %v4324
      %v4600 = vsel %vm2727, %v4568, %v4326
      %v4602 = vsel %vm2727, %v4570, %v4328
      %v4604 = vsel %vm2727, %v4572, %v4330
      %v4606 = vsel %vm2727, %v4574, %v4332
      %v4608 = vsel %vm2727, %v4576, %v4334
      %v4610 = vsel %vm2727, %v4578, %v4336
      %v4612 = vsel %vm2727, %v4580, %v4338
      %v4614 = vsel %vm2727, %v4582, %v4340
      %v4616 = vsel %vm2760, %v4584, %v4357
      %v4618 = vsel %vm2760, %v4586, %v4359
      %v4620 = vsel %vm2760, %v4588, %v4361
      %v4622 = vsel %vm2760, %v4590, %v4363
      %v4624 = vsel %vm2760, %v4592, %v4365
      %v4626 = vsel %vm2760, %v4594, %v4367
      %v4628 = vsel %vm2760, %v4596, %v4369
      %v4630 = vsel %vm2760, %v4598, %v4371
      %v4632 = vsel %vm2760, %v4600, %v4373
      %v4634 = vsel %vm2760, %v4602, %v4375
      %v4636 = vsel %vm2760, %v4604, %v4377
      %v4638 = vsel %vm2760, %v4606, %v4379
      %v4640 = vsel %vm2760, %v4608, %v4381
      %v4642 = vsel %vm2760, %v4610, %v4383
      %v4644 = vsel %vm2760, %v4612, %v4385
      %v4646 = vsel %vm2760, %v4614, %v4387
      %v4648 = vsel %vm2793, %v4616, %v4392
      %v4650 = vsel %vm2793, %v4618, %v4394
      %v4652 = vsel %vm2793, %v4620, %v4396
      %v4654 = vsel %vm2793, %v4622, %v4398
      %v4656 = vsel %vm2793, %v4624, %v4400
      %v4658 = vsel %vm2793, %v4626, %v4402
      %v4660 = vsel %vm2793, %v4628, %v4404
      %v4662 = vsel %vm2793, %v4630, %v4406
      %v4664 = vsel %vm2793, %v4632, %v4408
      %v4666 = vsel %vm2793, %v4634, %v4410
      %v4668 = vsel %vm2793, %v4636, %v4412
      %v4670 = vsel %vm2793, %v4638, %v4414
      %v4672 = vsel %vm2793, %v4640, %v4416
      %v4674 = vsel %vm2793, %v4642, %v4418
      %v4676 = vsel %vm2793, %v4644, %v4420
      %v4678 = vsel %vm2793, %v4646, %v4422
      %v4679 = vld [vmem:[%s5] sm:$0xf]
      %v4680 = vld [vmem:[%s5 + $0x4] sm:$0xf]
      %v4681 = vld [vmem:[%s5 + $0x8] sm:$0xf]
      %v4682 = vld [vmem:[%s5 + $0xc] sm:$0xf]
      %v4683 = vld [vmem:[%s5 + $0x10] sm:$0xf]
      %v4684 = vld [vmem:[%s5 + $0x14] sm:$0xf]
      %v4685 = vld [vmem:[%s5 + $0x18] sm:$0xf]
      %v4686 = vld [vmem:[%s5 + $0x1c] sm:$0xf]
      %v4687 = vld [vmem:[%s5 + $0x20] sm:$0xf]
      %v4688 = vld [vmem:[#allocation4] sm:$0xf]
      %v4689 = vld [vmem:[#allocation4 + $0x4] sm:$0xf]
      %v4690 = vld [vmem:[#allocation4 + $0x8] sm:$0x1]
      %v4691 = vld [vmem:[#allocation4 + $0xc] sm:$0xf]
      %v4692 = vld [vmem:[#allocation4 + $0x10] sm:$0xf]
      %v4693 = vld [vmem:[#allocation4 + $0x14] sm:$0x1]
      %v4694 = vld [vmem:[#allocation4 + $0x18] sm:$0xf]
      %v4695 = vld [vmem:[#allocation4 + $0x1c] sm:$0xf]
      %v4696 = vld [vmem:[#allocation4 + $0x20] sm:$0x1]
      %v4697 = vld [vmem:[#allocation4 + $0x24] sm:$0xf]
      %v4698 = vld [vmem:[#allocation4 + $0x28] sm:$0xf]
      %v4699 = vld [vmem:[#allocation4 + $0x2c] sm:$0x1]
      %v4700 = vld [vmem:[#allocation4 + $0x30] sm:$0xf]
      %v4701 = vld [vmem:[#allocation4 + $0x34] sm:$0xf]
      %v4702 = vld [vmem:[#allocation4 + $0x38] sm:$0x1]
      %v4703 = vld [vmem:[#allocation4 + $0x3c] sm:$0xf]
      %v4704 = vld [vmem:[#allocation4 + $0x40] sm:$0xf]
      %v4705 = vld [vmem:[#allocation4 + $0x44] sm:$0x1]
      %v4706 = vld [vmem:[#allocation4 + $0x48] sm:$0xf]
      %v4707 = vld [vmem:[#allocation4 + $0x4c] sm:$0xf]
      %v4708 = vld [vmem:[#allocation4 + $0x50] sm:$0x1]
      %v4709 = vld [vmem:[#allocation4 + $0x54] sm:$0xf]
      %v4710 = vld [vmem:[#allocation4 + $0x58] sm:$0xf]
      %v4711 = vld [vmem:[#allocation4 + $0x5c] sm:$0x1]
      %v4712 = vld [vmem:[#allocation4 + $0x60] sm:$0xf]
      %v4713 = vld [vmem:[#allocation4 + $0x64] sm:$0xf]
      %v4714 = vld [vmem:[#allocation4 + $0x68] sm:$0x1]
      %v4715 = vld [vmem:[#allocation4 + $0x6c] sm:$0xf]
      %v4716 = vld [vmem:[#allocation4 + $0x70] sm:$0xf]
      %v4717 = vld [vmem:[#allocation4 + $0x74] sm:$0x1]
      %v4718 = vld [vmem:[#allocation4 + $0x78] sm:$0xf]
      %v4719 = vld [vmem:[#allocation4 + $0x7c] sm:$0xf]
      %v4720 = vld [vmem:[#allocation4 + $0x80] sm:$0x1]
      %v4721 = vld [vmem:[#allocation4 + $0x84] sm:$0xf]
      %v4722 = vld [vmem:[#allocation4 + $0x88] sm:$0xf]
      %v4723 = vld [vmem:[#allocation4 + $0x8c] sm:$0x1]
      %v4724 = vld [vmem:[#allocation4 + $0x90] sm:$0xf]
      %v4725 = vld [vmem:[#allocation4 + $0x94] sm:$0xf]
      %v4726 = vld [vmem:[#allocation4 + $0x98] sm:$0x1]
      %v4727 = vld [vmem:[#allocation4 + $0x9c] sm:$0xf]
      %v4728 = vld [vmem:[#allocation4 + $0xa0] sm:$0xf]
      %v4729 = vld [vmem:[#allocation4 + $0xa4] sm:$0x1]
      %v4730 = vld [vmem:[#allocation4 + $0xa8] sm:$0xf]
      %v4731 = vld [vmem:[#allocation4 + $0xac] sm:$0xf]
      %v4732 = vld [vmem:[#allocation4 + $0xb0] sm:$0x1]
      %v4733 = vld [vmem:[#allocation4 + $0xb4] sm:$0xf]
      %v4734 = vld [vmem:[#allocation4 + $0xb8] sm:$0xf]
      %v4735 = vld [vmem:[#allocation4 + $0xbc] sm:$0x1]
      %v4736 = vld [vmem:[#allocation4 + $0xc0] sm:$0xf]
      %v4737 = vld [vmem:[#allocation4 + $0xc4] sm:$0xf]
      %v4738 = vld [vmem:[#allocation4 + $0xc8] sm:$0x1]
      %v4739 = vld [vmem:[#allocation4 + $0xcc] sm:$0xf]
      %v4740 = vld [vmem:[#allocation4 + $0xd0] sm:$0xf]
      %v4741 = vld [vmem:[#allocation4 + $0xd4] sm:$0x1]
      %v4774 = vunpack.c.l.b16 %v4688
      %v4775 = vunpack.c.l.b16 %v4689
      %v4776 = vunpack.c.l.b16 %v4691
      %v4777 = vunpack.c.l.b16 %v4692
      %v4778 = vunpack.c.l.b16 %v4694
      %v4779 = vunpack.c.l.b16 %v4695
      %v4780 = vunpack.c.l.b16 %v4697
      %v4781 = vunpack.c.l.b16 %v4698
      %v4782 = vunpack.c.l.b16 %v4700
      %v4783 = vunpack.c.l.b16 %v4701
      %v4784 = vunpack.c.l.b16 %v4703
      %v4785 = vunpack.c.l.b16 %v4704
      %v4786 = vunpack.c.l.b16 %v4706
      %v4787 = vunpack.c.l.b16 %v4707
      %v4788 = vunpack.c.l.b16 %v4709
      %v4789 = vunpack.c.l.b16 %v4710
      %v4790 = vunpack.c.l.b16 %v4712
      %v4791 = vunpack.c.l.b16 %v4713
      %v4792 = vunpack.c.l.b16 %v4715
      %v4793 = vunpack.c.l.b16 %v4716
      %v4794 = vunpack.c.l.b16 %v4718
      %v4795 = vunpack.c.l.b16 %v4719
      %v4796 = vunpack.c.l.b16 %v4721
      %v4797 = vunpack.c.l.b16 %v4722
      %v4798 = vunpack.c.l.b16 %v4724
      %v4799 = vunpack.c.l.b16 %v4725
      %v4800 = vunpack.c.l.b16 %v4727
      %v4801 = vunpack.c.l.b16 %v4728
      %v4802 = vunpack.c.l.b16 %v4730
      %v4803 = vunpack.c.l.b16 %v4731
      %v4804 = vunpack.c.l.b16 %v4733
      %v4805 = vunpack.c.l.b16 %v4734
      %v4806 = vpack.c.b16 %v4775, %v4774
      %v4807 = vpack.c.b16 %v4777, %v4776
      %v4808 = vpack.c.b16 %v4779, %v4778
      %v4809 = vpack.c.b16 %v4781, %v4780
      %v4810 = vpack.c.b16 %v4783, %v4782
      %v4811 = vpack.c.b16 %v4785, %v4784
      %v4812 = vpack.c.b16 %v4787, %v4786
      %v4813 = vpack.c.b16 %v4789, %v4788
      %v4814 = vpack.c.b16 %v4791, %v4790
      %v4815 = vpack.c.b16 %v4793, %v4792
      %v4816 = vpack.c.b16 %v4795, %v4794
      %v4817 = vpack.c.b16 %v4797, %v4796
      %v4818 = vpack.c.b16 %v4799, %v4798
      %v4819 = vpack.c.b16 %v4801, %v4800
      %v4820 = vpack.c.b16 %v4803, %v4802
      %v4821 = vpack.c.b16 %v4805, %v4804
      %v4838 = vunpack.c.l.b16 %v4690
      %v4839 = vunpack.c.l.b16 %v4693
      %v4840 = vunpack.c.l.b16 %v4696
      %v4841 = vunpack.c.l.b16 %v4699
      %v4842 = vunpack.c.l.b16 %v4702
      %v4843 = vunpack.c.l.b16 %v4705
      %v4844 = vunpack.c.l.b16 %v4708
      %v4845 = vunpack.c.l.b16 %v4711
      %v4846 = vunpack.c.l.b16 %v4714
      %v4847 = vunpack.c.l.b16 %v4717
      %v4848 = vunpack.c.l.b16 %v4720
      %v4849 = vunpack.c.l.b16 %v4723
      %v4850 = vunpack.c.l.b16 %v4726
      %v4851 = vunpack.c.l.b16 %v4729
      %v4852 = vunpack.c.l.b16 %v4732
      %v4853 = vunpack.c.l.b16 %v4735
      %v4854 = vpack.c.b16 %v4838, %v4838
      %v4855 = vpack.c.b16 %v4839, %v4839
      %v4856 = vpack.c.b16 %v4840, %v4840
      %v4857 = vpack.c.b16 %v4841, %v4841
      %v4858 = vpack.c.b16 %v4842, %v4842
      %v4859 = vpack.c.b16 %v4843, %v4843
      %v4860 = vpack.c.b16 %v4844, %v4844
      %v4861 = vpack.c.b16 %v4845, %v4845
      %v4862 = vpack.c.b16 %v4846, %v4846
      %v4863 = vpack.c.b16 %v4847, %v4847
      %v4864 = vpack.c.b16 %v4848, %v4848
      %v4865 = vpack.c.b16 %v4849, %v4849
      %v4866 = vpack.c.b16 %v4850, %v4850
      %v4867 = vpack.c.b16 %v4851, %v4851
      %v4868 = vpack.c.b16 %v4852, %v4852
      %v4869 = vpack.c.b16 %v4853, %v4853
      %v4871 = vshrl.u32 %v4806, 16
      %v4873 = vshll.u32 %v4806, 16
      %v4875 = vrot.slane %v4873, 1
      %v4876 = vor.u32 %v4871, %v4875
      %v4878 = vshll.u32 %v4854, 16
      %v4880 = vrot.slane %v4878, 1
      %v4881 = vsel %vm2018, %v4876, %v4880
      %v4883 = vshrl.u32 %v4807, 16
      %v4885 = vshll.u32 %v4807, 16
      %v4887 = vrot.slane %v4885, 1
      %v4888 = vor.u32 %v4883, %v4887
      %v4890 = vshll.u32 %v4855, 16
      %v4892 = vrot.slane %v4890, 1
      %v4893 = vsel %vm2018, %v4888, %v4892
      %v4895 = vshrl.u32 %v4808, 16
      %v4897 = vshll.u32 %v4808, 16
      %v4899 = vrot.slane %v4897, 1
      %v4900 = vor.u32 %v4895, %v4899
      %v4902 = vshll.u32 %v4856, 16
      %v4904 = vrot.slane %v4902, 1
      %v4905 = vsel %vm2018, %v4900, %v4904
      %v4907 = vshrl.u32 %v4809, 16
      %v4909 = vshll.u32 %v4809, 16
      %v4911 = vrot.slane %v4909, 1
      %v4912 = vor.u32 %v4907, %v4911
      %v4914 = vshll.u32 %v4857, 16
      %v4916 = vrot.slane %v4914, 1
      %v4917 = vsel %vm2018, %v4912, %v4916
      %v4919 = vshrl.u32 %v4810, 16
      %v4921 = vshll.u32 %v4810, 16
      %v4923 = vrot.slane %v4921, 1
      %v4924 = vor.u32 %v4919, %v4923
      %v4926 = vshll.u32 %v4858, 16
      %v4928 = vrot.slane %v4926, 1
      %v4929 = vsel %vm2018, %v4924, %v4928
      %v4931 = vshrl.u32 %v4811, 16
      %v4933 = vshll.u32 %v4811, 16
      %v4935 = vrot.slane %v4933, 1
      %v4936 = vor.u32 %v4931, %v4935
      %v4938 = vshll.u32 %v4859, 16
      %v4940 = vrot.slane %v4938, 1
      %v4941 = vsel %vm2018, %v4936, %v4940
      %v4943 = vshrl.u32 %v4812, 16
      %v4945 = vshll.u32 %v4812, 16
      %v4947 = vrot.slane %v4945, 1
      %v4948 = vor.u32 %v4943, %v4947
      %v4950 = vshll.u32 %v4860, 16
      %v4952 = vrot.slane %v4950, 1
      %v4953 = vsel %vm2018, %v4948, %v4952
      %v4955 = vshrl.u32 %v4813, 16
      %v4957 = vshll.u32 %v4813, 16
      %v4959 = vrot.slane %v4957, 1
      %v4960 = vor.u32 %v4955, %v4959
      %v4962 = vshll.u32 %v4861, 16
      %v4964 = vrot.slane %v4962, 1
      %v4965 = vsel %vm2018, %v4960, %v4964
      %v4967 = vshrl.u32 %v4814, 16
      %v4969 = vshll.u32 %v4814, 16
      %v4971 = vrot.slane %v4969, 1
      %v4972 = vor.u32 %v4967, %v4971
      %v4974 = vshll.u32 %v4862, 16
      %v4976 = vrot.slane %v4974, 1
      %v4977 = vsel %vm2018, %v4972, %v4976
      %v4979 = vshrl.u32 %v4815, 16
      %v4981 = vshll.u32 %v4815, 16
      %v4983 = vrot.slane %v4981, 1
      %v4984 = vor.u32 %v4979, %v4983
      %v4986 = vshll.u32 %v4863, 16
      %v4988 = vrot.slane %v4986, 1
      %v4989 = vsel %vm2018, %v4984, %v4988
      %v4991 = vshrl.u32 %v4816, 16
      %v4993 = vshll.u32 %v4816, 16
      %v4995 = vrot.slane %v4993, 1
      %v4996 = vor.u32 %v4991, %v4995
      %v4998 = vshll.u32 %v4864, 16
      %v5000 = vrot.slane %v4998, 1
      %v5001 = vsel %vm2018, %v4996, %v5000
      %v5003 = vshrl.u32 %v4817, 16
      %v5005 = vshll.u32 %v4817, 16
      %v5007 = vrot.slane %v5005, 1
      %v5008 = vor.u32 %v5003, %v5007
      %v5010 = vshll.u32 %v4865, 16
      %v5012 = vrot.slane %v5010, 1
      %v5013 = vsel %vm2018, %v5008, %v5012
      %v5015 = vshrl.u32 %v4818, 16
      %v5017 = vshll.u32 %v4818, 16
      %v5019 = vrot.slane %v5017, 1
      %v5020 = vor.u32 %v5015, %v5019
      %v5022 = vshll.u32 %v4866, 16
      %v5024 = vrot.slane %v5022, 1
      %v5025 = vsel %vm2018, %v5020, %v5024
      %v5027 = vshrl.u32 %v4819, 16
      %v5029 = vshll.u32 %v4819, 16
      %v5031 = vrot.slane %v5029, 1
      %v5032 = vor.u32 %v5027, %v5031
      %v5034 = vshll.u32 %v4867, 16
      %v5036 = vrot.slane %v5034, 1
      %v5037 = vsel %vm2018, %v5032, %v5036
      %v5039 = vshrl.u32 %v4820, 16
      %v5041 = vshll.u32 %v4820, 16
      %v5043 = vrot.slane %v5041, 1
      %v5044 = vor.u32 %v5039, %v5043
      %v5046 = vshll.u32 %v4868, 16
      %v5048 = vrot.slane %v5046, 1
      %v5049 = vsel %vm2018, %v5044, %v5048
      %v5051 = vshrl.u32 %v4821, 16
      %v5053 = vshll.u32 %v4821, 16
      %v5055 = vrot.slane %v5053, 1
      %v5056 = vor.u32 %v5051, %v5055
      %v5058 = vshll.u32 %v4869, 16
      %v5060 = vrot.slane %v5058, 1
      %v5061 = vsel %vm2018, %v5056, %v5060
      %5062 = vrot.lane.b32.xlu0 %v4881, 8
      %v5063 = vpop.permute.xlu0 %5062
      %5064 = vrot.lane.b32.xlu0 %v4893, 8
      %v5065 = vpop.permute.xlu0 %5064
      %5066 = vrot.lane.b32.xlu0 %v4905, 8
      %v5067 = vpop.permute.xlu0 %5066
      %5068 = vrot.lane.b32.xlu0 %v4917, 8
      %v5069 = vpop.permute.xlu0 %5068
      %5070 = vrot.lane.b32.xlu0 %v4929, 8
      %v5071 = vpop.permute.xlu0 %5070
      %5072 = vrot.lane.b32.xlu0 %v4941, 8
      %v5073 = vpop.permute.xlu0 %5072
      %5074 = vrot.lane.b32.xlu0 %v4953, 8
      %v5075 = vpop.permute.xlu0 %5074
      %5076 = vrot.lane.b32.xlu0 %v4965, 8
      %v5077 = vpop.permute.xlu0 %5076
      %5078 = vrot.lane.b32.xlu0 %v4977, 8
      %v5079 = vpop.permute.xlu0 %5078
      %5080 = vrot.lane.b32.xlu0 %v4989, 8
      %v5081 = vpop.permute.xlu0 %5080
      %5082 = vrot.lane.b32.xlu0 %v5001, 8
      %v5083 = vpop.permute.xlu0 %5082
      %5084 = vrot.lane.b32.xlu0 %v5013, 8
      %v5085 = vpop.permute.xlu0 %5084
      %5086 = vrot.lane.b32.xlu0 %v5025, 8
      %v5087 = vpop.permute.xlu0 %5086
      %5088 = vrot.lane.b32.xlu0 %v5037, 8
      %v5089 = vpop.permute.xlu0 %5088
      %5090 = vrot.lane.b32.xlu0 %v5049, 8
      %v5091 = vpop.permute.xlu0 %5090
      %5092 = vrot.lane.b32.xlu0 %v5061, 8
      %v5093 = vpop.permute.xlu0 %5092
      %v5094 = vrot.slane %v4806, 1
      %v5095 = vrot.slane %v4854, 1
      %v5096 = vsel %vm2243, %v5094, %v5095
      %v5097 = vrot.slane %v4807, 1
      %v5098 = vrot.slane %v4855, 1
      %v5099 = vsel %vm2243, %v5097, %v5098
      %v5100 = vrot.slane %v4808, 1
      %v5101 = vrot.slane %v4856, 1
      %v5102 = vsel %vm2243, %v5100, %v5101
      %v5103 = vrot.slane %v4809, 1
      %v5104 = vrot.slane %v4857, 1
      %v5105 = vsel %vm2243, %v5103, %v5104
      %v5106 = vrot.slane %v4810, 1
      %v5107 = vrot.slane %v4858, 1
      %v5108 = vsel %vm2243, %v5106, %v5107
      %v5109 = vrot.slane %v4811, 1
      %v5110 = vrot.slane %v4859, 1
      %v5111 = vsel %vm2243, %v5109, %v5110
      %v5112 = vrot.slane %v4812, 1
      %v5113 = vrot.slane %v4860, 1
      %v5114 = vsel %vm2243, %v5112, %v5113
      %v5115 = vrot.slane %v4813, 1
      %v5116 = vrot.slane %v4861, 1
      %v5117 = vsel %vm2243, %v5115, %v5116
      %v5118 = vrot.slane %v4814, 1
      %v5119 = vrot.slane %v4862, 1
      %v5120 = vsel %vm2243, %v5118, %v5119
      %v5121 = vrot.slane %v4815, 1
      %v5122 = vrot.slane %v4863, 1
      %v5123 = vsel %vm2243, %v5121, %v5122
      %v5124 = vrot.slane %v4816, 1
      %v5125 = vrot.slane %v4864, 1
      %v5126 = vsel %vm2243, %v5124, %v5125
      %v5127 = vrot.slane %v4817, 1
      %v5128 = vrot.slane %v4865, 1
      %v5129 = vsel %vm2243, %v5127, %v5128
      %v5130 = vrot.slane %v4818, 1
      %v5131 = vrot.slane %v4866, 1
      %v5132 = vsel %vm2243, %v5130, %v5131
      %v5133 = vrot.slane %v4819, 1
      %v5134 = vrot.slane %v4867, 1
      %v5135 = vsel %vm2243, %v5133, %v5134
      %v5136 = vrot.slane %v4820, 1
      %v5137 = vrot.slane %v4868, 1
      %v5138 = vsel %vm2243, %v5136, %v5137
      %v5139 = vrot.slane %v4821, 1
      %v5140 = vrot.slane %v4869, 1
      %v5141 = vsel %vm2243, %v5139, %v5140
      %5142 = vrot.lane.b32.xlu0 %v5096, 16
      %v5143 = vpop.permute.xlu0 %5142
      %5144 = vrot.lane.b32.xlu0 %v5099, 16
      %v5145 = vpop.permute.xlu0 %5144
      %5146 = vrot.lane.b32.xlu0 %v5102, 16
      %v5147 = vpop.permute.xlu0 %5146
      %5148 = vrot.lane.b32.xlu0 %v5105, 16
      %v5149 = vpop.permute.xlu0 %5148
      %5150 = vrot.lane.b32.xlu0 %v5108, 16
      %v5151 = vpop.permute.xlu0 %5150
      %5152 = vrot.lane.b32.xlu0 %v5111, 16
      %v5153 = vpop.permute.xlu0 %5152
      %5154 = vrot.lane.b32.xlu0 %v5114, 16
      %v5155 = vpop.permute.xlu0 %5154
      %5156 = vrot.lane.b32.xlu0 %v5117, 16
      %v5157 = vpop.permute.xlu0 %5156
      %5158 = vrot.lane.b32.xlu0 %v5120, 16
      %v5159 = vpop.permute.xlu0 %5158
      %5160 = vrot.lane.b32.xlu0 %v5123, 16
      %v5161 = vpop.permute.xlu0 %5160
      %5162 = vrot.lane.b32.xlu0 %v5126, 16
      %v5163 = vpop.permute.xlu0 %5162
      %5164 = vrot.lane.b32.xlu0 %v5129, 16
      %v5165 = vpop.permute.xlu0 %5164
      %5166 = vrot.lane.b32.xlu0 %v5132, 16
      %v5167 = vpop.permute.xlu0 %5166
      %5168 = vrot.lane.b32.xlu0 %v5135, 16
      %v5169 = vpop.permute.xlu0 %5168
      %5170 = vrot.lane.b32.xlu0 %v5138, 16
      %v5171 = vpop.permute.xlu0 %5170
      %5172 = vrot.lane.b32.xlu0 %v5141, 16
      %v5173 = vpop.permute.xlu0 %5172
      %v5176 = vunpack.c.l.b16 %v4736
      %v5177 = vunpack.c.l.b16 %v4737
      %v5178 = vpack.c.b16 %v5177, %v5176
      %5179 = vrot.lane.b32.xlu0 %v4807, 24
      %v5180 = vpop.permute.xlu0 %5179
      %5181 = vrot.lane.b32.xlu0 %v4808, 24
      %v5182 = vpop.permute.xlu0 %5181
      %5183 = vrot.lane.b32.xlu0 %v4809, 24
      %v5184 = vpop.permute.xlu0 %5183
      %5185 = vrot.lane.b32.xlu0 %v4810, 24
      %v5186 = vpop.permute.xlu0 %5185
      %5187 = vrot.lane.b32.xlu0 %v4811, 24
      %v5188 = vpop.permute.xlu0 %5187
      %5189 = vrot.lane.b32.xlu0 %v4812, 24
      %v5190 = vpop.permute.xlu0 %5189
      %5191 = vrot.lane.b32.xlu0 %v4813, 24
      %v5192 = vpop.permute.xlu0 %5191
      %5193 = vrot.lane.b32.xlu0 %v4814, 24
      %v5194 = vpop.permute.xlu0 %5193
      %5195 = vrot.lane.b32.xlu0 %v4815, 24
      %v5196 = vpop.permute.xlu0 %5195
      %5197 = vrot.lane.b32.xlu0 %v4816, 24
      %v5198 = vpop.permute.xlu0 %5197
      %5199 = vrot.lane.b32.xlu0 %v4817, 24
      %v5200 = vpop.permute.xlu0 %5199
      %5201 = vrot.lane.b32.xlu0 %v4818, 24
      %v5202 = vpop.permute.xlu0 %5201
      %5203 = vrot.lane.b32.xlu0 %v4819, 24
      %v5204 = vpop.permute.xlu0 %5203
      %5205 = vrot.lane.b32.xlu0 %v4820, 24
      %v5206 = vpop.permute.xlu0 %5205
      %5207 = vrot.lane.b32.xlu0 %v4821, 24
      %v5208 = vpop.permute.xlu0 %5207
      %5209 = vrot.lane.b32.xlu0 %v5178, 24
      %v5210 = vpop.permute.xlu0 %5209
      %v5212 = vunpack.c.l.b16 %v4738
      %v5213 = vpack.c.b16 %v5212, %v5212
      %v5215 = vshrl.u32 %v5178, 16
      %v5217 = vshll.u32 %v5178, 16
      %v5219 = vrot.slane %v5217, 1
      %v5220 = vor.u32 %v5215, %v5219
      %v5222 = vshll.u32 %v5213, 16
      %v5224 = vrot.slane %v5222, 1
      %v5225 = vsel %vm2018, %v5220, %v5224
      %5226 = vrot.lane.b32.xlu0 %v4893, 32
      %v5227 = vpop.permute.xlu0 %5226
      %5228 = vrot.lane.b32.xlu0 %v4905, 32
      %v5229 = vpop.permute.xlu0 %5228
      %5230 = vrot.lane.b32.xlu0 %v4917, 32
      %v5231 = vpop.permute.xlu0 %5230
      %5232 = vrot.lane.b32.xlu0 %v4929, 32
      %v5233 = vpop.permute.xlu0 %5232
      %5234 = vrot.lane.b32.xlu0 %v4941, 32
      %v5235 = vpop.permute.xlu0 %5234
      %5236 = vrot.lane.b32.xlu0 %v4953, 32
      %v5237 = vpop.permute.xlu0 %5236
      %5238 = vrot.lane.b32.xlu0 %v4965, 32
      %v5239 = vpop.permute.xlu0 %5238
      %5240 = vrot.lane.b32.xlu0 %v4977, 32
      %v5241 = vpop.permute.xlu0 %5240
      %5242 = vrot.lane.b32.xlu0 %v4989, 32
      %v5243 = vpop.permute.xlu0 %5242
      %5244 = vrot.lane.b32.xlu0 %v5001, 32
      %v5245 = vpop.permute.xlu0 %5244
      %5246 = vrot.lane.b32.xlu0 %v5013, 32
      %v5247 = vpop.permute.xlu0 %5246
      %5248 = vrot.lane.b32.xlu0 %v5025, 32
      %v5249 = vpop.permute.xlu0 %5248
      %5250 = vrot.lane.b32.xlu0 %v5037, 32
      %v5251 = vpop.permute.xlu0 %5250
      %5252 = vrot.lane.b32.xlu0 %v5049, 32
      %v5253 = vpop.permute.xlu0 %5252
      %5254 = vrot.lane.b32.xlu0 %v5061, 32
      %v5255 = vpop.permute.xlu0 %5254
      %5256 = vrot.lane.b32.xlu0 %v5225, 32
      %v5257 = vpop.permute.xlu0 %5256
      %v5258 = vrot.slane %v5178, 1
      %v5259 = vrot.slane %v5213, 1
      %v5260 = vsel %vm2243, %v5258, %v5259
      %5261 = vrot.lane.b32.xlu0 %v5099, 40
      %v5262 = vpop.permute.xlu0 %5261
      %5263 = vrot.lane.b32.xlu0 %v5102, 40
      %v5264 = vpop.permute.xlu0 %5263
      %5265 = vrot.lane.b32.xlu0 %v5105, 40
      %v5266 = vpop.permute.xlu0 %5265
      %5267 = vrot.lane.b32.xlu0 %v5108, 40
      %v5268 = vpop.permute.xlu0 %5267
      %5269 = vrot.lane.b32.xlu0 %v5111, 40
      %v5270 = vpop.permute.xlu0 %5269
      %5271 = vrot.lane.b32.xlu0 %v5114, 40
      %v5272 = vpop.permute.xlu0 %5271
      %5273 = vrot.lane.b32.xlu0 %v5117, 40
      %v5274 = vpop.permute.xlu0 %5273
      %5275 = vrot.lane.b32.xlu0 %v5120, 40
      %v5276 = vpop.permute.xlu0 %5275
      %5277 = vrot.lane.b32.xlu0 %v5123, 40
      %v5278 = vpop.permute.xlu0 %5277
      %5279 = vrot.lane.b32.xlu0 %v5126, 40
      %v5280 = vpop.permute.xlu0 %5279
      %5281 = vrot.lane.b32.xlu0 %v5129, 40
      %v5282 = vpop.permute.xlu0 %5281
      %5283 = vrot.lane.b32.xlu0 %v5132, 40
      %v5284 = vpop.permute.xlu0 %5283
      %5285 = vrot.lane.b32.xlu0 %v5135, 40
      %v5286 = vpop.permute.xlu0 %5285
      %5287 = vrot.lane.b32.xlu0 %v5138, 40
      %v5288 = vpop.permute.xlu0 %5287
      %5289 = vrot.lane.b32.xlu0 %v5141, 40
      %v5290 = vpop.permute.xlu0 %5289
      %5291 = vrot.lane.b32.xlu0 %v5260, 40
      %v5292 = vpop.permute.xlu0 %5291
      %v5295 = vunpack.c.l.b16 %v4739
      %v5296 = vunpack.c.l.b16 %v4740
      %v5297 = vpack.c.b16 %v5296, %v5295
      %5298 = vrot.lane.b32.xlu0 %v4808, 48
      %v5299 = vpop.permute.xlu0 %5298
      %5300 = vrot.lane.b32.xlu0 %v4809, 48
      %v5301 = vpop.permute.xlu0 %5300
      %5302 = vrot.lane.b32.xlu0 %v4810, 48
      %v5303 = vpop.permute.xlu0 %5302
      %5304 = vrot.lane.b32.xlu0 %v4811, 48
      %v5305 = vpop.permute.xlu0 %5304
      %5306 = vrot.lane.b32.xlu0 %v4812, 48
      %v5307 = vpop.permute.xlu0 %5306
      %5308 = vrot.lane.b32.xlu0 %v4813, 48
      %v5309 = vpop.permute.xlu0 %5308
      %5310 = vrot.lane.b32.xlu0 %v4814, 48
      %v5311 = vpop.permute.xlu0 %5310
      %5312 = vrot.lane.b32.xlu0 %v4815, 48
      %v5313 = vpop.permute.xlu0 %5312
      %5314 = vrot.lane.b32.xlu0 %v4816, 48
      %v5315 = vpop.permute.xlu0 %5314
      %5316 = vrot.lane.b32.xlu0 %v4817, 48
      %v5317 = vpop.permute.xlu0 %5316
      %5318 = vrot.lane.b32.xlu0 %v4818, 48
      %v5319 = vpop.permute.xlu0 %5318
      %5320 = vrot.lane.b32.xlu0 %v4819, 48
      %v5321 = vpop.permute.xlu0 %5320
      %5322 = vrot.lane.b32.xlu0 %v4820, 48
      %v5323 = vpop.permute.xlu0 %5322
      %5324 = vrot.lane.b32.xlu0 %v4821, 48
      %v5325 = vpop.permute.xlu0 %5324
      %5326 = vrot.lane.b32.xlu0 %v5178, 48
      %v5327 = vpop.permute.xlu0 %5326
      %5328 = vrot.lane.b32.xlu0 %v5297, 48
      %v5329 = vpop.permute.xlu0 %5328
      %v5331 = vunpack.c.l.b16 %v4741
      %v5332 = vpack.c.b16 %v5331, %v5331
      %v5334 = vshrl.u32 %v5297, 16
      %v5336 = vshll.u32 %v5297, 16
      %v5338 = vrot.slane %v5336, 1
      %v5339 = vor.u32 %v5334, %v5338
      %v5341 = vshll.u32 %v5332, 16
      %v5343 = vrot.slane %v5341, 1
      %v5344 = vsel %vm2018, %v5339, %v5343
      %5345 = vrot.lane.b32.xlu0 %v4905, 56
      %v5346 = vpop.permute.xlu0 %5345
      %5347 = vrot.lane.b32.xlu0 %v4917, 56
      %v5348 = vpop.permute.xlu0 %5347
      %5349 = vrot.lane.b32.xlu0 %v4929, 56
      %v5350 = vpop.permute.xlu0 %5349
      %5351 = vrot.lane.b32.xlu0 %v4941, 56
      %v5352 = vpop.permute.xlu0 %5351
      %5353 = vrot.lane.b32.xlu0 %v4953, 56
      %v5354 = vpop.permute.xlu0 %5353
      %5355 = vrot.lane.b32.xlu0 %v4965, 56
      %v5356 = vpop.permute.xlu0 %5355
      %5357 = vrot.lane.b32.xlu0 %v4977, 56
      %v5358 = vpop.permute.xlu0 %5357
      %5359 = vrot.lane.b32.xlu0 %v4989, 56
      %v5360 = vpop.permute.xlu0 %5359
      %5361 = vrot.lane.b32.xlu0 %v5001, 56
      %v5362 = vpop.permute.xlu0 %5361
      %5363 = vrot.lane.b32.xlu0 %v5013, 56
      %v5364 = vpop.permute.xlu0 %5363
      %5365 = vrot.lane.b32.xlu0 %v5025, 56
      %v5366 = vpop.permute.xlu0 %5365
      %5367 = vrot.lane.b32.xlu0 %v5037, 56
      %v5368 = vpop.permute.xlu0 %5367
      %5369 = vrot.lane.b32.xlu0 %v5049, 56
      %v5370 = vpop.permute.xlu0 %5369
      %5371 = vrot.lane.b32.xlu0 %v5061, 56
      %v5372 = vpop.permute.xlu0 %5371
      %5373 = vrot.lane.b32.xlu0 %v5225, 56
      %v5374 = vpop.permute.xlu0 %5373
      %5375 = vrot.lane.b32.xlu0 %v5344, 56
      %v5376 = vpop.permute.xlu0 %5375
      %v5377 = vrot.slane %v5297, 1
      %v5378 = vrot.slane %v5332, 1
      %v5379 = vsel %vm2243, %v5377, %v5378
      %5380 = vrot.lane.b32.xlu0 %v5102, 64
      %v5381 = vpop.permute.xlu0 %5380
      %5382 = vrot.lane.b32.xlu0 %v5105, 64
      %v5383 = vpop.permute.xlu0 %5382
      %5384 = vrot.lane.b32.xlu0 %v5108, 64
      %v5385 = vpop.permute.xlu0 %5384
      %5386 = vrot.lane.b32.xlu0 %v5111, 64
      %v5387 = vpop.permute.xlu0 %5386
      %5388 = vrot.lane.b32.xlu0 %v5114, 64
      %v5389 = vpop.permute.xlu0 %5388
      %5390 = vrot.lane.b32.xlu0 %v5117, 64
      %v5391 = vpop.permute.xlu0 %5390
      %5392 = vrot.lane.b32.xlu0 %v5120, 64
      %v5393 = vpop.permute.xlu0 %5392
      %5394 = vrot.lane.b32.xlu0 %v5123, 64
      %v5395 = vpop.permute.xlu0 %5394
      %5396 = vrot.lane.b32.xlu0 %v5126, 64
      %v5397 = vpop.permute.xlu0 %5396
      %5398 = vrot.lane.b32.xlu0 %v5129, 64
      %v5399 = vpop.permute.xlu0 %5398
      %5400 = vrot.lane.b32.xlu0 %v5132, 64
      %v5401 = vpop.permute.xlu0 %5400
      %5402 = vrot.lane.b32.xlu0 %v5135, 64
      %v5403 = vpop.permute.xlu0 %5402
      %5404 = vrot.lane.b32.xlu0 %v5138, 64
      %v5405 = vpop.permute.xlu0 %5404
      %5406 = vrot.lane.b32.xlu0 %v5141, 64
      %v5407 = vpop.permute.xlu0 %5406
      %5408 = vrot.lane.b32.xlu0 %v5260, 64
      %v5409 = vpop.permute.xlu0 %5408
      %5410 = vrot.lane.b32.xlu0 %v5379, 64
      %v5411 = vpop.permute.xlu0 %5410
      %v5413 = vsel %vm2562, %v4806, %v5063
      %v5415 = vsel %vm2562, %v4807, %v5065
      %v5417 = vsel %vm2562, %v4808, %v5067
      %v5419 = vsel %vm2562, %v4809, %v5069
      %v5421 = vsel %vm2562, %v4810, %v5071
      %v5423 = vsel %vm2562, %v4811, %v5073
      %v5425 = vsel %vm2562, %v4812, %v5075
      %v5427 = vsel %vm2562, %v4813, %v5077
      %v5429 = vsel %vm2562, %v4814, %v5079
      %v5431 = vsel %vm2562, %v4815, %v5081
      %v5433 = vsel %vm2562, %v4816, %v5083
      %v5435 = vsel %vm2562, %v4817, %v5085
      %v5437 = vsel %vm2562, %v4818, %v5087
      %v5439 = vsel %vm2562, %v4819, %v5089
      %v5441 = vsel %vm2562, %v4820, %v5091
      %v5443 = vsel %vm2562, %v4821, %v5093
      %v5445 = vsel %vm2595, %v5413, %v5143
      %v5447 = vsel %vm2595, %v5415, %v5145
      %v5449 = vsel %vm2595, %v5417, %v5147
      %v5451 = vsel %vm2595, %v5419, %v5149
      %v5453 = vsel %vm2595, %v5421, %v5151
      %v5455 = vsel %vm2595, %v5423, %v5153
      %v5457 = vsel %vm2595, %v5425, %v5155
      %v5459 = vsel %vm2595, %v5427, %v5157
      %v5461 = vsel %vm2595, %v5429, %v5159
      %v5463 = vsel %vm2595, %v5431, %v5161
      %v5465 = vsel %vm2595, %v5433, %v5163
      %v5467 = vsel %vm2595, %v5435, %v5165
      %v5469 = vsel %vm2595, %v5437, %v5167
      %v5471 = vsel %vm2595, %v5439, %v5169
      %v5473 = vsel %vm2595, %v5441, %v5171
      %v5475 = vsel %vm2595, %v5443, %v5173
      %v5477 = vsel %vm2628, %v5445, %v5180
      %v5479 = vsel %vm2628, %v5447, %v5182
      %v5481 = vsel %vm2628, %v5449, %v5184
      %v5483 = vsel %vm2628, %v5451, %v5186
      %v5485 = vsel %vm2628, %v5453, %v5188
      %v5487 = vsel %vm2628, %v5455, %v5190
      %v5489 = vsel %vm2628, %v5457, %v5192
      %v5491 = vsel %vm2628, %v5459, %v5194
      %v5493 = vsel %vm2628, %v5461, %v5196
      %v5495 = vsel %vm2628, %v5463, %v5198
      %v5497 = vsel %vm2628, %v5465, %v5200
      %v5499 = vsel %vm2628, %v5467, %v5202
      %v5501 = vsel %vm2628, %v5469, %v5204
      %v5503 = vsel %vm2628, %v5471, %v5206
      %v5505 = vsel %vm2628, %v5473, %v5208
      %v5507 = vsel %vm2628, %v5475, %v5210
      %v5509 = vsel %vm2661, %v5477, %v5227
      %v5511 = vsel %vm2661, %v5479, %v5229
      %v5513 = vsel %vm2661, %v5481, %v5231
      %v5515 = vsel %vm2661, %v5483, %v5233
      %v5517 = vsel %vm2661, %v5485, %v5235
      %v5519 = vsel %vm2661, %v5487, %v5237
      %v5521 = vsel %vm2661, %v5489, %v5239
      %v5523 = vsel %vm2661, %v5491, %v5241
      %v5525 = vsel %vm2661, %v5493, %v5243
      %v5527 = vsel %vm2661, %v5495, %v5245
      %v5529 = vsel %vm2661, %v5497, %v5247
      %v5531 = vsel %vm2661, %v5499, %v5249
      %v5533 = vsel %vm2661, %v5501, %v5251
      %v5535 = vsel %vm2661, %v5503, %v5253
      %v5537 = vsel %vm2661, %v5505, %v5255
      %v5539 = vsel %vm2661, %v5507, %v5257
      %v5541 = vsel %vm2694, %v5509, %v5262
      %v5543 = vsel %vm2694, %v5511, %v5264
      %v5545 = vsel %vm2694, %v5513, %v5266
      %v5547 = vsel %vm2694, %v5515, %v5268
      %v5549 = vsel %vm2694, %v5517, %v5270
      %v5551 = vsel %vm2694, %v5519, %v5272
      %v5553 = vsel %vm2694, %v5521, %v5274
      %v5555 = vsel %vm2694, %v5523, %v5276
      %v5557 = vsel %vm2694, %v5525, %v5278
      %v5559 = vsel %vm2694, %v5527, %v5280
      %v5561 = vsel %vm2694, %v5529, %v5282
      %v5563 = vsel %vm2694, %v5531, %v5284
      %v5565 = vsel %vm2694, %v5533, %v5286
      %v5567 = vsel %vm2694, %v5535, %v5288
      %v5569 = vsel %vm2694, %v5537, %v5290
      %v5571 = vsel %vm2694, %v5539, %v5292
      %v5573 = vsel %vm2727, %v5541, %v5299
      %v5575 = vsel %vm2727, %v5543, %v5301
      %v5577 = vsel %vm2727, %v5545, %v5303
      %v5579 = vsel %vm2727, %v5547, %v5305
      %v5581 = vsel %vm2727, %v5549, %v5307
      %v5583 = vsel %vm2727, %v5551, %v5309
      %v5585 = vsel %vm2727, %v5553, %v5311
      %v5587 = vsel %vm2727, %v5555, %v5313
      %v5589 = vsel %vm2727, %v5557, %v5315
      %v5591 = vsel %vm2727, %v5559, %v5317
      %v5593 = vsel %vm2727, %v5561, %v5319
      %v5595 = vsel %vm2727, %v5563, %v5321
      %v5597 = vsel %vm2727, %v5565, %v5323
      %v5599 = vsel %vm2727, %v5567, %v5325
      %v5601 = vsel %vm2727, %v5569, %v5327
      %v5603 = vsel %vm2727, %v5571, %v5329
      %v5605 = vsel %vm2760, %v5573, %v5346
      %v5607 = vsel %vm2760, %v5575, %v5348
      %v5609 = vsel %vm2760, %v5577, %v5350
      %v5611 = vsel %vm2760, %v5579, %v5352
      %v5613 = vsel %vm2760, %v5581, %v5354
      %v5615 = vsel %vm2760, %v5583, %v5356
      %v5617 = vsel %vm2760, %v5585, %v5358
      %v5619 = vsel %vm2760, %v5587, %v5360
      %v5621 = vsel %vm2760, %v5589, %v5362
      %v5623 = vsel %vm2760, %v5591, %v5364
      %v5625 = vsel %vm2760, %v5593, %v5366
      %v5627 = vsel %vm2760, %v5595, %v5368
      %v5629 = vsel %vm2760, %v5597, %v5370
      %v5631 = vsel %vm2760, %v5599, %v5372
      %v5633 = vsel %vm2760, %v5601, %v5374
      %v5635 = vsel %vm2760, %v5603, %v5376
      %v5637 = vsel %vm2793, %v5605, %v5381
      %v5639 = vsel %vm2793, %v5607, %v5383
      %v5641 = vsel %vm2793, %v5609, %v5385
      %v5643 = vsel %vm2793, %v5611, %v5387
      %v5645 = vsel %vm2793, %v5613, %v5389
      %v5647 = vsel %vm2793, %v5615, %v5391
      %v5649 = vsel %vm2793, %v5617, %v5393
      %v5651 = vsel %vm2793, %v5619, %v5395
      %v5653 = vsel %vm2793, %v5621, %v5397
      %v5655 = vsel %vm2793, %v5623, %v5399
      %v5657 = vsel %vm2793, %v5625, %v5401
      %v5659 = vsel %vm2793, %v5627, %v5403
      %v5661 = vsel %vm2793, %v5629, %v5405
      %v5663 = vsel %vm2793, %v5631, %v5407
      %v5665 = vsel %vm2793, %v5633, %v5409
      %v5667 = vsel %vm2793, %v5635, %v5411
      %v5668 = vld [vmem:[%s6] sm:$0xf]
      %v5669 = vld [vmem:[%s6 + $0x4] sm:$0xf]
      %v5670 = vld [vmem:[%s6 + $0x8] sm:$0xf]
      %v5671 = vld [vmem:[%s6 + $0xc] sm:$0xf]
      %v5672 = vld [vmem:[%s6 + $0x10] sm:$0xf]
      %v5673 = vld [vmem:[%s6 + $0x14] sm:$0xf]
      %v5674 = vld [vmem:[%s6 + $0x18] sm:$0xf]
      %v5675 = vld [vmem:[%s6 + $0x1c] sm:$0xf]
      %v5676 = vld [vmem:[%s6 + $0x20] sm:$0xf]
      %v5686 = vunpack.c.l.b16 %v5668
      %v5687 = vunpack.c.l.b16 %v5669
      %v5688 = vunpack.c.l.b16 %v5670
      %v5689 = vunpack.c.l.b16 %v5671
      %v5690 = vunpack.c.l.b16 %v5672
      %v5691 = vunpack.c.l.b16 %v5673
      %v5692 = vunpack.c.l.b16 %v5674
      %v5693 = vunpack.c.l.b16 %v5675
      %v5694 = vunpack.c.l.b16 %v5676
      %v5695 = vpack.c.b16 %v5687, %v5686
      %v5696 = vpack.c.b16 %v5689, %v5688
      %v5697 = vpack.c.b16 %v5691, %v5690
      %v5698 = vpack.c.b16 %v5693, %v5692
      %v5699 = vpack.c.b16 %v5694, %v5694
      %v5704 = vsel %vm2862, %v5637, 0
      %v5706 = vsel %vm2862, %v5639, 0
      %v5708 = vsel %vm2862, %v5641, 0
      %v5710 = vsel %vm2862, %v5643, 0
      %v5712 = vsel %vm2862, %v5645, 0
      %v5714 = vsel %vm2862, %v5647, 0
      %v5716 = vsel %vm2862, %v5649, 0
      %v5718 = vsel %vm2862, %v5651, 0
      %v5720 = vsel %vm2862, %v5653, 0
      %v5722 = vsel %vm2862, %v5655, 0
      %v5724 = vsel %vm2862, %v5657, 0
      %v5726 = vsel %vm2862, %v5659, 0
      %v5728 = vsel %vm2862, %v5661, 0
      %v5730 = vsel %vm2862, %v5663, 0
      %v5732 = vsel %vm2862, %v5665, 0
      %v5734 = vsel %vm2862, %v5667, 0
      %v5737 = vsel %vm2895, %v5699, 0
      %5739 = vmatprep.subr.bf16.mxu0 0
      %5740 = vmatpush1.bf16.msra.mxu0 %v5695
      %5741 = vmatprep.subr.bf16.mxu0 0
      %5742 = vmatpush1.bf16.msra.mxu0 %v5696
      %5743 = vmatprep.subr.bf16.mxu0 0
      %5744 = vmatpush1.bf16.msra.mxu0 %v5697
      %5745 = vmatprep.subr.bf16.mxu0 0
      %5746 = vmatpush1.bf16.msra.mxu0 %v5698
      %5747 = vmatprep.subr.bf16.mxu0 0
      %5748 = vmatpush1.bf16.msra.mxu0 %v5737
      %5749 = vmatprep.subr.bf16.mxu0 0
      %5750 = vmatpush1.bf16.msra.mxu0 0
      %5751 = vmatprep.subr.bf16.mxu0 0
      %5752 = vmatpush1.bf16.msra.mxu0 0
      %5753 = vmatprep.subr.bf16.mxu0 0
      %5754 = vmatpush1.bf16.msra.mxu0 0
      %5755 = vmatprep.subr.bf16.mxu0 0
      %5756 = vmatpush1.bf16.msra.mxu0 0
      %5757 = vmatprep.subr.bf16.mxu0 0
      %5758 = vmatpush1.bf16.msra.mxu0 0
      %5759 = vmatprep.subr.bf16.mxu0 0
      %5760 = vmatpush1.bf16.msra.mxu0 0
      %5761 = vmatprep.subr.bf16.mxu0 0
      %5762 = vmatpush1.bf16.msra.mxu0 0
      %5763 = vmatprep.subr.bf16.mxu0 0
      %5764 = vmatpush1.bf16.msra.mxu0 0
      %5765 = vmatprep.subr.bf16.mxu0 0
      %5766 = vmatpush1.bf16.msra.mxu0 0
      %5767 = vmatprep.subr.bf16.mxu0 0
      %5768 = vmatpush1.bf16.msra.mxu0 0
      %5769 = vmatprep.subr.bf16.mxu0 0
      %5770 = vmatpush1.bf16.msra.mxu0 0
      %5771 = vmatprep.mubr.bf16.mxu0 0
      %5772 = vmatmul.mubr.bf16.gmra.mrb[0].mxu0 %v5704
      %v5773 = vpop.f32.mrb[0].mxu0
      %v5774 = vadd.f32 0.0, %v5773
      %v5775 = vpop.f32.mrb[0].mxu0
      %v5776 = vpop.f32.mrb[0].mxu0
      %v5777 = vadd.f32 0.0, %v5776
      %v5778 = vpop.f32.mrb[0].mxu0
      %5779 = vmatprep.mubr.bf16.mxu0 0
      %5780 = vmatmul.mubr.bf16.gmra.mrb[0].mxu0 %v5706
      %v5781 = vpop.f32.mrb[0].mxu0
      %v5782 = vadd.f32 0.0, %v5781
      %v5783 = vpop.f32.mrb[0].mxu0
      %v5784 = vpop.f32.mrb[0].mxu0
      %v5785 = vadd.f32 0.0, %v5784
      %v5786 = vpop.f32.mrb[0].mxu0
      %5787 = vmatprep.mubr.bf16.mxu0 0
      %5788 = vmatmul.mubr.bf16.gmra.mrb[0].mxu0 %v5708
      %v5789 = vpop.f32.mrb[0].mxu0
      %v5790 = vadd.f32 0.0, %v5789
      %v5791 = vpop.f32.mrb[0].mxu0
      %v5792 = vpop.f32.mrb[0].mxu0
      %v5793 = vadd.f32 0.0, %v5792
      %v5794 = vpop.f32.mrb[0].mxu0
      %5795 = vmatprep.mubr.bf16.mxu0 0
      %5796 = vmatmul.mubr.bf16.gmra.mrb[0].mxu0 %v5710
      %v5797 = vpop.f32.mrb[0].mxu0
      %v5798 = vadd.f32 0.0, %v5797
      %v5799 = vpop.f32.mrb[0].mxu0
      %v5800 = vpop.f32.mrb[0].mxu0
      %v5801 = vadd.f32 0.0, %v5800
      %v5802 = vpop.f32.mrb[0].mxu0
      %5803 = vmatprep.mubr.bf16.mxu0 0
      %5804 = vmatmul.mubr.bf16.gmra.mrb[0].mxu0 %v5712
      %v5805 = vpop.f32.mrb[0].mxu0
      %v5806 = vadd.f32 0.0, %v5805
      %v5807 = vpop.f32.mrb[0].mxu0
      %v5808 = vpop.f32.mrb[0].mxu0
      %v5809 = vadd.f32 0.0, %v5808
      %v5810 = vpop.f32.mrb[0].mxu0
      %5811 = vmatprep.mubr.bf16.mxu0 0
      %5812 = vmatmul.mubr.bf16.gmra.mrb[0].mxu0 %v5714
      %v5813 = vpop.f32.mrb[0].mxu0
      %v5814 = vadd.f32 0.0, %v5813
      %v5815 = vpop.f32.mrb[0].mxu0
      %v5816 = vpop.f32.mrb[0].mxu0
      %v5817 = vadd.f32 0.0, %v5816
      %v5818 = vpop.f32.mrb[0].mxu0
      %5819 = vmatprep.mubr.bf16.mxu0 0
      %5820 = vmatmul.mubr.bf16.gmra.mrb[0].mxu0 %v5716
      %v5821 = vpop.f32.mrb[0].mxu0
      %v5822 = vadd.f32 0.0, %v5821
      %v5823 = vpop.f32.mrb[0].mxu0
      %v5824 = vpop.f32.mrb[0].mxu0
      %v5825 = vadd.f32 0.0, %v5824
      %v5826 = vpop.f32.mrb[0].mxu0
      %5827 = vmatprep.mubr.bf16.mxu0 0
      %5828 = vmatmul.mubr.bf16.gmra.mrb[0].mxu0 %v5718
      %v5829 = vpop.f32.mrb[0].mxu0
      %v5830 = vadd.f32 0.0, %v5829
      %v5831 = vpop.f32.mrb[0].mxu0
      %v5832 = vpop.f32.mrb[0].mxu0
      %v5833 = vadd.f32 0.0, %v5832
      %v5834 = vpop.f32.mrb[0].mxu0
      %5835 = vmatprep.mubr.bf16.mxu0 0
      %5836 = vmatmul.mubr.bf16.gmra.mrb[0].mxu0 %v5720
      %v5837 = vpop.f32.mrb[0].mxu0
      %v5838 = vadd.f32 0.0, %v5837
      %v5839 = vpop.f32.mrb[0].mxu0
      %v5840 = vpop.f32.mrb[0].mxu0
      %v5841 = vadd.f32 0.0, %v5840
      %v5842 = vpop.f32.mrb[0].mxu0
      %5843 = vmatprep.mubr.bf16.mxu0 0
      %5844 = vmatmul.mubr.bf16.gmra.mrb[0].mxu0 %v5722
      %v5845 = vpop.f32.mrb[0].mxu0
      %v5846 = vadd.f32 0.0, %v5845
      %v5847 = vpop.f32.mrb[0].mxu0
      %v5848 = vpop.f32.mrb[0].mxu0
      %v5849 = vadd.f32 0.0, %v5848
      %v5850 = vpop.f32.mrb[0].mxu0
      %5851 = vmatprep.mubr.bf16.mxu0 0
      %5852 = vmatmul.mubr.bf16.gmra.mrb[0].mxu0 %v5724
      %v5853 = vpop.f32.mrb[0].mxu0
      %v5854 = vadd.f32 0.0, %v5853
      %v5855 = vpop.f32.mrb[0].mxu0
      %v5856 = vpop.f32.mrb[0].mxu0
      %v5857 = vadd.f32 0.0, %v5856
      %v5858 = vpop.f32.mrb[0].mxu0
      %5859 = vmatprep.mubr.bf16.mxu0 0
      %5860 = vmatmul.mubr.bf16.gmra.mrb[0].mxu0 %v5726
      %v5861 = vpop.f32.mrb[0].mxu0
      %v5862 = vadd.f32 0.0, %v5861
      %v5863 = vpop.f32.mrb[0].mxu0
      %v5864 = vpop.f32.mrb[0].mxu0
      %v5865 = vadd.f32 0.0, %v5864
      %v5866 = vpop.f32.mrb[0].mxu0
      %5867 = vmatprep.mubr.bf16.mxu0 0
      %5868 = vmatmul.mubr.bf16.gmra.mrb[0].mxu0 %v5728
      %v5869 = vpop.f32.mrb[0].mxu0
      %v5870 = vadd.f32 0.0, %v5869
      %v5871 = vpop.f32.mrb[0].mxu0
      %v5872 = vpop.f32.mrb[0].mxu0
      %v5873 = vadd.f32 0.0, %v5872
      %v5874 = vpop.f32.mrb[0].mxu0
      %5875 = vmatprep.mubr.bf16.mxu0 0
      %5876 = vmatmul.mubr.bf16.gmra.mrb[0].mxu0 %v5730
      %v5877 = vpop.f32.mrb[0].mxu0
      %v5878 = vadd.f32 0.0, %v5877
      %v5879 = vpop.f32.mrb[0].mxu0
      %v5880 = vpop.f32.mrb[0].mxu0
      %v5881 = vadd.f32 0.0, %v5880
      %v5882 = vpop.f32.mrb[0].mxu0
      %5883 = vmatprep.mubr.bf16.mxu0 0
      %5884 = vmatmul.mubr.bf16.gmra.mrb[0].mxu0 %v5732
      %v5885 = vpop.f32.mrb[0].mxu0
      %v5886 = vadd.f32 0.0, %v5885
      %v5887 = vpop.f32.mrb[0].mxu0
      %v5888 = vpop.f32.mrb[0].mxu0
      %v5889 = vadd.f32 0.0, %v5888
      %v5890 = vpop.f32.mrb[0].mxu0
      %5891 = vmatprep.mubr.bf16.mxu0 0
      %5892 = vmatmul.mubr.bf16.gmra.mrb[0].mxu0 %v5734
      %v5893 = vpop.f32.mrb[0].mxu0
      %v5894 = vadd.f32 0.0, %v5893
      %v5895 = vpop.f32.mrb[0].mxu0
      %v5896 = vpop.f32.mrb[0].mxu0
      %v5897 = vadd.f32 0.0, %v5896
      %v5898 = vpop.f32.mrb[0].mxu0
      %5899 = vdwg.mxu0
      %v5909 = vunpack.c.l.b16 %v4679
      %v5910 = vunpack.c.l.b16 %v4680
      %v5911 = vunpack.c.l.b16 %v4681
      %v5912 = vunpack.c.l.b16 %v4682
      %v5913 = vunpack.c.l.b16 %v4683
      %v5914 = vunpack.c.l.b16 %v4684
      %v5915 = vunpack.c.l.b16 %v4685
      %v5916 = vunpack.c.l.b16 %v4686
      %v5917 = vunpack.c.l.b16 %v4687
      %v5918 = vpack.c.b16 %v5910, %v5909
      %v5919 = vpack.c.b16 %v5912, %v5911
      %v5920 = vpack.c.b16 %v5914, %v5913
      %v5921 = vpack.c.b16 %v5916, %v5915
      %v5922 = vpack.c.b16 %v5917, %v5917
      %v5927 = vsel %vm2862, %v4648, 0
      %v5929 = vsel %vm2862, %v4650, 0
      %v5931 = vsel %vm2862, %v4652, 0
      %v5933 = vsel %vm2862, %v4654, 0
      %v5935 = vsel %vm2862, %v4656, 0
      %v5937 = vsel %vm2862, %v4658, 0
      %v5939 = vsel %vm2862, %v4660, 0
      %v5941 = vsel %vm2862, %v4662, 0
      %v5943 = vsel %vm2862, %v4664, 0
      %v5945 = vsel %vm2862, %v4666, 0
      %v5947 = vsel %vm2862, %v4668, 0
      %v5949 = vsel %vm2862, %v4670, 0
      %v5951 = vsel %vm2862, %v4672, 0
      %v5953 = vsel %vm2862, %v4674, 0
      %v5955 = vsel %vm2862, %v4676, 0
      %v5957 = vsel %vm2862, %v4678, 0
      %v5960 = vsel %vm2895, %v5922, 0
      %5962 = vmatprep.subr.bf16.mxu0 0
      %5963 = vmatpush1.bf16.msra.mxu0 %v5918
      %5964 = vmatprep.subr.bf16.mxu0 0
      %5965 = vmatpush1.bf16.msra.mxu0 %v5919
      %5966 = vmatprep.subr.bf16.mxu0 0
      %5967 = vmatpush1.bf16.msra.mxu0 %v5920
      %5968 = vmatprep.subr.bf16.mxu0 0
      %5969 = vmatpush1.bf16.msra.mxu0 %v5921
      %5970 = vmatprep.subr.bf16.mxu0 0
      %5971 = vmatpush1.bf16.msra.mxu0 %v5960
      %5972 = vmatprep.subr.bf16.mxu0 0
      %5973 = vmatpush1.bf16.msra.mxu0 0
      %5974 = vmatprep.subr.bf16.mxu0 0
      %5975 = vmatpush1.bf16.msra.mxu0 0
      %5976 = vmatprep.subr.bf16.mxu0 0
      %5977 = vmatpush1.bf16.msra.mxu0 0
      %5978 = vmatprep.subr.bf16.mxu0 0
      %5979 = vmatpush1.bf16.msra.mxu0 0
      %5980 = vmatprep.subr.bf16.mxu0 0
      %5981 = vmatpush1.bf16.msra.mxu0 0
      %5982 = vmatprep.subr.bf16.mxu0 0
      %5983 = vmatpush1.bf16.msra.mxu0 0
      %5984 = vmatprep.subr.bf16.mxu0 0
      %5985 = vmatpush1.bf16.msra.mxu0 0
      %5986 = vmatprep.subr.bf16.mxu0 0
      %5987 = vmatpush1.bf16.msra.mxu0 0
      %5988 = vmatprep.subr.bf16.mxu0 0
      %5989 = vmatpush1.bf16.msra.mxu0 0
      %5990 = vmatprep.subr.bf16.mxu0 0
      %5991 = vmatpush1.bf16.msra.mxu0 0
      %5992 = vmatprep.subr.bf16.mxu0 0
      %5993 = vmatpush1.bf16.msra.mxu0 0
      %5994 = vmatprep.mubr.bf16.mxu0 0
      %5995 = vmatmul.mubr.bf16.gmra.mrb[0].mxu0 %v5927
      %v5996 = vpop.f32.mrb[0].mxu0
      %v5997 = vadd.f32 %v5774, %v5996
      %v5998 = vpop.f32.mrb[0].mxu0
      %v5999 = vpop.f32.mrb[0].mxu0
      %v6000 = vadd.f32 %v5777, %v5999
      %v6001 = vpop.f32.mrb[0].mxu0
      %6002 = vmatprep.mubr.bf16.mxu0 0
      %6003 = vmatmul.mubr.bf16.gmra.mrb[0].mxu0 %v5929
      %v6004 = vpop.f32.mrb[0].mxu0
      %v6005 = vadd.f32 %v5782, %v6004
      %v6006 = vpop.f32.mrb[0].mxu0
      %v6007 = vpop.f32.mrb[0].mxu0
      %v6008 = vadd.f32 %v5785, %v6007
      %v6009 = vpop.f32.mrb[0].mxu0
      %6010 = vmatprep.mubr.bf16.mxu0 0
      %6011 = vmatmul.mubr.bf16.gmra.mrb[0].mxu0 %v5931
      %v6012 = vpop.f32.mrb[0].mxu0
      %v6013 = vadd.f32 %v5790, %v6012
      %v6014 = vpop.f32.mrb[0].mxu0
      %v6015 = vpop.f32.mrb[0].mxu0
      %v6016 = vadd.f32 %v5793, %v6015
      %v6017 = vpop.f32.mrb[0].mxu0
      %6018 = vmatprep.mubr.bf16.mxu0 0
      %6019 = vmatmul.mubr.bf16.gmra.mrb[0].mxu0 %v5933
      %v6020 = vpop.f32.mrb[0].mxu0
      %v6021 = vadd.f32 %v5798, %v6020
      %v6022 = vpop.f32.mrb[0].mxu0
      %v6023 = vpop.f32.mrb[0].mxu0
      %v6024 = vadd.f32 %v5801, %v6023
      %v6025 = vpop.f32.mrb[0].mxu0
      %6026 = vmatprep.mubr.bf16.mxu0 0
      %6027 = vmatmul.mubr.bf16.gmra.mrb[0].mxu0 %v5935
      %v6028 = vpop.f32.mrb[0].mxu0
      %v6029 = vadd.f32 %v5806, %v6028
      %v6030 = vpop.f32.mrb[0].mxu0
      %v6031 = vpop.f32.mrb[0].mxu0
      %v6032 = vadd.f32 %v5809, %v6031
      %v6033 = vpop.f32.mrb[0].mxu0
      %6034 = vmatprep.mubr.bf16.mxu0 0
      %6035 = vmatmul.mubr.bf16.gmra.mrb[0].mxu0 %v5937
      %v6036 = vpop.f32.mrb[0].mxu0
      %v6037 = vadd.f32 %v5814, %v6036
      %v6038 = vpop.f32.mrb[0].mxu0
      %v6039 = vpop.f32.mrb[0].mxu0
      %v6040 = vadd.f32 %v5817, %v6039
      %v6041 = vpop.f32.mrb[0].mxu0
      %6042 = vmatprep.mubr.bf16.mxu0 0
      %6043 = vmatmul.mubr.bf16.gmra.mrb[0].mxu0 %v5939
      %v6044 = vpop.f32.mrb[0].mxu0
      %v6045 = vadd.f32 %v5822, %v6044
      %v6046 = vpop.f32.mrb[0].mxu0
      %v6047 = vpop.f32.mrb[0].mxu0
      %v6048 = vadd.f32 %v5825, %v6047
      %v6049 = vpop.f32.mrb[0].mxu0
      %6050 = vmatprep.mubr.bf16.mxu0 0
      %6051 = vmatmul.mubr.bf16.gmra.mrb[0].mxu0 %v5941
      %v6052 = vpop.f32.mrb[0].mxu0
      %v6053 = vadd.f32 %v5830, %v6052
      %v6054 = vpop.f32.mrb[0].mxu0
      %v6055 = vpop.f32.mrb[0].mxu0
      %v6056 = vadd.f32 %v5833, %v6055
      %v6057 = vpop.f32.mrb[0].mxu0
      %6058 = vmatprep.mubr.bf16.mxu0 0
      %6059 = vmatmul.mubr.bf16.gmra.mrb[0].mxu0 %v5943
      %v6060 = vpop.f32.mrb[0].mxu0
      %v6061 = vadd.f32 %v5838, %v6060
      %v6062 = vpop.f32.mrb[0].mxu0
      %v6063 = vpop.f32.mrb[0].mxu0
      %v6064 = vadd.f32 %v5841, %v6063
      %v6065 = vpop.f32.mrb[0].mxu0
      %6066 = vmatprep.mubr.bf16.mxu0 0
      %6067 = vmatmul.mubr.bf16.gmra.mrb[0].mxu0 %v5945
      %v6068 = vpop.f32.mrb[0].mxu0
      %v6069 = vadd.f32 %v5846, %v6068
      %v6070 = vpop.f32.mrb[0].mxu0
      %v6071 = vpop.f32.mrb[0].mxu0
      %v6072 = vadd.f32 %v5849, %v6071
      %v6073 = vpop.f32.mrb[0].mxu0
      %6074 = vmatprep.mubr.bf16.mxu0 0
      %6075 = vmatmul.mubr.bf16.gmra.mrb[0].mxu0 %v5947
      %v6076 = vpop.f32.mrb[0].mxu0
      %v6077 = vadd.f32 %v5854, %v6076
      %v6078 = vpop.f32.mrb[0].mxu0
      %v6079 = vpop.f32.mrb[0].mxu0
      %v6080 = vadd.f32 %v5857, %v6079
      %v6081 = vpop.f32.mrb[0].mxu0
      %6082 = vmatprep.mubr.bf16.mxu0 0
      %6083 = vmatmul.mubr.bf16.gmra.mrb[0].mxu0 %v5949
      %v6084 = vpop.f32.mrb[0].mxu0
      %v6085 = vadd.f32 %v5862, %v6084
      %v6086 = vpop.f32.mrb[0].mxu0
      %v6087 = vpop.f32.mrb[0].mxu0
      %v6088 = vadd.f32 %v5865, %v6087
      %v6089 = vpop.f32.mrb[0].mxu0
      %6090 = vmatprep.mubr.bf16.mxu0 0
      %6091 = vmatmul.mubr.bf16.gmra.mrb[0].mxu0 %v5951
      %v6092 = vpop.f32.mrb[0].mxu0
      %v6093 = vadd.f32 %v5870, %v6092
      %v6094 = vpop.f32.mrb[0].mxu0
      %v6095 = vpop.f32.mrb[0].mxu0
      %v6096 = vadd.f32 %v5873, %v6095
      %v6097 = vpop.f32.mrb[0].mxu0
      %6098 = vmatprep.mubr.bf16.mxu0 0
      %6099 = vmatmul.mubr.bf16.gmra.mrb[0].mxu0 %v5953
      %v6100 = vpop.f32.mrb[0].mxu0
      %v6101 = vadd.f32 %v5878, %v6100
      %v6102 = vpop.f32.mrb[0].mxu0
      %v6103 = vpop.f32.mrb[0].mxu0
      %v6104 = vadd.f32 %v5881, %v6103
      %v6105 = vpop.f32.mrb[0].mxu0
      %6106 = vmatprep.mubr.bf16.mxu0 0
      %6107 = vmatmul.mubr.bf16.gmra.mrb[0].mxu0 %v5955
      %v6108 = vpop.f32.mrb[0].mxu0
      %v6109 = vadd.f32 %v5886, %v6108
      %v6110 = vpop.f32.mrb[0].mxu0
      %v6111 = vpop.f32.mrb[0].mxu0
      %v6112 = vadd.f32 %v5889, %v6111
      %v6113 = vpop.f32.mrb[0].mxu0
      %6114 = vmatprep.mubr.bf16.mxu0 0
      %6115 = vmatmul.mubr.bf16.gmra.mrb[0].mxu0 %v5957
      %v6116 = vpop.f32.mrb[0].mxu0
      %v6117 = vadd.f32 %v5894, %v6116
      %v6118 = vpop.f32.mrb[0].mxu0
      %v6119 = vpop.f32.mrb[0].mxu0
      %v6120 = vadd.f32 %v5897, %v6119
      %v6121 = vpop.f32.mrb[0].mxu0
      %6122 = vdwg.mxu0
      %v6123 = vld [vmem:[%s7] sm:$0x1]
      %v6125 = vlaneseq
      %v6126 = vshrl.u32 %v6125, 7
      %v6127 = vsub.s32 0, %v6126
      %v6128 = vrot.slane %v6123, %v6127
      %v6130 = vmul.f32 %v5997, %v6128
      %v6131 = vmul.f32 %v6000, %v6128
      %v6132 = vmul.f32 %v6005, %v6128
      %v6133 = vmul.f32 %v6008, %v6128
      %v6134 = vmul.f32 %v6013, %v6128
      %v6135 = vmul.f32 %v6016, %v6128
      %v6136 = vmul.f32 %v6021, %v6128
      %v6137 = vmul.f32 %v6024, %v6128
      %v6138 = vmul.f32 %v6029, %v6128
      %v6139 = vmul.f32 %v6032, %v6128
      %v6140 = vmul.f32 %v6037, %v6128
      %v6141 = vmul.f32 %v6040, %v6128
      %v6142 = vmul.f32 %v6045, %v6128
      %v6143 = vmul.f32 %v6048, %v6128
      %v6144 = vmul.f32 %v6053, %v6128
      %v6145 = vmul.f32 %v6056, %v6128
      %v6146 = vmul.f32 %v6061, %v6128
      %v6147 = vmul.f32 %v6064, %v6128
      %v6148 = vmul.f32 %v6069, %v6128
      %v6149 = vmul.f32 %v6072, %v6128
      %v6150 = vmul.f32 %v6077, %v6128
      %v6151 = vmul.f32 %v6080, %v6128
      %v6152 = vmul.f32 %v6085, %v6128
      %v6153 = vmul.f32 %v6088, %v6128
      %v6154 = vmul.f32 %v6093, %v6128
      %v6155 = vmul.f32 %v6096, %v6128
      %v6156 = vmul.f32 %v6101, %v6128
      %v6157 = vmul.f32 %v6104, %v6128
      %v6158 = vmul.f32 %v6109, %v6128
      %v6159 = vmul.f32 %v6112, %v6128
      %v6160 = vmul.f32 %v6117, %v6128
      %v6161 = vmul.f32 %v6120, %v6128
      %v6162 = vld [vmem:[%s8] sm:$0x1]
      %v6164 = vlaneseq
      %v6165 = vshrl.u32 %v6164, 7
      %v6166 = vsub.s32 0, %v6165
      %v6167 = vrot.slane %v6162, %v6166
      %v6169 = vadd.f32 %v6130, %v6167
      %v6170 = vadd.f32 %v6131, %v6167
      %v6171 = vadd.f32 %v6132, %v6167
      %v6172 = vadd.f32 %v6133, %v6167
      %v6173 = vadd.f32 %v6134, %v6167
      %v6174 = vadd.f32 %v6135, %v6167
      %v6175 = vadd.f32 %v6136, %v6167
      %v6176 = vadd.f32 %v6137, %v6167
      %v6177 = vadd.f32 %v6138, %v6167
      %v6178 = vadd.f32 %v6139, %v6167
      %v6179 = vadd.f32 %v6140, %v6167
      %v6180 = vadd.f32 %v6141, %v6167
      %v6181 = vadd.f32 %v6142, %v6167
      %v6182 = vadd.f32 %v6143, %v6167
      %v6183 = vadd.f32 %v6144, %v6167
      %v6184 = vadd.f32 %v6145, %v6167
      %v6185 = vadd.f32 %v6146, %v6167
      %v6186 = vadd.f32 %v6147, %v6167
      %v6187 = vadd.f32 %v6148, %v6167
      %v6188 = vadd.f32 %v6149, %v6167
      %v6189 = vadd.f32 %v6150, %v6167
      %v6190 = vadd.f32 %v6151, %v6167
      %v6191 = vadd.f32 %v6152, %v6167
      %v6192 = vadd.f32 %v6153, %v6167
      %v6193 = vadd.f32 %v6154, %v6167
      %v6194 = vadd.f32 %v6155, %v6167
      %v6195 = vadd.f32 %v6156, %v6167
      %v6196 = vadd.f32 %v6157, %v6167
      %v6197 = vadd.f32 %v6158, %v6167
      %v6198 = vadd.f32 %v6159, %v6167
      %v6199 = vadd.f32 %v6160, %v6167
      %v6200 = vadd.f32 %v6161, %v6167
      %v6201 = vmax.f32 %v6169, 0.0
      %v6202 = vmax.f32 %v6170, 0.0
      %v6203 = vmax.f32 %v6171, 0.0
      %v6204 = vmax.f32 %v6172, 0.0
      %v6205 = vmax.f32 %v6173, 0.0
      %v6206 = vmax.f32 %v6174, 0.0
      %v6207 = vmax.f32 %v6175, 0.0
      %v6208 = vmax.f32 %v6176, 0.0
      %v6209 = vmax.f32 %v6177, 0.0
      %v6210 = vmax.f32 %v6178, 0.0
      %v6211 = vmax.f32 %v6179, 0.0
      %v6212 = vmax.f32 %v6180, 0.0
      %v6213 = vmax.f32 %v6181, 0.0
      %v6214 = vmax.f32 %v6182, 0.0
      %v6215 = vmax.f32 %v6183, 0.0
      %v6216 = vmax.f32 %v6184, 0.0
      %v6217 = vmax.f32 %v6185, 0.0
      %v6218 = vmax.f32 %v6186, 0.0
      %v6219 = vmax.f32 %v6187, 0.0
      %v6220 = vmax.f32 %v6188, 0.0
      %v6221 = vmax.f32 %v6189, 0.0
      %v6222 = vmax.f32 %v6190, 0.0
      %v6223 = vmax.f32 %v6191, 0.0
      %v6224 = vmax.f32 %v6192, 0.0
      %v6225 = vmax.f32 %v6193, 0.0
      %v6226 = vmax.f32 %v6194, 0.0
      %v6227 = vmax.f32 %v6195, 0.0
      %v6228 = vmax.f32 %v6196, 0.0
      %v6229 = vmax.f32 %v6197, 0.0
      %v6230 = vmax.f32 %v6198, 0.0
      %v6231 = vmax.f32 %v6199, 0.0
      %v6232 = vmax.f32 %v6200, 0.0
      %v6233 = vpack.c.bf16 %v6202, %v6201
      %v6234 = vpack.c.bf16 %v6204, %v6203
      %v6235 = vpack.c.bf16 %v6206, %v6205
      %v6236 = vpack.c.bf16 %v6208, %v6207
      %v6237 = vpack.c.bf16 %v6210, %v6209
      %v6238 = vpack.c.bf16 %v6212, %v6211
      %v6239 = vpack.c.bf16 %v6214, %v6213
      %v6240 = vpack.c.bf16 %v6216, %v6215
      %v6241 = vpack.c.bf16 %v6218, %v6217
      %v6242 = vpack.c.bf16 %v6220, %v6219
      %v6243 = vpack.c.bf16 %v6222, %v6221
      %v6244 = vpack.c.bf16 %v6224, %v6223
      %v6245 = vpack.c.bf16 %v6226, %v6225
      %v6246 = vpack.c.bf16 %v6228, %v6227
      %v6247 = vpack.c.bf16 %v6230, %v6229
      %v6248 = vpack.c.bf16 %v6232, %v6231
      %v6265 = vunpack.c.l.b16 %v6233
      %v6266 = vunpack.c.h.b16 %v6233
      %v6267 = vunpack.c.l.b16 %v6234
      %v6268 = vunpack.c.h.b16 %v6234
      %v6269 = vunpack.c.l.b16 %v6235
      %v6270 = vunpack.c.h.b16 %v6235
      %v6271 = vunpack.c.l.b16 %v6236
      %v6272 = vunpack.c.h.b16 %v6236
      %v6273 = vunpack.c.l.b16 %v6237
      %v6274 = vunpack.c.h.b16 %v6237
      %v6275 = vunpack.c.l.b16 %v6238
      %v6276 = vunpack.c.h.b16 %v6238
      %v6277 = vunpack.c.l.b16 %v6239
      %v6278 = vunpack.c.h.b16 %v6239
      %v6279 = vunpack.c.l.b16 %v6240
      %v6280 = vunpack.c.h.b16 %v6240
      %v6281 = vunpack.c.l.b16 %v6241
      %v6282 = vunpack.c.h.b16 %v6241
      %v6283 = vunpack.c.l.b16 %v6242
      %v6284 = vunpack.c.h.b16 %v6242
      %v6285 = vunpack.c.l.b16 %v6243
      %v6286 = vunpack.c.h.b16 %v6243
      %v6287 = vunpack.c.l.b16 %v6244
      %v6288 = vunpack.c.h.b16 %v6244
      %v6289 = vunpack.c.l.b16 %v6245
      %v6290 = vunpack.c.h.b16 %v6245
      %v6291 = vunpack.c.l.b16 %v6246
      %v6292 = vunpack.c.h.b16 %v6246
      %v6293 = vunpack.c.l.b16 %v6247
      %v6294 = vunpack.c.h.b16 %v6247
      %v6295 = vunpack.c.l.b16 %v6248
      %v6296 = vunpack.c.h.b16 %v6248
      %v6297 = vpack.c.b16 %v6265, %v6265
      %v6298 = vpack.c.b16 %v6266, %v6266
      %v6299 = vpack.c.b16 %v6267, %v6267
      %v6300 = vpack.c.b16 %v6268, %v6268
      %v6301 = vpack.c.b16 %v6269, %v6269
      %v6302 = vpack.c.b16 %v6270, %v6270
      %v6303 = vpack.c.b16 %v6271, %v6271
      %v6304 = vpack.c.b16 %v6272, %v6272
      %v6305 = vpack.c.b16 %v6273, %v6273
      %v6306 = vpack.c.b16 %v6274, %v6274
      %v6307 = vpack.c.b16 %v6275, %v6275
      %v6308 = vpack.c.b16 %v6276, %v6276
      %v6309 = vpack.c.b16 %v6277, %v6277
      %v6310 = vpack.c.b16 %v6278, %v6278
      %v6311 = vpack.c.b16 %v6279, %v6279
      %v6312 = vpack.c.b16 %v6280, %v6280
      %v6313 = vpack.c.b16 %v6281, %v6281
      %v6314 = vpack.c.b16 %v6282, %v6282
      %v6315 = vpack.c.b16 %v6283, %v6283
      %v6316 = vpack.c.b16 %v6284, %v6284
      %v6317 = vpack.c.b16 %v6285, %v6285
      %v6318 = vpack.c.b16 %v6286, %v6286
      %v6319 = vpack.c.b16 %v6287, %v6287
      %v6320 = vpack.c.b16 %v6288, %v6288
      %v6321 = vpack.c.b16 %v6289, %v6289
      %v6322 = vpack.c.b16 %v6290, %v6290
      %v6323 = vpack.c.b16 %v6291, %v6291
      %v6324 = vpack.c.b16 %v6292, %v6292
      %v6325 = vpack.c.b16 %v6293, %v6293
      %v6326 = vpack.c.b16 %v6294, %v6294
      %v6327 = vpack.c.b16 %v6295, %v6295
      %v6328 = vpack.c.b16 %v6296, %v6296
      %v6330 = vshrl.u32 %v6297, 16
      %v6332 = vrot.slane %v6330, 7
      %v6333 = vshll.u32 %v6297, 16
      %v6335 = vor.u32 %v6332, %v6333
      %v6336 = vrot.slane %v6332, 4
      %v6338 = vshrl.u32 %v6298, 16
      %v6340 = vrot.slane %v6338, 7
      %v6341 = vshll.u32 %v6298, 16
      %v6343 = vor.u32 %v6340, %v6341
      %v6344 = vsel %vm935, %v6336, %v6343
      %v6345 = vrot.slane %v6340, 4
      %v6347 = vshrl.u32 %v6299, 16
      %v6349 = vrot.slane %v6347, 7
      %v6350 = vshll.u32 %v6299, 16
      %v6352 = vor.u32 %v6349, %v6350
      %v6353 = vrot.slane %v6349, 4
      %v6355 = vshrl.u32 %v6300, 16
      %v6357 = vrot.slane %v6355, 7
      %v6358 = vshll.u32 %v6300, 16
      %v6360 = vor.u32 %v6357, %v6358
      %v6361 = vsel %vm935, %v6353, %v6360
      %v6362 = vrot.slane %v6357, 4
      %v6364 = vshrl.u32 %v6301, 16
      %v6366 = vrot.slane %v6364, 7
      %v6367 = vshll.u32 %v6301, 16
      %v6369 = vor.u32 %v6366, %v6367
      %v6370 = vrot.slane %v6366, 4
      %v6372 = vshrl.u32 %v6302, 16
      %v6374 = vrot.slane %v6372, 7
      %v6375 = vshll.u32 %v6302, 16
      %v6377 = vor.u32 %v6374, %v6375
      %v6378 = vsel %vm935, %v6370, %v6377
      %v6379 = vrot.slane %v6374, 4
      %v6381 = vshrl.u32 %v6303, 16
      %v6383 = vrot.slane %v6381, 7
      %v6384 = vshll.u32 %v6303, 16
      %v6386 = vor.u32 %v6383, %v6384
      %v6387 = vrot.slane %v6383, 4
      %v6389 = vshrl.u32 %v6304, 16
      %v6391 = vrot.slane %v6389, 7
      %v6392 = vshll.u32 %v6304, 16
      %v6394 = vor.u32 %v6391, %v6392
      %v6395 = vsel %vm935, %v6387, %v6394
      %v6396 = vrot.slane %v6391, 4
      %v6398 = vshrl.u32 %v6305, 16
      %v6400 = vrot.slane %v6398, 7
      %v6401 = vshll.u32 %v6305, 16
      %v6403 = vor.u32 %v6400, %v6401
      %v6404 = vrot.slane %v6400, 4
      %v6406 = vshrl.u32 %v6306, 16
      %v6408 = vrot.slane %v6406, 7
      %v6409 = vshll.u32 %v6306, 16
      %v6411 = vor.u32 %v6408, %v6409
      %v6412 = vsel %vm935, %v6404, %v6411
      %v6413 = vrot.slane %v6408, 4
      %v6415 = vshrl.u32 %v6307, 16
      %v6417 = vrot.slane %v6415, 7
      %v6418 = vshll.u32 %v6307, 16
      %v6420 = vor.u32 %v6417, %v6418
      %v6421 = vrot.slane %v6417, 4
      %v6423 = vshrl.u32 %v6308, 16
      %v6425 = vrot.slane %v6423, 7
      %v6426 = vshll.u32 %v6308, 16
      %v6428 = vor.u32 %v6425, %v6426
      %v6429 = vsel %vm935, %v6421, %v6428
      %v6430 = vrot.slane %v6425, 4
      %v6432 = vshrl.u32 %v6309, 16
      %v6434 = vrot.slane %v6432, 7
      %v6435 = vshll.u32 %v6309, 16
      %v6437 = vor.u32 %v6434, %v6435
      %v6438 = vrot.slane %v6434, 4
      %v6440 = vshrl.u32 %v6310, 16
      %v6442 = vrot.slane %v6440, 7
      %v6443 = vshll.u32 %v6310, 16
      %v6445 = vor.u32 %v6442, %v6443
      %v6446 = vsel %vm935, %v6438, %v6445
      %v6447 = vrot.slane %v6442, 4
      %v6449 = vshrl.u32 %v6311, 16
      %v6451 = vrot.slane %v6449, 7
      %v6452 = vshll.u32 %v6311, 16
      %v6454 = vor.u32 %v6451, %v6452
      %v6455 = vrot.slane %v6451, 4
      %v6457 = vshrl.u32 %v6312, 16
      %v6459 = vrot.slane %v6457, 7
      %v6460 = vshll.u32 %v6312, 16
      %v6462 = vor.u32 %v6459, %v6460
      %v6463 = vsel %vm935, %v6455, %v6462
      %v6464 = vrot.slane %v6459, 4
      %v6466 = vshrl.u32 %v6313, 16
      %v6468 = vrot.slane %v6466, 7
      %v6469 = vshll.u32 %v6313, 16
      %v6471 = vor.u32 %v6468, %v6469
      %v6472 = vrot.slane %v6468, 4
      %v6474 = vshrl.u32 %v6314, 16
      %v6476 = vrot.slane %v6474, 7
      %v6477 = vshll.u32 %v6314, 16
      %v6479 = vor.u32 %v6476, %v6477
      %v6480 = vsel %vm935, %v6472, %v6479
      %v6481 = vrot.slane %v6476, 4
      %v6483 = vshrl.u32 %v6315, 16
      %v6485 = vrot.slane %v6483, 7
      %v6486 = vshll.u32 %v6315, 16
      %v6488 = vor.u32 %v6485, %v6486
      %v6489 = vrot.slane %v6485, 4
      %v6491 = vshrl.u32 %v6316, 16
      %v6493 = vrot.slane %v6491, 7
      %v6494 = vshll.u32 %v6316, 16
      %v6496 = vor.u32 %v6493, %v6494
      %v6497 = vsel %vm935, %v6489, %v6496
      %v6498 = vrot.slane %v6493, 4
      %v6500 = vshrl.u32 %v6317, 16
      %v6502 = vrot.slane %v6500, 7
      %v6503 = vshll.u32 %v6317, 16
      %v6505 = vor.u32 %v6502, %v6503
      %v6506 = vrot.slane %v6502, 4
      %v6508 = vshrl.u32 %v6318, 16
      %v6510 = vrot.slane %v6508, 7
      %v6511 = vshll.u32 %v6318, 16
      %v6513 = vor.u32 %v6510, %v6511
      %v6514 = vsel %vm935, %v6506, %v6513
      %v6515 = vrot.slane %v6510, 4
      %v6517 = vshrl.u32 %v6319, 16
      %v6519 = vrot.slane %v6517, 7
      %v6520 = vshll.u32 %v6319, 16
      %v6522 = vor.u32 %v6519, %v6520
      %v6523 = vrot.slane %v6519, 4
      %v6525 = vshrl.u32 %v6320, 16
      %v6527 = vrot.slane %v6525, 7
      %v6528 = vshll.u32 %v6320, 16
      %v6530 = vor.u32 %v6527, %v6528
      %v6531 = vsel %vm935, %v6523, %v6530
      %v6532 = vrot.slane %v6527, 4
      %v6534 = vshrl.u32 %v6321, 16
      %v6536 = vrot.slane %v6534, 7
      %v6537 = vshll.u32 %v6321, 16
      %v6539 = vor.u32 %v6536, %v6537
      %v6540 = vrot.slane %v6536, 4
      %v6542 = vshrl.u32 %v6322, 16
      %v6544 = vrot.slane %v6542, 7
      %v6545 = vshll.u32 %v6322, 16
      %v6547 = vor.u32 %v6544, %v6545
      %v6548 = vsel %vm935, %v6540, %v6547
      %v6549 = vrot.slane %v6544, 4
      %v6551 = vshrl.u32 %v6323, 16
      %v6553 = vrot.slane %v6551, 7
      %v6554 = vshll.u32 %v6323, 16
      %v6556 = vor.u32 %v6553, %v6554
      %v6557 = vrot.slane %v6553, 4
      %v6559 = vshrl.u32 %v6324, 16
      %v6561 = vrot.slane %v6559, 7
      %v6562 = vshll.u32 %v6324, 16
      %v6564 = vor.u32 %v6561, %v6562
      %v6565 = vsel %vm935, %v6557, %v6564
      %v6566 = vrot.slane %v6561, 4
      %v6568 = vshrl.u32 %v6325, 16
      %v6570 = vrot.slane %v6568, 7
      %v6571 = vshll.u32 %v6325, 16
      %v6573 = vor.u32 %v6570, %v6571
      %v6574 = vrot.slane %v6570, 4
      %v6576 = vshrl.u32 %v6326, 16
      %v6578 = vrot.slane %v6576, 7
      %v6579 = vshll.u32 %v6326, 16
      %v6581 = vor.u32 %v6578, %v6579
      %v6582 = vsel %vm935, %v6574, %v6581
      %v6583 = vrot.slane %v6578, 4
      %v6585 = vshrl.u32 %v6327, 16
      %v6587 = vrot.slane %v6585, 7
      %v6588 = vshll.u32 %v6327, 16
      %v6590 = vor.u32 %v6587, %v6588
      %v6591 = vrot.slane %v6587, 4
      %v6593 = vshrl.u32 %v6328, 16
      %v6595 = vrot.slane %v6593, 7
      %v6596 = vshll.u32 %v6328, 16
      %v6598 = vor.u32 %v6595, %v6596
      %v6599 = vsel %vm935, %v6591, %v6598
      %v6600 = vrot.slane %v6595, 4
      %s6649 = scalar_lea.vmem [#allocation5], 12
      %v6650 = vld [vmem:[%s6649] sm:$0xf]
      %v6651 = vsel %vm1258, %v6335, %v6650
      %6652 = vst [vmem:[%s6649] sm:$0xf] %v6651
      %6653 = vst.msk [vmem:[%s6649 + $0x4] sm:$0xf] %vm435, %v6344
      %v6654 = vld [vmem:[%s6649 + $0x8] sm:$0x1]
      %v6655 = vsel %vm446, %v6345, %v6654
      %6656 = vst [vmem:[%s6649 + $0x8] sm:$0x1] %v6655
      %v6657 = vld [vmem:[%s6649 + $0xc] sm:$0xf]
      %v6658 = vsel %vm1258, %v6352, %v6657
      %6659 = vst [vmem:[%s6649 + $0xc] sm:$0xf] %v6658
      %6660 = vst.msk [vmem:[%s6649 + $0x10] sm:$0xf] %vm435, %v6361
      %v6661 = vld [vmem:[%s6649 + $0x14] sm:$0x1]
      %v6662 = vsel %vm446, %v6362, %v6661
      %6663 = vst [vmem:[%s6649 + $0x14] sm:$0x1] %v6662
      %v6664 = vld [vmem:[%s6649 + $0x18] sm:$0xf]
      %v6665 = vsel %vm1258, %v6369, %v6664
      %6666 = vst [vmem:[%s6649 + $0x18] sm:$0xf] %v6665
      %6667 = vst.msk [vmem:[%s6649 + $0x1c] sm:$0xf] %vm435, %v6378
      %v6668 = vld [vmem:[%s6649 + $0x20] sm:$0x1]
      %v6669 = vsel %vm446, %v6379, %v6668
      %6670 = vst [vmem:[%s6649 + $0x20] sm:$0x1] %v6669
      %v6671 = vld [vmem:[%s6649 + $0x24] sm:$0xf]
      %v6672 = vsel %vm1258, %v6386, %v6671
      %6673 = vst [vmem:[%s6649 + $0x24] sm:$0xf] %v6672
      %6674 = vst.msk [vmem:[%s6649 + $0x28] sm:$0xf] %vm435, %v6395
      %v6675 = vld [vmem:[%s6649 + $0x2c] sm:$0x1]
      %v6676 = vsel %vm446, %v6396, %v6675
      %6677 = vst [vmem:[%s6649 + $0x2c] sm:$0x1] %v6676
      %v6678 = vld [vmem:[%s6649 + $0x30] sm:$0xf]
      %v6679 = vsel %vm1258, %v6403, %v6678
      %6680 = vst [vmem:[%s6649 + $0x30] sm:$0xf] %v6679
      %6681 = vst.msk [vmem:[%s6649 + $0x34] sm:$0xf] %vm435, %v6412
      %v6682 = vld [vmem:[%s6649 + $0x38] sm:$0x1]
      %v6683 = vsel %vm446, %v6413, %v6682
      %6684 = vst [vmem:[%s6649 + $0x38] sm:$0x1] %v6683
      %v6685 = vld [vmem:[%s6649 + $0x3c] sm:$0xf]
      %v6686 = vsel %vm1258, %v6420, %v6685
      %6687 = vst [vmem:[%s6649 + $0x3c] sm:$0xf] %v6686
      %6688 = vst.msk [vmem:[%s6649 + $0x40] sm:$0xf] %vm435, %v6429
      %v6689 = vld [vmem:[%s6649 + $0x44] sm:$0x1]
      %v6690 = vsel %vm446, %v6430, %v6689
      %6691 = vst [vmem:[%s6649 + $0x44] sm:$0x1] %v6690
      %v6692 = vld [vmem:[%s6649 + $0x48] sm:$0xf]
      %v6693 = vsel %vm1258, %v6437, %v6692
      %6694 = vst [vmem:[%s6649 + $0x48] sm:$0xf] %v6693
      %6695 = vst.msk [vmem:[%s6649 + $0x4c] sm:$0xf] %vm435, %v6446
      %v6696 = vld [vmem:[%s6649 + $0x50] sm:$0x1]
      %v6697 = vsel %vm446, %v6447, %v6696
      %6698 = vst [vmem:[%s6649 + $0x50] sm:$0x1] %v6697
      %v6699 = vld [vmem:[%s6649 + $0x54] sm:$0xf]
      %v6700 = vsel %vm1258, %v6454, %v6699
      %6701 = vst [vmem:[%s6649 + $0x54] sm:$0xf] %v6700
      %6702 = vst.msk [vmem:[%s6649 + $0x58] sm:$0xf] %vm435, %v6463
      %v6703 = vld [vmem:[%s6649 + $0x5c] sm:$0x1]
      %v6704 = vsel %vm446, %v6464, %v6703
      %6705 = vst [vmem:[%s6649 + $0x5c] sm:$0x1] %v6704
      %v6706 = vld [vmem:[%s6649 + $0x60] sm:$0xf]
      %v6707 = vsel %vm1258, %v6471, %v6706
      %6708 = vst [vmem:[%s6649 + $0x60] sm:$0xf] %v6707
      %6709 = vst.msk [vmem:[%s6649 + $0x64] sm:$0xf] %vm435, %v6480
      %v6710 = vld [vmem:[%s6649 + $0x68] sm:$0x1]
      %v6711 = vsel %vm446, %v6481, %v6710
      %6712 = vst [vmem:[%s6649 + $0x68] sm:$0x1] %v6711
      %v6713 = vld [vmem:[%s6649 + $0x6c] sm:$0xf]
      %v6714 = vsel %vm1258, %v6488, %v6713
      %6715 = vst [vmem:[%s6649 + $0x6c] sm:$0xf] %v6714
      %6716 = vst.msk [vmem:[%s6649 + $0x70] sm:$0xf] %vm435, %v6497
      %v6717 = vld [vmem:[%s6649 + $0x74] sm:$0x1]
      %v6718 = vsel %vm446, %v6498, %v6717
      %6719 = vst [vmem:[%s6649 + $0x74] sm:$0x1] %v6718
      %v6720 = vld [vmem:[%s6649 + $0x78] sm:$0xf]
      %v6721 = vsel %vm1258, %v6505, %v6720
      %6722 = vst [vmem:[%s6649 + $0x78] sm:$0xf] %v6721
      %6723 = vst.msk [vmem:[%s6649 + $0x7c] sm:$0xf] %vm435, %v6514
      %v6724 = vld [vmem:[%s6649 + $0x80] sm:$0x1]
      %v6725 = vsel %vm446, %v6515, %v6724
      %6726 = vst [vmem:[%s6649 + $0x80] sm:$0x1] %v6725
      %v6727 = vld [vmem:[%s6649 + $0x84] sm:$0xf]
      %v6728 = vsel %vm1258, %v6522, %v6727
      %6729 = vst [vmem:[%s6649 + $0x84] sm:$0xf] %v6728
      %6730 = vst.msk [vmem:[%s6649 + $0x88] sm:$0xf] %vm435, %v6531
      %v6731 = vld [vmem:[%s6649 + $0x8c] sm:$0x1]
      %v6732 = vsel %vm446, %v6532, %v6731
      %6733 = vst [vmem:[%s6649 + $0x8c] sm:$0x1] %v6732
      %v6734 = vld [vmem:[%s6649 + $0x90] sm:$0xf]
      %v6735 = vsel %vm1258, %v6539, %v6734
      %6736 = vst [vmem:[%s6649 + $0x90] sm:$0xf] %v6735
      %6737 = vst.msk [vmem:[%s6649 + $0x94] sm:$0xf] %vm435, %v6548
      %v6738 = vld [vmem:[%s6649 + $0x98] sm:$0x1]
      %v6739 = vsel %vm446, %v6549, %v6738
      %6740 = vst [vmem:[%s6649 + $0x98] sm:$0x1] %v6739
      %v6741 = vld [vmem:[%s6649 + $0x9c] sm:$0xf]
      %v6742 = vsel %vm1258, %v6556, %v6741
      %6743 = vst [vmem:[%s6649 + $0x9c] sm:$0xf] %v6742
      %6744 = vst.msk [vmem:[%s6649 + $0xa0] sm:$0xf] %vm435, %v6565
      %v6745 = vld [vmem:[%s6649 + $0xa4] sm:$0x1]
      %v6746 = vsel %vm446, %v6566, %v6745
      %6747 = vst [vmem:[%s6649 + $0xa4] sm:$0x1] %v6746
      %v6748 = vld [vmem:[%s6649 + $0xa8] sm:$0xf]
      %v6749 = vsel %vm1258, %v6573, %v6748
      %6750 = vst [vmem:[%s6649 + $0xa8] sm:$0xf] %v6749
      %6751 = vst.msk [vmem:[%s6649 + $0xac] sm:$0xf] %vm435, %v6582
      %v6752 = vld [vmem:[%s6649 + $0xb0] sm:$0x1]
      %v6753 = vsel %vm446, %v6583, %v6752
      %6754 = vst [vmem:[%s6649 + $0xb0] sm:$0x1] %v6753
      %v6755 = vld [vmem:[%s6649 + $0xb4] sm:$0xf]
      %v6756 = vsel %vm1258, %v6590, %v6755
      %6757 = vst [vmem:[%s6649 + $0xb4] sm:$0xf] %v6756
      %6758 = vst.msk [vmem:[%s6649 + $0xb8] sm:$0xf] %vm435, %v6599
      %v6759 = vld [vmem:[%s6649 + $0xbc] sm:$0x1]
      %v6760 = vsel %vm446, %v6600, %v6759
      %6761 = vst [vmem:[%s6649 + $0xbc] sm:$0x1] %v6760
      %v6762 = vld [vmem:[#allocation5] sm:$0xf]
      %v6763 = vld [vmem:[#allocation5 + $0x4] sm:$0xf]
      %v6764 = vld [vmem:[#allocation5 + $0x8] sm:$0x1]
      %v6765 = vld [vmem:[#allocation5 + $0xc] sm:$0xf]
      %v6766 = vld [vmem:[#allocation5 + $0x10] sm:$0xf]
      %v6767 = vld [vmem:[#allocation5 + $0x14] sm:$0x1]
      %v6768 = vld [vmem:[#allocation5 + $0x18] sm:$0xf]
      %v6769 = vld [vmem:[#allocation5 + $0x1c] sm:$0xf]
      %v6770 = vld [vmem:[#allocation5 + $0x20] sm:$0x1]
      %v6771 = vld [vmem:[#allocation5 + $0x24] sm:$0xf]
      %v6772 = vld [vmem:[#allocation5 + $0x28] sm:$0xf]
      %v6773 = vld [vmem:[#allocation5 + $0x2c] sm:$0x1]
      %v6774 = vld [vmem:[#allocation5 + $0x30] sm:$0xf]
      %v6775 = vld [vmem:[#allocation5 + $0x34] sm:$0xf]
      %v6776 = vld [vmem:[#allocation5 + $0x38] sm:$0x1]
      %v6777 = vld [vmem:[#allocation5 + $0x3c] sm:$0xf]
      %v6778 = vld [vmem:[#allocation5 + $0x40] sm:$0xf]
      %v6779 = vld [vmem:[#allocation5 + $0x44] sm:$0x1]
      %v6780 = vld [vmem:[#allocation5 + $0x48] sm:$0xf]
      %v6781 = vld [vmem:[#allocation5 + $0x4c] sm:$0xf]
      %v6782 = vld [vmem:[#allocation5 + $0x50] sm:$0x1]
      %v6783 = vld [vmem:[#allocation5 + $0x54] sm:$0xf]
      %v6784 = vld [vmem:[#allocation5 + $0x58] sm:$0xf]
      %v6785 = vld [vmem:[#allocation5 + $0x5c] sm:$0x1]
      %v6786 = vld [vmem:[#allocation5 + $0x60] sm:$0xf]
      %v6787 = vld [vmem:[#allocation5 + $0x64] sm:$0xf]
      %v6788 = vld [vmem:[#allocation5 + $0x68] sm:$0x1]
      %v6789 = vld [vmem:[#allocation5 + $0x6c] sm:$0xf]
      %v6790 = vld [vmem:[#allocation5 + $0x70] sm:$0xf]
      %v6791 = vld [vmem:[#allocation5 + $0x74] sm:$0x1]
      %v6792 = vld [vmem:[#allocation5 + $0x78] sm:$0xf]
      %v6793 = vld [vmem:[#allocation5 + $0x7c] sm:$0xf]
      %v6794 = vld [vmem:[#allocation5 + $0x80] sm:$0x1]
      %v6795 = vld [vmem:[#allocation5 + $0x84] sm:$0xf]
      %v6796 = vld [vmem:[#allocation5 + $0x88] sm:$0xf]
      %v6797 = vld [vmem:[#allocation5 + $0x8c] sm:$0x1]
      %v6798 = vld [vmem:[#allocation5 + $0x90] sm:$0xf]
      %v6799 = vld [vmem:[#allocation5 + $0x94] sm:$0xf]
      %v6800 = vld [vmem:[#allocation5 + $0x98] sm:$0x1]
      %v6801 = vld [vmem:[#allocation5 + $0x9c] sm:$0xf]
      %v6802 = vld [vmem:[#allocation5 + $0xa0] sm:$0xf]
      %v6803 = vld [vmem:[#allocation5 + $0xa4] sm:$0x1]
      %v6804 = vld [vmem:[#allocation5 + $0xa8] sm:$0xf]
      %v6805 = vld [vmem:[#allocation5 + $0xac] sm:$0xf]
      %v6806 = vld [vmem:[#allocation5 + $0xb0] sm:$0x1]
      %v6807 = vld [vmem:[#allocation5 + $0xb4] sm:$0xf]
      %v6808 = vld [vmem:[#allocation5 + $0xb8] sm:$0xf]
      %v6809 = vld [vmem:[#allocation5 + $0xbc] sm:$0x1]
      %v6810 = vld [vmem:[#allocation5 + $0xc0] sm:$0xf]
      %v6811 = vld [vmem:[#allocation5 + $0xc4] sm:$0xf]
      %v6812 = vld [vmem:[#allocation5 + $0xc8] sm:$0x1]
      %v6813 = vld [vmem:[#allocation5 + $0xcc] sm:$0xf]
      %v6814 = vld [vmem:[#allocation5 + $0xd0] sm:$0xf]
      %v6815 = vld [vmem:[#allocation5 + $0xd4] sm:$0x1]
      %v6848 = vunpack.c.l.b16 %v6762
      %v6849 = vunpack.c.l.b16 %v6763
      %v6850 = vunpack.c.l.b16 %v6765
      %v6851 = vunpack.c.l.b16 %v6766
      %v6852 = vunpack.c.l.b16 %v6768
      %v6853 = vunpack.c.l.b16 %v6769
      %v6854 = vunpack.c.l.b16 %v6771
      %v6855 = vunpack.c.l.b16 %v6772
      %v6856 = vunpack.c.l.b16 %v6774
      %v6857 = vunpack.c.l.b16 %v6775
      %v6858 = vunpack.c.l.b16 %v6777
      %v6859 = vunpack.c.l.b16 %v6778
      %v6860 = vunpack.c.l.b16 %v6780
      %v6861 = vunpack.c.l.b16 %v6781
      %v6862 = vunpack.c.l.b16 %v6783
      %v6863 = vunpack.c.l.b16 %v6784
      %v6864 = vunpack.c.l.b16 %v6786
      %v6865 = vunpack.c.l.b16 %v6787
      %v6866 = vunpack.c.l.b16 %v6789
      %v6867 = vunpack.c.l.b16 %v6790
      %v6868 = vunpack.c.l.b16 %v6792
      %v6869 = vunpack.c.l.b16 %v6793
      %v6870 = vunpack.c.l.b16 %v6795
      %v6871 = vunpack.c.l.b16 %v6796
      %v6872 = vunpack.c.l.b16 %v6798
      %v6873 = vunpack.c.l.b16 %v6799
      %v6874 = vunpack.c.l.b16 %v6801
      %v6875 = vunpack.c.l.b16 %v6802
      %v6876 = vunpack.c.l.b16 %v6804
      %v6877 = vunpack.c.l.b16 %v6805
      %v6878 = vunpack.c.l.b16 %v6807
      %v6879 = vunpack.c.l.b16 %v6808
      %v6880 = vpack.c.b16 %v6849, %v6848
      %v6881 = vpack.c.b16 %v6851, %v6850
      %v6882 = vpack.c.b16 %v6853, %v6852
      %v6883 = vpack.c.b16 %v6855, %v6854
      %v6884 = vpack.c.b16 %v6857, %v6856
      %v6885 = vpack.c.b16 %v6859, %v6858
      %v6886 = vpack.c.b16 %v6861, %v6860
      %v6887 = vpack.c.b16 %v6863, %v6862
      %v6888 = vpack.c.b16 %v6865, %v6864
      %v6889 = vpack.c.b16 %v6867, %v6866
      %v6890 = vpack.c.b16 %v6869, %v6868
      %v6891 = vpack.c.b16 %v6871, %v6870
      %v6892 = vpack.c.b16 %v6873, %v6872
      %v6893 = vpack.c.b16 %v6875, %v6874
      %v6894 = vpack.c.b16 %v6877, %v6876
      %v6895 = vpack.c.b16 %v6879, %v6878
      %v6912 = vunpack.c.l.b16 %v6764
      %v6913 = vunpack.c.l.b16 %v6767
      %v6914 = vunpack.c.l.b16 %v6770
      %v6915 = vunpack.c.l.b16 %v6773
      %v6916 = vunpack.c.l.b16 %v6776
      %v6917 = vunpack.c.l.b16 %v6779
      %v6918 = vunpack.c.l.b16 %v6782
      %v6919 = vunpack.c.l.b16 %v6785
      %v6920 = vunpack.c.l.b16 %v6788
      %v6921 = vunpack.c.l.b16 %v6791
      %v6922 = vunpack.c.l.b16 %v6794
      %v6923 = vunpack.c.l.b16 %v6797
      %v6924 = vunpack.c.l.b16 %v6800
      %v6925 = vunpack.c.l.b16 %v6803
      %v6926 = vunpack.c.l.b16 %v6806
      %v6927 = vunpack.c.l.b16 %v6809
      %v6928 = vpack.c.b16 %v6912, %v6912
      %v6929 = vpack.c.b16 %v6913, %v6913
      %v6930 = vpack.c.b16 %v6914, %v6914
      %v6931 = vpack.c.b16 %v6915, %v6915
      %v6932 = vpack.c.b16 %v6916, %v6916
      %v6933 = vpack.c.b16 %v6917, %v6917
      %v6934 = vpack.c.b16 %v6918, %v6918
      %v6935 = vpack.c.b16 %v6919, %v6919
      %v6936 = vpack.c.b16 %v6920, %v6920
      %v6937 = vpack.c.b16 %v6921, %v6921
      %v6938 = vpack.c.b16 %v6922, %v6922
      %v6939 = vpack.c.b16 %v6923, %v6923
      %v6940 = vpack.c.b16 %v6924, %v6924
      %v6941 = vpack.c.b16 %v6925, %v6925
      %v6942 = vpack.c.b16 %v6926, %v6926
      %v6943 = vpack.c.b16 %v6927, %v6927
      %v6945 = vshrl.u32 %v6880, 16
      %v6947 = vshll.u32 %v6880, 16
      %v6949 = vrot.slane %v6947, 1
      %v6950 = vor.u32 %v6945, %v6949
      %v6952 = vshll.u32 %v6928, 16
      %v6954 = vrot.slane %v6952, 1
      %v6955 = vsel %vm2018, %v6950, %v6954
      %v6957 = vshrl.u32 %v6881, 16
      %v6959 = vshll.u32 %v6881, 16
      %v6961 = vrot.slane %v6959, 1
      %v6962 = vor.u32 %v6957, %v6961
      %v6964 = vshll.u32 %v6929, 16
      %v6966 = vrot.slane %v6964, 1
      %v6967 = vsel %vm2018, %v6962, %v6966
      %v6969 = vshrl.u32 %v6882, 16
      %v6971 = vshll.u32 %v6882, 16
      %v6973 = vrot.slane %v6971, 1
      %v6974 = vor.u32 %v6969, %v6973
      %v6976 = vshll.u32 %v6930, 16
      %v6978 = vrot.slane %v6976, 1
      %v6979 = vsel %vm2018, %v6974, %v6978
      %v6981 = vshrl.u32 %v6883, 16
      %v6983 = vshll.u32 %v6883, 16
      %v6985 = vrot.slane %v6983, 1
      %v6986 = vor.u32 %v6981, %v6985
      %v6988 = vshll.u32 %v6931, 16
      %v6990 = vrot.slane %v6988, 1
      %v6991 = vsel %vm2018, %v6986, %v6990
      %v6993 = vshrl.u32 %v6884, 16
      %v6995 = vshll.u32 %v6884, 16
      %v6997 = vrot.slane %v6995, 1
      %v6998 = vor.u32 %v6993, %v6997
      %v7000 = vshll.u32 %v6932, 16
      %v7002 = vrot.slane %v7000, 1
      %v7003 = vsel %vm2018, %v6998, %v7002
      %v7005 = vshrl.u32 %v6885, 16
      %v7007 = vshll.u32 %v6885, 16
      %v7009 = vrot.slane %v7007, 1
      %v7010 = vor.u32 %v7005, %v7009
      %v7012 = vshll.u32 %v6933, 16
      %v7014 = vrot.slane %v7012, 1
      %v7015 = vsel %vm2018, %v7010, %v7014
      %v7017 = vshrl.u32 %v6886, 16
      %v7019 = vshll.u32 %v6886, 16
      %v7021 = vrot.slane %v7019, 1
      %v7022 = vor.u32 %v7017, %v7021
      %v7024 = vshll.u32 %v6934, 16
      %v7026 = vrot.slane %v7024, 1
      %v7027 = vsel %vm2018, %v7022, %v7026
      %v7029 = vshrl.u32 %v6887, 16
      %v7031 = vshll.u32 %v6887, 16
      %v7033 = vrot.slane %v7031, 1
      %v7034 = vor.u32 %v7029, %v7033
      %v7036 = vshll.u32 %v6935, 16
      %v7038 = vrot.slane %v7036, 1
      %v7039 = vsel %vm2018, %v7034, %v7038
      %v7041 = vshrl.u32 %v6888, 16
      %v7043 = vshll.u32 %v6888, 16
      %v7045 = vrot.slane %v7043, 1
      %v7046 = vor.u32 %v7041, %v7045
      %v7048 = vshll.u32 %v6936, 16
      %v7050 = vrot.slane %v7048, 1
      %v7051 = vsel %vm2018, %v7046, %v7050
      %v7053 = vshrl.u32 %v6889, 16
      %v7055 = vshll.u32 %v6889, 16
      %v7057 = vrot.slane %v7055, 1
      %v7058 = vor.u32 %v7053, %v7057
      %v7060 = vshll.u32 %v6937, 16
      %v7062 = vrot.slane %v7060, 1
      %v7063 = vsel %vm2018, %v7058, %v7062
      %v7065 = vshrl.u32 %v6890, 16
      %v7067 = vshll.u32 %v6890, 16
      %v7069 = vrot.slane %v7067, 1
      %v7070 = vor.u32 %v7065, %v7069
      %v7072 = vshll.u32 %v6938, 16
      %v7074 = vrot.slane %v7072, 1
      %v7075 = vsel %vm2018, %v7070, %v7074
      %v7077 = vshrl.u32 %v6891, 16
      %v7079 = vshll.u32 %v6891, 16
      %v7081 = vrot.slane %v7079, 1
      %v7082 = vor.u32 %v7077, %v7081
      %v7084 = vshll.u32 %v6939, 16
      %v7086 = vrot.slane %v7084, 1
      %v7087 = vsel %vm2018, %v7082, %v7086
      %v7089 = vshrl.u32 %v6892, 16
      %v7091 = vshll.u32 %v6892, 16
      %v7093 = vrot.slane %v7091, 1
      %v7094 = vor.u32 %v7089, %v7093
      %v7096 = vshll.u32 %v6940, 16
      %v7098 = vrot.slane %v7096, 1
      %v7099 = vsel %vm2018, %v7094, %v7098
      %v7101 = vshrl.u32 %v6893, 16
      %v7103 = vshll.u32 %v6893, 16
      %v7105 = vrot.slane %v7103, 1
      %v7106 = vor.u32 %v7101, %v7105
      %v7108 = vshll.u32 %v6941, 16
      %v7110 = vrot.slane %v7108, 1
      %v7111 = vsel %vm2018, %v7106, %v7110
      %v7113 = vshrl.u32 %v6894, 16
      %v7115 = vshll.u32 %v6894, 16
      %v7117 = vrot.slane %v7115, 1
      %v7118 = vor.u32 %v7113, %v7117
      %v7120 = vshll.u32 %v6942, 16
      %v7122 = vrot.slane %v7120, 1
      %v7123 = vsel %vm2018, %v7118, %v7122
      %v7125 = vshrl.u32 %v6895, 16
      %v7127 = vshll.u32 %v6895, 16
      %v7129 = vrot.slane %v7127, 1
      %v7130 = vor.u32 %v7125, %v7129
      %v7132 = vshll.u32 %v6943, 16
      %v7134 = vrot.slane %v7132, 1
      %v7135 = vsel %vm2018, %v7130, %v7134
      %7136 = vrot.lane.b32.xlu0 %v6955, 8
      %v7137 = vpop.permute.xlu0 %7136
      %7138 = vrot.lane.b32.xlu0 %v6967, 8
      %v7139 = vpop.permute.xlu0 %7138
      %7140 = vrot.lane.b32.xlu0 %v6979, 8
      %v7141 = vpop.permute.xlu0 %7140
      %7142 = vrot.lane.b32.xlu0 %v6991, 8
      %v7143 = vpop.permute.xlu0 %7142
      %7144 = vrot.lane.b32.xlu0 %v7003, 8
      %v7145 = vpop.permute.xlu0 %7144
      %7146 = vrot.lane.b32.xlu0 %v7015, 8
      %v7147 = vpop.permute.xlu0 %7146
      %7148 = vrot.lane.b32.xlu0 %v7027, 8
      %v7149 = vpop.permute.xlu0 %7148
      %7150 = vrot.lane.b32.xlu0 %v7039, 8
      %v7151 = vpop.permute.xlu0 %7150
      %7152 = vrot.lane.b32.xlu0 %v7051, 8
      %v7153 = vpop.permute.xlu0 %7152
      %7154 = vrot.lane.b32.xlu0 %v7063, 8
      %v7155 = vpop.permute.xlu0 %7154
      %7156 = vrot.lane.b32.xlu0 %v7075, 8
      %v7157 = vpop.permute.xlu0 %7156
      %7158 = vrot.lane.b32.xlu0 %v7087, 8
      %v7159 = vpop.permute.xlu0 %7158
      %7160 = vrot.lane.b32.xlu0 %v7099, 8
      %v7161 = vpop.permute.xlu0 %7160
      %7162 = vrot.lane.b32.xlu0 %v7111, 8
      %v7163 = vpop.permute.xlu0 %7162
      %7164 = vrot.lane.b32.xlu0 %v7123, 8
      %v7165 = vpop.permute.xlu0 %7164
      %7166 = vrot.lane.b32.xlu0 %v7135, 8
      %v7167 = vpop.permute.xlu0 %7166
      %v7168 = vrot.slane %v6880, 1
      %v7169 = vrot.slane %v6928, 1
      %v7170 = vsel %vm2243, %v7168, %v7169
      %v7171 = vrot.slane %v6881, 1
      %v7172 = vrot.slane %v6929, 1
      %v7173 = vsel %vm2243, %v7171, %v7172
      %v7174 = vrot.slane %v6882, 1
      %v7175 = vrot.slane %v6930, 1
      %v7176 = vsel %vm2243, %v7174, %v7175
      %v7177 = vrot.slane %v6883, 1
      %v7178 = vrot.slane %v6931, 1
      %v7179 = vsel %vm2243, %v7177, %v7178
      %v7180 = vrot.slane %v6884, 1
      %v7181 = vrot.slane %v6932, 1
      %v7182 = vsel %vm2243, %v7180, %v7181
      %v7183 = vrot.slane %v6885, 1
      %v7184 = vrot.slane %v6933, 1
      %v7185 = vsel %vm2243, %v7183, %v7184
      %v7186 = vrot.slane %v6886, 1
      %v7187 = vrot.slane %v6934, 1
      %v7188 = vsel %vm2243, %v7186, %v7187
      %v7189 = vrot.slane %v6887, 1
      %v7190 = vrot.slane %v6935, 1
      %v7191 = vsel %vm2243, %v7189, %v7190
      %v7192 = vrot.slane %v6888, 1
      %v7193 = vrot.slane %v6936, 1
      %v7194 = vsel %vm2243, %v7192, %v7193
      %v7195 = vrot.slane %v6889, 1
      %v7196 = vrot.slane %v6937, 1
      %v7197 = vsel %vm2243, %v7195, %v7196
      %v7198 = vrot.slane %v6890, 1
      %v7199 = vrot.slane %v6938, 1
      %v7200 = vsel %vm2243, %v7198, %v7199
      %v7201 = vrot.slane %v6891, 1
      %v7202 = vrot.slane %v6939, 1
      %v7203 = vsel %vm2243, %v7201, %v7202
      %v7204 = vrot.slane %v6892, 1
      %v7205 = vrot.slane %v6940, 1
      %v7206 = vsel %vm2243, %v7204, %v7205
      %v7207 = vrot.slane %v6893, 1
      %v7208 = vrot.slane %v6941, 1
      %v7209 = vsel %vm2243, %v7207, %v7208
      %v7210 = vrot.slane %v6894, 1
      %v7211 = vrot.slane %v6942, 1
      %v7212 = vsel %vm2243, %v7210, %v7211
      %v7213 = vrot.slane %v6895, 1
      %v7214 = vrot.slane %v6943, 1
      %v7215 = vsel %vm2243, %v7213, %v7214
      %7216 = vrot.lane.b32.xlu0 %v7170, 16
      %v7217 = vpop.permute.xlu0 %7216
      %7218 = vrot.lane.b32.xlu0 %v7173, 16
      %v7219 = vpop.permute.xlu0 %7218
      %7220 = vrot.lane.b32.xlu0 %v7176, 16
      %v7221 = vpop.permute.xlu0 %7220
      %7222 = vrot.lane.b32.xlu0 %v7179, 16
      %v7223 = vpop.permute.xlu0 %7222
      %7224 = vrot.lane.b32.xlu0 %v7182, 16
      %v7225 = vpop.permute.xlu0 %7224
      %7226 = vrot.lane.b32.xlu0 %v7185, 16
      %v7227 = vpop.permute.xlu0 %7226
      %7228 = vrot.lane.b32.xlu0 %v7188, 16
      %v7229 = vpop.permute.xlu0 %7228
      %7230 = vrot.lane.b32.xlu0 %v7191, 16
      %v7231 = vpop.permute.xlu0 %7230
      %7232 = vrot.lane.b32.xlu0 %v7194, 16
      %v7233 = vpop.permute.xlu0 %7232
      %7234 = vrot.lane.b32.xlu0 %v7197, 16
      %v7235 = vpop.permute.xlu0 %7234
      %7236 = vrot.lane.b32.xlu0 %v7200, 16
      %v7237 = vpop.permute.xlu0 %7236
      %7238 = vrot.lane.b32.xlu0 %v7203, 16
      %v7239 = vpop.permute.xlu0 %7238
      %7240 = vrot.lane.b32.xlu0 %v7206, 16
      %v7241 = vpop.permute.xlu0 %7240
      %7242 = vrot.lane.b32.xlu0 %v7209, 16
      %v7243 = vpop.permute.xlu0 %7242
      %7244 = vrot.lane.b32.xlu0 %v7212, 16
      %v7245 = vpop.permute.xlu0 %7244
      %7246 = vrot.lane.b32.xlu0 %v7215, 16
      %v7247 = vpop.permute.xlu0 %7246
      %v7250 = vunpack.c.l.b16 %v6810
      %v7251 = vunpack.c.l.b16 %v6811
      %v7252 = vpack.c.b16 %v7251, %v7250
      %7253 = vrot.lane.b32.xlu0 %v6881, 24
      %v7254 = vpop.permute.xlu0 %7253
      %7255 = vrot.lane.b32.xlu0 %v6882, 24
      %v7256 = vpop.permute.xlu0 %7255
      %7257 = vrot.lane.b32.xlu0 %v6883, 24
      %v7258 = vpop.permute.xlu0 %7257
      %7259 = vrot.lane.b32.xlu0 %v6884, 24
      %v7260 = vpop.permute.xlu0 %7259
      %7261 = vrot.lane.b32.xlu0 %v6885, 24
      %v7262 = vpop.permute.xlu0 %7261
      %7263 = vrot.lane.b32.xlu0 %v6886, 24
      %v7264 = vpop.permute.xlu0 %7263
      %7265 = vrot.lane.b32.xlu0 %v6887, 24
      %v7266 = vpop.permute.xlu0 %7265
      %7267 = vrot.lane.b32.xlu0 %v6888, 24
      %v7268 = vpop.permute.xlu0 %7267
      %7269 = vrot.lane.b32.xlu0 %v6889, 24
      %v7270 = vpop.permute.xlu0 %7269
      %7271 = vrot.lane.b32.xlu0 %v6890, 24
      %v7272 = vpop.permute.xlu0 %7271
      %7273 = vrot.lane.b32.xlu0 %v6891, 24
      %v7274 = vpop.permute.xlu0 %7273
      %7275 = vrot.lane.b32.xlu0 %v6892, 24
      %v7276 = vpop.permute.xlu0 %7275
      %7277 = vrot.lane.b32.xlu0 %v6893, 24
      %v7278 = vpop.permute.xlu0 %7277
      %7279 = vrot.lane.b32.xlu0 %v6894, 24
      %v7280 = vpop.permute.xlu0 %7279
      %7281 = vrot.lane.b32.xlu0 %v6895, 24
      %v7282 = vpop.permute.xlu0 %7281
      %7283 = vrot.lane.b32.xlu0 %v7252, 24
      %v7284 = vpop.permute.xlu0 %7283
      %v7286 = vunpack.c.l.b16 %v6812
      %v7287 = vpack.c.b16 %v7286, %v7286
      %v7289 = vshrl.u32 %v7252, 16
      %v7291 = vshll.u32 %v7252, 16
      %v7293 = vrot.slane %v7291, 1
      %v7294 = vor.u32 %v7289, %v7293
      %v7296 = vshll.u32 %v7287, 16
      %v7298 = vrot.slane %v7296, 1
      %v7299 = vsel %vm2018, %v7294, %v7298
      %7300 = vrot.lane.b32.xlu0 %v6967, 32
      %v7301 = vpop.permute.xlu0 %7300
      %7302 = vrot.lane.b32.xlu0 %v6979, 32
      %v7303 = vpop.permute.xlu0 %7302
      %7304 = vrot.lane.b32.xlu0 %v6991, 32
      %v7305 = vpop.permute.xlu0 %7304
      %7306 = vrot.lane.b32.xlu0 %v7003, 32
      %v7307 = vpop.permute.xlu0 %7306
      %7308 = vrot.lane.b32.xlu0 %v7015, 32
      %v7309 = vpop.permute.xlu0 %7308
      %7310 = vrot.lane.b32.xlu0 %v7027, 32
      %v7311 = vpop.permute.xlu0 %7310
      %7312 = vrot.lane.b32.xlu0 %v7039, 32
      %v7313 = vpop.permute.xlu0 %7312
      %7314 = vrot.lane.b32.xlu0 %v7051, 32
      %v7315 = vpop.permute.xlu0 %7314
      %7316 = vrot.lane.b32.xlu0 %v7063, 32
      %v7317 = vpop.permute.xlu0 %7316
      %7318 = vrot.lane.b32.xlu0 %v7075, 32
      %v7319 = vpop.permute.xlu0 %7318
      %7320 = vrot.lane.b32.xlu0 %v7087, 32
      %v7321 = vpop.permute.xlu0 %7320
      %7322 = vrot.lane.b32.xlu0 %v7099, 32
      %v7323 = vpop.permute.xlu0 %7322
      %7324 = vrot.lane.b32.xlu0 %v7111, 32
      %v7325 = vpop.permute.xlu0 %7324
      %7326 = vrot.lane.b32.xlu0 %v7123, 32
      %v7327 = vpop.permute.xlu0 %7326
      %7328 = vrot.lane.b32.xlu0 %v7135, 32
      %v7329 = vpop.permute.xlu0 %7328
      %7330 = vrot.lane.b32.xlu0 %v7299, 32
      %v7331 = vpop.permute.xlu0 %7330
      %v7332 = vrot.slane %v7252, 1
      %v7333 = vrot.slane %v7287, 1
      %v7334 = vsel %vm2243, %v7332, %v7333
      %7335 = vrot.lane.b32.xlu0 %v7173, 40
      %v7336 = vpop.permute.xlu0 %7335
      %7337 = vrot.lane.b32.xlu0 %v7176, 40
      %v7338 = vpop.permute.xlu0 %7337
      %7339 = vrot.lane.b32.xlu0 %v7179, 40
      %v7340 = vpop.permute.xlu0 %7339
      %7341 = vrot.lane.b32.xlu0 %v7182, 40
      %v7342 = vpop.permute.xlu0 %7341
      %7343 = vrot.lane.b32.xlu0 %v7185, 40
      %v7344 = vpop.permute.xlu0 %7343
      %7345 = vrot.lane.b32.xlu0 %v7188, 40
      %v7346 = vpop.permute.xlu0 %7345
      %7347 = vrot.lane.b32.xlu0 %v7191, 40
      %v7348 = vpop.permute.xlu0 %7347
      %7349 = vrot.lane.b32.xlu0 %v7194, 40
      %v7350 = vpop.permute.xlu0 %7349
      %7351 = vrot.lane.b32.xlu0 %v7197, 40
      %v7352 = vpop.permute.xlu0 %7351
      %7353 = vrot.lane.b32.xlu0 %v7200, 40
      %v7354 = vpop.permute.xlu0 %7353
      %7355 = vrot.lane.b32.xlu0 %v7203, 40
      %v7356 = vpop.permute.xlu0 %7355
      %7357 = vrot.lane.b32.xlu0 %v7206, 40
      %v7358 = vpop.permute.xlu0 %7357
      %7359 = vrot.lane.b32.xlu0 %v7209, 40
      %v7360 = vpop.permute.xlu0 %7359
      %7361 = vrot.lane.b32.xlu0 %v7212, 40
      %v7362 = vpop.permute.xlu0 %7361
      %7363 = vrot.lane.b32.xlu0 %v7215, 40
      %v7364 = vpop.permute.xlu0 %7363
      %7365 = vrot.lane.b32.xlu0 %v7334, 40
      %v7366 = vpop.permute.xlu0 %7365
      %v7369 = vunpack.c.l.b16 %v6813
      %v7370 = vunpack.c.l.b16 %v6814
      %v7371 = vpack.c.b16 %v7370, %v7369
      %7372 = vrot.lane.b32.xlu0 %v6882, 48
      %v7373 = vpop.permute.xlu0 %7372
      %7374 = vrot.lane.b32.xlu0 %v6883, 48
      %v7375 = vpop.permute.xlu0 %7374
      %7376 = vrot.lane.b32.xlu0 %v6884, 48
      %v7377 = vpop.permute.xlu0 %7376
      %7378 = vrot.lane.b32.xlu0 %v6885, 48
      %v7379 = vpop.permute.xlu0 %7378
      %7380 = vrot.lane.b32.xlu0 %v6886, 48
      %v7381 = vpop.permute.xlu0 %7380
      %7382 = vrot.lane.b32.xlu0 %v6887, 48
      %v7383 = vpop.permute.xlu0 %7382
      %7384 = vrot.lane.b32.xlu0 %v6888, 48
      %v7385 = vpop.permute.xlu0 %7384
      %7386 = vrot.lane.b32.xlu0 %v6889, 48
      %v7387 = vpop.permute.xlu0 %7386
      %7388 = vrot.lane.b32.xlu0 %v6890, 48
      %v7389 = vpop.permute.xlu0 %7388
      %7390 = vrot.lane.b32.xlu0 %v6891, 48
      %v7391 = vpop.permute.xlu0 %7390
      %7392 = vrot.lane.b32.xlu0 %v6892, 48
      %v7393 = vpop.permute.xlu0 %7392
      %7394 = vrot.lane.b32.xlu0 %v6893, 48
      %v7395 = vpop.permute.xlu0 %7394
      %7396 = vrot.lane.b32.xlu0 %v6894, 48
      %v7397 = vpop.permute.xlu0 %7396
      %7398 = vrot.lane.b32.xlu0 %v6895, 48
      %v7399 = vpop.permute.xlu0 %7398
      %7400 = vrot.lane.b32.xlu0 %v7252, 48
      %v7401 = vpop.permute.xlu0 %7400
      %7402 = vrot.lane.b32.xlu0 %v7371, 48
      %v7403 = vpop.permute.xlu0 %7402
      %v7405 = vunpack.c.l.b16 %v6815
      %v7406 = vpack.c.b16 %v7405, %v7405
      %v7408 = vshrl.u32 %v7371, 16
      %v7410 = vshll.u32 %v7371, 16
      %v7412 = vrot.slane %v7410, 1
      %v7413 = vor.u32 %v7408, %v7412
      %v7415 = vshll.u32 %v7406, 16
      %v7417 = vrot.slane %v7415, 1
      %v7418 = vsel %vm2018, %v7413, %v7417
      %7419 = vrot.lane.b32.xlu0 %v6979, 56
      %v7420 = vpop.permute.xlu0 %7419
      %7421 = vrot.lane.b32.xlu0 %v6991, 56
      %v7422 = vpop.permute.xlu0 %7421
      %7423 = vrot.lane.b32.xlu0 %v7003, 56
      %v7424 = vpop.permute.xlu0 %7423
      %7425 = vrot.lane.b32.xlu0 %v7015, 56
      %v7426 = vpop.permute.xlu0 %7425
      %7427 = vrot.lane.b32.xlu0 %v7027, 56
      %v7428 = vpop.permute.xlu0 %7427
      %7429 = vrot.lane.b32.xlu0 %v7039, 56
      %v7430 = vpop.permute.xlu0 %7429
      %7431 = vrot.lane.b32.xlu0 %v7051, 56
      %v7432 = vpop.permute.xlu0 %7431
      %7433 = vrot.lane.b32.xlu0 %v7063, 56
      %v7434 = vpop.permute.xlu0 %7433
      %7435 = vrot.lane.b32.xlu0 %v7075, 56
      %v7436 = vpop.permute.xlu0 %7435
      %7437 = vrot.lane.b32.xlu0 %v7087, 56
      %v7438 = vpop.permute.xlu0 %7437
      %7439 = vrot.lane.b32.xlu0 %v7099, 56
      %v7440 = vpop.permute.xlu0 %7439
      %7441 = vrot.lane.b32.xlu0 %v7111, 56
      %v7442 = vpop.permute.xlu0 %7441
      %7443 = vrot.lane.b32.xlu0 %v7123, 56
      %v7444 = vpop.permute.xlu0 %7443
      %7445 = vrot.lane.b32.xlu0 %v7135, 56
      %v7446 = vpop.permute.xlu0 %7445
      %7447 = vrot.lane.b32.xlu0 %v7299, 56
      %v7448 = vpop.permute.xlu0 %7447
      %7449 = vrot.lane.b32.xlu0 %v7418, 56
      %v7450 = vpop.permute.xlu0 %7449
      %v7451 = vrot.slane %v7371, 1
      %v7452 = vrot.slane %v7406, 1
      %v7453 = vsel %vm2243, %v7451, %v7452
      %7454 = vrot.lane.b32.xlu0 %v7176, 64
      %v7455 = vpop.permute.xlu0 %7454
      %7456 = vrot.lane.b32.xlu0 %v7179, 64
      %v7457 = vpop.permute.xlu0 %7456
      %7458 = vrot.lane.b32.xlu0 %v7182, 64
      %v7459 = vpop.permute.xlu0 %7458
      %7460 = vrot.lane.b32.xlu0 %v7185, 64
      %v7461 = vpop.permute.xlu0 %7460
      %7462 = vrot.lane.b32.xlu0 %v7188, 64
      %v7463 = vpop.permute.xlu0 %7462
      %7464 = vrot.lane.b32.xlu0 %v7191, 64
      %v7465 = vpop.permute.xlu0 %7464
      %7466 = vrot.lane.b32.xlu0 %v7194, 64
      %v7467 = vpop.permute.xlu0 %7466
      %7468 = vrot.lane.b32.xlu0 %v7197, 64
      %v7469 = vpop.permute.xlu0 %7468
      %7470 = vrot.lane.b32.xlu0 %v7200, 64
      %v7471 = vpop.permute.xlu0 %7470
      %7472 = vrot.lane.b32.xlu0 %v7203, 64
      %v7473 = vpop.permute.xlu0 %7472
      %7474 = vrot.lane.b32.xlu0 %v7206, 64
      %v7475 = vpop.permute.xlu0 %7474
      %7476 = vrot.lane.b32.xlu0 %v7209, 64
      %v7477 = vpop.permute.xlu0 %7476
      %7478 = vrot.lane.b32.xlu0 %v7212, 64
      %v7479 = vpop.permute.xlu0 %7478
      %7480 = vrot.lane.b32.xlu0 %v7215, 64
      %v7481 = vpop.permute.xlu0 %7480
      %7482 = vrot.lane.b32.xlu0 %v7334, 64
      %v7483 = vpop.permute.xlu0 %7482
      %7484 = vrot.lane.b32.xlu0 %v7453, 64
      %v7485 = vpop.permute.xlu0 %7484
      %v7487 = vsel %vm2562, %v6880, %v7137
      %v7489 = vsel %vm2562, %v6881, %v7139
      %v7491 = vsel %vm2562, %v6882, %v7141
      %v7493 = vsel %vm2562, %v6883, %v7143
      %v7495 = vsel %vm2562, %v6884, %v7145
      %v7497 = vsel %vm2562, %v6885, %v7147
      %v7499 = vsel %vm2562, %v6886, %v7149
      %v7501 = vsel %vm2562, %v6887, %v7151
      %v7503 = vsel %vm2562, %v6888, %v7153
      %v7505 = vsel %vm2562, %v6889, %v7155
      %v7507 = vsel %vm2562, %v6890, %v7157
      %v7509 = vsel %vm2562, %v6891, %v7159
      %v7511 = vsel %vm2562, %v6892, %v7161
      %v7513 = vsel %vm2562, %v6893, %v7163
      %v7515 = vsel %vm2562, %v6894, %v7165
      %v7517 = vsel %vm2562, %v6895, %v7167
      %v7519 = vsel %vm2595, %v7487, %v7217
      %v7521 = vsel %vm2595, %v7489, %v7219
      %v7523 = vsel %vm2595, %v7491, %v7221
      %v7525 = vsel %vm2595, %v7493, %v7223
      %v7527 = vsel %vm2595, %v7495, %v7225
      %v7529 = vsel %vm2595, %v7497, %v7227
      %v7531 = vsel %vm2595, %v7499, %v7229
      %v7533 = vsel %vm2595, %v7501, %v7231
      %v7535 = vsel %vm2595, %v7503, %v7233
      %v7537 = vsel %vm2595, %v7505, %v7235
      %v7539 = vsel %vm2595, %v7507, %v7237
      %v7541 = vsel %vm2595, %v7509, %v7239
      %v7543 = vsel %vm2595, %v7511, %v7241
      %v7545 = vsel %vm2595, %v7513, %v7243
      %v7547 = vsel %vm2595, %v7515, %v7245
      %v7549 = vsel %vm2595, %v7517, %v7247
      %v7551 = vsel %vm2628, %v7519, %v7254
      %v7553 = vsel %vm2628, %v7521, %v7256
      %v7555 = vsel %vm2628, %v7523, %v7258
      %v7557 = vsel %vm2628, %v7525, %v7260
      %v7559 = vsel %vm2628, %v7527, %v7262
      %v7561 = vsel %vm2628, %v7529, %v7264
      %v7563 = vsel %vm2628, %v7531, %v7266
      %v7565 = vsel %vm2628, %v7533, %v7268
      %v7567 = vsel %vm2628, %v7535, %v7270
      %v7569 = vsel %vm2628, %v7537, %v7272
      %v7571 = vsel %vm2628, %v7539, %v7274
      %v7573 = vsel %vm2628, %v7541, %v7276
      %v7575 = vsel %vm2628, %v7543, %v7278
      %v7577 = vsel %vm2628, %v7545, %v7280
      %v7579 = vsel %vm2628, %v7547, %v7282
      %v7581 = vsel %vm2628, %v7549, %v7284
      %v7583 = vsel %vm2661, %v7551, %v7301
      %v7585 = vsel %vm2661, %v7553, %v7303
      %v7587 = vsel %vm2661, %v7555, %v7305
      %v7589 = vsel %vm2661, %v7557, %v7307
      %v7591 = vsel %vm2661, %v7559, %v7309
      %v7593 = vsel %vm2661, %v7561, %v7311
      %v7595 = vsel %vm2661, %v7563, %v7313
      %v7597 = vsel %vm2661, %v7565, %v7315
      %v7599 = vsel %vm2661, %v7567, %v7317
      %v7601 = vsel %vm2661, %v7569, %v7319
      %v7603 = vsel %vm2661, %v7571, %v7321
      %v7605 = vsel %vm2661, %v7573, %v7323
      %v7607 = vsel %vm2661, %v7575, %v7325
      %v7609 = vsel %vm2661, %v7577, %v7327
      %v7611 = vsel %vm2661, %v7579, %v7329
      %v7613 = vsel %vm2661, %v7581, %v7331
      %v7615 = vsel %vm2694, %v7583, %v7336
      %v7617 = vsel %vm2694, %v7585, %v7338
      %v7619 = vsel %vm2694, %v7587, %v7340
      %v7621 = vsel %vm2694, %v7589, %v7342
      %v7623 = vsel %vm2694, %v7591, %v7344
      %v7625 = vsel %vm2694, %v7593, %v7346
      %v7627 = vsel %vm2694, %v7595, %v7348
      %v7629 = vsel %vm2694, %v7597, %v7350
      %v7631 = vsel %vm2694, %v7599, %v7352
      %v7633 = vsel %vm2694, %v7601, %v7354
      %v7635 = vsel %vm2694, %v7603, %v7356
      %v7637 = vsel %vm2694, %v7605, %v7358
      %v7639 = vsel %vm2694, %v7607, %v7360
      %v7641 = vsel %vm2694, %v7609, %v7362
      %v7643 = vsel %vm2694, %v7611, %v7364
      %v7645 = vsel %vm2694, %v7613, %v7366
      %v7647 = vsel %vm2727, %v7615, %v7373
      %v7649 = vsel %vm2727, %v7617, %v7375
      %v7651 = vsel %vm2727, %v7619, %v7377
      %v7653 = vsel %vm2727, %v7621, %v7379
      %v7655 = vsel %vm2727, %v7623, %v7381
      %v7657 = vsel %vm2727, %v7625, %v7383
      %v7659 = vsel %vm2727, %v7627, %v7385
      %v7661 = vsel %vm2727, %v7629, %v7387
      %v7663 = vsel %vm2727, %v7631, %v7389
      %v7665 = vsel %vm2727, %v7633, %v7391
      %v7667 = vsel %vm2727, %v7635, %v7393
      %v7669 = vsel %vm2727, %v7637, %v7395
      %v7671 = vsel %vm2727, %v7639, %v7397
      %v7673 = vsel %vm2727, %v7641, %v7399
      %v7675 = vsel %vm2727, %v7643, %v7401
      %v7677 = vsel %vm2727, %v7645, %v7403
      %v7679 = vsel %vm2760, %v7647, %v7420
      %v7681 = vsel %vm2760, %v7649, %v7422
      %v7683 = vsel %vm2760, %v7651, %v7424
      %v7685 = vsel %vm2760, %v7653, %v7426
      %v7687 = vsel %vm2760, %v7655, %v7428
      %v7689 = vsel %vm2760, %v7657, %v7430
      %v7691 = vsel %vm2760, %v7659, %v7432
      %v7693 = vsel %vm2760, %v7661, %v7434
      %v7695 = vsel %vm2760, %v7663, %v7436
      %v7697 = vsel %vm2760, %v7665, %v7438
      %v7699 = vsel %vm2760, %v7667, %v7440
      %v7701 = vsel %vm2760, %v7669, %v7442
      %v7703 = vsel %vm2760, %v7671, %v7444
      %v7705 = vsel %vm2760, %v7673, %v7446
      %v7707 = vsel %vm2760, %v7675, %v7448
      %v7709 = vsel %vm2760, %v7677, %v7450
      %v7711 = vsel %vm2793, %v7679, %v7455
      %v7713 = vsel %vm2793, %v7681, %v7457
      %v7715 = vsel %vm2793, %v7683, %v7459
      %v7717 = vsel %vm2793, %v7685, %v7461
      %v7719 = vsel %vm2793, %v7687, %v7463
      %v7721 = vsel %vm2793, %v7689, %v7465
      %v7723 = vsel %vm2793, %v7691, %v7467
      %v7725 = vsel %vm2793, %v7693, %v7469
      %v7727 = vsel %vm2793, %v7695, %v7471
      %v7729 = vsel %vm2793, %v7697, %v7473
      %v7731 = vsel %vm2793, %v7699, %v7475
      %v7733 = vsel %vm2793, %v7701, %v7477
      %v7735 = vsel %vm2793, %v7703, %v7479
      %v7737 = vsel %vm2793, %v7705, %v7481
      %v7739 = vsel %vm2793, %v7707, %v7483
      %v7741 = vsel %vm2793, %v7709, %v7485
      %v7742 = vld [vmem:[%s9] sm:$0xf]
      %v7743 = vld [vmem:[%s9 + $0x4] sm:$0xf]
      %v7744 = vld [vmem:[%s9 + $0x8] sm:$0xf]
      %v7745 = vld [vmem:[%s9 + $0xc] sm:$0xf]
      %v7746 = vld [vmem:[%s9 + $0x10] sm:$0xf]
      %v7747 = vld [vmem:[%s9 + $0x14] sm:$0xf]
      %v7748 = vld [vmem:[%s9 + $0x18] sm:$0xf]
      %v7749 = vld [vmem:[%s9 + $0x1c] sm:$0xf]
      %v7750 = vld [vmem:[%s9 + $0x20] sm:$0xf]
      %v7760 = vunpack.c.l.b16 %v7742
      %v7761 = vunpack.c.l.b16 %v7743
      %v7762 = vunpack.c.l.b16 %v7744
      %v7763 = vunpack.c.l.b16 %v7745
      %v7764 = vunpack.c.l.b16 %v7746
      %v7765 = vunpack.c.l.b16 %v7747
      %v7766 = vunpack.c.l.b16 %v7748
      %v7767 = vunpack.c.l.b16 %v7749
      %v7768 = vunpack.c.l.b16 %v7750
      %v7769 = vpack.c.b16 %v7761, %v7760
      %v7770 = vpack.c.b16 %v7763, %v7762
      %v7771 = vpack.c.b16 %v7765, %v7764
      %v7772 = vpack.c.b16 %v7767, %v7766
      %v7773 = vpack.c.b16 %v7768, %v7768
      %v7778 = vsel %vm2862, %v7711, 0
      %v7780 = vsel %vm2862, %v7713, 0
      %v7782 = vsel %vm2862, %v7715, 0
      %v7784 = vsel %vm2862, %v7717, 0
      %v7786 = vsel %vm2862, %v7719, 0
      %v7788 = vsel %vm2862, %v7721, 0
      %v7790 = vsel %vm2862, %v7723, 0
      %v7792 = vsel %vm2862, %v7725, 0
      %v7794 = vsel %vm2862, %v7727, 0
      %v7796 = vsel %vm2862, %v7729, 0
      %v7798 = vsel %vm2862, %v7731, 0
      %v7800 = vsel %vm2862, %v7733, 0
      %v7802 = vsel %vm2862, %v7735, 0
      %v7804 = vsel %vm2862, %v7737, 0
      %v7806 = vsel %vm2862, %v7739, 0
      %v7808 = vsel %vm2862, %v7741, 0
      %v7811 = vsel %vm2895, %v7773, 0
      %7813 = vmatprep.subr.bf16.mxu0 0
      %7814 = vmatpush1.bf16.msra.mxu0 %v7769
      %7815 = vmatprep.subr.bf16.mxu0 0
      %7816 = vmatpush1.bf16.msra.mxu0 %v7770
      %7817 = vmatprep.subr.bf16.mxu0 0
      %7818 = vmatpush1.bf16.msra.mxu0 %v7771
      %7819 = vmatprep.subr.bf16.mxu0 0
      %7820 = vmatpush1.bf16.msra.mxu0 %v7772
      %7821 = vmatprep.subr.bf16.mxu0 0
      %7822 = vmatpush1.bf16.msra.mxu0 %v7811
      %7823 = vmatprep.subr.bf16.mxu0 0
      %7824 = vmatpush1.bf16.msra.mxu0 0
      %7825 = vmatprep.subr.bf16.mxu0 0
      %7826 = vmatpush1.bf16.msra.mxu0 0
      %7827 = vmatprep.subr.bf16.mxu0 0
      %7828 = vmatpush1.bf16.msra.mxu0 0
      %7829 = vmatprep.subr.bf16.mxu0 0
      %7830 = vmatpush1.bf16.msra.mxu0 0
      %7831 = vmatprep.subr.bf16.mxu0 0
      %7832 = vmatpush1.bf16.msra.mxu0 0
      %7833 = vmatprep.subr.bf16.mxu0 0
      %7834 = vmatpush1.bf16.msra.mxu0 0
      %7835 = vmatprep.subr.bf16.mxu0 0
      %7836 = vmatpush1.bf16.msra.mxu0 0
      %7837 = vmatprep.subr.bf16.mxu0 0
      %7838 = vmatpush1.bf16.msra.mxu0 0
      %7839 = vmatprep.subr.bf16.mxu0 0
      %7840 = vmatpush1.bf16.msra.mxu0 0
      %7841 = vmatprep.subr.bf16.mxu0 0
      %7842 = vmatpush1.bf16.msra.mxu0 0
      %7843 = vmatprep.subr.bf16.mxu0 0
      %7844 = vmatpush1.bf16.msra.mxu0 0
      %7845 = vmatprep.mubr.bf16.mxu0 0
      %7846 = vmatmul.mubr.bf16.gmra.mrb[0].mxu0 %v7778
      %v7847 = vpop.f32.mrb[0].mxu0
      %v7848 = vadd.f32 0.0, %v7847
      %v7849 = vpop.f32.mrb[0].mxu0
      %v7850 = vpop.f32.mrb[0].mxu0
      %v7851 = vadd.f32 0.0, %v7850
      %v7852 = vpop.f32.mrb[0].mxu0
      %7853 = vmatprep.mubr.bf16.mxu0 0
      %7854 = vmatmul.mubr.bf16.gmra.mrb[0].mxu0 %v7780
      %v7855 = vpop.f32.mrb[0].mxu0
      %v7856 = vadd.f32 0.0, %v7855
      %v7857 = vpop.f32.mrb[0].mxu0
      %v7858 = vpop.f32.mrb[0].mxu0
      %v7859 = vadd.f32 0.0, %v7858
      %v7860 = vpop.f32.mrb[0].mxu0
      %7861 = vmatprep.mubr.bf16.mxu0 0
      %7862 = vmatmul.mubr.bf16.gmra.mrb[0].mxu0 %v7782
      %v7863 = vpop.f32.mrb[0].mxu0
      %v7864 = vadd.f32 0.0, %v7863
      %v7865 = vpop.f32.mrb[0].mxu0
      %v7866 = vpop.f32.mrb[0].mxu0
      %v7867 = vadd.f32 0.0, %v7866
      %v7868 = vpop.f32.mrb[0].mxu0
      %7869 = vmatprep.mubr.bf16.mxu0 0
      %7870 = vmatmul.mubr.bf16.gmra.mrb[0].mxu0 %v7784
      %v7871 = vpop.f32.mrb[0].mxu0
      %v7872 = vadd.f32 0.0, %v7871
      %v7873 = vpop.f32.mrb[0].mxu0
      %v7874 = vpop.f32.mrb[0].mxu0
      %v7875 = vadd.f32 0.0, %v7874
      %v7876 = vpop.f32.mrb[0].mxu0
      %7877 = vmatprep.mubr.bf16.mxu0 0
      %7878 = vmatmul.mubr.bf16.gmra.mrb[0].mxu0 %v7786
      %v7879 = vpop.f32.mrb[0].mxu0
      %v7880 = vadd.f32 0.0, %v7879
      %v7881 = vpop.f32.mrb[0].mxu0
      %v7882 = vpop.f32.mrb[0].mxu0
      %v7883 = vadd.f32 0.0, %v7882
      %v7884 = vpop.f32.mrb[0].mxu0
      %7885 = vmatprep.mubr.bf16.mxu0 0
      %7886 = vmatmul.mubr.bf16.gmra.mrb[0].mxu0 %v7788
      %v7887 = vpop.f32.mrb[0].mxu0
      %v7888 = vadd.f32 0.0, %v7887
      %v7889 = vpop.f32.mrb[0].mxu0
      %v7890 = vpop.f32.mrb[0].mxu0
      %v7891 = vadd.f32 0.0, %v7890
      %v7892 = vpop.f32.mrb[0].mxu0
      %7893 = vmatprep.mubr.bf16.mxu0 0
      %7894 = vmatmul.mubr.bf16.gmra.mrb[0].mxu0 %v7790
      %v7895 = vpop.f32.mrb[0].mxu0
      %v7896 = vadd.f32 0.0, %v7895
      %v7897 = vpop.f32.mrb[0].mxu0
      %v7898 = vpop.f32.mrb[0].mxu0
      %v7899 = vadd.f32 0.0, %v7898
      %v7900 = vpop.f32.mrb[0].mxu0
      %7901 = vmatprep.mubr.bf16.mxu0 0
      %7902 = vmatmul.mubr.bf16.gmra.mrb[0].mxu0 %v7792
      %v7903 = vpop.f32.mrb[0].mxu0
      %v7904 = vadd.f32 0.0, %v7903
      %v7905 = vpop.f32.mrb[0].mxu0
      %v7906 = vpop.f32.mrb[0].mxu0
      %v7907 = vadd.f32 0.0, %v7906
      %v7908 = vpop.f32.mrb[0].mxu0
      %7909 = vmatprep.mubr.bf16.mxu0 0
      %7910 = vmatmul.mubr.bf16.gmra.mrb[0].mxu0 %v7794
      %v7911 = vpop.f32.mrb[0].mxu0
      %v7912 = vadd.f32 0.0, %v7911
      %v7913 = vpop.f32.mrb[0].mxu0
      %v7914 = vpop.f32.mrb[0].mxu0
      %v7915 = vadd.f32 0.0, %v7914
      %v7916 = vpop.f32.mrb[0].mxu0
      %7917 = vmatprep.mubr.bf16.mxu0 0
      %7918 = vmatmul.mubr.bf16.gmra.mrb[0].mxu0 %v7796
      %v7919 = vpop.f32.mrb[0].mxu0
      %v7920 = vadd.f32 0.0, %v7919
      %v7921 = vpop.f32.mrb[0].mxu0
      %v7922 = vpop.f32.mrb[0].mxu0
      %v7923 = vadd.f32 0.0, %v7922
      %v7924 = vpop.f32.mrb[0].mxu0
      %7925 = vmatprep.mubr.bf16.mxu0 0
      %7926 = vmatmul.mubr.bf16.gmra.mrb[0].mxu0 %v7798
      %v7927 = vpop.f32.mrb[0].mxu0
      %v7928 = vadd.f32 0.0, %v7927
      %v7929 = vpop.f32.mrb[0].mxu0
      %v7930 = vpop.f32.mrb[0].mxu0
      %v7931 = vadd.f32 0.0, %v7930
      %v7932 = vpop.f32.mrb[0].mxu0
      %7933 = vmatprep.mubr.bf16.mxu0 0
      %7934 = vmatmul.mubr.bf16.gmra.mrb[0].mxu0 %v7800
      %v7935 = vpop.f32.mrb[0].mxu0
      %v7936 = vadd.f32 0.0, %v7935
      %v7937 = vpop.f32.mrb[0].mxu0
      %v7938 = vpop.f32.mrb[0].mxu0
      %v7939 = vadd.f32 0.0, %v7938
      %v7940 = vpop.f32.mrb[0].mxu0
      %7941 = vmatprep.mubr.bf16.mxu0 0
      %7942 = vmatmul.mubr.bf16.gmra.mrb[0].mxu0 %v7802
      %v7943 = vpop.f32.mrb[0].mxu0
      %v7944 = vadd.f32 0.0, %v7943
      %v7945 = vpop.f32.mrb[0].mxu0
      %v7946 = vpop.f32.mrb[0].mxu0
      %v7947 = vadd.f32 0.0, %v7946
      %v7948 = vpop.f32.mrb[0].mxu0
      %7949 = vmatprep.mubr.bf16.mxu0 0
      %7950 = vmatmul.mubr.bf16.gmra.mrb[0].mxu0 %v7804
      %v7951 = vpop.f32.mrb[0].mxu0
      %v7952 = vadd.f32 0.0, %v7951
      %v7953 = vpop.f32.mrb[0].mxu0
      %v7954 = vpop.f32.mrb[0].mxu0
      %v7955 = vadd.f32 0.0, %v7954
      %v7956 = vpop.f32.mrb[0].mxu0
      %7957 = vmatprep.mubr.bf16.mxu0 0
      %7958 = vmatmul.mubr.bf16.gmra.mrb[0].mxu0 %v7806
      %v7959 = vpop.f32.mrb[0].mxu0
      %v7960 = vadd.f32 0.0, %v7959
      %v7961 = vpop.f32.mrb[0].mxu0
      %v7962 = vpop.f32.mrb[0].mxu0
      %v7963 = vadd.f32 0.0, %v7962
      %v7964 = vpop.f32.mrb[0].mxu0
      %7965 = vmatprep.mubr.bf16.mxu0 0
      %7966 = vmatmul.mubr.bf16.gmra.mrb[0].mxu0 %v7808
      %v7967 = vpop.f32.mrb[0].mxu0
      %v7968 = vadd.f32 0.0, %v7967
      %v7969 = vpop.f32.mrb[0].mxu0
      %v7970 = vpop.f32.mrb[0].mxu0
      %v7971 = vadd.f32 0.0, %v7970
      %v7972 = vpop.f32.mrb[0].mxu0
      %7973 = vdwg.mxu0
      %v7974 = vld [vmem:[%s10] sm:$0x1]
      %v7976 = vlaneseq
      %v7977 = vshrl.u32 %v7976, 7
      %v7978 = vsub.s32 0, %v7977
      %v7979 = vrot.slane %v7974, %v7978
      %v7981 = vmul.f32 %v7848, %v7979
      %v7982 = vmul.f32 %v7851, %v7979
      %v7983 = vmul.f32 %v7856, %v7979
      %v7984 = vmul.f32 %v7859, %v7979
      %v7985 = vmul.f32 %v7864, %v7979
      %v7986 = vmul.f32 %v7867, %v7979
      %v7987 = vmul.f32 %v7872, %v7979
      %v7988 = vmul.f32 %v7875, %v7979
      %v7989 = vmul.f32 %v7880, %v7979
      %v7990 = vmul.f32 %v7883, %v7979
      %v7991 = vmul.f32 %v7888, %v7979
      %v7992 = vmul.f32 %v7891, %v7979
      %v7993 = vmul.f32 %v7896, %v7979
      %v7994 = vmul.f32 %v7899, %v7979
      %v7995 = vmul.f32 %v7904, %v7979
      %v7996 = vmul.f32 %v7907, %v7979
      %v7997 = vmul.f32 %v7912, %v7979
      %v7998 = vmul.f32 %v7915, %v7979
      %v7999 = vmul.f32 %v7920, %v7979
      %v8000 = vmul.f32 %v7923, %v7979
      %v8001 = vmul.f32 %v7928, %v7979
      %v8002 = vmul.f32 %v7931, %v7979
      %v8003 = vmul.f32 %v7936, %v7979
      %v8004 = vmul.f32 %v7939, %v7979
      %v8005 = vmul.f32 %v7944, %v7979
      %v8006 = vmul.f32 %v7947, %v7979
      %v8007 = vmul.f32 %v7952, %v7979
      %v8008 = vmul.f32 %v7955, %v7979
      %v8009 = vmul.f32 %v7960, %v7979
      %v8010 = vmul.f32 %v7963, %v7979
      %v8011 = vmul.f32 %v7968, %v7979
      %v8012 = vmul.f32 %v7971, %v7979
      %v8013 = vld [vmem:[%s11] sm:$0x1]
      %v8015 = vlaneseq
      %v8016 = vshrl.u32 %v8015, 7
      %v8017 = vsub.s32 0, %v8016
      %v8018 = vrot.slane %v8013, %v8017
      %v8020 = vadd.f32 %v7981, %v8018
      %v8021 = vadd.f32 %v7982, %v8018
      %v8022 = vadd.f32 %v7983, %v8018
      %v8023 = vadd.f32 %v7984, %v8018
      %v8024 = vadd.f32 %v7985, %v8018
      %v8025 = vadd.f32 %v7986, %v8018
      %v8026 = vadd.f32 %v7987, %v8018
      %v8027 = vadd.f32 %v7988, %v8018
      %v8028 = vadd.f32 %v7989, %v8018
      %v8029 = vadd.f32 %v7990, %v8018
      %v8030 = vadd.f32 %v7991, %v8018
      %v8031 = vadd.f32 %v7992, %v8018
      %v8032 = vadd.f32 %v7993, %v8018
      %v8033 = vadd.f32 %v7994, %v8018
      %v8034 = vadd.f32 %v7995, %v8018
      %v8035 = vadd.f32 %v7996, %v8018
      %v8036 = vadd.f32 %v7997, %v8018
      %v8037 = vadd.f32 %v7998, %v8018
      %v8038 = vadd.f32 %v7999, %v8018
      %v8039 = vadd.f32 %v8000, %v8018
      %v8040 = vadd.f32 %v8001, %v8018
      %v8041 = vadd.f32 %v8002, %v8018
      %v8042 = vadd.f32 %v8003, %v8018
      %v8043 = vadd.f32 %v8004, %v8018
      %v8044 = vadd.f32 %v8005, %v8018
      %v8045 = vadd.f32 %v8006, %v8018
      %v8046 = vadd.f32 %v8007, %v8018
      %v8047 = vadd.f32 %v8008, %v8018
      %v8048 = vadd.f32 %v8009, %v8018
      %v8049 = vadd.f32 %v8010, %v8018
      %v8050 = vadd.f32 %v8011, %v8018
      %v8051 = vadd.f32 %v8012, %v8018
      %v8052 = vmax.f32 %v8020, 0.0
      %v8053 = vmax.f32 %v8021, 0.0
      %v8054 = vmax.f32 %v8022, 0.0
      %v8055 = vmax.f32 %v8023, 0.0
      %v8056 = vmax.f32 %v8024, 0.0
      %v8057 = vmax.f32 %v8025, 0.0
      %v8058 = vmax.f32 %v8026, 0.0
      %v8059 = vmax.f32 %v8027, 0.0
      %v8060 = vmax.f32 %v8028, 0.0
      %v8061 = vmax.f32 %v8029, 0.0
      %v8062 = vmax.f32 %v8030, 0.0
      %v8063 = vmax.f32 %v8031, 0.0
      %v8064 = vmax.f32 %v8032, 0.0
      %v8065 = vmax.f32 %v8033, 0.0
      %v8066 = vmax.f32 %v8034, 0.0
      %v8067 = vmax.f32 %v8035, 0.0
      %v8068 = vmax.f32 %v8036, 0.0
      %v8069 = vmax.f32 %v8037, 0.0
      %v8070 = vmax.f32 %v8038, 0.0
      %v8071 = vmax.f32 %v8039, 0.0
      %v8072 = vmax.f32 %v8040, 0.0
      %v8073 = vmax.f32 %v8041, 0.0
      %v8074 = vmax.f32 %v8042, 0.0
      %v8075 = vmax.f32 %v8043, 0.0
      %v8076 = vmax.f32 %v8044, 0.0
      %v8077 = vmax.f32 %v8045, 0.0
      %v8078 = vmax.f32 %v8046, 0.0
      %v8079 = vmax.f32 %v8047, 0.0
      %v8080 = vmax.f32 %v8048, 0.0
      %v8081 = vmax.f32 %v8049, 0.0
      %v8082 = vmax.f32 %v8050, 0.0
      %v8083 = vmax.f32 %v8051, 0.0
      %8084 = vxpose.xlu0.b32.start [1/16] %v8052, 128
      %8085 = vxpose.xlu0.b32.cont [2/16] %v8053, 128
      %8086 = vxpose.xlu0.b32.cont [3/16] %v8054, 128
      %8087 = vxpose.xlu0.b32.cont [4/16] %v8055, 128
      %8088 = vxpose.xlu0.b32.cont [5/16] %v8056, 128
      %8089 = vxpose.xlu0.b32.cont [6/16] %v8057, 128
      %8090 = vxpose.xlu0.b32.cont [7/16] %v8058, 128
      %8091 = vxpose.xlu0.b32.cont [8/16] %v8059, 128
      %8092 = vxpose.xlu0.b32.cont [9/16] %v8060, 128
      %8093 = vxpose.xlu0.b32.cont [10/16] %v8061, 128
      %8094 = vxpose.xlu0.b32.cont [11/16] %v8062, 128
      %8095 = vxpose.xlu0.b32.cont [12/16] %v8063, 128
      %8096 = vxpose.xlu0.b32.cont [13/16] %v8064, 128
      %8097 = vxpose.xlu0.b32.cont [14/16] %v8065, 128
      %8098 = vxpose.xlu0.b32.cont [15/16] %v8066, 128
      %8099 = vxpose.xlu0.b32.end [16/16] %v8067, 128
      %v8100 = vpop.trf.xlu0
      %v8101 = vpop.trf.xlu0
      %v8102 = vpop.trf.xlu0
      %v8103 = vpop.trf.xlu0
      %v8104 = vpop.trf.xlu0
      %v8105 = vpop.trf.xlu0
      %v8106 = vpop.trf.xlu0
      %v8107 = vpop.trf.xlu0
      %v8108 = vpop.trf.xlu0
      %v8109 = vpop.trf.xlu0
      %v8110 = vpop.trf.xlu0
      %v8111 = vpop.trf.xlu0
      %v8112 = vpop.trf.xlu0
      %v8113 = vpop.trf.xlu0
      %v8114 = vpop.trf.xlu0
      %v8115 = vpop.trf.xlu0
      %8116 = vxpose.xlu0.b32.start [1/16] %v8068, 128
      %8117 = vxpose.xlu0.b32.cont [2/16] %v8069, 128
      %8118 = vxpose.xlu0.b32.cont [3/16] %v8070, 128
      %8119 = vxpose.xlu0.b32.cont [4/16] %v8071, 128
      %8120 = vxpose.xlu0.b32.cont [5/16] %v8072, 128
      %8121 = vxpose.xlu0.b32.cont [6/16] %v8073, 128
      %8122 = vxpose.xlu0.b32.cont [7/16] %v8074, 128
      %8123 = vxpose.xlu0.b32.cont [8/16] %v8075, 128
      %8124 = vxpose.xlu0.b32.cont [9/16] %v8076, 128
      %8125 = vxpose.xlu0.b32.cont [10/16] %v8077, 128
      %8126 = vxpose.xlu0.b32.cont [11/16] %v8078, 128
      %8127 = vxpose.xlu0.b32.cont [12/16] %v8079, 128
      %8128 = vxpose.xlu0.b32.cont [13/16] %v8080, 128
      %8129 = vxpose.xlu0.b32.cont [14/16] %v8081, 128
      %8130 = vxpose.xlu0.b32.cont [15/16] %v8082, 128
      %8131 = vxpose.xlu0.b32.end [16/16] %v8083, 128
      %v8132 = vpop.trf.xlu0
      %v8133 = vpop.trf.xlu0
      %v8134 = vpop.trf.xlu0
      %v8135 = vpop.trf.xlu0
      %v8136 = vpop.trf.xlu0
      %v8137 = vpop.trf.xlu0
      %v8138 = vpop.trf.xlu0
      %v8139 = vpop.trf.xlu0
      %v8140 = vpop.trf.xlu0
      %v8141 = vpop.trf.xlu0
      %v8142 = vpop.trf.xlu0
      %v8143 = vpop.trf.xlu0
      %v8144 = vpop.trf.xlu0
      %v8145 = vpop.trf.xlu0
      %v8146 = vpop.trf.xlu0
      %v8147 = vpop.trf.xlu0
      %8148 = vst [vmem:[%s433] sm:$0xff] %v8100
      %8149 = vst [vmem:[%s433 + $0x8] sm:$0xff] %v8132
      %p8150 = scmp.lt.s32.totalorder %s23, 1
      %s8151 = scalar_select %p8150, %s23, 1
      %s8152 = smul.addr %s8151, 2
      %s8153 = smul.addr %s8152, 8
      %s8154 = scalar_lea.vmem %s12, %s8153
      // Predicated region
      $region69: #{upconv_block_forward.1} parent=67 // pred_check
        %p8155 = pneg %p303
      $region70: #{upconv_block_forward.1} parent=67 // pred_check_branch
        %8157 = sbr.rel (%p8155) target = $region72
      $region71: #{upconv_block_forward.1} parent=67 // pred_region
        _
      $region72: #{upconv_block_forward.1} parent=67 // pred_fallthru
        _
    $region68: #{upconv_block_forward.1} parent=5 // pred_fallthru
      _
    %p8158 = scmp.le.s32.totalorder 2, %s18
    // Predicated region
    $region73: #{upconv_block_forward.1} parent=5 // pred_check
      %p8159 = pneg %p8158
    $region74: #{upconv_block_forward.1} parent=5 // pred_check_branch
      %8161 = sbr.rel (%p8159) target = $region76
    $region75: #{upconv_block_forward.1} parent=5 // pred_region
      %s8162 = ssub.s32 %s18, 2
      // Predicated region
      $region77: #{upconv_block_forward.1} parent=75 // pred_check
        %p8163 = pneg %p309
      $region78: #{upconv_block_forward.1} parent=75 // pred_check_branch
        %8165 = sbr.rel (%p8163) target = $region80
      $region79: #{upconv_block_forward.1} parent=75 // pred_region
        %p8166 = scmp.lt.s32.totalorder %s24, 1
        %s8167 = scalar_select %p8166, %s24, 1
        %s8168 = smul.addr %s8167, 2
        %s8169 = smul.addr %s8168, 8
        %s8170 = scalar_lea.vmem %s12, %s8169
      $region80: #{upconv_block_forward.1} parent=75 // pred_fallthru
        _
    $region76: #{upconv_block_forward.1} parent=5 // pred_fallthru
      _
  $region6: #{upconv_block_forward.1} parent=0 // loop_footer
    %s22 = sadd.s32 1, %s18
  $region7: #{upconv_block_forward.1} parent=0 // loop_footer_branch
    %17 = sbr.rel target = $region3
  $region8: #{upconv_block_forward.1} parent=0 // loop_exit
    _

</llo_original>
